<compile_context>
chip_gen: v7x
topology: tpu7x:2x2x1
jax: 0.10.0
libtpu: 0.0.40
codegen_flags: <defaults>
</compile_context>

<pallas_src>
import math

import jax
import jax.numpy as jnp
from jax.experimental import pallas as pl
from jax.experimental.pallas import tpu as pltpu


TAPS = [(kh, kw) for kh in range(3) for kw in range(3)]   # t = kh*3 + kw


# ---------------------------------------------------------------------------
# Fused kernel: conv1+pool1 -> conv2+pool2 -> conv3+pool3 -> classifier
# Single grid step; whole batch folded into M.
# ---------------------------------------------------------------------------

def vgg_fused_kernel(p1_ref, w1_ref, b1_ref, w2_ref, b2_ref, w3_ref, b3_ref,
                     l1_ref, c1_ref, l2_ref, c2_ref, l3_ref, c3_ref,
                     o_ref,
                     pad2_ref, p2_ref, pad3_ref, p3_ref):
    f32 = jnp.float32
    bf16 = jnp.bfloat16
    B = o_ref.shape[0]          # static
    HW4 = B * 16                # rows per (dy,dx) offset block of conv1 output

    # Single grid step -> these zero-fills run exactly once per call.  They
    # cover the conv padding halos and p2's 64 tail lanes (K padded 576->640),
    # so stale VMEM can never leak into the matmuls (even against zero weights).
    pad2_ref[...] = jnp.zeros(pad2_ref.shape, f32)
    pad3_ref[...] = jnp.zeros(pad3_ref.shape, f32)
    p2_ref[...] = jnp.zeros(p2_ref.shape, bf16)

    # ---- stage 1: conv3x3 (3 -> 64), whole batch in M (M = B*64, K = 32) ----
    h1 = jnp.dot(p1_ref[...], w1_ref[...], preferred_element_type=f32)
    h1 = jnp.maximum(h1 + b1_ref[...], 0.0)           # rows ordered (dy,dx,b,i,j)

    # ---- pool1 2x2: elementwise max of the four (dy,dx) offset blocks ----
    v = jnp.maximum(jnp.maximum(h1[0:HW4, :], h1[HW4:2 * HW4, :]),
                    jnp.maximum(h1[2 * HW4:3 * HW4, :], h1[3 * HW4:4 * HW4, :]))
    # v rows = (b, i, j); scatter 4-row slabs into the zero-padded 6x6 planes.
    for b in range(B):
        for i in range(4):
            pad2_ref[b * 6 + i + 1, 1:5, :] = v[b * 16 + 4 * i:b * 16 + 4 * i + 4, :]

    # ---- stage 2 im2col: tap t -> lanes [t*64, t*64+64)  (no zero K waste) ----
    for b in range(B):
        for y in range(4):
            r0 = b * 16 + 4 * y
            for t, (kh, kw) in enumerate(TAPS):
                p2_ref[r0:r0 + 4, t * 64:t * 64 + 64] = (
                    pad2_ref[b * 6 + y + kh, kw:kw + 4, :].astype(bf16))

    # ---- stage 2: conv3x3 (64 -> 128), M = B*16, K = 640 (576 real) ----
    h2 = jnp.dot(p2_ref[...], w2_ref[...], preferred_element_type=f32)
    h2 = jnp.maximum(h2 + b2_ref[...], 0.0)           # rows = b*16 + Y*4 + X

    # ---- pool2 2x2 -> zero-padded 4x4 planes ----
    for b in range(B):
        for i in range(2):
            r = b * 16 + 8 * i
            m4 = jnp.maximum(h2[r:r + 4, :], h2[r + 4:r + 8, :])    # X = 0..3
            m2 = jnp.concatenate(
                [jnp.maximum(m4[0:1, :], m4[1:2, :]),
                 jnp.maximum(m4[2:3, :], m4[3:4, :])], axis=0)      # j = 0, 1
            pad3_ref[b * 4 + i + 1, 1:3, :] = m2

    # ---- stage 3 im2col: tap t -> lanes [t*128, (t+1)*128) ----
    for b in range(B):
        for y in range(2):
            r0 = b * 4 + 2 * y
            for t, (kh, kw) in enumerate(TAPS):
                p3_ref[r0:r0 + 2, t * 128:(t + 1) * 128] = (
                    pad3_ref[b * 4 + y + kh, kw:kw + 2, :].astype(bf16))

    # ---- stage 3: conv3x3 (128 -> 512), M = B*4, K = 1152, + final 2x2 pool ----
    h3 = jnp.dot(p3_ref[...], w3_ref[...], preferred_element_type=f32)
    h3 = jnp.maximum(h3 + b3_ref[...], 0.0)           # (B*4, 512)
    feat = jnp.concatenate(
        [jnp.max(h3[4 * b:4 * b + 4, :], axis=0, keepdims=True) for b in range(B)],
        axis=0)                                       # (B, 512) == flatten(512,1,1)

    # ---- classifier: [Dropout=id] Linear ReLU [Dropout=id] Linear ReLU Linear Softmax
    a = jnp.dot(feat.astype(bf16), l1_ref[...], preferred_element_type=f32)
    a = jnp.maximum(a + c1_ref[...], 0.0)
    a = jnp.dot(a.astype(bf16), l2_ref[...], preferred_element_type=f32)
    a = jnp.maximum(a + c2_ref[...], 0.0)
    logits = jnp.dot(a.astype(bf16), l3_ref[...], preferred_element_type=f32) + c3_ref[...]

    mx = jnp.max(logits, axis=-1, keepdims=True)
    e = jnp.exp(logits - mx)
    s = jnp.sum(e, axis=-1, keepdims=True)
    o_ref[...] = (e * pl.reciprocal(s, approx=True)).astype(o_ref.dtype)


# ---------------------------------------------------------------------------
# Wrapper
# ---------------------------------------------------------------------------

def _conv1_patches(x_nchw):
    """NCHW (B,3,8,8) -> layer-1 im2col patches (B*64, 32) bf16.

    Rows are ordered (dy, dx, b, i, j) with spatial (y, x) = (2i+dy, 2j+dx) so
    the in-kernel 2x2 maxpool is an elementwise max of 4 contiguous row blocks.
    K is (kh, kw, cin) flattened (27), zero-padded to 32 for clean bf16 packing.
    """
    B = x_nchw.shape[0]
    x = jnp.transpose(x_nchw, (0, 2, 3, 1))               # (B,8,8,3)
    xp = jnp.pad(x, ((0, 0), (1, 1), (1, 1), (0, 0)))     # (B,10,10,3)
    taps = [xp[:, kh:kh + 8, kw:kw + 8, :] for kh in range(3) for kw in range(3)]
    p = jnp.concatenate(taps, axis=-1)                    # (B,8,8,27), K=(kh,kw,cin)
    p = p.reshape(B, 4, 2, 4, 2, 27)                      # (b, i, dy, j, dx, k)
    p = jnp.transpose(p, (2, 4, 0, 1, 3, 5))              # (dy, dx, b, i, j, k)
    p = p.reshape(B * 64, 27)
    p = jnp.pad(p, ((0, 0), (0, 5)))                      # K: 27 -> 32
    return p.astype(jnp.bfloat16)


def vgg_forward(x_nchw, kp):
    """x_nchw: (B, 3, 8, 8) f32; kp: packed kernel-layout params -> (B, 10) probs."""
    B = x_nchw.shape[0]
    p1 = _conv1_patches(x_nchw)
    (w1, b1, w2, b2, w3, b3, l1, c1, l2, c2, l3, c3) = kp

    flops = 2 * B * (64 * 32 * 64 + 16 * 640 * 128 + 4 * 1152 * 512
                     + 512 * 512 + 512 * 512 + 512 * 10)
    bytes_accessed = int(
        2 * (p1.size + w1.size + w2.size + w3.size + l1.size + l2.size + l3.size)
        + 4 * (b1.size + b2.size + b3.size + c1.size + c2.size + c3.size)
        + 4 * B * 10)
    cost = pl.CostEstimate(flops=int(flops), transcendentals=int(B * 10),
                           bytes_accessed=bytes_accessed)

    out = pl.pallas_call(
        vgg_fused_kernel,
        out_shape=jax.ShapeDtypeStruct((B, 10), jnp.float32),
        grid=(1,),
        in_specs=[
            pl.BlockSpec((B * 64, 32), lambda i: (0, 0)),   # p1 patches (whole batch)
            pl.BlockSpec((32, 64), lambda i: (0, 0)),       # w1 (K padded 27->32)
            pl.BlockSpec((1, 64), lambda i: (0, 0)),        # b1
            pl.BlockSpec((640, 128), lambda i: (0, 0)),     # w2 (K = 9*64, padded to 640)
            pl.BlockSpec((1, 128), lambda i: (0, 0)),       # b2
            pl.BlockSpec((1152, 512), lambda i: (0, 0)),    # w3 (K = 9*128)
            pl.BlockSpec((1, 512), lambda i: (0, 0)),       # b3
            pl.BlockSpec((512, 512), lambda i: (0, 0)),     # l1
            pl.BlockSpec((1, 512), lambda i: (0, 0)),       # c1
            pl.BlockSpec((512, 512), lambda i: (0, 0)),     # l2
            pl.BlockSpec((1, 512), lambda i: (0, 0)),       # c2
            pl.BlockSpec((512, 10), lambda i: (0, 0)),      # l3
            pl.BlockSpec((1, 10), lambda i: (0, 0)),        # c3
        ],
        out_specs=pl.BlockSpec((B, 10), lambda i: (0, 0)),
        scratch_shapes=[
            pltpu.VMEM((B * 6, 6, 64), jnp.float32),        # pad2: pooled1 + halo
            pltpu.VMEM((B * 16, 640), jnp.bfloat16),        # p2: stage-2 patches
            pltpu.VMEM((B * 4, 4, 128), jnp.float32),       # pad3: pooled2 + halo
            pltpu.VMEM((B * 4, 1152), jnp.bfloat16),        # p3: stage-3 patches
        ],
        compiler_params=pltpu.CompilerParams(
            dimension_semantics=("arbitrary",)),            # singleton grid, one TC
        cost_estimate=cost,
    )(p1, w1, b1, w2, b2, w3, b3, l1, c1, l2, c2, l3, c3)
    return out


# ---------------------------------------------------------------------------
# Parameters (torch-style init) and one-time packing into kernel layout
# ---------------------------------------------------------------------------

def init_params(key):
    # Conv2d init from VGG.__init__: weight ~ N(0, sqrt(2/(kh*kw*out))), bias = 0
    feat_cfg = [(3, 64), (64, 128), (128, 512)]
    feats = []
    for (cin, cout) in feat_cfg:
        key, kw_ = jax.random.split(key)
        std = math.sqrt(2.0 / (3 * 3 * cout))
        w = jax.random.normal(kw_, (3, 3, cin, cout), jnp.float32) * std
        b = jnp.zeros((cout,), jnp.float32)
        feats.append((w, b))

    # Linear layers: deterministic synthetic init (scaled normal), stored (in, out)
    lin_cfg = [(512, 512), (512, 512), (512, 10)]
    cls = []
    for (fin, fout) in lin_cfg:
        key, kw_, kb_ = jax.random.split(key, 3)
        w = jax.random.normal(kw_, (fin, fout), jnp.float32) / math.sqrt(fin)
        b = jax.random.normal(kb_, (fout,), jnp.float32) * 0.01
        cls.append((w, b))
    return {"features": feats, "classifier": cls}


def pack_params(params):
    """Flatten conv weights over (kh, kw, cin) to match the in-kernel patch
    layout, pad conv1's K to 32 and conv2's K to 640 with zero rows, cast all
    matmul operands to bf16, keep biases in f32 as (1, N)."""
    (w1, b1), (w2, b2), (w3, b3) = params["features"]
    bf16 = jnp.bfloat16
    w1k = jnp.pad(w1.reshape(27, 64), ((0, 5), (0, 0))).astype(bf16)      # (32, 64)
    w2k = jnp.pad(w2.reshape(576, 128), ((0, 64), (0, 0))).astype(bf16)   # (640, 128)
    w3k = w3.reshape(1152, 512).astype(bf16)                              # K = t*128+cin
    (lw1, lb1), (lw2, lb2), (lw3, lb3) = params["classifier"]
    return (w1k, b1.reshape(1, -1),
            w2k, b2.reshape(1, -1),
            w3k, b3.reshape(1, -1),
            lw1.astype(bf16), lb1.reshape(1, -1),
            lw2.astype(bf16), lb2.reshape(1, -1),
            lw3.astype(bf16), lb3.reshape(1, -1))


if __name__ == "__main__":
    key = jax.random.PRNGKey(0)
    key, kx = jax.random.split(key)

    params = init_params(key)
    kp = pack_params(params)

    # NCHW input: 8x8 spatial reduces to 1x1 after three conv+pool stages,
    # giving the 512-dim flatten the classifier expects.
    x = jax.random.normal(kx, (2, 3, 8, 8), jnp.float32)

    fwd = jax.jit(vgg_forward)
    out = jax.block_until_ready(fwd(x, kp))

    assert out.shape == (2, 10), out.shape
    assert bool(jnp.all(jnp.isfinite(out)))
    # softmax rows sum to ~1 (approx-reciprocal + bf16 matmuls => loose atol)
    assert bool(jnp.allclose(jnp.sum(out, axis=1), 1.0, atol=5e-3))
    print("KERNEL_OK")
</pallas_src>

<mosaic_0001>
module attributes {stable_mosaic.version = 11 : i64} {
  func.func @vgg_fused_kernel(%arg0: i32, %arg1: memref<128x32xbf16, #tpu.memory_space<vmem>>, %arg2: memref<32x64xbf16, #tpu.memory_space<vmem>>, %arg3: memref<1x64xf32, #tpu.memory_space<vmem>>, %arg4: memref<640x128xbf16, #tpu.memory_space<vmem>>, %arg5: memref<1x128xf32, #tpu.memory_space<vmem>>, %arg6: memref<1152x512xbf16, #tpu.memory_space<vmem>>, %arg7: memref<1x512xf32, #tpu.memory_space<vmem>>, %arg8: memref<512x512xbf16, #tpu.memory_space<vmem>>, %arg9: memref<1x512xf32, #tpu.memory_space<vmem>>, %arg10: memref<512x512xbf16, #tpu.memory_space<vmem>>, %arg11: memref<1x512xf32, #tpu.memory_space<vmem>>, %arg12: memref<512x10xbf16, #tpu.memory_space<vmem>>, %arg13: memref<1x10xf32, #tpu.memory_space<vmem>>, %arg14: memref<2x10xf32, #tpu.memory_space<vmem>>, %arg15: memref<12x6x64xf32, #tpu.memory_space<vmem>>, %arg16: memref<32x640xbf16, #tpu.memory_space<vmem>>, %arg17: memref<8x4x128xf32, #tpu.memory_space<vmem>>, %arg18: memref<8x1152xbf16, #tpu.memory_space<vmem>>) attributes {dimension_semantics = [#tpu.dimension_semantics<arbitrary>], iteration_bounds = array<i64: 1>, scalar_prefetch = 0 : i64, scratch_operands = 4 : i64, tpu.core_type = #tpu.core_type<tc>, window_params = [{pipeline_mode = #tpu.pipeline_mode<synchronous>, transform_indices = @transform_0, window_bounds = array<i64: 128, 32>}, {pipeline_mode = #tpu.pipeline_mode<synchronous>, transform_indices = @transform_1, window_bounds = array<i64: 32, 64>}, {pipeline_mode = #tpu.pipeline_mode<synchronous>, transform_indices = @transform_2, window_bounds = array<i64: 1, 64>}, {pipeline_mode = #tpu.pipeline_mode<synchronous>, transform_indices = @transform_3, window_bounds = array<i64: 640, 128>}, {pipeline_mode = #tpu.pipeline_mode<synchronous>, transform_indices = @transform_4, window_bounds = array<i64: 1, 128>}, {pipeline_mode = #tpu.pipeline_mode<synchronous>, transform_indices = @transform_5, window_bounds = array<i64: 1152, 512>}, {pipeline_mode = #tpu.pipeline_mode<synchronous>, transform_indices = @transform_6, window_bounds = array<i64: 1, 512>}, {pipeline_mode = #tpu.pipeline_mode<synchronous>, transform_indices = @transform_7, window_bounds = array<i64: 512, 512>}, {pipeline_mode = #tpu.pipeline_mode<synchronous>, transform_indices = @transform_8, window_bounds = array<i64: 1, 512>}, {pipeline_mode = #tpu.pipeline_mode<synchronous>, transform_indices = @transform_9, window_bounds = array<i64: 512, 512>}, {pipeline_mode = #tpu.pipeline_mode<synchronous>, transform_indices = @transform_10, window_bounds = array<i64: 1, 512>}, {pipeline_mode = #tpu.pipeline_mode<synchronous>, transform_indices = @transform_11, window_bounds = array<i64: 512, 10>}, {pipeline_mode = #tpu.pipeline_mode<synchronous>, transform_indices = @transform_12, window_bounds = array<i64: 1, 10>}, {pipeline_mode = #tpu.pipeline_mode<synchronous>, transform_indices = @transform_13, window_bounds = array<i64: 2, 10>}]} {
    %cst = arith.constant 0.000000e+00 : f32
    %0 = vector.broadcast %cst : f32 to vector<12x6x64xf32>
    %c0 = arith.constant 0 : index
    %c0_0 = arith.constant 0 : index
    %c0_1 = arith.constant 0 : index
    %1 = vector.load %arg15[%c0, %c0_0, %c0_1] : memref<12x6x64xf32, #tpu.memory_space<vmem>>, vector<12x6x64xf32>
    tpu.vector_store %arg15[%c0, %c0_0, %c0_1], %0 {strides = array<i32>} : memref<12x6x64xf32, #tpu.memory_space<vmem>>, vector<12x6x64xf32>,
    %cst_2 = arith.constant 0.000000e+00 : f32
    %2 = vector.broadcast %cst_2 : f32 to vector<8x4x128xf32>
    %c0_3 = arith.constant 0 : index
    %c0_4 = arith.constant 0 : index
    %c0_5 = arith.constant 0 : index
    %3 = vector.load %arg17[%c0_3, %c0_4, %c0_5] : memref<8x4x128xf32, #tpu.memory_space<vmem>>, vector<8x4x128xf32>
    tpu.vector_store %arg17[%c0_3, %c0_4, %c0_5], %2 {strides = array<i32>} : memref<8x4x128xf32, #tpu.memory_space<vmem>>, vector<8x4x128xf32>,
    %cst_6 = arith.constant 0.000000e+00 : bf16
    %4 = vector.broadcast %cst_6 : bf16 to vector<32x640xbf16>
    %c0_7 = arith.constant 0 : index
    %c0_8 = arith.constant 0 : index
    %5 = vector.load %arg16[%c0_7, %c0_8] : memref<32x640xbf16, #tpu.memory_space<vmem>>, vector<32x640xbf16>
    tpu.vector_store %arg16[%c0_7, %c0_8], %4 {strides = array<i32>} : memref<32x640xbf16, #tpu.memory_space<vmem>>, vector<32x640xbf16>,
    %c0_9 = arith.constant 0 : index
    %c0_10 = arith.constant 0 : index
    %6 = vector.load %arg1[%c0_9, %c0_10] : memref<128x32xbf16, #tpu.memory_space<vmem>>, vector<128x32xbf16>
    %c0_11 = arith.constant 0 : index
    %c0_12 = arith.constant 0 : index
    %7 = vector.load %arg2[%c0_11, %c0_12] : memref<32x64xbf16, #tpu.memory_space<vmem>>, vector<32x64xbf16>
    %cst_13 = arith.constant dense<0.000000e+00> : vector<128x64xf32>
    %8 = tpu.matmul %6, %7, %cst_13 {dimension_numbers = #tpu.dot_dimension_numbers<[1], [0], [0], [1], [0, 0, 1, 1], [], []>} : vector<128x32xbf16>, vector<32x64xbf16>, vector<128x64xf32> -> vector<128x64xf32>
    %c0_14 = arith.constant 0 : index
    %c0_15 = arith.constant 0 : index
    %9 = vector.load %arg3[%c0_14, %c0_15] : memref<1x64xf32, #tpu.memory_space<vmem>>, vector<1x64xf32>
    %10 = vector.broadcast %9 : vector<1x64xf32> to vector<128x64xf32>
    %11 = arith.addf %8, %10 : vector<128x64xf32>
    %cst_16 = arith.constant 0.000000e+00 : f32
    %12 = vector.broadcast %cst_16 : f32 to vector<128x64xf32>
    %13 = arith.maximumf %11, %12 : vector<128x64xf32>
    %14 = vector.extract_strided_slice %13 {offsets = [0, 0], sizes = [32, 64], strides = [1, 1]} : vector<128x64xf32> to vector<32x64xf32>
    %15 = vector.extract_strided_slice %13 {offsets = [32, 0], sizes = [32, 64], strides = [1, 1]} : vector<128x64xf32> to vector<32x64xf32>
    %16 = arith.maximumf %14, %15 : vector<32x64xf32>
    %17 = vector.extract_strided_slice %13 {offsets = [64, 0], sizes = [32, 64], strides = [1, 1]} : vector<128x64xf32> to vector<32x64xf32>
    %18 = vector.extract_strided_slice %13 {offsets = [96, 0], sizes = [32, 64], strides = [1, 1]} : vector<128x64xf32> to vector<32x64xf32>
    %19 = arith.maximumf %17, %18 : vector<32x64xf32>
    %20 = arith.maximumf %16, %19 : vector<32x64xf32>
    %21 = vector.extract_strided_slice %20 {offsets = [0, 0], sizes = [4, 64], strides = [1, 1]} : vector<32x64xf32> to vector<4x64xf32>
    %c1 = arith.constant 1 : index
    %c1_17 = arith.constant 1 : index
    %c0_18 = arith.constant 0 : index
    %22 = vector.load %arg15[%c1, %c1_17, %c0_18] : memref<12x6x64xf32, #tpu.memory_space<vmem>>, vector<1x4x64xf32>
    %23 = vector.shape_cast %22 : vector<1x4x64xf32> to vector<4x64xf32>
    %24 = vector.shape_cast %21 : vector<4x64xf32> to vector<1x4x64xf32>
    tpu.vector_store %arg15[%c1, %c1_17, %c0_18], %24 {strides = array<i32>} : memref<12x6x64xf32, #tpu.memory_space<vmem>>, vector<1x4x64xf32>,
    %25 = vector.extract_strided_slice %20 {offsets = [4, 0], sizes = [4, 64], strides = [1, 1]} : vector<32x64xf32> to vector<4x64xf32>
    %c2 = arith.constant 2 : index
    %c1_19 = arith.constant 1 : index
    %c0_20 = arith.constant 0 : index
    %26 = vector.load %arg15[%c2, %c1_19, %c0_20] : memref<12x6x64xf32, #tpu.memory_space<vmem>>, vector<1x4x64xf32>
    %27 = vector.shape_cast %26 : vector<1x4x64xf32> to vector<4x64xf32>
    %28 = vector.shape_cast %25 : vector<4x64xf32> to vector<1x4x64xf32>
    tpu.vector_store %arg15[%c2, %c1_19, %c0_20], %28 {strides = array<i32>} : memref<12x6x64xf32, #tpu.memory_space<vmem>>, vector<1x4x64xf32>,
    %29 = vector.extract_strided_slice %20 {offsets = [8, 0], sizes = [4, 64], strides = [1, 1]} : vector<32x64xf32> to vector<4x64xf32>
    %c3 = arith.constant 3 : index
    %c1_21 = arith.constant 1 : index
    %c0_22 = arith.constant 0 : index
    %30 = vector.load %arg15[%c3, %c1_21, %c0_22] : memref<12x6x64xf32, #tpu.memory_space<vmem>>, vector<1x4x64xf32>
    %31 = vector.shape_cast %30 : vector<1x4x64xf32> to vector<4x64xf32>
    %32 = vector.shape_cast %29 : vector<4x64xf32> to vector<1x4x64xf32>
    tpu.vector_store %arg15[%c3, %c1_21, %c0_22], %32 {strides = array<i32>} : memref<12x6x64xf32, #tpu.memory_space<vmem>>, vector<1x4x64xf32>,
    %33 = vector.extract_strided_slice %20 {offsets = [12, 0], sizes = [4, 64], strides = [1, 1]} : vector<32x64xf32> to vector<4x64xf32>
    %c4 = arith.constant 4 : index
    %c1_23 = arith.constant 1 : index
    %c0_24 = arith.constant 0 : index
    %34 = vector.load %arg15[%c4, %c1_23, %c0_24] : memref<12x6x64xf32, #tpu.memory_space<vmem>>, vector<1x4x64xf32>
    %35 = vector.shape_cast %34 : vector<1x4x64xf32> to vector<4x64xf32>
    %36 = vector.shape_cast %33 : vector<4x64xf32> to vector<1x4x64xf32>
    tpu.vector_store %arg15[%c4, %c1_23, %c0_24], %36 {strides = array<i32>} : memref<12x6x64xf32, #tpu.memory_space<vmem>>, vector<1x4x64xf32>,
    %37 = vector.extract_strided_slice %20 {offsets = [16, 0], sizes = [4, 64], strides = [1, 1]} : vector<32x64xf32> to vector<4x64xf32>
    %c7 = arith.constant 7 : index
    %c1_25 = arith.constant 1 : index
    %c0_26 = arith.constant 0 : index
    %38 = vector.load %arg15[%c7, %c1_25, %c0_26] : memref<12x6x64xf32, #tpu.memory_space<vmem>>, vector<1x4x64xf32>
    %39 = vector.shape_cast %38 : vector<1x4x64xf32> to vector<4x64xf32>
    %40 = vector.shape_cast %37 : vector<4x64xf32> to vector<1x4x64xf32>
    tpu.vector_store %arg15[%c7, %c1_25, %c0_26], %40 {strides = array<i32>} : memref<12x6x64xf32, #tpu.memory_space<vmem>>, vector<1x4x64xf32>,
    %41 = vector.extract_strided_slice %20 {offsets = [20, 0], sizes = [4, 64], strides = [1, 1]} : vector<32x64xf32> to vector<4x64xf32>
    %c8 = arith.constant 8 : index
    %c1_27 = arith.constant 1 : index
    %c0_28 = arith.constant 0 : index
    %42 = vector.load %arg15[%c8, %c1_27, %c0_28] : memref<12x6x64xf32, #tpu.memory_space<vmem>>, vector<1x4x64xf32>
    %43 = vector.shape_cast %42 : vector<1x4x64xf32> to vector<4x64xf32>
    %44 = vector.shape_cast %41 : vector<4x64xf32> to vector<1x4x64xf32>
    tpu.vector_store %arg15[%c8, %c1_27, %c0_28], %44 {strides = array<i32>} : memref<12x6x64xf32, #tpu.memory_space<vmem>>, vector<1x4x64xf32>,
    %45 = vector.extract_strided_slice %20 {offsets = [24, 0], sizes = [4, 64], strides = [1, 1]} : vector<32x64xf32> to vector<4x64xf32>
    %c9 = arith.constant 9 : index
    %c1_29 = arith.constant 1 : index
    %c0_30 = arith.constant 0 : index
    %46 = vector.load %arg15[%c9, %c1_29, %c0_30] : memref<12x6x64xf32, #tpu.memory_space<vmem>>, vector<1x4x64xf32>
    %47 = vector.shape_cast %46 : vector<1x4x64xf32> to vector<4x64xf32>
    %48 = vector.shape_cast %45 : vector<4x64xf32> to vector<1x4x64xf32>
    tpu.vector_store %arg15[%c9, %c1_29, %c0_30], %48 {strides = array<i32>} : memref<12x6x64xf32, #tpu.memory_space<vmem>>, vector<1x4x64xf32>,
    %49 = vector.extract_strided_slice %20 {offsets = [28, 0], sizes = [4, 64], strides = [1, 1]} : vector<32x64xf32> to vector<4x64xf32>
    %c10 = arith.constant 10 : index
    %c1_31 = arith.constant 1 : index
    %c0_32 = arith.constant 0 : index
    %50 = vector.load %arg15[%c10, %c1_31, %c0_32] : memref<12x6x64xf32, #tpu.memory_space<vmem>>, vector<1x4x64xf32>
    %51 = vector.shape_cast %50 : vector<1x4x64xf32> to vector<4x64xf32>
    %52 = vector.shape_cast %49 : vector<4x64xf32> to vector<1x4x64xf32>
    tpu.vector_store %arg15[%c10, %c1_31, %c0_32], %52 {strides = array<i32>} : memref<12x6x64xf32, #tpu.memory_space<vmem>>, vector<1x4x64xf32>,
    %c0_33 = arith.constant 0 : index
    %c0_34 = arith.constant 0 : index
    %c0_35 = arith.constant 0 : index
    %53 = vector.load %arg15[%c0_33, %c0_34, %c0_35] : memref<12x6x64xf32, #tpu.memory_space<vmem>>, vector<1x4x64xf32>
    %54 = vector.shape_cast %53 : vector<1x4x64xf32> to vector<4x64xf32>
    %55 = arith.truncf %54 : vector<4x64xf32> to vector<4x64xbf16>
    %c0_36 = arith.constant 0 : index
    %c0_37 = arith.constant 0 : index
    %56 = vector.load %arg16[%c0_36, %c0_37] : memref<32x640xbf16, #tpu.memory_space<vmem>>, vector<4x64xbf16>
    tpu.vector_store %arg16[%c0_36, %c0_37], %55 {strides = array<i32>} : memref<32x640xbf16, #tpu.memory_space<vmem>>, vector<4x64xbf16>,
    %c0_38 = arith.constant 0 : index
    %c1_39 = arith.constant 1 : index
    %c0_40 = arith.constant 0 : index
    %57 = vector.load %arg15[%c0_38, %c1_39, %c0_40] : memref<12x6x64xf32, #tpu.memory_space<vmem>>, vector<1x4x64xf32>
    %58 = vector.shape_cast %57 : vector<1x4x64xf32> to vector<4x64xf32>
    %59 = arith.truncf %58 : vector<4x64xf32> to vector<4x64xbf16>
    %c0_41 = arith.constant 0 : index
    %c64 = arith.constant 64 : index
    %60 = vector.load %arg16[%c0_41, %c64] : memref<32x640xbf16, #tpu.memory_space<vmem>>, vector<4x64xbf16>
    tpu.vector_store %arg16[%c0_41, %c64], %59 {strides = array<i32>} : memref<32x640xbf16, #tpu.memory_space<vmem>>, vector<4x64xbf16>,
    %c0_42 = arith.constant 0 : index
    %c2_43 = arith.constant 2 : index
    %c0_44 = arith.constant 0 : index
    %61 = vector.load %arg15[%c0_42, %c2_43, %c0_44] : memref<12x6x64xf32, #tpu.memory_space<vmem>>, vector<1x4x64xf32>
    %62 = vector.shape_cast %61 : vector<1x4x64xf32> to vector<4x64xf32>
    %63 = arith.truncf %62 : vector<4x64xf32> to vector<4x64xbf16>
    %c0_45 = arith.constant 0 : index
    %c128 = arith.constant 128 : index
    %64 = vector.load %arg16[%c0_45, %c128] : memref<32x640xbf16, #tpu.memory_space<vmem>>, vector<4x64xbf16>
    tpu.vector_store %arg16[%c0_45, %c128], %63 {strides = array<i32>} : memref<32x640xbf16, #tpu.memory_space<vmem>>, vector<4x64xbf16>,
    %c1_46 = arith.constant 1 : index
    %c0_47 = arith.constant 0 : index
    %c0_48 = arith.constant 0 : index
    %65 = vector.load %arg15[%c1_46, %c0_47, %c0_48] : memref<12x6x64xf32, #tpu.memory_space<vmem>>, vector<1x4x64xf32>
    %66 = vector.shape_cast %65 : vector<1x4x64xf32> to vector<4x64xf32>
    %67 = arith.truncf %66 : vector<4x64xf32> to vector<4x64xbf16>
    %c0_49 = arith.constant 0 : index
    %c192 = arith.constant 192 : index
    %68 = vector.load %arg16[%c0_49, %c192] : memref<32x640xbf16, #tpu.memory_space<vmem>>, vector<4x64xbf16>
    tpu.vector_store %arg16[%c0_49, %c192], %67 {strides = array<i32>} : memref<32x640xbf16, #tpu.memory_space<vmem>>, vector<4x64xbf16>,
    %c1_50 = arith.constant 1 : index
    %c1_51 = arith.constant 1 : index
    %c0_52 = arith.constant 0 : index
    %69 = vector.load %arg15[%c1_50, %c1_51, %c0_52] : memref<12x6x64xf32, #tpu.memory_space<vmem>>, vector<1x4x64xf32>
    %70 = vector.shape_cast %69 : vector<1x4x64xf32> to vector<4x64xf32>
    %71 = arith.truncf %70 : vector<4x64xf32> to vector<4x64xbf16>
    %c0_53 = arith.constant 0 : index
    %c256 = arith.constant 256 : index
    %72 = vector.load %arg16[%c0_53, %c256] : memref<32x640xbf16, #tpu.memory_space<vmem>>, vector<4x64xbf16>
    tpu.vector_store %arg16[%c0_53, %c256], %71 {strides = array<i32>} : memref<32x640xbf16, #tpu.memory_space<vmem>>, vector<4x64xbf16>,
    %c1_54 = arith.constant 1 : index
    %c2_55 = arith.constant 2 : index
    %c0_56 = arith.constant 0 : index
    %73 = vector.load %arg15[%c1_54, %c2_55, %c0_56] : memref<12x6x64xf32, #tpu.memory_space<vmem>>, vector<1x4x64xf32>
    %74 = vector.shape_cast %73 : vector<1x4x64xf32> to vector<4x64xf32>
    %75 = arith.truncf %74 : vector<4x64xf32> to vector<4x64xbf16>
    %c0_57 = arith.constant 0 : index
    %c320 = arith.constant 320 : index
    %76 = vector.load %arg16[%c0_57, %c320] : memref<32x640xbf16, #tpu.memory_space<vmem>>, vector<4x64xbf16>
    tpu.vector_store %arg16[%c0_57, %c320], %75 {strides = array<i32>} : memref<32x640xbf16, #tpu.memory_space<vmem>>, vector<4x64xbf16>,
    %c2_58 = arith.constant 2 : index
    %c0_59 = arith.constant 0 : index
    %c0_60 = arith.constant 0 : index
    %77 = vector.load %arg15[%c2_58, %c0_59, %c0_60] : memref<12x6x64xf32, #tpu.memory_space<vmem>>, vector<1x4x64xf32>
    %78 = vector.shape_cast %77 : vector<1x4x64xf32> to vector<4x64xf32>
    %79 = arith.truncf %78 : vector<4x64xf32> to vector<4x64xbf16>
    %c0_61 = arith.constant 0 : index
    %c384 = arith.constant 384 : index
    %80 = vector.load %arg16[%c0_61, %c384] : memref<32x640xbf16, #tpu.memory_space<vmem>>, vector<4x64xbf16>
    tpu.vector_store %arg16[%c0_61, %c384], %79 {strides = array<i32>} : memref<32x640xbf16, #tpu.memory_space<vmem>>, vector<4x64xbf16>,
    %c2_62 = arith.constant 2 : index
    %c1_63 = arith.constant 1 : index
    %c0_64 = arith.constant 0 : index
    %81 = vector.load %arg15[%c2_62, %c1_63, %c0_64] : memref<12x6x64xf32, #tpu.memory_space<vmem>>, vector<1x4x64xf32>
    %82 = vector.shape_cast %81 : vector<1x4x64xf32> to vector<4x64xf32>
    %83 = arith.truncf %82 : vector<4x64xf32> to vector<4x64xbf16>
    %c0_65 = arith.constant 0 : index
    %c448 = arith.constant 448 : index
    %84 = vector.load %arg16[%c0_65, %c448] : memref<32x640xbf16, #tpu.memory_space<vmem>>, vector<4x64xbf16>
    tpu.vector_store %arg16[%c0_65, %c448], %83 {strides = array<i32>} : memref<32x640xbf16, #tpu.memory_space<vmem>>, vector<4x64xbf16>,
    %c2_66 = arith.constant 2 : index
    %c2_67 = arith.constant 2 : index
    %c0_68 = arith.constant 0 : index
    %85 = vector.load %arg15[%c2_66, %c2_67, %c0_68] : memref<12x6x64xf32, #tpu.memory_space<vmem>>, vector<1x4x64xf32>
    %86 = vector.shape_cast %85 : vector<1x4x64xf32> to vector<4x64xf32>
    %87 = arith.truncf %86 : vector<4x64xf32> to vector<4x64xbf16>
    %c0_69 = arith.constant 0 : index
    %c512 = arith.constant 512 : index
    %88 = vector.load %arg16[%c0_69, %c512] : memref<32x640xbf16, #tpu.memory_space<vmem>>, vector<4x64xbf16>
    tpu.vector_store %arg16[%c0_69, %c512], %87 {strides = array<i32>} : memref<32x640xbf16, #tpu.memory_space<vmem>>, vector<4x64xbf16>,
    %c1_70 = arith.constant 1 : index
    %c0_71 = arith.constant 0 : index
    %c0_72 = arith.constant 0 : index
    %89 = vector.load %arg15[%c1_70, %c0_71, %c0_72] : memref<12x6x64xf32, #tpu.memory_space<vmem>>, vector<1x4x64xf32>
    %90 = vector.shape_cast %89 : vector<1x4x64xf32> to vector<4x64xf32>
    %91 = arith.truncf %90 : vector<4x64xf32> to vector<4x64xbf16>
    %c4_73 = arith.constant 4 : index
    %c0_74 = arith.constant 0 : index
    %92 = vector.load %arg16[%c4_73, %c0_74] : memref<32x640xbf16, #tpu.memory_space<vmem>>, vector<4x64xbf16>
    tpu.vector_store %arg16[%c4_73, %c0_74], %91 {strides = array<i32>} : memref<32x640xbf16, #tpu.memory_space<vmem>>, vector<4x64xbf16>,
    %c1_75 = arith.constant 1 : index
    %c1_76 = arith.constant 1 : index
    %c0_77 = arith.constant 0 : index
    %93 = vector.load %arg15[%c1_75, %c1_76, %c0_77] : memref<12x6x64xf32, #tpu.memory_space<vmem>>, vector<1x4x64xf32>
    %94 = vector.shape_cast %93 : vector<1x4x64xf32> to vector<4x64xf32>
    %95 = arith.truncf %94 : vector<4x64xf32> to vector<4x64xbf16>
    %c4_78 = arith.constant 4 : index
    %c64_79 = arith.constant 64 : index
    %96 = vector.load %arg16[%c4_78, %c64_79] : memref<32x640xbf16, #tpu.memory_space<vmem>>, vector<4x64xbf16>
    tpu.vector_store %arg16[%c4_78, %c64_79], %95 {strides = array<i32>} : memref<32x640xbf16, #tpu.memory_space<vmem>>, vector<4x64xbf16>,
    %c1_80 = arith.constant 1 : index
    %c2_81 = arith.constant 2 : index
    %c0_82 = arith.constant 0 : index
    %97 = vector.load %arg15[%c1_80, %c2_81, %c0_82] : memref<12x6x64xf32, #tpu.memory_space<vmem>>, vector<1x4x64xf32>
    %98 = vector.shape_cast %97 : vector<1x4x64xf32> to vector<4x64xf32>
    %99 = arith.truncf %98 : vector<4x64xf32> to vector<4x64xbf16>
    %c4_83 = arith.constant 4 : index
    %c128_84 = arith.constant 128 : index
    %100 = vector.load %arg16[%c4_83, %c128_84] : memref<32x640xbf16, #tpu.memory_space<vmem>>, vector<4x64xbf16>
    tpu.vector_store %arg16[%c4_83, %c128_84], %99 {strides = array<i32>} : memref<32x640xbf16, #tpu.memory_space<vmem>>, vector<4x64xbf16>,
    %c2_85 = arith.constant 2 : index
    %c0_86 = arith.constant 0 : index
    %c0_87 = arith.constant 0 : index
    %101 = vector.load %arg15[%c2_85, %c0_86, %c0_87] : memref<12x6x64xf32, #tpu.memory_space<vmem>>, vector<1x4x64xf32>
    %102 = vector.shape_cast %101 : vector<1x4x64xf32> to vector<4x64xf32>
    %103 = arith.truncf %102 : vector<4x64xf32> to vector<4x64xbf16>
    %c4_88 = arith.constant 4 : index
    %c192_89 = arith.constant 192 : index
    %104 = vector.load %arg16[%c4_88, %c192_89] : memref<32x640xbf16, #tpu.memory_space<vmem>>, vector<4x64xbf16>
    tpu.vector_store %arg16[%c4_88, %c192_89], %103 {strides = array<i32>} : memref<32x640xbf16, #tpu.memory_space<vmem>>, vector<4x64xbf16>,
    %c2_90 = arith.constant 2 : index
    %c1_91 = arith.constant 1 : index
    %c0_92 = arith.constant 0 : index
    %105 = vector.load %arg15[%c2_90, %c1_91, %c0_92] : memref<12x6x64xf32, #tpu.memory_space<vmem>>, vector<1x4x64xf32>
    %106 = vector.shape_cast %105 : vector<1x4x64xf32> to vector<4x64xf32>
    %107 = arith.truncf %106 : vector<4x64xf32> to vector<4x64xbf16>
    %c4_93 = arith.constant 4 : index
    %c256_94 = arith.constant 256 : index
    %108 = vector.load %arg16[%c4_93, %c256_94] : memref<32x640xbf16, #tpu.memory_space<vmem>>, vector<4x64xbf16>
    tpu.vector_store %arg16[%c4_93, %c256_94], %107 {strides = array<i32>} : memref<32x640xbf16, #tpu.memory_space<vmem>>, vector<4x64xbf16>,
    %c2_95 = arith.constant 2 : index
    %c2_96 = arith.constant 2 : index
    %c0_97 = arith.constant 0 : index
    %109 = vector.load %arg15[%c2_95, %c2_96, %c0_97] : memref<12x6x64xf32, #tpu.memory_space<vmem>>, vector<1x4x64xf32>
    %110 = vector.shape_cast %109 : vector<1x4x64xf32> to vector<4x64xf32>
    %111 = arith.truncf %110 : vector<4x64xf32> to vector<4x64xbf16>
    %c4_98 = arith.constant 4 : index
    %c320_99 = arith.constant 320 : index
    %112 = vector.load %arg16[%c4_98, %c320_99] : memref<32x640xbf16, #tpu.memory_space<vmem>>, vector<4x64xbf16>
    tpu.vector_store %arg16[%c4_98, %c320_99], %111 {strides = array<i32>} : memref<32x640xbf16, #tpu.memory_space<vmem>>, vector<4x64xbf16>,
    %c3_100 = arith.constant 3 : index
    %c0_101 = arith.constant 0 : index
    %c0_102 = arith.constant 0 : index
    %113 = vector.load %arg15[%c3_100, %c0_101, %c0_102] : memref<12x6x64xf32, #tpu.memory_space<vmem>>, vector<1x4x64xf32>
    %114 = vector.shape_cast %113 : vector<1x4x64xf32> to vector<4x64xf32>
    %115 = arith.truncf %114 : vector<4x64xf32> to vector<4x64xbf16>
    %c4_103 = arith.constant 4 : index
    %c384_104 = arith.constant 384 : index
    %116 = vector.load %arg16[%c4_103, %c384_104] : memref<32x640xbf16, #tpu.memory_space<vmem>>, vector<4x64xbf16>
    tpu.vector_store %arg16[%c4_103, %c384_104], %115 {strides = array<i32>} : memref<32x640xbf16, #tpu.memory_space<vmem>>, vector<4x64xbf16>,
    %c3_105 = arith.constant 3 : index
    %c1_106 = arith.constant 1 : index
    %c0_107 = arith.constant 0 : index
    %117 = vector.load %arg15[%c3_105, %c1_106, %c0_107] : memref<12x6x64xf32, #tpu.memory_space<vmem>>, vector<1x4x64xf32>
    %118 = vector.shape_cast %117 : vector<1x4x64xf32> to vector<4x64xf32>
    %119 = arith.truncf %118 : vector<4x64xf32> to vector<4x64xbf16>
    %c4_108 = arith.constant 4 : index
    %c448_109 = arith.constant 448 : index
    %120 = vector.load %arg16[%c4_108, %c448_109] : memref<32x640xbf16, #tpu.memory_space<vmem>>, vector<4x64xbf16>
    tpu.vector_store %arg16[%c4_108, %c448_109], %119 {strides = array<i32>} : memref<32x640xbf16, #tpu.memory_space<vmem>>, vector<4x64xbf16>,
    %c3_110 = arith.constant 3 : index
    %c2_111 = arith.constant 2 : index
    %c0_112 = arith.constant 0 : index
    %121 = vector.load %arg15[%c3_110, %c2_111, %c0_112] : memref<12x6x64xf32, #tpu.memory_space<vmem>>, vector<1x4x64xf32>
    %122 = vector.shape_cast %121 : vector<1x4x64xf32> to vector<4x64xf32>
    %123 = arith.truncf %122 : vector<4x64xf32> to vector<4x64xbf16>
    %c4_113 = arith.constant 4 : index
    %c512_114 = arith.constant 512 : index
    %124 = vector.load %arg16[%c4_113, %c512_114] : memref<32x640xbf16, #tpu.memory_space<vmem>>, vector<4x64xbf16>
    tpu.vector_store %arg16[%c4_113, %c512_114], %123 {strides = array<i32>} : memref<32x640xbf16, #tpu.memory_space<vmem>>, vector<4x64xbf16>,
    %c2_115 = arith.constant 2 : index
    %c0_116 = arith.constant 0 : index
    %c0_117 = arith.constant 0 : index
    %125 = vector.load %arg15[%c2_115, %c0_116, %c0_117] : memref<12x6x64xf32, #tpu.memory_space<vmem>>, vector<1x4x64xf32>
    %126 = vector.shape_cast %125 : vector<1x4x64xf32> to vector<4x64xf32>
    %127 = arith.truncf %126 : vector<4x64xf32> to vector<4x64xbf16>
    %c8_118 = arith.constant 8 : index
    %c0_119 = arith.constant 0 : index
    %128 = vector.load %arg16[%c8_118, %c0_119] : memref<32x640xbf16, #tpu.memory_space<vmem>>, vector<4x64xbf16>
    tpu.vector_store %arg16[%c8_118, %c0_119], %127 {strides = array<i32>} : memref<32x640xbf16, #tpu.memory_space<vmem>>, vector<4x64xbf16>,
    %c2_120 = arith.constant 2 : index
    %c1_121 = arith.constant 1 : index
    %c0_122 = arith.constant 0 : index
    %129 = vector.load %arg15[%c2_120, %c1_121, %c0_122] : memref<12x6x64xf32, #tpu.memory_space<vmem>>, vector<1x4x64xf32>
    %130 = vector.shape_cast %129 : vector<1x4x64xf32> to vector<4x64xf32>
    %131 = arith.truncf %130 : vector<4x64xf32> to vector<4x64xbf16>
    %c8_123 = arith.constant 8 : index
    %c64_124 = arith.constant 64 : index
    %132 = vector.load %arg16[%c8_123, %c64_124] : memref<32x640xbf16, #tpu.memory_space<vmem>>, vector<4x64xbf16>
    tpu.vector_store %arg16[%c8_123, %c64_124], %131 {strides = array<i32>} : memref<32x640xbf16, #tpu.memory_space<vmem>>, vector<4x64xbf16>,
    %c2_125 = arith.constant 2 : index
    %c2_126 = arith.constant 2 : index
    %c0_127 = arith.constant 0 : index
    %133 = vector.load %arg15[%c2_125, %c2_126, %c0_127] : memref<12x6x64xf32, #tpu.memory_space<vmem>>, vector<1x4x64xf32>
    %134 = vector.shape_cast %133 : vector<1x4x64xf32> to vector<4x64xf32>
    %135 = arith.truncf %134 : vector<4x64xf32> to vector<4x64xbf16>
    %c8_128 = arith.constant 8 : index
    %c128_129 = arith.constant 128 : index
    %136 = vector.load %arg16[%c8_128, %c128_129] : memref<32x640xbf16, #tpu.memory_space<vmem>>, vector<4x64xbf16>
    tpu.vector_store %arg16[%c8_128, %c128_129], %135 {strides = array<i32>} : memref<32x640xbf16, #tpu.memory_space<vmem>>, vector<4x64xbf16>,
    %c3_130 = arith.constant 3 : index
    %c0_131 = arith.constant 0 : index
    %c0_132 = arith.constant 0 : index
    %137 = vector.load %arg15[%c3_130, %c0_131, %c0_132] : memref<12x6x64xf32, #tpu.memory_space<vmem>>, vector<1x4x64xf32>
    %138 = vector.shape_cast %137 : vector<1x4x64xf32> to vector<4x64xf32>
    %139 = arith.truncf %138 : vector<4x64xf32> to vector<4x64xbf16>
    %c8_133 = arith.constant 8 : index
    %c192_134 = arith.constant 192 : index
    %140 = vector.load %arg16[%c8_133, %c192_134] : memref<32x640xbf16, #tpu.memory_space<vmem>>, vector<4x64xbf16>
    tpu.vector_store %arg16[%c8_133, %c192_134], %139 {strides = array<i32>} : memref<32x640xbf16, #tpu.memory_space<vmem>>, vector<4x64xbf16>,
    %c3_135 = arith.constant 3 : index
    %c1_136 = arith.constant 1 : index
    %c0_137 = arith.constant 0 : index
    %141 = vector.load %arg15[%c3_135, %c1_136, %c0_137] : memref<12x6x64xf32, #tpu.memory_space<vmem>>, vector<1x4x64xf32>
    %142 = vector.shape_cast %141 : vector<1x4x64xf32> to vector<4x64xf32>
    %143 = arith.truncf %142 : vector<4x64xf32> to vector<4x64xbf16>
    %c8_138 = arith.constant 8 : index
    %c256_139 = arith.constant 256 : index
    %144 = vector.load %arg16[%c8_138, %c256_139] : memref<32x640xbf16, #tpu.memory_space<vmem>>, vector<4x64xbf16>
    tpu.vector_store %arg16[%c8_138, %c256_139], %143 {strides = array<i32>} : memref<32x640xbf16, #tpu.memory_space<vmem>>, vector<4x64xbf16>,
    %c3_140 = arith.constant 3 : index
    %c2_141 = arith.constant 2 : index
    %c0_142 = arith.constant 0 : index
    %145 = vector.load %arg15[%c3_140, %c2_141, %c0_142] : memref<12x6x64xf32, #tpu.memory_space<vmem>>, vector<1x4x64xf32>
    %146 = vector.shape_cast %145 : vector<1x4x64xf32> to vector<4x64xf32>
    %147 = arith.truncf %146 : vector<4x64xf32> to vector<4x64xbf16>
    %c8_143 = arith.constant 8 : index
    %c320_144 = arith.constant 320 : index
    %148 = vector.load %arg16[%c8_143, %c320_144] : memref<32x640xbf16, #tpu.memory_space<vmem>>, vector<4x64xbf16>
    tpu.vector_store %arg16[%c8_143, %c320_144], %147 {strides = array<i32>} : memref<32x640xbf16, #tpu.memory_space<vmem>>, vector<4x64xbf16>,
    %c4_145 = arith.constant 4 : index
    %c0_146 = arith.constant 0 : index
    %c0_147 = arith.constant 0 : index
    %149 = vector.load %arg15[%c4_145, %c0_146, %c0_147] : memref<12x6x64xf32, #tpu.memory_space<vmem>>, vector<1x4x64xf32>
    %150 = vector.shape_cast %149 : vector<1x4x64xf32> to vector<4x64xf32>
    %151 = arith.truncf %150 : vector<4x64xf32> to vector<4x64xbf16>
    %c8_148 = arith.constant 8 : index
    %c384_149 = arith.constant 384 : index
    %152 = vector.load %arg16[%c8_148, %c384_149] : memref<32x640xbf16, #tpu.memory_space<vmem>>, vector<4x64xbf16>
    tpu.vector_store %arg16[%c8_148, %c384_149], %151 {strides = array<i32>} : memref<32x640xbf16, #tpu.memory_space<vmem>>, vector<4x64xbf16>,
    %c4_150 = arith.constant 4 : index
    %c1_151 = arith.constant 1 : index
    %c0_152 = arith.constant 0 : index
    %153 = vector.load %arg15[%c4_150, %c1_151, %c0_152] : memref<12x6x64xf32, #tpu.memory_space<vmem>>, vector<1x4x64xf32>
    %154 = vector.shape_cast %153 : vector<1x4x64xf32> to vector<4x64xf32>
    %155 = arith.truncf %154 : vector<4x64xf32> to vector<4x64xbf16>
    %c8_153 = arith.constant 8 : index
    %c448_154 = arith.constant 448 : index
    %156 = vector.load %arg16[%c8_153, %c448_154] : memref<32x640xbf16, #tpu.memory_space<vmem>>, vector<4x64xbf16>
    tpu.vector_store %arg16[%c8_153, %c448_154], %155 {strides = array<i32>} : memref<32x640xbf16, #tpu.memory_space<vmem>>, vector<4x64xbf16>,
    %c4_155 = arith.constant 4 : index
    %c2_156 = arith.constant 2 : index
    %c0_157 = arith.constant 0 : index
    %157 = vector.load %arg15[%c4_155, %c2_156, %c0_157] : memref<12x6x64xf32, #tpu.memory_space<vmem>>, vector<1x4x64xf32>
    %158 = vector.shape_cast %157 : vector<1x4x64xf32> to vector<4x64xf32>
    %159 = arith.truncf %158 : vector<4x64xf32> to vector<4x64xbf16>
    %c8_158 = arith.constant 8 : index
    %c512_159 = arith.constant 512 : index
    %160 = vector.load %arg16[%c8_158, %c512_159] : memref<32x640xbf16, #tpu.memory_space<vmem>>, vector<4x64xbf16>
    tpu.vector_store %arg16[%c8_158, %c512_159], %159 {strides = array<i32>} : memref<32x640xbf16, #tpu.memory_space<vmem>>, vector<4x64xbf16>,
    %c3_160 = arith.constant 3 : index
    %c0_161 = arith.constant 0 : index
    %c0_162 = arith.constant 0 : index
    %161 = vector.load %arg15[%c3_160, %c0_161, %c0_162] : memref<12x6x64xf32, #tpu.memory_space<vmem>>, vector<1x4x64xf32>
    %162 = vector.shape_cast %161 : vector<1x4x64xf32> to vector<4x64xf32>
    %163 = arith.truncf %162 : vector<4x64xf32> to vector<4x64xbf16>
    %c12 = arith.constant 12 : index
    %c0_163 = arith.constant 0 : index
    %164 = vector.load %arg16[%c12, %c0_163] : memref<32x640xbf16, #tpu.memory_space<vmem>>, vector<4x64xbf16>
    tpu.vector_store %arg16[%c12, %c0_163], %163 {strides = array<i32>} : memref<32x640xbf16, #tpu.memory_space<vmem>>, vector<4x64xbf16>,
    %c3_164 = arith.constant 3 : index
    %c1_165 = arith.constant 1 : index
    %c0_166 = arith.constant 0 : index
    %165 = vector.load %arg15[%c3_164, %c1_165, %c0_166] : memref<12x6x64xf32, #tpu.memory_space<vmem>>, vector<1x4x64xf32>
    %166 = vector.shape_cast %165 : vector<1x4x64xf32> to vector<4x64xf32>
    %167 = arith.truncf %166 : vector<4x64xf32> to vector<4x64xbf16>
    %c12_167 = arith.constant 12 : index
    %c64_168 = arith.constant 64 : index
    %168 = vector.load %arg16[%c12_167, %c64_168] : memref<32x640xbf16, #tpu.memory_space<vmem>>, vector<4x64xbf16>
    tpu.vector_store %arg16[%c12_167, %c64_168], %167 {strides = array<i32>} : memref<32x640xbf16, #tpu.memory_space<vmem>>, vector<4x64xbf16>,
    %c3_169 = arith.constant 3 : index
    %c2_170 = arith.constant 2 : index
    %c0_171 = arith.constant 0 : index
    %169 = vector.load %arg15[%c3_169, %c2_170, %c0_171] : memref<12x6x64xf32, #tpu.memory_space<vmem>>, vector<1x4x64xf32>
    %170 = vector.shape_cast %169 : vector<1x4x64xf32> to vector<4x64xf32>
    %171 = arith.truncf %170 : vector<4x64xf32> to vector<4x64xbf16>
    %c12_172 = arith.constant 12 : index
    %c128_173 = arith.constant 128 : index
    %172 = vector.load %arg16[%c12_172, %c128_173] : memref<32x640xbf16, #tpu.memory_space<vmem>>, vector<4x64xbf16>
    tpu.vector_store %arg16[%c12_172, %c128_173], %171 {strides = array<i32>} : memref<32x640xbf16, #tpu.memory_space<vmem>>, vector<4x64xbf16>,
    %c4_174 = arith.constant 4 : index
    %c0_175 = arith.constant 0 : index
    %c0_176 = arith.constant 0 : index
    %173 = vector.load %arg15[%c4_174, %c0_175, %c0_176] : memref<12x6x64xf32, #tpu.memory_space<vmem>>, vector<1x4x64xf32>
    %174 = vector.shape_cast %173 : vector<1x4x64xf32> to vector<4x64xf32>
    %175 = arith.truncf %174 : vector<4x64xf32> to vector<4x64xbf16>
    %c12_177 = arith.constant 12 : index
    %c192_178 = arith.constant 192 : index
    %176 = vector.load %arg16[%c12_177, %c192_178] : memref<32x640xbf16, #tpu.memory_space<vmem>>, vector<4x64xbf16>
    tpu.vector_store %arg16[%c12_177, %c192_178], %175 {strides = array<i32>} : memref<32x640xbf16, #tpu.memory_space<vmem>>, vector<4x64xbf16>,
    %c4_179 = arith.constant 4 : index
    %c1_180 = arith.constant 1 : index
    %c0_181 = arith.constant 0 : index
    %177 = vector.load %arg15[%c4_179, %c1_180, %c0_181] : memref<12x6x64xf32, #tpu.memory_space<vmem>>, vector<1x4x64xf32>
    %178 = vector.shape_cast %177 : vector<1x4x64xf32> to vector<4x64xf32>
    %179 = arith.truncf %178 : vector<4x64xf32> to vector<4x64xbf16>
    %c12_182 = arith.constant 12 : index
    %c256_183 = arith.constant 256 : index
    %180 = vector.load %arg16[%c12_182, %c256_183] : memref<32x640xbf16, #tpu.memory_space<vmem>>, vector<4x64xbf16>
    tpu.vector_store %arg16[%c12_182, %c256_183], %179 {strides = array<i32>} : memref<32x640xbf16, #tpu.memory_space<vmem>>, vector<4x64xbf16>,
    %c4_184 = arith.constant 4 : index
    %c2_185 = arith.constant 2 : index
    %c0_186 = arith.constant 0 : index
    %181 = vector.load %arg15[%c4_184, %c2_185, %c0_186] : memref<12x6x64xf32, #tpu.memory_space<vmem>>, vector<1x4x64xf32>
    %182 = vector.shape_cast %181 : vector<1x4x64xf32> to vector<4x64xf32>
    %183 = arith.truncf %182 : vector<4x64xf32> to vector<4x64xbf16>
    %c12_187 = arith.constant 12 : index
    %c320_188 = arith.constant 320 : index
    %184 = vector.load %arg16[%c12_187, %c320_188] : memref<32x640xbf16, #tpu.memory_space<vmem>>, vector<4x64xbf16>
    tpu.vector_store %arg16[%c12_187, %c320_188], %183 {strides = array<i32>} : memref<32x640xbf16, #tpu.memory_space<vmem>>, vector<4x64xbf16>,
    %c5 = arith.constant 5 : index
    %c0_189 = arith.constant 0 : index
    %c0_190 = arith.constant 0 : index
    %185 = vector.load %arg15[%c5, %c0_189, %c0_190] : memref<12x6x64xf32, #tpu.memory_space<vmem>>, vector<1x4x64xf32>
    %186 = vector.shape_cast %185 : vector<1x4x64xf32> to vector<4x64xf32>
    %187 = arith.truncf %186 : vector<4x64xf32> to vector<4x64xbf16>
    %c12_191 = arith.constant 12 : index
    %c384_192 = arith.constant 384 : index
    %188 = vector.load %arg16[%c12_191, %c384_192] : memref<32x640xbf16, #tpu.memory_space<vmem>>, vector<4x64xbf16>
    tpu.vector_store %arg16[%c12_191, %c384_192], %187 {strides = array<i32>} : memref<32x640xbf16, #tpu.memory_space<vmem>>, vector<4x64xbf16>,
    %c5_193 = arith.constant 5 : index
    %c1_194 = arith.constant 1 : index
    %c0_195 = arith.constant 0 : index
    %189 = vector.load %arg15[%c5_193, %c1_194, %c0_195] : memref<12x6x64xf32, #tpu.memory_space<vmem>>, vector<1x4x64xf32>
    %190 = vector.shape_cast %189 : vector<1x4x64xf32> to vector<4x64xf32>
    %191 = arith.truncf %190 : vector<4x64xf32> to vector<4x64xbf16>
    %c12_196 = arith.constant 12 : index
    %c448_197 = arith.constant 448 : index
    %192 = vector.load %arg16[%c12_196, %c448_197] : memref<32x640xbf16, #tpu.memory_space<vmem>>, vector<4x64xbf16>
    tpu.vector_store %arg16[%c12_196, %c448_197], %191 {strides = array<i32>} : memref<32x640xbf16, #tpu.memory_space<vmem>>, vector<4x64xbf16>,
    %c5_198 = arith.constant 5 : index
    %c2_199 = arith.constant 2 : index
    %c0_200 = arith.constant 0 : index
    %193 = vector.load %arg15[%c5_198, %c2_199, %c0_200] : memref<12x6x64xf32, #tpu.memory_space<vmem>>, vector<1x4x64xf32>
    %194 = vector.shape_cast %193 : vector<1x4x64xf32> to vector<4x64xf32>
    %195 = arith.truncf %194 : vector<4x64xf32> to vector<4x64xbf16>
    %c12_201 = arith.constant 12 : index
    %c512_202 = arith.constant 512 : index
    %196 = vector.load %arg16[%c12_201, %c512_202] : memref<32x640xbf16, #tpu.memory_space<vmem>>, vector<4x64xbf16>
    tpu.vector_store %arg16[%c12_201, %c512_202], %195 {strides = array<i32>} : memref<32x640xbf16, #tpu.memory_space<vmem>>, vector<4x64xbf16>,
    %c6 = arith.constant 6 : index
    %c0_203 = arith.constant 0 : index
    %c0_204 = arith.constant 0 : index
    %197 = vector.load %arg15[%c6, %c0_203, %c0_204] : memref<12x6x64xf32, #tpu.memory_space<vmem>>, vector<1x4x64xf32>
    %198 = vector.shape_cast %197 : vector<1x4x64xf32> to vector<4x64xf32>
    %199 = arith.truncf %198 : vector<4x64xf32> to vector<4x64xbf16>
    %c16 = arith.constant 16 : index
    %c0_205 = arith.constant 0 : index
    %200 = vector.load %arg16[%c16, %c0_205] : memref<32x640xbf16, #tpu.memory_space<vmem>>, vector<4x64xbf16>
    tpu.vector_store %arg16[%c16, %c0_205], %199 {strides = array<i32>} : memref<32x640xbf16, #tpu.memory_space<vmem>>, vector<4x64xbf16>,
    %c6_206 = arith.constant 6 : index
    %c1_207 = arith.constant 1 : index
    %c0_208 = arith.constant 0 : index
    %201 = vector.load %arg15[%c6_206, %c1_207, %c0_208] : memref<12x6x64xf32, #tpu.memory_space<vmem>>, vector<1x4x64xf32>
    %202 = vector.shape_cast %201 : vector<1x4x64xf32> to vector<4x64xf32>
    %203 = arith.truncf %202 : vector<4x64xf32> to vector<4x64xbf16>
    %c16_209 = arith.constant 16 : index
    %c64_210 = arith.constant 64 : index
    %204 = vector.load %arg16[%c16_209, %c64_210] : memref<32x640xbf16, #tpu.memory_space<vmem>>, vector<4x64xbf16>
    tpu.vector_store %arg16[%c16_209, %c64_210], %203 {strides = array<i32>} : memref<32x640xbf16, #tpu.memory_space<vmem>>, vector<4x64xbf16>,
    %c6_211 = arith.constant 6 : index
    %c2_212 = arith.constant 2 : index
    %c0_213 = arith.constant 0 : index
    %205 = vector.load %arg15[%c6_211, %c2_212, %c0_213] : memref<12x6x64xf32, #tpu.memory_space<vmem>>, vector<1x4x64xf32>
    %206 = vector.shape_cast %205 : vector<1x4x64xf32> to vector<4x64xf32>
    %207 = arith.truncf %206 : vector<4x64xf32> to vector<4x64xbf16>
    %c16_214 = arith.constant 16 : index
    %c128_215 = arith.constant 128 : index
    %208 = vector.load %arg16[%c16_214, %c128_215] : memref<32x640xbf16, #tpu.memory_space<vmem>>, vector<4x64xbf16>
    tpu.vector_store %arg16[%c16_214, %c128_215], %207 {strides = array<i32>} : memref<32x640xbf16, #tpu.memory_space<vmem>>, vector<4x64xbf16>,
    %c7_216 = arith.constant 7 : index
    %c0_217 = arith.constant 0 : index
    %c0_218 = arith.constant 0 : index
    %209 = vector.load %arg15[%c7_216, %c0_217, %c0_218] : memref<12x6x64xf32, #tpu.memory_space<vmem>>, vector<1x4x64xf32>
    %210 = vector.shape_cast %209 : vector<1x4x64xf32> to vector<4x64xf32>
    %211 = arith.truncf %210 : vector<4x64xf32> to vector<4x64xbf16>
    %c16_219 = arith.constant 16 : index
    %c192_220 = arith.constant 192 : index
    %212 = vector.load %arg16[%c16_219, %c192_220] : memref<32x640xbf16, #tpu.memory_space<vmem>>, vector<4x64xbf16>
    tpu.vector_store %arg16[%c16_219, %c192_220], %211 {strides = array<i32>} : memref<32x640xbf16, #tpu.memory_space<vmem>>, vector<4x64xbf16>,
    %c7_221 = arith.constant 7 : index
    %c1_222 = arith.constant 1 : index
    %c0_223 = arith.constant 0 : index
    %213 = vector.load %arg15[%c7_221, %c1_222, %c0_223] : memref<12x6x64xf32, #tpu.memory_space<vmem>>, vector<1x4x64xf32>
    %214 = vector.shape_cast %213 : vector<1x4x64xf32> to vector<4x64xf32>
    %215 = arith.truncf %214 : vector<4x64xf32> to vector<4x64xbf16>
    %c16_224 = arith.constant 16 : index
    %c256_225 = arith.constant 256 : index
    %216 = vector.load %arg16[%c16_224, %c256_225] : memref<32x640xbf16, #tpu.memory_space<vmem>>, vector<4x64xbf16>
    tpu.vector_store %arg16[%c16_224, %c256_225], %215 {strides = array<i32>} : memref<32x640xbf16, #tpu.memory_space<vmem>>, vector<4x64xbf16>,
    %c7_226 = arith.constant 7 : index
    %c2_227 = arith.constant 2 : index
    %c0_228 = arith.constant 0 : index
    %217 = vector.load %arg15[%c7_226, %c2_227, %c0_228] : memref<12x6x64xf32, #tpu.memory_space<vmem>>, vector<1x4x64xf32>
    %218 = vector.shape_cast %217 : vector<1x4x64xf32> to vector<4x64xf32>
    %219 = arith.truncf %218 : vector<4x64xf32> to vector<4x64xbf16>
    %c16_229 = arith.constant 16 : index
    %c320_230 = arith.constant 320 : index
    %220 = vector.load %arg16[%c16_229, %c320_230] : memref<32x640xbf16, #tpu.memory_space<vmem>>, vector<4x64xbf16>
    tpu.vector_store %arg16[%c16_229, %c320_230], %219 {strides = array<i32>} : memref<32x640xbf16, #tpu.memory_space<vmem>>, vector<4x64xbf16>,
    %c8_231 = arith.constant 8 : index
    %c0_232 = arith.constant 0 : index
    %c0_233 = arith.constant 0 : index
    %221 = vector.load %arg15[%c8_231, %c0_232, %c0_233] : memref<12x6x64xf32, #tpu.memory_space<vmem>>, vector<1x4x64xf32>
    %222 = vector.shape_cast %221 : vector<1x4x64xf32> to vector<4x64xf32>
    %223 = arith.truncf %222 : vector<4x64xf32> to vector<4x64xbf16>
    %c16_234 = arith.constant 16 : index
    %c384_235 = arith.constant 384 : index
    %224 = vector.load %arg16[%c16_234, %c384_235] : memref<32x640xbf16, #tpu.memory_space<vmem>>, vector<4x64xbf16>
    tpu.vector_store %arg16[%c16_234, %c384_235], %223 {strides = array<i32>} : memref<32x640xbf16, #tpu.memory_space<vmem>>, vector<4x64xbf16>,
    %c8_236 = arith.constant 8 : index
    %c1_237 = arith.constant 1 : index
    %c0_238 = arith.constant 0 : index
    %225 = vector.load %arg15[%c8_236, %c1_237, %c0_238] : memref<12x6x64xf32, #tpu.memory_space<vmem>>, vector<1x4x64xf32>
    %226 = vector.shape_cast %225 : vector<1x4x64xf32> to vector<4x64xf32>
    %227 = arith.truncf %226 : vector<4x64xf32> to vector<4x64xbf16>
    %c16_239 = arith.constant 16 : index
    %c448_240 = arith.constant 448 : index
    %228 = vector.load %arg16[%c16_239, %c448_240] : memref<32x640xbf16, #tpu.memory_space<vmem>>, vector<4x64xbf16>
    tpu.vector_store %arg16[%c16_239, %c448_240], %227 {strides = array<i32>} : memref<32x640xbf16, #tpu.memory_space<vmem>>, vector<4x64xbf16>,
    %c8_241 = arith.constant 8 : index
    %c2_242 = arith.constant 2 : index
    %c0_243 = arith.constant 0 : index
    %229 = vector.load %arg15[%c8_241, %c2_242, %c0_243] : memref<12x6x64xf32, #tpu.memory_space<vmem>>, vector<1x4x64xf32>
    %230 = vector.shape_cast %229 : vector<1x4x64xf32> to vector<4x64xf32>
    %231 = arith.truncf %230 : vector<4x64xf32> to vector<4x64xbf16>
    %c16_244 = arith.constant 16 : index
    %c512_245 = arith.constant 512 : index
    %232 = vector.load %arg16[%c16_244, %c512_245] : memref<32x640xbf16, #tpu.memory_space<vmem>>, vector<4x64xbf16>
    tpu.vector_store %arg16[%c16_244, %c512_245], %231 {strides = array<i32>} : memref<32x640xbf16, #tpu.memory_space<vmem>>, vector<4x64xbf16>,
    %c7_246 = arith.constant 7 : index
    %c0_247 = arith.constant 0 : index
    %c0_248 = arith.constant 0 : index
    %233 = vector.load %arg15[%c7_246, %c0_247, %c0_248] : memref<12x6x64xf32, #tpu.memory_space<vmem>>, vector<1x4x64xf32>
    %234 = vector.shape_cast %233 : vector<1x4x64xf32> to vector<4x64xf32>
    %235 = arith.truncf %234 : vector<4x64xf32> to vector<4x64xbf16>
    %c20 = arith.constant 20 : index
    %c0_249 = arith.constant 0 : index
    %236 = vector.load %arg16[%c20, %c0_249] : memref<32x640xbf16, #tpu.memory_space<vmem>>, vector<4x64xbf16>
    tpu.vector_store %arg16[%c20, %c0_249], %235 {strides = array<i32>} : memref<32x640xbf16, #tpu.memory_space<vmem>>, vector<4x64xbf16>,
    %c7_250 = arith.constant 7 : index
    %c1_251 = arith.constant 1 : index
    %c0_252 = arith.constant 0 : index
    %237 = vector.load %arg15[%c7_250, %c1_251, %c0_252] : memref<12x6x64xf32, #tpu.memory_space<vmem>>, vector<1x4x64xf32>
    %238 = vector.shape_cast %237 : vector<1x4x64xf32> to vector<4x64xf32>
    %239 = arith.truncf %238 : vector<4x64xf32> to vector<4x64xbf16>
    %c20_253 = arith.constant 20 : index
    %c64_254 = arith.constant 64 : index
    %240 = vector.load %arg16[%c20_253, %c64_254] : memref<32x640xbf16, #tpu.memory_space<vmem>>, vector<4x64xbf16>
    tpu.vector_store %arg16[%c20_253, %c64_254], %239 {strides = array<i32>} : memref<32x640xbf16, #tpu.memory_space<vmem>>, vector<4x64xbf16>,
    %c7_255 = arith.constant 7 : index
    %c2_256 = arith.constant 2 : index
    %c0_257 = arith.constant 0 : index
    %241 = vector.load %arg15[%c7_255, %c2_256, %c0_257] : memref<12x6x64xf32, #tpu.memory_space<vmem>>, vector<1x4x64xf32>
    %242 = vector.shape_cast %241 : vector<1x4x64xf32> to vector<4x64xf32>
    %243 = arith.truncf %242 : vector<4x64xf32> to vector<4x64xbf16>
    %c20_258 = arith.constant 20 : index
    %c128_259 = arith.constant 128 : index
    %244 = vector.load %arg16[%c20_258, %c128_259] : memref<32x640xbf16, #tpu.memory_space<vmem>>, vector<4x64xbf16>
    tpu.vector_store %arg16[%c20_258, %c128_259], %243 {strides = array<i32>} : memref<32x640xbf16, #tpu.memory_space<vmem>>, vector<4x64xbf16>,
    %c8_260 = arith.constant 8 : index
    %c0_261 = arith.constant 0 : index
    %c0_262 = arith.constant 0 : index
    %245 = vector.load %arg15[%c8_260, %c0_261, %c0_262] : memref<12x6x64xf32, #tpu.memory_space<vmem>>, vector<1x4x64xf32>
    %246 = vector.shape_cast %245 : vector<1x4x64xf32> to vector<4x64xf32>
    %247 = arith.truncf %246 : vector<4x64xf32> to vector<4x64xbf16>
    %c20_263 = arith.constant 20 : index
    %c192_264 = arith.constant 192 : index
    %248 = vector.load %arg16[%c20_263, %c192_264] : memref<32x640xbf16, #tpu.memory_space<vmem>>, vector<4x64xbf16>
    tpu.vector_store %arg16[%c20_263, %c192_264], %247 {strides = array<i32>} : memref<32x640xbf16, #tpu.memory_space<vmem>>, vector<4x64xbf16>,
    %c8_265 = arith.constant 8 : index
    %c1_266 = arith.constant 1 : index
    %c0_267 = arith.constant 0 : index
    %249 = vector.load %arg15[%c8_265, %c1_266, %c0_267] : memref<12x6x64xf32, #tpu.memory_space<vmem>>, vector<1x4x64xf32>
    %250 = vector.shape_cast %249 : vector<1x4x64xf32> to vector<4x64xf32>
    %251 = arith.truncf %250 : vector<4x64xf32> to vector<4x64xbf16>
    %c20_268 = arith.constant 20 : index
    %c256_269 = arith.constant 256 : index
    %252 = vector.load %arg16[%c20_268, %c256_269] : memref<32x640xbf16, #tpu.memory_space<vmem>>, vector<4x64xbf16>
    tpu.vector_store %arg16[%c20_268, %c256_269], %251 {strides = array<i32>} : memref<32x640xbf16, #tpu.memory_space<vmem>>, vector<4x64xbf16>,
    %c8_270 = arith.constant 8 : index
    %c2_271 = arith.constant 2 : index
    %c0_272 = arith.constant 0 : index
    %253 = vector.load %arg15[%c8_270, %c2_271, %c0_272] : memref<12x6x64xf32, #tpu.memory_space<vmem>>, vector<1x4x64xf32>
    %254 = vector.shape_cast %253 : vector<1x4x64xf32> to vector<4x64xf32>
    %255 = arith.truncf %254 : vector<4x64xf32> to vector<4x64xbf16>
    %c20_273 = arith.constant 20 : index
    %c320_274 = arith.constant 320 : index
    %256 = vector.load %arg16[%c20_273, %c320_274] : memref<32x640xbf16, #tpu.memory_space<vmem>>, vector<4x64xbf16>
    tpu.vector_store %arg16[%c20_273, %c320_274], %255 {strides = array<i32>} : memref<32x640xbf16, #tpu.memory_space<vmem>>, vector<4x64xbf16>,
    %c9_275 = arith.constant 9 : index
    %c0_276 = arith.constant 0 : index
    %c0_277 = arith.constant 0 : index
    %257 = vector.load %arg15[%c9_275, %c0_276, %c0_277] : memref<12x6x64xf32, #tpu.memory_space<vmem>>, vector<1x4x64xf32>
    %258 = vector.shape_cast %257 : vector<1x4x64xf32> to vector<4x64xf32>
    %259 = arith.truncf %258 : vector<4x64xf32> to vector<4x64xbf16>
    %c20_278 = arith.constant 20 : index
    %c384_279 = arith.constant 384 : index
    %260 = vector.load %arg16[%c20_278, %c384_279] : memref<32x640xbf16, #tpu.memory_space<vmem>>, vector<4x64xbf16>
    tpu.vector_store %arg16[%c20_278, %c384_279], %259 {strides = array<i32>} : memref<32x640xbf16, #tpu.memory_space<vmem>>, vector<4x64xbf16>,
    %c9_280 = arith.constant 9 : index
    %c1_281 = arith.constant 1 : index
    %c0_282 = arith.constant 0 : index
    %261 = vector.load %arg15[%c9_280, %c1_281, %c0_282] : memref<12x6x64xf32, #tpu.memory_space<vmem>>, vector<1x4x64xf32>
    %262 = vector.shape_cast %261 : vector<1x4x64xf32> to vector<4x64xf32>
    %263 = arith.truncf %262 : vector<4x64xf32> to vector<4x64xbf16>
    %c20_283 = arith.constant 20 : index
    %c448_284 = arith.constant 448 : index
    %264 = vector.load %arg16[%c20_283, %c448_284] : memref<32x640xbf16, #tpu.memory_space<vmem>>, vector<4x64xbf16>
    tpu.vector_store %arg16[%c20_283, %c448_284], %263 {strides = array<i32>} : memref<32x640xbf16, #tpu.memory_space<vmem>>, vector<4x64xbf16>,
    %c9_285 = arith.constant 9 : index
    %c2_286 = arith.constant 2 : index
    %c0_287 = arith.constant 0 : index
    %265 = vector.load %arg15[%c9_285, %c2_286, %c0_287] : memref<12x6x64xf32, #tpu.memory_space<vmem>>, vector<1x4x64xf32>
    %266 = vector.shape_cast %265 : vector<1x4x64xf32> to vector<4x64xf32>
    %267 = arith.truncf %266 : vector<4x64xf32> to vector<4x64xbf16>
    %c20_288 = arith.constant 20 : index
    %c512_289 = arith.constant 512 : index
    %268 = vector.load %arg16[%c20_288, %c512_289] : memref<32x640xbf16, #tpu.memory_space<vmem>>, vector<4x64xbf16>
    tpu.vector_store %arg16[%c20_288, %c512_289], %267 {strides = array<i32>} : memref<32x640xbf16, #tpu.memory_space<vmem>>, vector<4x64xbf16>,
    %c8_290 = arith.constant 8 : index
    %c0_291 = arith.constant 0 : index
    %c0_292 = arith.constant 0 : index
    %269 = vector.load %arg15[%c8_290, %c0_291, %c0_292] : memref<12x6x64xf32, #tpu.memory_space<vmem>>, vector<1x4x64xf32>
    %270 = vector.shape_cast %269 : vector<1x4x64xf32> to vector<4x64xf32>
    %271 = arith.truncf %270 : vector<4x64xf32> to vector<4x64xbf16>
    %c24 = arith.constant 24 : index
    %c0_293 = arith.constant 0 : index
    %272 = vector.load %arg16[%c24, %c0_293] : memref<32x640xbf16, #tpu.memory_space<vmem>>, vector<4x64xbf16>
    tpu.vector_store %arg16[%c24, %c0_293], %271 {strides = array<i32>} : memref<32x640xbf16, #tpu.memory_space<vmem>>, vector<4x64xbf16>,
    %c8_294 = arith.constant 8 : index
    %c1_295 = arith.constant 1 : index
    %c0_296 = arith.constant 0 : index
    %273 = vector.load %arg15[%c8_294, %c1_295, %c0_296] : memref<12x6x64xf32, #tpu.memory_space<vmem>>, vector<1x4x64xf32>
    %274 = vector.shape_cast %273 : vector<1x4x64xf32> to vector<4x64xf32>
    %275 = arith.truncf %274 : vector<4x64xf32> to vector<4x64xbf16>
    %c24_297 = arith.constant 24 : index
    %c64_298 = arith.constant 64 : index
    %276 = vector.load %arg16[%c24_297, %c64_298] : memref<32x640xbf16, #tpu.memory_space<vmem>>, vector<4x64xbf16>
    tpu.vector_store %arg16[%c24_297, %c64_298], %275 {strides = array<i32>} : memref<32x640xbf16, #tpu.memory_space<vmem>>, vector<4x64xbf16>,
    %c8_299 = arith.constant 8 : index
    %c2_300 = arith.constant 2 : index
    %c0_301 = arith.constant 0 : index
    %277 = vector.load %arg15[%c8_299, %c2_300, %c0_301] : memref<12x6x64xf32, #tpu.memory_space<vmem>>, vector<1x4x64xf32>
    %278 = vector.shape_cast %277 : vector<1x4x64xf32> to vector<4x64xf32>
    %279 = arith.truncf %278 : vector<4x64xf32> to vector<4x64xbf16>
    %c24_302 = arith.constant 24 : index
    %c128_303 = arith.constant 128 : index
    %280 = vector.load %arg16[%c24_302, %c128_303] : memref<32x640xbf16, #tpu.memory_space<vmem>>, vector<4x64xbf16>
    tpu.vector_store %arg16[%c24_302, %c128_303], %279 {strides = array<i32>} : memref<32x640xbf16, #tpu.memory_space<vmem>>, vector<4x64xbf16>,
    %c9_304 = arith.constant 9 : index
    %c0_305 = arith.constant 0 : index
    %c0_306 = arith.constant 0 : index
    %281 = vector.load %arg15[%c9_304, %c0_305, %c0_306] : memref<12x6x64xf32, #tpu.memory_space<vmem>>, vector<1x4x64xf32>
    %282 = vector.shape_cast %281 : vector<1x4x64xf32> to vector<4x64xf32>
    %283 = arith.truncf %282 : vector<4x64xf32> to vector<4x64xbf16>
    %c24_307 = arith.constant 24 : index
    %c192_308 = arith.constant 192 : index
    %284 = vector.load %arg16[%c24_307, %c192_308] : memref<32x640xbf16, #tpu.memory_space<vmem>>, vector<4x64xbf16>
    tpu.vector_store %arg16[%c24_307, %c192_308], %283 {strides = array<i32>} : memref<32x640xbf16, #tpu.memory_space<vmem>>, vector<4x64xbf16>,
    %c9_309 = arith.constant 9 : index
    %c1_310 = arith.constant 1 : index
    %c0_311 = arith.constant 0 : index
    %285 = vector.load %arg15[%c9_309, %c1_310, %c0_311] : memref<12x6x64xf32, #tpu.memory_space<vmem>>, vector<1x4x64xf32>
    %286 = vector.shape_cast %285 : vector<1x4x64xf32> to vector<4x64xf32>
    %287 = arith.truncf %286 : vector<4x64xf32> to vector<4x64xbf16>
    %c24_312 = arith.constant 24 : index
    %c256_313 = arith.constant 256 : index
    %288 = vector.load %arg16[%c24_312, %c256_313] : memref<32x640xbf16, #tpu.memory_space<vmem>>, vector<4x64xbf16>
    tpu.vector_store %arg16[%c24_312, %c256_313], %287 {strides = array<i32>} : memref<32x640xbf16, #tpu.memory_space<vmem>>, vector<4x64xbf16>,
    %c9_314 = arith.constant 9 : index
    %c2_315 = arith.constant 2 : index
    %c0_316 = arith.constant 0 : index
    %289 = vector.load %arg15[%c9_314, %c2_315, %c0_316] : memref<12x6x64xf32, #tpu.memory_space<vmem>>, vector<1x4x64xf32>
    %290 = vector.shape_cast %289 : vector<1x4x64xf32> to vector<4x64xf32>
    %291 = arith.truncf %290 : vector<4x64xf32> to vector<4x64xbf16>
    %c24_317 = arith.constant 24 : index
    %c320_318 = arith.constant 320 : index
    %292 = vector.load %arg16[%c24_317, %c320_318] : memref<32x640xbf16, #tpu.memory_space<vmem>>, vector<4x64xbf16>
    tpu.vector_store %arg16[%c24_317, %c320_318], %291 {strides = array<i32>} : memref<32x640xbf16, #tpu.memory_space<vmem>>, vector<4x64xbf16>,
    %c10_319 = arith.constant 10 : index
    %c0_320 = arith.constant 0 : index
    %c0_321 = arith.constant 0 : index
    %293 = vector.load %arg15[%c10_319, %c0_320, %c0_321] : memref<12x6x64xf32, #tpu.memory_space<vmem>>, vector<1x4x64xf32>
    %294 = vector.shape_cast %293 : vector<1x4x64xf32> to vector<4x64xf32>
    %295 = arith.truncf %294 : vector<4x64xf32> to vector<4x64xbf16>
    %c24_322 = arith.constant 24 : index
    %c384_323 = arith.constant 384 : index
    %296 = vector.load %arg16[%c24_322, %c384_323] : memref<32x640xbf16, #tpu.memory_space<vmem>>, vector<4x64xbf16>
    tpu.vector_store %arg16[%c24_322, %c384_323], %295 {strides = array<i32>} : memref<32x640xbf16, #tpu.memory_space<vmem>>, vector<4x64xbf16>,
    %c10_324 = arith.constant 10 : index
    %c1_325 = arith.constant 1 : index
    %c0_326 = arith.constant 0 : index
    %297 = vector.load %arg15[%c10_324, %c1_325, %c0_326] : memref<12x6x64xf32, #tpu.memory_space<vmem>>, vector<1x4x64xf32>
    %298 = vector.shape_cast %297 : vector<1x4x64xf32> to vector<4x64xf32>
    %299 = arith.truncf %298 : vector<4x64xf32> to vector<4x64xbf16>
    %c24_327 = arith.constant 24 : index
    %c448_328 = arith.constant 448 : index
    %300 = vector.load %arg16[%c24_327, %c448_328] : memref<32x640xbf16, #tpu.memory_space<vmem>>, vector<4x64xbf16>
    tpu.vector_store %arg16[%c24_327, %c448_328], %299 {strides = array<i32>} : memref<32x640xbf16, #tpu.memory_space<vmem>>, vector<4x64xbf16>,
    %c10_329 = arith.constant 10 : index
    %c2_330 = arith.constant 2 : index
    %c0_331 = arith.constant 0 : index
    %301 = vector.load %arg15[%c10_329, %c2_330, %c0_331] : memref<12x6x64xf32, #tpu.memory_space<vmem>>, vector<1x4x64xf32>
    %302 = vector.shape_cast %301 : vector<1x4x64xf32> to vector<4x64xf32>
    %303 = arith.truncf %302 : vector<4x64xf32> to vector<4x64xbf16>
    %c24_332 = arith.constant 24 : index
    %c512_333 = arith.constant 512 : index
    %304 = vector.load %arg16[%c24_332, %c512_333] : memref<32x640xbf16, #tpu.memory_space<vmem>>, vector<4x64xbf16>
    tpu.vector_store %arg16[%c24_332, %c512_333], %303 {strides = array<i32>} : memref<32x640xbf16, #tpu.memory_space<vmem>>, vector<4x64xbf16>,
    %c9_334 = arith.constant 9 : index
    %c0_335 = arith.constant 0 : index
    %c0_336 = arith.constant 0 : index
    %305 = vector.load %arg15[%c9_334, %c0_335, %c0_336] : memref<12x6x64xf32, #tpu.memory_space<vmem>>, vector<1x4x64xf32>
    %306 = vector.shape_cast %305 : vector<1x4x64xf32> to vector<4x64xf32>
    %307 = arith.truncf %306 : vector<4x64xf32> to vector<4x64xbf16>
    %c28 = arith.constant 28 : index
    %c0_337 = arith.constant 0 : index
    %308 = vector.load %arg16[%c28, %c0_337] : memref<32x640xbf16, #tpu.memory_space<vmem>>, vector<4x64xbf16>
    tpu.vector_store %arg16[%c28, %c0_337], %307 {strides = array<i32>} : memref<32x640xbf16, #tpu.memory_space<vmem>>, vector<4x64xbf16>,
    %c9_338 = arith.constant 9 : index
    %c1_339 = arith.constant 1 : index
    %c0_340 = arith.constant 0 : index
    %309 = vector.load %arg15[%c9_338, %c1_339, %c0_340] : memref<12x6x64xf32, #tpu.memory_space<vmem>>, vector<1x4x64xf32>
    %310 = vector.shape_cast %309 : vector<1x4x64xf32> to vector<4x64xf32>
    %311 = arith.truncf %310 : vector<4x64xf32> to vector<4x64xbf16>
    %c28_341 = arith.constant 28 : index
    %c64_342 = arith.constant 64 : index
    %312 = vector.load %arg16[%c28_341, %c64_342] : memref<32x640xbf16, #tpu.memory_space<vmem>>, vector<4x64xbf16>
    tpu.vector_store %arg16[%c28_341, %c64_342], %311 {strides = array<i32>} : memref<32x640xbf16, #tpu.memory_space<vmem>>, vector<4x64xbf16>,
    %c9_343 = arith.constant 9 : index
    %c2_344 = arith.constant 2 : index
    %c0_345 = arith.constant 0 : index
    %313 = vector.load %arg15[%c9_343, %c2_344, %c0_345] : memref<12x6x64xf32, #tpu.memory_space<vmem>>, vector<1x4x64xf32>
    %314 = vector.shape_cast %313 : vector<1x4x64xf32> to vector<4x64xf32>
    %315 = arith.truncf %314 : vector<4x64xf32> to vector<4x64xbf16>
    %c28_346 = arith.constant 28 : index
    %c128_347 = arith.constant 128 : index
    %316 = vector.load %arg16[%c28_346, %c128_347] : memref<32x640xbf16, #tpu.memory_space<vmem>>, vector<4x64xbf16>
    tpu.vector_store %arg16[%c28_346, %c128_347], %315 {strides = array<i32>} : memref<32x640xbf16, #tpu.memory_space<vmem>>, vector<4x64xbf16>,
    %c10_348 = arith.constant 10 : index
    %c0_349 = arith.constant 0 : index
    %c0_350 = arith.constant 0 : index
    %317 = vector.load %arg15[%c10_348, %c0_349, %c0_350] : memref<12x6x64xf32, #tpu.memory_space<vmem>>, vector<1x4x64xf32>
    %318 = vector.shape_cast %317 : vector<1x4x64xf32> to vector<4x64xf32>
    %319 = arith.truncf %318 : vector<4x64xf32> to vector<4x64xbf16>
    %c28_351 = arith.constant 28 : index
    %c192_352 = arith.constant 192 : index
    %320 = vector.load %arg16[%c28_351, %c192_352] : memref<32x640xbf16, #tpu.memory_space<vmem>>, vector<4x64xbf16>
    tpu.vector_store %arg16[%c28_351, %c192_352], %319 {strides = array<i32>} : memref<32x640xbf16, #tpu.memory_space<vmem>>, vector<4x64xbf16>,
    %c10_353 = arith.constant 10 : index
    %c1_354 = arith.constant 1 : index
    %c0_355 = arith.constant 0 : index
    %321 = vector.load %arg15[%c10_353, %c1_354, %c0_355] : memref<12x6x64xf32, #tpu.memory_space<vmem>>, vector<1x4x64xf32>
    %322 = vector.shape_cast %321 : vector<1x4x64xf32> to vector<4x64xf32>
    %323 = arith.truncf %322 : vector<4x64xf32> to vector<4x64xbf16>
    %c28_356 = arith.constant 28 : index
    %c256_357 = arith.constant 256 : index
    %324 = vector.load %arg16[%c28_356, %c256_357] : memref<32x640xbf16, #tpu.memory_space<vmem>>, vector<4x64xbf16>
    tpu.vector_store %arg16[%c28_356, %c256_357], %323 {strides = array<i32>} : memref<32x640xbf16, #tpu.memory_space<vmem>>, vector<4x64xbf16>,
    %c10_358 = arith.constant 10 : index
    %c2_359 = arith.constant 2 : index
    %c0_360 = arith.constant 0 : index
    %325 = vector.load %arg15[%c10_358, %c2_359, %c0_360] : memref<12x6x64xf32, #tpu.memory_space<vmem>>, vector<1x4x64xf32>
    %326 = vector.shape_cast %325 : vector<1x4x64xf32> to vector<4x64xf32>
    %327 = arith.truncf %326 : vector<4x64xf32> to vector<4x64xbf16>
    %c28_361 = arith.constant 28 : index
    %c320_362 = arith.constant 320 : index
    %328 = vector.load %arg16[%c28_361, %c320_362] : memref<32x640xbf16, #tpu.memory_space<vmem>>, vector<4x64xbf16>
    tpu.vector_store %arg16[%c28_361, %c320_362], %327 {strides = array<i32>} : memref<32x640xbf16, #tpu.memory_space<vmem>>, vector<4x64xbf16>,
    %c11 = arith.constant 11 : index
    %c0_363 = arith.constant 0 : index
    %c0_364 = arith.constant 0 : index
    %329 = vector.load %arg15[%c11, %c0_363, %c0_364] : memref<12x6x64xf32, #tpu.memory_space<vmem>>, vector<1x4x64xf32>
    %330 = vector.shape_cast %329 : vector<1x4x64xf32> to vector<4x64xf32>
    %331 = arith.truncf %330 : vector<4x64xf32> to vector<4x64xbf16>
    %c28_365 = arith.constant 28 : index
    %c384_366 = arith.constant 384 : index
    %332 = vector.load %arg16[%c28_365, %c384_366] : memref<32x640xbf16, #tpu.memory_space<vmem>>, vector<4x64xbf16>
    tpu.vector_store %arg16[%c28_365, %c384_366], %331 {strides = array<i32>} : memref<32x640xbf16, #tpu.memory_space<vmem>>, vector<4x64xbf16>,
    %c11_367 = arith.constant 11 : index
    %c1_368 = arith.constant 1 : index
    %c0_369 = arith.constant 0 : index
    %333 = vector.load %arg15[%c11_367, %c1_368, %c0_369] : memref<12x6x64xf32, #tpu.memory_space<vmem>>, vector<1x4x64xf32>
    %334 = vector.shape_cast %333 : vector<1x4x64xf32> to vector<4x64xf32>
    %335 = arith.truncf %334 : vector<4x64xf32> to vector<4x64xbf16>
    %c28_370 = arith.constant 28 : index
    %c448_371 = arith.constant 448 : index
    %336 = vector.load %arg16[%c28_370, %c448_371] : memref<32x640xbf16, #tpu.memory_space<vmem>>, vector<4x64xbf16>
    tpu.vector_store %arg16[%c28_370, %c448_371], %335 {strides = array<i32>} : memref<32x640xbf16, #tpu.memory_space<vmem>>, vector<4x64xbf16>,
    %c11_372 = arith.constant 11 : index
    %c2_373 = arith.constant 2 : index
    %c0_374 = arith.constant 0 : index
    %337 = vector.load %arg15[%c11_372, %c2_373, %c0_374] : memref<12x6x64xf32, #tpu.memory_space<vmem>>, vector<1x4x64xf32>
    %338 = vector.shape_cast %337 : vector<1x4x64xf32> to vector<4x64xf32>
    %339 = arith.truncf %338 : vector<4x64xf32> to vector<4x64xbf16>
    %c28_375 = arith.constant 28 : index
    %c512_376 = arith.constant 512 : index
    %340 = vector.load %arg16[%c28_375, %c512_376] : memref<32x640xbf16, #tpu.memory_space<vmem>>, vector<4x64xbf16>
    tpu.vector_store %arg16[%c28_375, %c512_376], %339 {strides = array<i32>} : memref<32x640xbf16, #tpu.memory_space<vmem>>, vector<4x64xbf16>,
    %c0_377 = arith.constant 0 : index
    %c0_378 = arith.constant 0 : index
    %341 = vector.load %arg16[%c0_377, %c0_378] : memref<32x640xbf16, #tpu.memory_space<vmem>>, vector<32x640xbf16>
    %c0_379 = arith.constant 0 : index
    %c0_380 = arith.constant 0 : index
    %342 = vector.load %arg4[%c0_379, %c0_380] : memref<640x128xbf16, #tpu.memory_space<vmem>>, vector<640x128xbf16>
    %cst_381 = arith.constant dense<0.000000e+00> : vector<32x128xf32>
    %343 = tpu.matmul %341, %342, %cst_381 {dimension_numbers = #tpu.dot_dimension_numbers<[1], [0], [0], [1], [0, 0, 1, 1], [], []>} : vector<32x640xbf16>, vector<640x128xbf16>, vector<32x128xf32> -> vector<32x128xf32>
    %c0_382 = arith.constant 0 : index
    %c0_383 = arith.constant 0 : index
    %344 = vector.load %arg5[%c0_382, %c0_383] : memref<1x128xf32, #tpu.memory_space<vmem>>, vector<1x128xf32>
    %345 = vector.broadcast %344 : vector<1x128xf32> to vector<32x128xf32>
    %346 = arith.addf %343, %345 : vector<32x128xf32>
    %cst_384 = arith.constant 0.000000e+00 : f32
    %347 = vector.broadcast %cst_384 : f32 to vector<32x128xf32>
    %348 = arith.maximumf %346, %347 : vector<32x128xf32>
    %349 = vector.extract_strided_slice %348 {offsets = [0, 0], sizes = [4, 128], strides = [1, 1]} : vector<32x128xf32> to vector<4x128xf32>
    %350 = vector.extract_strided_slice %348 {offsets = [4, 0], sizes = [4, 128], strides = [1, 1]} : vector<32x128xf32> to vector<4x128xf32>
    %351 = arith.maximumf %349, %350 : vector<4x128xf32>
    %352 = vector.extract_strided_slice %351 {offsets = [0, 0], sizes = [1, 128], strides = [1, 1]} : vector<4x128xf32> to vector<1x128xf32>
    %353 = vector.extract_strided_slice %351 {offsets = [1, 0], sizes = [1, 128], strides = [1, 1]} : vector<4x128xf32> to vector<1x128xf32>
    %354 = arith.maximumf %352, %353 : vector<1x128xf32>
    %355 = vector.extract_strided_slice %351 {offsets = [2, 0], sizes = [1, 128], strides = [1, 1]} : vector<4x128xf32> to vector<1x128xf32>
    %356 = vector.extract_strided_slice %351 {offsets = [3, 0], sizes = [1, 128], strides = [1, 1]} : vector<4x128xf32> to vector<1x128xf32>
    %357 = arith.maximumf %355, %356 : vector<1x128xf32>
    %358 = tpu.concatenate %354, %357 in 0 : vector<1x128xf32>, vector<1x128xf32> -> vector<2x128xf32>
    %c1_385 = arith.constant 1 : index
    %c1_386 = arith.constant 1 : index
    %c0_387 = arith.constant 0 : index
    %359 = vector.load %arg17[%c1_385, %c1_386, %c0_387] : memref<8x4x128xf32, #tpu.memory_space<vmem>>, vector<1x2x128xf32>
    %360 = vector.shape_cast %359 : vector<1x2x128xf32> to vector<2x128xf32>
    %361 = vector.shape_cast %358 : vector<2x128xf32> to vector<1x2x128xf32>
    tpu.vector_store %arg17[%c1_385, %c1_386, %c0_387], %361 {strides = array<i32>} : memref<8x4x128xf32, #tpu.memory_space<vmem>>, vector<1x2x128xf32>,
    %362 = vector.extract_strided_slice %348 {offsets = [8, 0], sizes = [4, 128], strides = [1, 1]} : vector<32x128xf32> to vector<4x128xf32>
    %363 = vector.extract_strided_slice %348 {offsets = [12, 0], sizes = [4, 128], strides = [1, 1]} : vector<32x128xf32> to vector<4x128xf32>
    %364 = arith.maximumf %362, %363 : vector<4x128xf32>
    %365 = vector.extract_strided_slice %364 {offsets = [0, 0], sizes = [1, 128], strides = [1, 1]} : vector<4x128xf32> to vector<1x128xf32>
    %366 = vector.extract_strided_slice %364 {offsets = [1, 0], sizes = [1, 128], strides = [1, 1]} : vector<4x128xf32> to vector<1x128xf32>
    %367 = arith.maximumf %365, %366 : vector<1x128xf32>
    %368 = vector.extract_strided_slice %364 {offsets = [2, 0], sizes = [1, 128], strides = [1, 1]} : vector<4x128xf32> to vector<1x128xf32>
    %369 = vector.extract_strided_slice %364 {offsets = [3, 0], sizes = [1, 128], strides = [1, 1]} : vector<4x128xf32> to vector<1x128xf32>
    %370 = arith.maximumf %368, %369 : vector<1x128xf32>
    %371 = tpu.concatenate %367, %370 in 0 : vector<1x128xf32>, vector<1x128xf32> -> vector<2x128xf32>
    %c2_388 = arith.constant 2 : index
    %c1_389 = arith.constant 1 : index
    %c0_390 = arith.constant 0 : index
    %372 = vector.load %arg17[%c2_388, %c1_389, %c0_390] : memref<8x4x128xf32, #tpu.memory_space<vmem>>, vector<1x2x128xf32>
    %373 = vector.shape_cast %372 : vector<1x2x128xf32> to vector<2x128xf32>
    %374 = vector.shape_cast %371 : vector<2x128xf32> to vector<1x2x128xf32>
    tpu.vector_store %arg17[%c2_388, %c1_389, %c0_390], %374 {strides = array<i32>} : memref<8x4x128xf32, #tpu.memory_space<vmem>>, vector<1x2x128xf32>,
    %375 = vector.extract_strided_slice %348 {offsets = [16, 0], sizes = [4, 128], strides = [1, 1]} : vector<32x128xf32> to vector<4x128xf32>
    %376 = vector.extract_strided_slice %348 {offsets = [20, 0], sizes = [4, 128], strides = [1, 1]} : vector<32x128xf32> to vector<4x128xf32>
    %377 = arith.maximumf %375, %376 : vector<4x128xf32>
    %378 = vector.extract_strided_slice %377 {offsets = [0, 0], sizes = [1, 128], strides = [1, 1]} : vector<4x128xf32> to vector<1x128xf32>
    %379 = vector.extract_strided_slice %377 {offsets = [1, 0], sizes = [1, 128], strides = [1, 1]} : vector<4x128xf32> to vector<1x128xf32>
    %380 = arith.maximumf %378, %379 : vector<1x128xf32>
    %381 = vector.extract_strided_slice %377 {offsets = [2, 0], sizes = [1, 128], strides = [1, 1]} : vector<4x128xf32> to vector<1x128xf32>
    %382 = vector.extract_strided_slice %377 {offsets = [3, 0], sizes = [1, 128], strides = [1, 1]} : vector<4x128xf32> to vector<1x128xf32>
    %383 = arith.maximumf %381, %382 : vector<1x128xf32>
    %384 = tpu.concatenate %380, %383 in 0 : vector<1x128xf32>, vector<1x128xf32> -> vector<2x128xf32>
    %c5_391 = arith.constant 5 : index
    %c1_392 = arith.constant 1 : index
    %c0_393 = arith.constant 0 : index
    %385 = vector.load %arg17[%c5_391, %c1_392, %c0_393] : memref<8x4x128xf32, #tpu.memory_space<vmem>>, vector<1x2x128xf32>
    %386 = vector.shape_cast %385 : vector<1x2x128xf32> to vector<2x128xf32>
    %387 = vector.shape_cast %384 : vector<2x128xf32> to vector<1x2x128xf32>
    tpu.vector_store %arg17[%c5_391, %c1_392, %c0_393], %387 {strides = array<i32>} : memref<8x4x128xf32, #tpu.memory_space<vmem>>, vector<1x2x128xf32>,
    %388 = vector.extract_strided_slice %348 {offsets = [24, 0], sizes = [4, 128], strides = [1, 1]} : vector<32x128xf32> to vector<4x128xf32>
    %389 = vector.extract_strided_slice %348 {offsets = [28, 0], sizes = [4, 128], strides = [1, 1]} : vector<32x128xf32> to vector<4x128xf32>
    %390 = arith.maximumf %388, %389 : vector<4x128xf32>
    %391 = vector.extract_strided_slice %390 {offsets = [0, 0], sizes = [1, 128], strides = [1, 1]} : vector<4x128xf32> to vector<1x128xf32>
    %392 = vector.extract_strided_slice %390 {offsets = [1, 0], sizes = [1, 128], strides = [1, 1]} : vector<4x128xf32> to vector<1x128xf32>
    %393 = arith.maximumf %391, %392 : vector<1x128xf32>
    %394 = vector.extract_strided_slice %390 {offsets = [2, 0], sizes = [1, 128], strides = [1, 1]} : vector<4x128xf32> to vector<1x128xf32>
    %395 = vector.extract_strided_slice %390 {offsets = [3, 0], sizes = [1, 128], strides = [1, 1]} : vector<4x128xf32> to vector<1x128xf32>
    %396 = arith.maximumf %394, %395 : vector<1x128xf32>
    %397 = tpu.concatenate %393, %396 in 0 : vector<1x128xf32>, vector<1x128xf32> -> vector<2x128xf32>
    %c6_394 = arith.constant 6 : index
    %c1_395 = arith.constant 1 : index
    %c0_396 = arith.constant 0 : index
    %398 = vector.load %arg17[%c6_394, %c1_395, %c0_396] : memref<8x4x128xf32, #tpu.memory_space<vmem>>, vector<1x2x128xf32>
    %399 = vector.shape_cast %398 : vector<1x2x128xf32> to vector<2x128xf32>
    %400 = vector.shape_cast %397 : vector<2x128xf32> to vector<1x2x128xf32>
    tpu.vector_store %arg17[%c6_394, %c1_395, %c0_396], %400 {strides = array<i32>} : memref<8x4x128xf32, #tpu.memory_space<vmem>>, vector<1x2x128xf32>,
    %c0_397 = arith.constant 0 : index
    %c0_398 = arith.constant 0 : index
    %c0_399 = arith.constant 0 : index
    %401 = vector.load %arg17[%c0_397, %c0_398, %c0_399] : memref<8x4x128xf32, #tpu.memory_space<vmem>>, vector<1x2x128xf32>
    %402 = vector.shape_cast %401 : vector<1x2x128xf32> to vector<2x128xf32>
    %403 = arith.truncf %402 : vector<2x128xf32> to vector<2x128xbf16>
    %c0_400 = arith.constant 0 : index
    %c0_401 = arith.constant 0 : index
    %404 = vector.load %arg18[%c0_400, %c0_401] : memref<8x1152xbf16, #tpu.memory_space<vmem>>, vector<2x128xbf16>
    tpu.vector_store %arg18[%c0_400, %c0_401], %403 {strides = array<i32>} : memref<8x1152xbf16, #tpu.memory_space<vmem>>, vector<2x128xbf16>,
    %c0_402 = arith.constant 0 : index
    %c1_403 = arith.constant 1 : index
    %c0_404 = arith.constant 0 : index
    %405 = vector.load %arg17[%c0_402, %c1_403, %c0_404] : memref<8x4x128xf32, #tpu.memory_space<vmem>>, vector<1x2x128xf32>
    %406 = vector.shape_cast %405 : vector<1x2x128xf32> to vector<2x128xf32>
    %407 = arith.truncf %406 : vector<2x128xf32> to vector<2x128xbf16>
    %c0_405 = arith.constant 0 : index
    %c128_406 = arith.constant 128 : index
    %408 = vector.load %arg18[%c0_405, %c128_406] : memref<8x1152xbf16, #tpu.memory_space<vmem>>, vector<2x128xbf16>
    tpu.vector_store %arg18[%c0_405, %c128_406], %407 {strides = array<i32>} : memref<8x1152xbf16, #tpu.memory_space<vmem>>, vector<2x128xbf16>,
    %c0_407 = arith.constant 0 : index
    %c2_408 = arith.constant 2 : index
    %c0_409 = arith.constant 0 : index
    %409 = vector.load %arg17[%c0_407, %c2_408, %c0_409] : memref<8x4x128xf32, #tpu.memory_space<vmem>>, vector<1x2x128xf32>
    %410 = vector.shape_cast %409 : vector<1x2x128xf32> to vector<2x128xf32>
    %411 = arith.truncf %410 : vector<2x128xf32> to vector<2x128xbf16>
    %c0_410 = arith.constant 0 : index
    %c256_411 = arith.constant 256 : index
    %412 = vector.load %arg18[%c0_410, %c256_411] : memref<8x1152xbf16, #tpu.memory_space<vmem>>, vector<2x128xbf16>
    tpu.vector_store %arg18[%c0_410, %c256_411], %411 {strides = array<i32>} : memref<8x1152xbf16, #tpu.memory_space<vmem>>, vector<2x128xbf16>,
    %c1_412 = arith.constant 1 : index
    %c0_413 = arith.constant 0 : index
    %c0_414 = arith.constant 0 : index
    %413 = vector.load %arg17[%c1_412, %c0_413, %c0_414] : memref<8x4x128xf32, #tpu.memory_space<vmem>>, vector<1x2x128xf32>
    %414 = vector.shape_cast %413 : vector<1x2x128xf32> to vector<2x128xf32>
    %415 = arith.truncf %414 : vector<2x128xf32> to vector<2x128xbf16>
    %c0_415 = arith.constant 0 : index
    %c384_416 = arith.constant 384 : index
    %416 = vector.load %arg18[%c0_415, %c384_416] : memref<8x1152xbf16, #tpu.memory_space<vmem>>, vector<2x128xbf16>
    tpu.vector_store %arg18[%c0_415, %c384_416], %415 {strides = array<i32>} : memref<8x1152xbf16, #tpu.memory_space<vmem>>, vector<2x128xbf16>,
    %c1_417 = arith.constant 1 : index
    %c1_418 = arith.constant 1 : index
    %c0_419 = arith.constant 0 : index
    %417 = vector.load %arg17[%c1_417, %c1_418, %c0_419] : memref<8x4x128xf32, #tpu.memory_space<vmem>>, vector<1x2x128xf32>
    %418 = vector.shape_cast %417 : vector<1x2x128xf32> to vector<2x128xf32>
    %419 = arith.truncf %418 : vector<2x128xf32> to vector<2x128xbf16>
    %c0_420 = arith.constant 0 : index
    %c512_421 = arith.constant 512 : index
    %420 = vector.load %arg18[%c0_420, %c512_421] : memref<8x1152xbf16, #tpu.memory_space<vmem>>, vector<2x128xbf16>
    tpu.vector_store %arg18[%c0_420, %c512_421], %419 {strides = array<i32>} : memref<8x1152xbf16, #tpu.memory_space<vmem>>, vector<2x128xbf16>,
    %c1_422 = arith.constant 1 : index
    %c2_423 = arith.constant 2 : index
    %c0_424 = arith.constant 0 : index
    %421 = vector.load %arg17[%c1_422, %c2_423, %c0_424] : memref<8x4x128xf32, #tpu.memory_space<vmem>>, vector<1x2x128xf32>
    %422 = vector.shape_cast %421 : vector<1x2x128xf32> to vector<2x128xf32>
    %423 = arith.truncf %422 : vector<2x128xf32> to vector<2x128xbf16>
    %c0_425 = arith.constant 0 : index
    %c640 = arith.constant 640 : index
    %424 = vector.load %arg18[%c0_425, %c640] : memref<8x1152xbf16, #tpu.memory_space<vmem>>, vector<2x128xbf16>
    tpu.vector_store %arg18[%c0_425, %c640], %423 {strides = array<i32>} : memref<8x1152xbf16, #tpu.memory_space<vmem>>, vector<2x128xbf16>,
    %c2_426 = arith.constant 2 : index
    %c0_427 = arith.constant 0 : index
    %c0_428 = arith.constant 0 : index
    %425 = vector.load %arg17[%c2_426, %c0_427, %c0_428] : memref<8x4x128xf32, #tpu.memory_space<vmem>>, vector<1x2x128xf32>
    %426 = vector.shape_cast %425 : vector<1x2x128xf32> to vector<2x128xf32>
    %427 = arith.truncf %426 : vector<2x128xf32> to vector<2x128xbf16>
    %c0_429 = arith.constant 0 : index
    %c768 = arith.constant 768 : index
    %428 = vector.load %arg18[%c0_429, %c768] : memref<8x1152xbf16, #tpu.memory_space<vmem>>, vector<2x128xbf16>
    tpu.vector_store %arg18[%c0_429, %c768], %427 {strides = array<i32>} : memref<8x1152xbf16, #tpu.memory_space<vmem>>, vector<2x128xbf16>,
    %c2_430 = arith.constant 2 : index
    %c1_431 = arith.constant 1 : index
    %c0_432 = arith.constant 0 : index
    %429 = vector.load %arg17[%c2_430, %c1_431, %c0_432] : memref<8x4x128xf32, #tpu.memory_space<vmem>>, vector<1x2x128xf32>
    %430 = vector.shape_cast %429 : vector<1x2x128xf32> to vector<2x128xf32>
    %431 = arith.truncf %430 : vector<2x128xf32> to vector<2x128xbf16>
    %c0_433 = arith.constant 0 : index
    %c896 = arith.constant 896 : index
    %432 = vector.load %arg18[%c0_433, %c896] : memref<8x1152xbf16, #tpu.memory_space<vmem>>, vector<2x128xbf16>
    tpu.vector_store %arg18[%c0_433, %c896], %431 {strides = array<i32>} : memref<8x1152xbf16, #tpu.memory_space<vmem>>, vector<2x128xbf16>,
    %c2_434 = arith.constant 2 : index
    %c2_435 = arith.constant 2 : index
    %c0_436 = arith.constant 0 : index
    %433 = vector.load %arg17[%c2_434, %c2_435, %c0_436] : memref<8x4x128xf32, #tpu.memory_space<vmem>>, vector<1x2x128xf32>
    %434 = vector.shape_cast %433 : vector<1x2x128xf32> to vector<2x128xf32>
    %435 = arith.truncf %434 : vector<2x128xf32> to vector<2x128xbf16>
    %c0_437 = arith.constant 0 : index
    %c1024 = arith.constant 1024 : index
    %436 = vector.load %arg18[%c0_437, %c1024] : memref<8x1152xbf16, #tpu.memory_space<vmem>>, vector<2x128xbf16>
    tpu.vector_store %arg18[%c0_437, %c1024], %435 {strides = array<i32>} : memref<8x1152xbf16, #tpu.memory_space<vmem>>, vector<2x128xbf16>,
    %c1_438 = arith.constant 1 : index
    %c0_439 = arith.constant 0 : index
    %c0_440 = arith.constant 0 : index
    %437 = vector.load %arg17[%c1_438, %c0_439, %c0_440] : memref<8x4x128xf32, #tpu.memory_space<vmem>>, vector<1x2x128xf32>
    %438 = vector.shape_cast %437 : vector<1x2x128xf32> to vector<2x128xf32>
    %439 = arith.truncf %438 : vector<2x128xf32> to vector<2x128xbf16>
    %c2_441 = arith.constant 2 : index
    %c0_442 = arith.constant 0 : index
    %440 = vector.load %arg18[%c2_441, %c0_442] : memref<8x1152xbf16, #tpu.memory_space<vmem>>, vector<2x128xbf16>
    tpu.vector_store %arg18[%c2_441, %c0_442], %439 {strides = array<i32>} : memref<8x1152xbf16, #tpu.memory_space<vmem>>, vector<2x128xbf16>,
    %c1_443 = arith.constant 1 : index
    %c1_444 = arith.constant 1 : index
    %c0_445 = arith.constant 0 : index
    %441 = vector.load %arg17[%c1_443, %c1_444, %c0_445] : memref<8x4x128xf32, #tpu.memory_space<vmem>>, vector<1x2x128xf32>
    %442 = vector.shape_cast %441 : vector<1x2x128xf32> to vector<2x128xf32>
    %443 = arith.truncf %442 : vector<2x128xf32> to vector<2x128xbf16>
    %c2_446 = arith.constant 2 : index
    %c128_447 = arith.constant 128 : index
    %444 = vector.load %arg18[%c2_446, %c128_447] : memref<8x1152xbf16, #tpu.memory_space<vmem>>, vector<2x128xbf16>
    tpu.vector_store %arg18[%c2_446, %c128_447], %443 {strides = array<i32>} : memref<8x1152xbf16, #tpu.memory_space<vmem>>, vector<2x128xbf16>,
    %c1_448 = arith.constant 1 : index
    %c2_449 = arith.constant 2 : index
    %c0_450 = arith.constant 0 : index
    %445 = vector.load %arg17[%c1_448, %c2_449, %c0_450] : memref<8x4x128xf32, #tpu.memory_space<vmem>>, vector<1x2x128xf32>
    %446 = vector.shape_cast %445 : vector<1x2x128xf32> to vector<2x128xf32>
    %447 = arith.truncf %446 : vector<2x128xf32> to vector<2x128xbf16>
    %c2_451 = arith.constant 2 : index
    %c256_452 = arith.constant 256 : index
    %448 = vector.load %arg18[%c2_451, %c256_452] : memref<8x1152xbf16, #tpu.memory_space<vmem>>, vector<2x128xbf16>
    tpu.vector_store %arg18[%c2_451, %c256_452], %447 {strides = array<i32>} : memref<8x1152xbf16, #tpu.memory_space<vmem>>, vector<2x128xbf16>,
    %c2_453 = arith.constant 2 : index
    %c0_454 = arith.constant 0 : index
    %c0_455 = arith.constant 0 : index
    %449 = vector.load %arg17[%c2_453, %c0_454, %c0_455] : memref<8x4x128xf32, #tpu.memory_space<vmem>>, vector<1x2x128xf32>
    %450 = vector.shape_cast %449 : vector<1x2x128xf32> to vector<2x128xf32>
    %451 = arith.truncf %450 : vector<2x128xf32> to vector<2x128xbf16>
    %c2_456 = arith.constant 2 : index
    %c384_457 = arith.constant 384 : index
    %452 = vector.load %arg18[%c2_456, %c384_457] : memref<8x1152xbf16, #tpu.memory_space<vmem>>, vector<2x128xbf16>
    tpu.vector_store %arg18[%c2_456, %c384_457], %451 {strides = array<i32>} : memref<8x1152xbf16, #tpu.memory_space<vmem>>, vector<2x128xbf16>,
    %c2_458 = arith.constant 2 : index
    %c1_459 = arith.constant 1 : index
    %c0_460 = arith.constant 0 : index
    %453 = vector.load %arg17[%c2_458, %c1_459, %c0_460] : memref<8x4x128xf32, #tpu.memory_space<vmem>>, vector<1x2x128xf32>
    %454 = vector.shape_cast %453 : vector<1x2x128xf32> to vector<2x128xf32>
    %455 = arith.truncf %454 : vector<2x128xf32> to vector<2x128xbf16>
    %c2_461 = arith.constant 2 : index
    %c512_462 = arith.constant 512 : index
    %456 = vector.load %arg18[%c2_461, %c512_462] : memref<8x1152xbf16, #tpu.memory_space<vmem>>, vector<2x128xbf16>
    tpu.vector_store %arg18[%c2_461, %c512_462], %455 {strides = array<i32>} : memref<8x1152xbf16, #tpu.memory_space<vmem>>, vector<2x128xbf16>,
    %c2_463 = arith.constant 2 : index
    %c2_464 = arith.constant 2 : index
    %c0_465 = arith.constant 0 : index
    %457 = vector.load %arg17[%c2_463, %c2_464, %c0_465] : memref<8x4x128xf32, #tpu.memory_space<vmem>>, vector<1x2x128xf32>
    %458 = vector.shape_cast %457 : vector<1x2x128xf32> to vector<2x128xf32>
    %459 = arith.truncf %458 : vector<2x128xf32> to vector<2x128xbf16>
    %c2_466 = arith.constant 2 : index
    %c640_467 = arith.constant 640 : index
    %460 = vector.load %arg18[%c2_466, %c640_467] : memref<8x1152xbf16, #tpu.memory_space<vmem>>, vector<2x128xbf16>
    tpu.vector_store %arg18[%c2_466, %c640_467], %459 {strides = array<i32>} : memref<8x1152xbf16, #tpu.memory_space<vmem>>, vector<2x128xbf16>,
    %c3_468 = arith.constant 3 : index
    %c0_469 = arith.constant 0 : index
    %c0_470 = arith.constant 0 : index
    %461 = vector.load %arg17[%c3_468, %c0_469, %c0_470] : memref<8x4x128xf32, #tpu.memory_space<vmem>>, vector<1x2x128xf32>
    %462 = vector.shape_cast %461 : vector<1x2x128xf32> to vector<2x128xf32>
    %463 = arith.truncf %462 : vector<2x128xf32> to vector<2x128xbf16>
    %c2_471 = arith.constant 2 : index
    %c768_472 = arith.constant 768 : index
    %464 = vector.load %arg18[%c2_471, %c768_472] : memref<8x1152xbf16, #tpu.memory_space<vmem>>, vector<2x128xbf16>
    tpu.vector_store %arg18[%c2_471, %c768_472], %463 {strides = array<i32>} : memref<8x1152xbf16, #tpu.memory_space<vmem>>, vector<2x128xbf16>,
    %c3_473 = arith.constant 3 : index
    %c1_474 = arith.constant 1 : index
    %c0_475 = arith.constant 0 : index
    %465 = vector.load %arg17[%c3_473, %c1_474, %c0_475] : memref<8x4x128xf32, #tpu.memory_space<vmem>>, vector<1x2x128xf32>
    %466 = vector.shape_cast %465 : vector<1x2x128xf32> to vector<2x128xf32>
    %467 = arith.truncf %466 : vector<2x128xf32> to vector<2x128xbf16>
    %c2_476 = arith.constant 2 : index
    %c896_477 = arith.constant 896 : index
    %468 = vector.load %arg18[%c2_476, %c896_477] : memref<8x1152xbf16, #tpu.memory_space<vmem>>, vector<2x128xbf16>
    tpu.vector_store %arg18[%c2_476, %c896_477], %467 {strides = array<i32>} : memref<8x1152xbf16, #tpu.memory_space<vmem>>, vector<2x128xbf16>,
    %c3_478 = arith.constant 3 : index
    %c2_479 = arith.constant 2 : index
    %c0_480 = arith.constant 0 : index
    %469 = vector.load %arg17[%c3_478, %c2_479, %c0_480] : memref<8x4x128xf32, #tpu.memory_space<vmem>>, vector<1x2x128xf32>
    %470 = vector.shape_cast %469 : vector<1x2x128xf32> to vector<2x128xf32>
    %471 = arith.truncf %470 : vector<2x128xf32> to vector<2x128xbf16>
    %c2_481 = arith.constant 2 : index
    %c1024_482 = arith.constant 1024 : index
    %472 = vector.load %arg18[%c2_481, %c1024_482] : memref<8x1152xbf16, #tpu.memory_space<vmem>>, vector<2x128xbf16>
    tpu.vector_store %arg18[%c2_481, %c1024_482], %471 {strides = array<i32>} : memref<8x1152xbf16, #tpu.memory_space<vmem>>, vector<2x128xbf16>,
    %c4_483 = arith.constant 4 : index
    %c0_484 = arith.constant 0 : index
    %c0_485 = arith.constant 0 : index
    %473 = vector.load %arg17[%c4_483, %c0_484, %c0_485] : memref<8x4x128xf32, #tpu.memory_space<vmem>>, vector<1x2x128xf32>
    %474 = vector.shape_cast %473 : vector<1x2x128xf32> to vector<2x128xf32>
    %475 = arith.truncf %474 : vector<2x128xf32> to vector<2x128xbf16>
    %c4_486 = arith.constant 4 : index
    %c0_487 = arith.constant 0 : index
    %476 = vector.load %arg18[%c4_486, %c0_487] : memref<8x1152xbf16, #tpu.memory_space<vmem>>, vector<2x128xbf16>
    tpu.vector_store %arg18[%c4_486, %c0_487], %475 {strides = array<i32>} : memref<8x1152xbf16, #tpu.memory_space<vmem>>, vector<2x128xbf16>,
    %c4_488 = arith.constant 4 : index
    %c1_489 = arith.constant 1 : index
    %c0_490 = arith.constant 0 : index
    %477 = vector.load %arg17[%c4_488, %c1_489, %c0_490] : memref<8x4x128xf32, #tpu.memory_space<vmem>>, vector<1x2x128xf32>
    %478 = vector.shape_cast %477 : vector<1x2x128xf32> to vector<2x128xf32>
    %479 = arith.truncf %478 : vector<2x128xf32> to vector<2x128xbf16>
    %c4_491 = arith.constant 4 : index
    %c128_492 = arith.constant 128 : index
    %480 = vector.load %arg18[%c4_491, %c128_492] : memref<8x1152xbf16, #tpu.memory_space<vmem>>, vector<2x128xbf16>
    tpu.vector_store %arg18[%c4_491, %c128_492], %479 {strides = array<i32>} : memref<8x1152xbf16, #tpu.memory_space<vmem>>, vector<2x128xbf16>,
    %c4_493 = arith.constant 4 : index
    %c2_494 = arith.constant 2 : index
    %c0_495 = arith.constant 0 : index
    %481 = vector.load %arg17[%c4_493, %c2_494, %c0_495] : memref<8x4x128xf32, #tpu.memory_space<vmem>>, vector<1x2x128xf32>
    %482 = vector.shape_cast %481 : vector<1x2x128xf32> to vector<2x128xf32>
    %483 = arith.truncf %482 : vector<2x128xf32> to vector<2x128xbf16>
    %c4_496 = arith.constant 4 : index
    %c256_497 = arith.constant 256 : index
    %484 = vector.load %arg18[%c4_496, %c256_497] : memref<8x1152xbf16, #tpu.memory_space<vmem>>, vector<2x128xbf16>
    tpu.vector_store %arg18[%c4_496, %c256_497], %483 {strides = array<i32>} : memref<8x1152xbf16, #tpu.memory_space<vmem>>, vector<2x128xbf16>,
    %c5_498 = arith.constant 5 : index
    %c0_499 = arith.constant 0 : index
    %c0_500 = arith.constant 0 : index
    %485 = vector.load %arg17[%c5_498, %c0_499, %c0_500] : memref<8x4x128xf32, #tpu.memory_space<vmem>>, vector<1x2x128xf32>
    %486 = vector.shape_cast %485 : vector<1x2x128xf32> to vector<2x128xf32>
    %487 = arith.truncf %486 : vector<2x128xf32> to vector<2x128xbf16>
    %c4_501 = arith.constant 4 : index
    %c384_502 = arith.constant 384 : index
    %488 = vector.load %arg18[%c4_501, %c384_502] : memref<8x1152xbf16, #tpu.memory_space<vmem>>, vector<2x128xbf16>
    tpu.vector_store %arg18[%c4_501, %c384_502], %487 {strides = array<i32>} : memref<8x1152xbf16, #tpu.memory_space<vmem>>, vector<2x128xbf16>,
    %c5_503 = arith.constant 5 : index
    %c1_504 = arith.constant 1 : index
    %c0_505 = arith.constant 0 : index
    %489 = vector.load %arg17[%c5_503, %c1_504, %c0_505] : memref<8x4x128xf32, #tpu.memory_space<vmem>>, vector<1x2x128xf32>
    %490 = vector.shape_cast %489 : vector<1x2x128xf32> to vector<2x128xf32>
    %491 = arith.truncf %490 : vector<2x128xf32> to vector<2x128xbf16>
    %c4_506 = arith.constant 4 : index
    %c512_507 = arith.constant 512 : index
    %492 = vector.load %arg18[%c4_506, %c512_507] : memref<8x1152xbf16, #tpu.memory_space<vmem>>, vector<2x128xbf16>
    tpu.vector_store %arg18[%c4_506, %c512_507], %491 {strides = array<i32>} : memref<8x1152xbf16, #tpu.memory_space<vmem>>, vector<2x128xbf16>,
    %c5_508 = arith.constant 5 : index
    %c2_509 = arith.constant 2 : index
    %c0_510 = arith.constant 0 : index
    %493 = vector.load %arg17[%c5_508, %c2_509, %c0_510] : memref<8x4x128xf32, #tpu.memory_space<vmem>>, vector<1x2x128xf32>
    %494 = vector.shape_cast %493 : vector<1x2x128xf32> to vector<2x128xf32>
    %495 = arith.truncf %494 : vector<2x128xf32> to vector<2x128xbf16>
    %c4_511 = arith.constant 4 : index
    %c640_512 = arith.constant 640 : index
    %496 = vector.load %arg18[%c4_511, %c640_512] : memref<8x1152xbf16, #tpu.memory_space<vmem>>, vector<2x128xbf16>
    tpu.vector_store %arg18[%c4_511, %c640_512], %495 {strides = array<i32>} : memref<8x1152xbf16, #tpu.memory_space<vmem>>, vector<2x128xbf16>,
    %c6_513 = arith.constant 6 : index
    %c0_514 = arith.constant 0 : index
    %c0_515 = arith.constant 0 : index
    %497 = vector.load %arg17[%c6_513, %c0_514, %c0_515] : memref<8x4x128xf32, #tpu.memory_space<vmem>>, vector<1x2x128xf32>
    %498 = vector.shape_cast %497 : vector<1x2x128xf32> to vector<2x128xf32>
    %499 = arith.truncf %498 : vector<2x128xf32> to vector<2x128xbf16>
    %c4_516 = arith.constant 4 : index
    %c768_517 = arith.constant 768 : index
    %500 = vector.load %arg18[%c4_516, %c768_517] : memref<8x1152xbf16, #tpu.memory_space<vmem>>, vector<2x128xbf16>
    tpu.vector_store %arg18[%c4_516, %c768_517], %499 {strides = array<i32>} : memref<8x1152xbf16, #tpu.memory_space<vmem>>, vector<2x128xbf16>,
    %c6_518 = arith.constant 6 : index
    %c1_519 = arith.constant 1 : index
    %c0_520 = arith.constant 0 : index
    %501 = vector.load %arg17[%c6_518, %c1_519, %c0_520] : memref<8x4x128xf32, #tpu.memory_space<vmem>>, vector<1x2x128xf32>
    %502 = vector.shape_cast %501 : vector<1x2x128xf32> to vector<2x128xf32>
    %503 = arith.truncf %502 : vector<2x128xf32> to vector<2x128xbf16>
    %c4_521 = arith.constant 4 : index
    %c896_522 = arith.constant 896 : index
    %504 = vector.load %arg18[%c4_521, %c896_522] : memref<8x1152xbf16, #tpu.memory_space<vmem>>, vector<2x128xbf16>
    tpu.vector_store %arg18[%c4_521, %c896_522], %503 {strides = array<i32>} : memref<8x1152xbf16, #tpu.memory_space<vmem>>, vector<2x128xbf16>,
    %c6_523 = arith.constant 6 : index
    %c2_524 = arith.constant 2 : index
    %c0_525 = arith.constant 0 : index
    %505 = vector.load %arg17[%c6_523, %c2_524, %c0_525] : memref<8x4x128xf32, #tpu.memory_space<vmem>>, vector<1x2x128xf32>
    %506 = vector.shape_cast %505 : vector<1x2x128xf32> to vector<2x128xf32>
    %507 = arith.truncf %506 : vector<2x128xf32> to vector<2x128xbf16>
    %c4_526 = arith.constant 4 : index
    %c1024_527 = arith.constant 1024 : index
    %508 = vector.load %arg18[%c4_526, %c1024_527] : memref<8x1152xbf16, #tpu.memory_space<vmem>>, vector<2x128xbf16>
    tpu.vector_store %arg18[%c4_526, %c1024_527], %507 {strides = array<i32>} : memref<8x1152xbf16, #tpu.memory_space<vmem>>, vector<2x128xbf16>,
    %c5_528 = arith.constant 5 : index
    %c0_529 = arith.constant 0 : index
    %c0_530 = arith.constant 0 : index
    %509 = vector.load %arg17[%c5_528, %c0_529, %c0_530] : memref<8x4x128xf32, #tpu.memory_space<vmem>>, vector<1x2x128xf32>
    %510 = vector.shape_cast %509 : vector<1x2x128xf32> to vector<2x128xf32>
    %511 = arith.truncf %510 : vector<2x128xf32> to vector<2x128xbf16>
    %c6_531 = arith.constant 6 : index
    %c0_532 = arith.constant 0 : index
    %512 = vector.load %arg18[%c6_531, %c0_532] : memref<8x1152xbf16, #tpu.memory_space<vmem>>, vector<2x128xbf16>
    tpu.vector_store %arg18[%c6_531, %c0_532], %511 {strides = array<i32>} : memref<8x1152xbf16, #tpu.memory_space<vmem>>, vector<2x128xbf16>,
    %c5_533 = arith.constant 5 : index
    %c1_534 = arith.constant 1 : index
    %c0_535 = arith.constant 0 : index
    %513 = vector.load %arg17[%c5_533, %c1_534, %c0_535] : memref<8x4x128xf32, #tpu.memory_space<vmem>>, vector<1x2x128xf32>
    %514 = vector.shape_cast %513 : vector<1x2x128xf32> to vector<2x128xf32>
    %515 = arith.truncf %514 : vector<2x128xf32> to vector<2x128xbf16>
    %c6_536 = arith.constant 6 : index
    %c128_537 = arith.constant 128 : index
    %516 = vector.load %arg18[%c6_536, %c128_537] : memref<8x1152xbf16, #tpu.memory_space<vmem>>, vector<2x128xbf16>
    tpu.vector_store %arg18[%c6_536, %c128_537], %515 {strides = array<i32>} : memref<8x1152xbf16, #tpu.memory_space<vmem>>, vector<2x128xbf16>,
    %c5_538 = arith.constant 5 : index
    %c2_539 = arith.constant 2 : index
    %c0_540 = arith.constant 0 : index
    %517 = vector.load %arg17[%c5_538, %c2_539, %c0_540] : memref<8x4x128xf32, #tpu.memory_space<vmem>>, vector<1x2x128xf32>
    %518 = vector.shape_cast %517 : vector<1x2x128xf32> to vector<2x128xf32>
    %519 = arith.truncf %518 : vector<2x128xf32> to vector<2x128xbf16>
    %c6_541 = arith.constant 6 : index
    %c256_542 = arith.constant 256 : index
    %520 = vector.load %arg18[%c6_541, %c256_542] : memref<8x1152xbf16, #tpu.memory_space<vmem>>, vector<2x128xbf16>
    tpu.vector_store %arg18[%c6_541, %c256_542], %519 {strides = array<i32>} : memref<8x1152xbf16, #tpu.memory_space<vmem>>, vector<2x128xbf16>,
    %c6_543 = arith.constant 6 : index
    %c0_544 = arith.constant 0 : index
    %c0_545 = arith.constant 0 : index
    %521 = vector.load %arg17[%c6_543, %c0_544, %c0_545] : memref<8x4x128xf32, #tpu.memory_space<vmem>>, vector<1x2x128xf32>
    %522 = vector.shape_cast %521 : vector<1x2x128xf32> to vector<2x128xf32>
    %523 = arith.truncf %522 : vector<2x128xf32> to vector<2x128xbf16>
    %c6_546 = arith.constant 6 : index
    %c384_547 = arith.constant 384 : index
    %524 = vector.load %arg18[%c6_546, %c384_547] : memref<8x1152xbf16, #tpu.memory_space<vmem>>, vector<2x128xbf16>
    tpu.vector_store %arg18[%c6_546, %c384_547], %523 {strides = array<i32>} : memref<8x1152xbf16, #tpu.memory_space<vmem>>, vector<2x128xbf16>,
    %c6_548 = arith.constant 6 : index
    %c1_549 = arith.constant 1 : index
    %c0_550 = arith.constant 0 : index
    %525 = vector.load %arg17[%c6_548, %c1_549, %c0_550] : memref<8x4x128xf32, #tpu.memory_space<vmem>>, vector<1x2x128xf32>
    %526 = vector.shape_cast %525 : vector<1x2x128xf32> to vector<2x128xf32>
    %527 = arith.truncf %526 : vector<2x128xf32> to vector<2x128xbf16>
    %c6_551 = arith.constant 6 : index
    %c512_552 = arith.constant 512 : index
    %528 = vector.load %arg18[%c6_551, %c512_552] : memref<8x1152xbf16, #tpu.memory_space<vmem>>, vector<2x128xbf16>
    tpu.vector_store %arg18[%c6_551, %c512_552], %527 {strides = array<i32>} : memref<8x1152xbf16, #tpu.memory_space<vmem>>, vector<2x128xbf16>,
    %c6_553 = arith.constant 6 : index
    %c2_554 = arith.constant 2 : index
    %c0_555 = arith.constant 0 : index
    %529 = vector.load %arg17[%c6_553, %c2_554, %c0_555] : memref<8x4x128xf32, #tpu.memory_space<vmem>>, vector<1x2x128xf32>
    %530 = vector.shape_cast %529 : vector<1x2x128xf32> to vector<2x128xf32>
    %531 = arith.truncf %530 : vector<2x128xf32> to vector<2x128xbf16>
    %c6_556 = arith.constant 6 : index
    %c640_557 = arith.constant 640 : index
    %532 = vector.load %arg18[%c6_556, %c640_557] : memref<8x1152xbf16, #tpu.memory_space<vmem>>, vector<2x128xbf16>
    tpu.vector_store %arg18[%c6_556, %c640_557], %531 {strides = array<i32>} : memref<8x1152xbf16, #tpu.memory_space<vmem>>, vector<2x128xbf16>,
    %c7_558 = arith.constant 7 : index
    %c0_559 = arith.constant 0 : index
    %c0_560 = arith.constant 0 : index
    %533 = vector.load %arg17[%c7_558, %c0_559, %c0_560] : memref<8x4x128xf32, #tpu.memory_space<vmem>>, vector<1x2x128xf32>
    %534 = vector.shape_cast %533 : vector<1x2x128xf32> to vector<2x128xf32>
    %535 = arith.truncf %534 : vector<2x128xf32> to vector<2x128xbf16>
    %c6_561 = arith.constant 6 : index
    %c768_562 = arith.constant 768 : index
    %536 = vector.load %arg18[%c6_561, %c768_562] : memref<8x1152xbf16, #tpu.memory_space<vmem>>, vector<2x128xbf16>
    tpu.vector_store %arg18[%c6_561, %c768_562], %535 {strides = array<i32>} : memref<8x1152xbf16, #tpu.memory_space<vmem>>, vector<2x128xbf16>,
    %c7_563 = arith.constant 7 : index
    %c1_564 = arith.constant 1 : index
    %c0_565 = arith.constant 0 : index
    %537 = vector.load %arg17[%c7_563, %c1_564, %c0_565] : memref<8x4x128xf32, #tpu.memory_space<vmem>>, vector<1x2x128xf32>
    %538 = vector.shape_cast %537 : vector<1x2x128xf32> to vector<2x128xf32>
    %539 = arith.truncf %538 : vector<2x128xf32> to vector<2x128xbf16>
    %c6_566 = arith.constant 6 : index
    %c896_567 = arith.constant 896 : index
    %540 = vector.load %arg18[%c6_566, %c896_567] : memref<8x1152xbf16, #tpu.memory_space<vmem>>, vector<2x128xbf16>
    tpu.vector_store %arg18[%c6_566, %c896_567], %539 {strides = array<i32>} : memref<8x1152xbf16, #tpu.memory_space<vmem>>, vector<2x128xbf16>,
    %c7_568 = arith.constant 7 : index
    %c2_569 = arith.constant 2 : index
    %c0_570 = arith.constant 0 : index
    %541 = vector.load %arg17[%c7_568, %c2_569, %c0_570] : memref<8x4x128xf32, #tpu.memory_space<vmem>>, vector<1x2x128xf32>
    %542 = vector.shape_cast %541 : vector<1x2x128xf32> to vector<2x128xf32>
    %543 = arith.truncf %542 : vector<2x128xf32> to vector<2x128xbf16>
    %c6_571 = arith.constant 6 : index
    %c1024_572 = arith.constant 1024 : index
    %544 = vector.load %arg18[%c6_571, %c1024_572] : memref<8x1152xbf16, #tpu.memory_space<vmem>>, vector<2x128xbf16>
    tpu.vector_store %arg18[%c6_571, %c1024_572], %543 {strides = array<i32>} : memref<8x1152xbf16, #tpu.memory_space<vmem>>, vector<2x128xbf16>,
    %c0_573 = arith.constant 0 : index
    %c0_574 = arith.constant 0 : index
    %545 = vector.load %arg18[%c0_573, %c0_574] : memref<8x1152xbf16, #tpu.memory_space<vmem>>, vector<8x1152xbf16>
    %c0_575 = arith.constant 0 : index
    %c0_576 = arith.constant 0 : index
    %546 = vector.load %arg6[%c0_575, %c0_576] : memref<1152x512xbf16, #tpu.memory_space<vmem>>, vector<1152x512xbf16>
    %cst_577 = arith.constant dense<0.000000e+00> : vector<8x512xf32>
    %547 = tpu.matmul %545, %546, %cst_577 {dimension_numbers = #tpu.dot_dimension_numbers<[1], [0], [0], [1], [0, 0, 1, 1], [], []>} : vector<8x1152xbf16>, vector<1152x512xbf16>, vector<8x512xf32> -> vector<8x512xf32>
    %c0_578 = arith.constant 0 : index
    %c0_579 = arith.constant 0 : index
    %548 = vector.load %arg7[%c0_578, %c0_579] : memref<1x512xf32, #tpu.memory_space<vmem>>, vector<1x512xf32>
    %549 = vector.broadcast %548 : vector<1x512xf32> to vector<8x512xf32>
    %550 = arith.addf %547, %549 : vector<8x512xf32>
    %cst_580 = arith.constant 0.000000e+00 : f32
    %551 = vector.broadcast %cst_580 : f32 to vector<8x512xf32>
    %552 = arith.maximumf %550, %551 : vector<8x512xf32>
    %553 = vector.extract_strided_slice %552 {offsets = [0, 0], sizes = [4, 512], strides = [1, 1]} : vector<8x512xf32> to vector<4x512xf32>
    %cst_581 = arith.constant dense<0xFF800000> : vector<512xf32>
    %554 = vector.multi_reduction <maximumf>, %553, %cst_581 [0] : vector<4x512xf32> to vector<512xf32>
    %555 = vector.shape_cast %554 : vector<512xf32> to vector<1x512xf32>
    %556 = vector.extract_strided_slice %552 {offsets = [4, 0], sizes = [4, 512], strides = [1, 1]} : vector<8x512xf32> to vector<4x512xf32>
    %cst_582 = arith.constant dense<0xFF800000> : vector<512xf32>
    %557 = vector.multi_reduction <maximumf>, %556, %cst_582 [0] : vector<4x512xf32> to vector<512xf32>
    %558 = vector.shape_cast %557 : vector<512xf32> to vector<1x512xf32>
    %559 = tpu.concatenate %555, %558 in 0 : vector<1x512xf32>, vector<1x512xf32> -> vector<2x512xf32>
    %560 = arith.truncf %559 : vector<2x512xf32> to vector<2x512xbf16>
    %c0_583 = arith.constant 0 : index
    %c0_584 = arith.constant 0 : index
    %561 = vector.load %arg8[%c0_583, %c0_584] : memref<512x512xbf16, #tpu.memory_space<vmem>>, vector<512x512xbf16>
    %cst_585 = arith.constant dense<0.000000e+00> : vector<2x512xf32>
    %562 = tpu.matmul %560, %561, %cst_585 {dimension_numbers = #tpu.dot_dimension_numbers<[1], [0], [0], [1], [0, 0, 1, 1], [], []>} : vector<2x512xbf16>, vector<512x512xbf16>, vector<2x512xf32> -> vector<2x512xf32>
    %c0_586 = arith.constant 0 : index
    %c0_587 = arith.constant 0 : index
    %563 = vector.load %arg9[%c0_586, %c0_587] : memref<1x512xf32, #tpu.memory_space<vmem>>, vector<1x512xf32>
    %564 = vector.broadcast %563 : vector<1x512xf32> to vector<2x512xf32>
    %565 = arith.addf %562, %564 : vector<2x512xf32>
    %cst_588 = arith.constant 0.000000e+00 : f32
    %566 = vector.broadcast %cst_588 : f32 to vector<2x512xf32>
    %567 = arith.maximumf %565, %566 : vector<2x512xf32>
    %568 = arith.truncf %567 : vector<2x512xf32> to vector<2x512xbf16>
    %c0_589 = arith.constant 0 : index
    %c0_590 = arith.constant 0 : index
    %569 = vector.load %arg10[%c0_589, %c0_590] : memref<512x512xbf16, #tpu.memory_space<vmem>>, vector<512x512xbf16>
    %cst_591 = arith.constant dense<0.000000e+00> : vector<2x512xf32>
    %570 = tpu.matmul %568, %569, %cst_591 {dimension_numbers = #tpu.dot_dimension_numbers<[1], [0], [0], [1], [0, 0, 1, 1], [], []>} : vector<2x512xbf16>, vector<512x512xbf16>, vector<2x512xf32> -> vector<2x512xf32>
    %c0_592 = arith.constant 0 : index
    %c0_593 = arith.constant 0 : index
    %571 = vector.load %arg11[%c0_592, %c0_593] : memref<1x512xf32, #tpu.memory_space<vmem>>, vector<1x512xf32>
    %572 = vector.broadcast %571 : vector<1x512xf32> to vector<2x512xf32>
    %573 = arith.addf %570, %572 : vector<2x512xf32>
    %cst_594 = arith.constant 0.000000e+00 : f32
    %574 = vector.broadcast %cst_594 : f32 to vector<2x512xf32>
    %575 = arith.maximumf %573, %574 : vector<2x512xf32>
    %576 = arith.truncf %575 : vector<2x512xf32> to vector<2x512xbf16>
    %c0_595 = arith.constant 0 : index
    %c0_596 = arith.constant 0 : index
    %577 = vector.load %arg12[%c0_595, %c0_596] : memref<512x10xbf16, #tpu.memory_space<vmem>>, vector<512x10xbf16>
    %cst_597 = arith.constant dense<0.000000e+00> : vector<2x10xf32>
    %578 = tpu.matmul %576, %577, %cst_597 {dimension_numbers = #tpu.dot_dimension_numbers<[1], [0], [0], [1], [0, 0, 1, 1], [], []>} : vector<2x512xbf16>, vector<512x10xbf16>, vector<2x10xf32> -> vector<2x10xf32>
    %c0_598 = arith.constant 0 : index
    %c0_599 = arith.constant 0 : index
    %579 = vector.load %arg13[%c0_598, %c0_599] : memref<1x10xf32, #tpu.memory_space<vmem>>, vector<1x10xf32>
    %580 = vector.broadcast %579 : vector<1x10xf32> to vector<2x10xf32>
    %581 = arith.addf %578, %580 : vector<2x10xf32>
    %cst_600 = arith.constant dense<0xFF800000> : vector<2xf32>
    %582 = vector.multi_reduction <maximumf>, %581, %cst_600 [1] : vector<2x10xf32> to vector<2xf32>
    %583 = vector.shape_cast %582 : vector<2xf32> to vector<2x1xf32>
    %584 = vector.broadcast %583 : vector<2x1xf32> to vector<2x10xf32>
    %585 = arith.subf %581, %584 : vector<2x10xf32>
    %586 = math.exp %585 : vector<2x10xf32>
    %cst_601 = arith.constant dense<0.000000e+00> : vector<2xf32>
    %587 = vector.multi_reduction <add>, %586, %cst_601 [1] : vector<2x10xf32> to vector<2xf32>
    %588 = vector.shape_cast %587 : vector<2xf32> to vector<2x1xf32>
    %589 = tpu.reciprocal %588 {approx = true} : vector<2x1xf32> -> vector<2x1xf32>
    %590 = vector.broadcast %589 : vector<2x1xf32> to vector<2x10xf32>
    %591 = arith.mulf %586, %590 : vector<2x10xf32>
    %c0_602 = arith.constant 0 : index
    %c0_603 = arith.constant 0 : index
    %592 = vector.load %arg14[%c0_602, %c0_603] : memref<2x10xf32, #tpu.memory_space<vmem>>, vector<2x10xf32>
    tpu.vector_store %arg14[%c0_602, %c0_603], %591 {strides = array<i32>} : memref<2x10xf32, #tpu.memory_space<vmem>>, vector<2x10xf32>,
    return
  }
  func.func @transform_0(%arg0: i32) -> (i32, i32) {
    %c0_i32 = arith.constant 0 : i32
    %c0_i32_0 = arith.constant 0 : i32
    %c0_i32_1 = arith.constant 0 : i32
    return %c0_i32, %c0_i32_0 : i32, i32
  }
  func.func @transform_1(%arg0: i32) -> (i32, i32) {
    %c0_i32 = arith.constant 0 : i32
    %c0_i32_0 = arith.constant 0 : i32
    %c0_i32_1 = arith.constant 0 : i32
    return %c0_i32, %c0_i32_0 : i32, i32
  }
  func.func @transform_2(%arg0: i32) -> (i32, i32) {
    %c0_i32 = arith.constant 0 : i32
    %c0_i32_0 = arith.constant 0 : i32
    %c0_i32_1 = arith.constant 0 : i32
    return %c0_i32, %c0_i32_0 : i32, i32
  }
  func.func @transform_3(%arg0: i32) -> (i32, i32) {
    %c0_i32 = arith.constant 0 : i32
    %c0_i32_0 = arith.constant 0 : i32
    %c0_i32_1 = arith.constant 0 : i32
    return %c0_i32, %c0_i32_0 : i32, i32
  }
  func.func @transform_4(%arg0: i32) -> (i32, i32) {
    %c0_i32 = arith.constant 0 : i32
    %c0_i32_0 = arith.constant 0 : i32
    %c0_i32_1 = arith.constant 0 : i32
    return %c0_i32, %c0_i32_0 : i32, i32
  }
  func.func @transform_5(%arg0: i32) -> (i32, i32) {
    %c0_i32 = arith.constant 0 : i32
    %c0_i32_0 = arith.constant 0 : i32
    %c0_i32_1 = arith.constant 0 : i32
    return %c0_i32, %c0_i32_0 : i32, i32
  }
  func.func @transform_6(%arg0: i32) -> (i32, i32) {
    %c0_i32 = arith.constant 0 : i32
    %c0_i32_0 = arith.constant 0 : i32
    %c0_i32_1 = arith.constant 0 : i32
    return %c0_i32, %c0_i32_0 : i32, i32
  }
  func.func @transform_7(%arg0: i32) -> (i32, i32) {
    %c0_i32 = arith.constant 0 : i32
    %c0_i32_0 = arith.constant 0 : i32
    %c0_i32_1 = arith.constant 0 : i32
    return %c0_i32, %c0_i32_0 : i32, i32
  }
  func.func @transform_8(%arg0: i32) -> (i32, i32) {
    %c0_i32 = arith.constant 0 : i32
    %c0_i32_0 = arith.constant 0 : i32
    %c0_i32_1 = arith.constant 0 : i32
    return %c0_i32, %c0_i32_0 : i32, i32
  }
  func.func @transform_9(%arg0: i32) -> (i32, i32) {
    %c0_i32 = arith.constant 0 : i32
    %c0_i32_0 = arith.constant 0 : i32
    %c0_i32_1 = arith.constant 0 : i32
    return %c0_i32, %c0_i32_0 : i32, i32
  }
  func.func @transform_10(%arg0: i32) -> (i32, i32) {
    %c0_i32 = arith.constant 0 : i32
    %c0_i32_0 = arith.constant 0 : i32
    %c0_i32_1 = arith.constant 0 : i32
    return %c0_i32, %c0_i32_0 : i32, i32
  }
  func.func @transform_11(%arg0: i32) -> (i32, i32) {
    %c0_i32 = arith.constant 0 : i32
    %c0_i32_0 = arith.constant 0 : i32
    %c0_i32_1 = arith.constant 0 : i32
    return %c0_i32, %c0_i32_0 : i32, i32
  }
  func.func @transform_12(%arg0: i32) -> (i32, i32) {
    %c0_i32 = arith.constant 0 : i32
    %c0_i32_0 = arith.constant 0 : i32
    %c0_i32_1 = arith.constant 0 : i32
    return %c0_i32, %c0_i32_0 : i32, i32
  }
  func.func @transform_13(%arg0: i32) -> (i32, i32) {
    %c0_i32 = arith.constant 0 : i32
    %c0_i32_0 = arith.constant 0 : i32
    %c0_i32_1 = arith.constant 0 : i32
    return %c0_i32, %c0_i32_0 : i32, i32
  }
}

</mosaic_0001>

<llo_original>
// kernel: vgg_forward.1
$region0: #{vgg_forward.1}
  #allocation0 [shape = 'u32[]', space=smem, size = 0x4, offset = 0x4, fixed_abs, tag = 'smem constant byte address 0x4 - core index']
  #allocation1 [shape = 'u32[144,128]{1,0:T(1,128)}', space=vmem, size = 0x12000, scoped, tag = 'internal scratch']
  #allocation2 [shape = 'f32[12,6,64]{2,1,0:T(8,128)}', space=vmem, size = 0xc000, scoped, tag = 'scratch operand']
  #allocation3 [shape = 'bf16[32,640]{1,0:T(16,128)(2,1)}', space=vmem, size = 0xa000, scoped, tag = 'scratch operand']
  #allocation4 [shape = 'f32[8,4,128]{2,1,0:T(4,128)}', space=vmem, size = 0x4000, scoped, tag = 'scratch operand']
  #allocation5 [shape = 'bf16[8,1152]{1,0:T(8,128)(2,1)}', space=vmem, size = 0x4800, scoped, tag = 'scratch operand']
  %s0 = inlined_call_operand.vmem [shape: bf16[128,32], index: 0, kind: input, shape index: {}]
  %s1 = inlined_call_operand.vmem [shape: bf16[32,64], index: 1, kind: input, shape index: {}]
  %s2 = inlined_call_operand.vmem [shape: f32[1,64], index: 2, kind: input, shape index: {}]
  %s3 = inlined_call_operand.hbm [shape: bf16[640,128], index: 3, kind: input, shape index: {}]
  %s4 = inlined_call_operand.vmem [shape: f32[1,128], index: 4, kind: input, shape index: {}]
  %s5 = inlined_call_operand.vmem [shape: bf16[1152,512], index: 5, kind: input, shape index: {}]
  %s6 = inlined_call_operand.vmem [shape: f32[1,512], index: 6, kind: input, shape index: {}]
  %s7 = inlined_call_operand.hbm [shape: bf16[512,512], index: 7, kind: input, shape index: {}]
  %s8 = inlined_call_operand.vmem [shape: f32[1,512], index: 8, kind: input, shape index: {}]
  %s9 = inlined_call_operand.hbm [shape: bf16[512,512], index: 9, kind: input, shape index: {}]
  %s10 = inlined_call_operand.vmem [shape: f32[1,512], index: 10, kind: input, shape index: {}]
  %s11 = inlined_call_operand.vmem [shape: bf16[512,10], index: 11, kind: input, shape index: {}]
  %s12 = inlined_call_operand.vmem [shape: f32[1,10], index: 12, kind: input, shape index: {}]
  %s13 = inlined_call_operand.hbm [shape: f32[2,10], index: 13, kind: output, shape index: {}]
  %s14 = sld [smem:[#allocation0]]
  $region74: #{vgg_forward.1} parent=0
    _
  %s16 = ssub.s32 1, %s14
  %s17 = scalar_select 0, %s16, %s14
  $region1: #{vgg_forward.1} parent=0
    #allocation6 [shape = 'u8[163840]{0}', space=vmem, size = 0x28000, scoped, tag = 'input window, operand 3, single buffered']
    #allocation7 [shape = 's32[1]{0}', space=sflag, size = 0x4, scoped, tag = 'scoped memory for vgg_forward.1']
    #allocation8 [shape = 's32[1]{0}', space=sflag, size = 0x4, scoped, tag = 'scoped memory for vgg_forward.1']
    #allocation9 [shape = 'u8[524288]{0}', space=vmem, size = 0x80000, scoped, tag = 'input window, operand 7, single buffered']
    #allocation10 [shape = 's32[1]{0}', space=sflag, size = 0x4, scoped, tag = 'scoped memory for vgg_forward.1']
    #allocation11 [shape = 'u8[524288]{0}', space=vmem, size = 0x80000, scoped, tag = 'input window, operand 9, single buffered']
    #allocation12 [shape = 'u8[1024]{0}', space=vmem, size = 0x400, scoped, tag = 'output window, operand 0, single buffered']
    %18 = vsyncpa [#allocation7], 0
    %19 = vsyncpa [#allocation10], 0
    %20 = vsyncpa [#allocation8], 0
    // Predicated region
    $region2: #{vgg_forward.1} parent=1 // pred_check
      _
    $region3: #{vgg_forward.1} parent=1 // pred_check_branch
      %22 = sbr.rel (0) target = $region5
    $region4: #{vgg_forward.1} parent=1 // pred_region
      _
    $region5: #{vgg_forward.1} parent=1 // pred_fallthru
      _
    // Predicated region
    $region6: #{vgg_forward.1} parent=1 // pred_check
      _
    $region7: #{vgg_forward.1} parent=1 // pred_check_branch
      %24 = sbr.rel (0) target = $region9
    $region8: #{vgg_forward.1} parent=1 // pred_region
      _
    $region9: #{vgg_forward.1} parent=1 // pred_fallthru
      _
    // Predicated region
    $region10: #{vgg_forward.1} parent=1 // pred_check
      _
    $region11: #{vgg_forward.1} parent=1 // pred_check_branch
      %26 = sbr.rel (0) target = $region13
    $region12: #{vgg_forward.1} parent=1 // pred_region
      _
    $region13: #{vgg_forward.1} parent=1 // pred_fallthru
      _
    // Predicated region
    $region14: #{vgg_forward.1} parent=1 // pred_check
      _
    $region15: #{vgg_forward.1} parent=1 // pred_check_branch
      %28 = sbr.rel (0) target = $region17
    $region16: #{vgg_forward.1} parent=1 // pred_region
      %s30 = ssub.s32 5120, 5120
      %31 = vsyncadd [#allocation7], %s30
      %s32 = sshll.u32 [#allocation6], 4
      %s33 = int_to_ptr.vmem [resolvable:$true] %s32
      %38 = dma.hbm_to_vmem [thread:$0]  %s3, 5120, %s33, [#allocation7], 64, 64, 4
    $region17: #{vgg_forward.1} parent=1 // pred_fallthru
      _
    // Predicated region
    $region18: #{vgg_forward.1} parent=1 // pred_check
      _
    $region19: #{vgg_forward.1} parent=1 // pred_check_branch
      %40 = sbr.rel (0) target = $region21
    $region20: #{vgg_forward.1} parent=1 // pred_region
      _
    $region21: #{vgg_forward.1} parent=1 // pred_fallthru
      _
    // Predicated region
    $region22: #{vgg_forward.1} parent=1 // pred_check
      _
    $region23: #{vgg_forward.1} parent=1 // pred_check_branch
      %42 = sbr.rel (0) target = $region25
    $region24: #{vgg_forward.1} parent=1 // pred_region
      _
    $region25: #{vgg_forward.1} parent=1 // pred_fallthru
      _
    // Predicated region
    $region26: #{vgg_forward.1} parent=1 // pred_check
      _
    $region27: #{vgg_forward.1} parent=1 // pred_check_branch
      %44 = sbr.rel (0) target = $region29
    $region28: #{vgg_forward.1} parent=1 // pred_region
      _
    $region29: #{vgg_forward.1} parent=1 // pred_fallthru
      _
    // Predicated region
    $region30: #{vgg_forward.1} parent=1 // pred_check
      _
    $region31: #{vgg_forward.1} parent=1 // pred_check_branch
      %46 = sbr.rel (0) target = $region33
    $region32: #{vgg_forward.1} parent=1 // pred_region
      %s48 = ssub.s32 16384, 16384
      %49 = vsyncadd [#allocation10], %s48
      %s50 = sshll.u32 [#allocation9], 4
      %s51 = int_to_ptr.vmem [resolvable:$true] %s50
      %56 = dma.hbm_to_vmem [thread:$0]  %s7, 16384, %s51, [#allocation10], 256, 256, 16
    $region33: #{vgg_forward.1} parent=1 // pred_fallthru
      _
    // Predicated region
    $region34: #{vgg_forward.1} parent=1 // pred_check
      _
    $region35: #{vgg_forward.1} parent=1 // pred_check_branch
      %58 = sbr.rel (0) target = $region37
    $region36: #{vgg_forward.1} parent=1 // pred_region
      _
    $region37: #{vgg_forward.1} parent=1 // pred_fallthru
      _
    // Predicated region
    $region38: #{vgg_forward.1} parent=1 // pred_check
      _
    $region39: #{vgg_forward.1} parent=1 // pred_check_branch
      %60 = sbr.rel (0) target = $region41
    $region40: #{vgg_forward.1} parent=1 // pred_region
      %s62 = ssub.s32 16384, 16384
      %63 = vsyncadd [#allocation10], %s62
      %s64 = sshll.u32 [#allocation11], 4
      %s65 = int_to_ptr.vmem [resolvable:$true] %s64
      %70 = dma.hbm_to_vmem [thread:$0]  %s9, 16384, %s65, [#allocation10], 256, 256, 16
    $region41: #{vgg_forward.1} parent=1 // pred_fallthru
      _
    // Predicated region
    $region42: #{vgg_forward.1} parent=1 // pred_check
      _
    $region43: #{vgg_forward.1} parent=1 // pred_check_branch
      %72 = sbr.rel (0) target = $region45
    $region44: #{vgg_forward.1} parent=1 // pred_region
      _
    $region45: #{vgg_forward.1} parent=1 // pred_fallthru
      _
    // Predicated region
    $region46: #{vgg_forward.1} parent=1 // pred_check
      _
    $region47: #{vgg_forward.1} parent=1 // pred_check_branch
      %74 = sbr.rel (0) target = $region49
    $region48: #{vgg_forward.1} parent=1 // pred_region
      _
    $region49: #{vgg_forward.1} parent=1 // pred_fallthru
      _
    // Predicated region
    $region50: #{vgg_forward.1} parent=1 // pred_check
      _
    $region51: #{vgg_forward.1} parent=1 // pred_check_branch
      %76 = sbr.rel (0) target = $region53
    $region52: #{vgg_forward.1} parent=1 // pred_region
      _
    $region53: #{vgg_forward.1} parent=1 // pred_fallthru
      _
    // Predicated region
    $region54: #{vgg_forward.1} parent=1 // pred_check
      _
    $region55: #{vgg_forward.1} parent=1 // pred_check_branch
      %78 = sbr.rel (0) target = $region57
    $region56: #{vgg_forward.1} parent=1 // pred_region
      %79 = dma.done [#allocation7], 5120
    $region57: #{vgg_forward.1} parent=1 // pred_fallthru
      _
    // Predicated region
    $region58: #{vgg_forward.1} parent=1 // pred_check
      _
    $region59: #{vgg_forward.1} parent=1 // pred_check_branch
      %81 = sbr.rel (0) target = $region61
    $region60: #{vgg_forward.1} parent=1 // pred_region
      %82 = dma.done [#allocation10], 16384
    $region61: #{vgg_forward.1} parent=1 // pred_fallthru
      _
    // Predicated region
    $region62: #{vgg_forward.1} parent=1 // pred_check
      _
    $region63: #{vgg_forward.1} parent=1 // pred_check_branch
      %84 = sbr.rel (0) target = $region65
    $region64: #{vgg_forward.1} parent=1 // pred_region
      %85 = dma.done [#allocation10], 16384
    $region65: #{vgg_forward.1} parent=1 // pred_fallthru
      _
    %vm87 = vcmask 521216
    %88 = vst.msk [vmem:[#allocation2] sm:$0x3f] %vm87, 0.0
    %89 = vst.msk [vmem:[#allocation2 + $0x8] sm:$0x3f] %vm87, 0.0
    %90 = vst.msk [vmem:[#allocation2 + $0x10] sm:$0x3f] %vm87, 0.0
    %91 = vst.msk [vmem:[#allocation2 + $0x18] sm:$0x3f] %vm87, 0.0
    %92 = vst.msk [vmem:[#allocation2 + $0x20] sm:$0x3f] %vm87, 0.0
    %93 = vst.msk [vmem:[#allocation2 + $0x28] sm:$0x3f] %vm87, 0.0
    %94 = vst.msk [vmem:[#allocation2 + $0x30] sm:$0x3f] %vm87, 0.0
    %95 = vst.msk [vmem:[#allocation2 + $0x38] sm:$0x3f] %vm87, 0.0
    %96 = vst.msk [vmem:[#allocation2 + $0x40] sm:$0x3f] %vm87, 0.0
    %97 = vst.msk [vmem:[#allocation2 + $0x48] sm:$0x3f] %vm87, 0.0
    %98 = vst.msk [vmem:[#allocation2 + $0x50] sm:$0x3f] %vm87, 0.0
    %99 = vst.msk [vmem:[#allocation2 + $0x58] sm:$0x3f] %vm87, 0.0
    %100 = vst [vmem:[#allocation4] sm:$0xf] 0.0
    %101 = vst [vmem:[#allocation4 + $0x4] sm:$0xf] 0.0
    %102 = vst [vmem:[#allocation4 + $0x8] sm:$0xf] 0.0
    %103 = vst [vmem:[#allocation4 + $0xc] sm:$0xf] 0.0
    %104 = vst [vmem:[#allocation4 + $0x10] sm:$0xf] 0.0
    %105 = vst [vmem:[#allocation4 + $0x14] sm:$0xf] 0.0
    %106 = vst [vmem:[#allocation4 + $0x18] sm:$0xf] 0.0
    %107 = vst [vmem:[#allocation4 + $0x1c] sm:$0xf] 0.0
    %108 = vst [vmem:[#allocation3] sm:$0xff] 0
    %109 = vst [vmem:[#allocation3 + $0x8] sm:$0xff] 0
    %110 = vst [vmem:[#allocation3 + $0x10] sm:$0xff] 0
    %111 = vst [vmem:[#allocation3 + $0x18] sm:$0xff] 0
    %112 = vst [vmem:[#allocation3 + $0x20] sm:$0xff] 0
    %113 = vst [vmem:[#allocation3 + $0x28] sm:$0xff] 0
    %114 = vst [vmem:[#allocation3 + $0x30] sm:$0xff] 0
    %115 = vst [vmem:[#allocation3 + $0x38] sm:$0xff] 0
    %116 = vst [vmem:[#allocation3 + $0x40] sm:$0xff] 0
    %117 = vst [vmem:[#allocation3 + $0x48] sm:$0xff] 0
    %v118 = vld [vmem:[%s0] sm:$0xf]
    %v119 = vld [vmem:[%s0 + $0x4] sm:$0xf]
    %v120 = vld [vmem:[%s0 + $0x8] sm:$0xf]
    %v121 = vld [vmem:[%s0 + $0xc] sm:$0xf]
    %v122 = vld [vmem:[%s0 + $0x10] sm:$0xf]
    %v123 = vld [vmem:[%s0 + $0x14] sm:$0xf]
    %v124 = vld [vmem:[%s0 + $0x18] sm:$0xf]
    %v125 = vld [vmem:[%s0 + $0x1c] sm:$0xf]
    %v126 = vld [vmem:[%s0 + $0x20] sm:$0xf]
    %v127 = vld [vmem:[%s0 + $0x24] sm:$0xf]
    %v128 = vld [vmem:[%s0 + $0x28] sm:$0xf]
    %v129 = vld [vmem:[%s0 + $0x2c] sm:$0xf]
    %v130 = vld [vmem:[%s0 + $0x30] sm:$0xf]
    %v131 = vld [vmem:[%s0 + $0x34] sm:$0xf]
    %v132 = vld [vmem:[%s0 + $0x38] sm:$0xf]
    %v133 = vld [vmem:[%s0 + $0x3c] sm:$0xf]
    %v134 = vld [vmem:[%s1] sm:$0xf]
    %v135 = vld [vmem:[%s1 + $0x4] sm:$0xf]
    %v136 = vld [vmem:[%s1 + $0x8] sm:$0xf]
    %v137 = vld [vmem:[%s1 + $0xc] sm:$0xf]
    %v138 = vld [vmem:[%s2] sm:$0x1]
    %v140 = vlaneseq
    %v141 = vshrl.u32 %v140, 7
    %v142 = vsub.s32 0, %v141
    %v143 = vrot.slane %v138, %v142
    %v161 = vunpack.c.l.b16 %v118
    %v162 = vunpack.c.l.b16 %v119
    %v163 = vunpack.c.l.b16 %v120
    %v164 = vunpack.c.l.b16 %v121
    %v165 = vunpack.c.l.b16 %v122
    %v166 = vunpack.c.l.b16 %v123
    %v167 = vunpack.c.l.b16 %v124
    %v168 = vunpack.c.l.b16 %v125
    %v169 = vunpack.c.l.b16 %v126
    %v170 = vunpack.c.l.b16 %v127
    %v171 = vunpack.c.l.b16 %v128
    %v172 = vunpack.c.l.b16 %v129
    %v173 = vunpack.c.l.b16 %v130
    %v174 = vunpack.c.l.b16 %v131
    %v175 = vunpack.c.l.b16 %v132
    %v176 = vunpack.c.l.b16 %v133
    %v177 = vpack.c.b16 %v162, %v161
    %v178 = vpack.c.b16 %v164, %v163
    %v179 = vpack.c.b16 %v166, %v165
    %v180 = vpack.c.b16 %v168, %v167
    %v181 = vpack.c.b16 %v170, %v169
    %v182 = vpack.c.b16 %v172, %v171
    %v183 = vpack.c.b16 %v174, %v173
    %v184 = vpack.c.b16 %v176, %v175
    %v189 = vunpack.c.l.b16 %v134
    %v190 = vunpack.c.l.b16 %v135
    %v191 = vunpack.c.l.b16 %v136
    %v192 = vunpack.c.l.b16 %v137
    %v193 = vpack.c.b16 %v190, %v189
    %v194 = vpack.c.b16 %v192, %v191
    %vm197 = vcmask 261120
    %v199 = vsel %vm197, %v177, 0
    %v202 = vsel %vm197, %v178, 0
    %v205 = vsel %vm197, %v179, 0
    %v208 = vsel %vm197, %v180, 0
    %v211 = vsel %vm197, %v181, 0
    %v214 = vsel %vm197, %v182, 0
    %v217 = vsel %vm197, %v183, 0
    %v220 = vsel %vm197, %v184, 0
    %222 = vmatprep.subr.bf16.mxu0 0
    %223 = vmatpush1.bf16.msra.mxu0 %v193
    %224 = vmatprep.subr.bf16.mxu0 0
    %225 = vmatpush1.bf16.msra.mxu0 %v194
    %226 = vmatprep.subr.bf16.mxu0 0
    %227 = vmatpush1.bf16.msra.mxu0 0
    %228 = vmatprep.subr.bf16.mxu0 0
    %229 = vmatpush1.bf16.msra.mxu0 0
    %230 = vmatprep.subr.bf16.mxu0 0
    %231 = vmatpush1.bf16.msra.mxu0 0
    %232 = vmatprep.subr.bf16.mxu0 0
    %233 = vmatpush1.bf16.msra.mxu0 0
    %234 = vmatprep.subr.bf16.mxu0 0
    %235 = vmatpush1.bf16.msra.mxu0 0
    %236 = vmatprep.subr.bf16.mxu0 0
    %237 = vmatpush1.bf16.msra.mxu0 0
    %238 = vmatprep.subr.bf16.mxu0 0
    %239 = vmatpush1.bf16.msra.mxu0 0
    %240 = vmatprep.subr.bf16.mxu0 0
    %241 = vmatpush1.bf16.msra.mxu0 0
    %242 = vmatprep.subr.bf16.mxu0 0
    %243 = vmatpush1.bf16.msra.mxu0 0
    %244 = vmatprep.subr.bf16.mxu0 0
    %245 = vmatpush1.bf16.msra.mxu0 0
    %246 = vmatprep.subr.bf16.mxu0 0
    %247 = vmatpush1.bf16.msra.mxu0 0
    %248 = vmatprep.subr.bf16.mxu0 0
    %249 = vmatpush1.bf16.msra.mxu0 0
    %250 = vmatprep.subr.bf16.mxu0 0
    %251 = vmatpush1.bf16.msra.mxu0 0
    %252 = vmatprep.subr.bf16.mxu0 0
    %253 = vmatpush1.bf16.msra.mxu0 0
    %254 = vmatprep.mubr.bf16.mxu0 0
    %255 = vmatmul.mubr.bf16.gmra.mrb[0].mxu0 %v199
    %v256 = vpop.f32.mrb[0].mxu0
    %v257 = vadd.f32 %v143, %v256
    %v258 = vpop.f32.mrb[0].mxu0
    %v259 = vpop.f32.mrb[0].mxu0
    %v260 = vadd.f32 %v143, %v259
    %v261 = vpop.f32.mrb[0].mxu0
    %262 = vmatprep.mubr.bf16.mxu0 0
    %263 = vmatmul.mubr.bf16.gmra.mrb[0].mxu0 %v202
    %v264 = vpop.f32.mrb[0].mxu0
    %v265 = vadd.f32 %v143, %v264
    %v266 = vpop.f32.mrb[0].mxu0
    %v267 = vpop.f32.mrb[0].mxu0
    %v268 = vadd.f32 %v143, %v267
    %v269 = vpop.f32.mrb[0].mxu0
    %270 = vmatprep.mubr.bf16.mxu0 0
    %271 = vmatmul.mubr.bf16.gmra.mrb[0].mxu0 %v205
    %v272 = vpop.f32.mrb[0].mxu0
    %v273 = vadd.f32 %v143, %v272
    %v274 = vpop.f32.mrb[0].mxu0
    %v275 = vpop.f32.mrb[0].mxu0
    %v276 = vadd.f32 %v143, %v275
    %v277 = vpop.f32.mrb[0].mxu0
    %278 = vmatprep.mubr.bf16.mxu0 0
    %279 = vmatmul.mubr.bf16.gmra.mrb[0].mxu0 %v208
    %v280 = vpop.f32.mrb[0].mxu0
    %v281 = vadd.f32 %v143, %v280
    %v282 = vpop.f32.mrb[0].mxu0
    %v283 = vpop.f32.mrb[0].mxu0
    %v284 = vadd.f32 %v143, %v283
    %v285 = vpop.f32.mrb[0].mxu0
    %286 = vmatprep.mubr.bf16.mxu0 0
    %287 = vmatmul.mubr.bf16.gmra.mrb[0].mxu0 %v211
    %v288 = vpop.f32.mrb[0].mxu0
    %v289 = vadd.f32 %v143, %v288
    %v290 = vpop.f32.mrb[0].mxu0
    %v291 = vpop.f32.mrb[0].mxu0
    %v292 = vadd.f32 %v143, %v291
    %v293 = vpop.f32.mrb[0].mxu0
    %294 = vmatprep.mubr.bf16.mxu0 0
    %295 = vmatmul.mubr.bf16.gmra.mrb[0].mxu0 %v214
    %v296 = vpop.f32.mrb[0].mxu0
    %v297 = vadd.f32 %v143, %v296
    %v298 = vpop.f32.mrb[0].mxu0
    %v299 = vpop.f32.mrb[0].mxu0
    %v300 = vadd.f32 %v143, %v299
    %v301 = vpop.f32.mrb[0].mxu0
    %302 = vmatprep.mubr.bf16.mxu0 0
    %303 = vmatmul.mubr.bf16.gmra.mrb[0].mxu0 %v217
    %v304 = vpop.f32.mrb[0].mxu0
    %v305 = vadd.f32 %v143, %v304
    %v306 = vpop.f32.mrb[0].mxu0
    %v307 = vpop.f32.mrb[0].mxu0
    %v308 = vadd.f32 %v143, %v307
    %v309 = vpop.f32.mrb[0].mxu0
    %310 = vmatprep.mubr.bf16.mxu0 0
    %311 = vmatmul.mubr.bf16.gmra.mrb[0].mxu0 %v220
    %v312 = vpop.f32.mrb[0].mxu0
    %v313 = vadd.f32 %v143, %v312
    %v314 = vpop.f32.mrb[0].mxu0
    %v315 = vpop.f32.mrb[0].mxu0
    %v316 = vadd.f32 %v143, %v315
    %v317 = vpop.f32.mrb[0].mxu0
    %318 = vdwg.mxu0
    %v319 = vmax.f32 %v257, 0.0
    %v320 = vmax.f32 %v260, 0.0
    %v321 = vmax.f32 %v265, 0.0
    %v322 = vmax.f32 %v268, 0.0
    %v323 = vmax.f32 %v273, 0.0
    %v324 = vmax.f32 %v276, 0.0
    %v325 = vmax.f32 %v281, 0.0
    %v326 = vmax.f32 %v284, 0.0
    %v327 = vmax.f32 %v289, 0.0
    %v328 = vmax.f32 %v292, 0.0
    %v329 = vmax.f32 %v297, 0.0
    %v330 = vmax.f32 %v300, 0.0
    %v331 = vmax.f32 %v305, 0.0
    %v332 = vmax.f32 %v308, 0.0
    %v333 = vmax.f32 %v313, 0.0
    %v334 = vmax.f32 %v316, 0.0
    %v335 = vmax.f32 %v319, %v323
    %v336 = vmax.f32 %v320, %v324
    %v337 = vmax.f32 %v321, %v325
    %v338 = vmax.f32 %v322, %v326
    %v339 = vmax.f32 %v327, %v331
    %v340 = vmax.f32 %v328, %v332
    %v341 = vmax.f32 %v329, %v333
    %v342 = vmax.f32 %v330, %v334
    %v343 = vmax.f32 %v335, %v339
    %v344 = vmax.f32 %v336, %v340
    %v345 = vmax.f32 %v337, %v341
    %v346 = vmax.f32 %v338, %v342
    %s347 = scalar_lea.vmem [#allocation2], 8
    %vm348 = vcmask 519168
    %349 = vst.msk [vmem:[%s347 + $0x1] sm:$0xf] %vm348, %v343
    %s350 = scalar_lea.vmem [#allocation2], 16
    %vm351 = vcmask 523268
    %352 = vst.msk [vmem:[%s350 - $0x3] sm:$0xf0] %vm351, %v343
    %s353 = scalar_lea.vmem [#allocation2], 24
    %354 = vst.msk [vmem:[%s353 + $0x1] sm:$0xf] %vm348, %v344
    %s355 = scalar_lea.vmem [#allocation2], 32
    %356 = vst.msk [vmem:[%s355 - $0x3] sm:$0xf0] %vm351, %v344
    %s357 = scalar_lea.vmem [#allocation2], 56
    %358 = vst.msk [vmem:[%s357 + $0x1] sm:$0xf] %vm348, %v345
    %s359 = scalar_lea.vmem [#allocation2], 64
    %360 = vst.msk [vmem:[%s359 - $0x3] sm:$0xf0] %vm351, %v345
    %s361 = scalar_lea.vmem [#allocation2], 72
    %362 = vst.msk [vmem:[%s361 + $0x1] sm:$0xf] %vm348, %v346
    %s363 = scalar_lea.vmem [#allocation2], 80
    %364 = vst.msk [vmem:[%s363 - $0x3] sm:$0xf0] %vm351, %v346
    %v365 = vld [vmem:[#allocation2] sm:$0xf]
    %v366 = vpack.c.bf16 %v365, %v365
    %vm367 = vcmask 517120
    %368 = vst.msk [vmem:[#allocation3] sm:$0x3] %vm367, %v366
    %v369 = vld [vmem:[#allocation2 + $0x1] sm:$0xf]
    %v370 = vpack.c.bf16 %v369, %v369
    %372 = vrot.lane.b32.xlu0 %v370, 64
    %v373 = vpop.permute.xlu0 %372
    %vm375 = vcmask 1041920
    %376 = vst.msk [vmem:[#allocation3] sm:$0x3] %vm375, %v373
    %v377 = vld [vmem:[#allocation2 + $0x2] sm:$0xf]
    %v378 = vpack.c.bf16 %v377, %v377
    %379 = vst.msk [vmem:[#allocation3 + $0x8] sm:$0x3] %vm367, %v378
    %v380 = vld [vmem:[%s347] sm:$0xf]
    %v381 = vpack.c.bf16 %v380, %v380
    %383 = vrot.lane.b32.xlu0 %v381, 64
    %v384 = vpop.permute.xlu0 %383
    %386 = vst.msk [vmem:[#allocation3 + $0x8] sm:$0x3] %vm375, %v384
    %v387 = vld [vmem:[%s347 + $0x1] sm:$0xf]
    %v388 = vpack.c.bf16 %v387, %v387
    %389 = vst.msk [vmem:[#allocation3 + $0x10] sm:$0x3] %vm367, %v388
    %v390 = vld [vmem:[%s347 + $0x2] sm:$0xf]
    %v391 = vpack.c.bf16 %v390, %v390
    %393 = vrot.lane.b32.xlu0 %v391, 64
    %v394 = vpop.permute.xlu0 %393
    %396 = vst.msk [vmem:[#allocation3 + $0x10] sm:$0x3] %vm375, %v394
    %v397 = vld [vmem:[%s350] sm:$0xf]
    %v398 = vpack.c.bf16 %v397, %v397
    %399 = vst.msk [vmem:[#allocation3 + $0x18] sm:$0x3] %vm367, %v398
    %v400 = vld [vmem:[%s350 + $0x1] sm:$0xf]
    %v401 = vpack.c.bf16 %v400, %v400
    %403 = vrot.lane.b32.xlu0 %v401, 64
    %v404 = vpop.permute.xlu0 %403
    %406 = vst.msk [vmem:[#allocation3 + $0x18] sm:$0x3] %vm375, %v404
    %v407 = vld [vmem:[%s350 + $0x2] sm:$0xf]
    %v408 = vpack.c.bf16 %v407, %v407
    %409 = vst.msk [vmem:[#allocation3 + $0x20] sm:$0x3] %vm367, %v408
    %v410 = vld [vmem:[%s347] sm:$0xf]
    %v411 = vpack.c.bf16 %v410, %v410
    %v413 = vrot.slane %v411, 6
    %vm415 = vcmask 519170
    %416 = vst.msk [vmem:[#allocation3] sm:$0xc] %vm415, %v413
    %v417 = vld [vmem:[%s347 + $0x1] sm:$0xf]
    %v418 = vpack.c.bf16 %v417, %v417
    %v420 = vrot.slane %v418, 6
    %421 = vrot.lane.b32.xlu0 %v420, 64
    %v422 = vpop.permute.xlu0 %421
    %vm424 = vcmask 1043970
    %425 = vst.msk [vmem:[#allocation3] sm:$0xc] %vm424, %v422
    %v426 = vld [vmem:[%s347 + $0x2] sm:$0xf]
    %v427 = vpack.c.bf16 %v426, %v426
    %v429 = vrot.slane %v427, 6
    %431 = vst.msk [vmem:[#allocation3 + $0x8] sm:$0xc] %vm415, %v429
    %v432 = vld [vmem:[%s350] sm:$0xf]
    %v433 = vpack.c.bf16 %v432, %v432
    %v435 = vrot.slane %v433, 6
    %436 = vrot.lane.b32.xlu0 %v435, 64
    %v437 = vpop.permute.xlu0 %436
    %439 = vst.msk [vmem:[#allocation3 + $0x8] sm:$0xc] %vm424, %v437
    %v440 = vld [vmem:[%s350 + $0x1] sm:$0xf]
    %v441 = vpack.c.bf16 %v440, %v440
    %v443 = vrot.slane %v441, 6
    %445 = vst.msk [vmem:[#allocation3 + $0x10] sm:$0xc] %vm415, %v443
    %v446 = vld [vmem:[%s350 + $0x2] sm:$0xf]
    %v447 = vpack.c.bf16 %v446, %v446
    %v449 = vrot.slane %v447, 6
    %450 = vrot.lane.b32.xlu0 %v449, 64
    %v451 = vpop.permute.xlu0 %450
    %453 = vst.msk [vmem:[#allocation3 + $0x10] sm:$0xc] %vm424, %v451
    %v454 = vld [vmem:[%s353] sm:$0xf]
    %v455 = vpack.c.bf16 %v454, %v454
    %v457 = vrot.slane %v455, 6
    %459 = vst.msk [vmem:[#allocation3 + $0x18] sm:$0xc] %vm415, %v457
    %v460 = vld [vmem:[%s353 + $0x1] sm:$0xf]
    %v461 = vpack.c.bf16 %v460, %v460
    %v463 = vrot.slane %v461, 6
    %464 = vrot.lane.b32.xlu0 %v463, 64
    %v465 = vpop.permute.xlu0 %464
    %467 = vst.msk [vmem:[#allocation3 + $0x18] sm:$0xc] %vm424, %v465
    %v468 = vld [vmem:[%s353 + $0x2] sm:$0xf]
    %v469 = vpack.c.bf16 %v468, %v468
    %v471 = vrot.slane %v469, 6
    %473 = vst.msk [vmem:[#allocation3 + $0x20] sm:$0xc] %vm415, %v471
    %v474 = vld [vmem:[%s350] sm:$0xf]
    %v475 = vpack.c.bf16 %v474, %v474
    %v477 = vrot.slane %v475, 4
    %vm479 = vcmask 521220
    %480 = vst.msk [vmem:[#allocation3] sm:$0x30] %vm479, %v477
    %v481 = vld [vmem:[%s350 + $0x1] sm:$0xf]
    %v482 = vpack.c.bf16 %v481, %v481
    %v484 = vrot.slane %v482, 4
    %485 = vrot.lane.b32.xlu0 %v484, 64
    %v486 = vpop.permute.xlu0 %485
    %vm488 = vcmask 1046020
    %489 = vst.msk [vmem:[#allocation3] sm:$0x30] %vm488, %v486
    %v490 = vld [vmem:[%s350 + $0x2] sm:$0xf]
    %v491 = vpack.c.bf16 %v490, %v490
    %v493 = vrot.slane %v491, 4
    %495 = vst.msk [vmem:[#allocation3 + $0x8] sm:$0x30] %vm479, %v493
    %v496 = vld [vmem:[%s353] sm:$0xf]
    %v497 = vpack.c.bf16 %v496, %v496
    %v499 = vrot.slane %v497, 4
    %500 = vrot.lane.b32.xlu0 %v499, 64
    %v501 = vpop.permute.xlu0 %500
    %503 = vst.msk [vmem:[#allocation3 + $0x8] sm:$0x30] %vm488, %v501
    %v504 = vld [vmem:[%s353 + $0x1] sm:$0xf]
    %v505 = vpack.c.bf16 %v504, %v504
    %v507 = vrot.slane %v505, 4
    %509 = vst.msk [vmem:[#allocation3 + $0x10] sm:$0x30] %vm479, %v507
    %v510 = vld [vmem:[%s353 + $0x2] sm:$0xf]
    %v511 = vpack.c.bf16 %v510, %v510
    %v513 = vrot.slane %v511, 4
    %514 = vrot.lane.b32.xlu0 %v513, 64
    %v515 = vpop.permute.xlu0 %514
    %517 = vst.msk [vmem:[#allocation3 + $0x10] sm:$0x30] %vm488, %v515
    %v518 = vld [vmem:[%s355] sm:$0xf]
    %v519 = vpack.c.bf16 %v518, %v518
    %v521 = vrot.slane %v519, 4
    %523 = vst.msk [vmem:[#allocation3 + $0x18] sm:$0x30] %vm479, %v521
    %v524 = vld [vmem:[%s355 + $0x1] sm:$0xf]
    %v525 = vpack.c.bf16 %v524, %v524
    %v527 = vrot.slane %v525, 4
    %528 = vrot.lane.b32.xlu0 %v527, 64
    %v529 = vpop.permute.xlu0 %528
    %531 = vst.msk [vmem:[#allocation3 + $0x18] sm:$0x30] %vm488, %v529
    %v532 = vld [vmem:[%s355 + $0x2] sm:$0xf]
    %v533 = vpack.c.bf16 %v532, %v532
    %v535 = vrot.slane %v533, 4
    %537 = vst.msk [vmem:[#allocation3 + $0x20] sm:$0x30] %vm479, %v535
    %v538 = vld [vmem:[%s353] sm:$0xf]
    %v539 = vpack.c.bf16 %v538, %v538
    %v541 = vrot.slane %v539, 2
    %vm543 = vcmask 523270
    %544 = vst.msk [vmem:[#allocation3] sm:$0xc0] %vm543, %v541
    %v545 = vld [vmem:[%s353 + $0x1] sm:$0xf]
    %v546 = vpack.c.bf16 %v545, %v545
    %v548 = vrot.slane %v546, 2
    %549 = vrot.lane.b32.xlu0 %v548, 64
    %v550 = vpop.permute.xlu0 %549
    %vm552 = vcmask 1048070
    %553 = vst.msk [vmem:[#allocation3] sm:$0xc0] %vm552, %v550
    %v554 = vld [vmem:[%s353 + $0x2] sm:$0xf]
    %v555 = vpack.c.bf16 %v554, %v554
    %v557 = vrot.slane %v555, 2
    %559 = vst.msk [vmem:[#allocation3 + $0x8] sm:$0xc0] %vm543, %v557
    %v560 = vld [vmem:[%s355] sm:$0xf]
    %v561 = vpack.c.bf16 %v560, %v560
    %v563 = vrot.slane %v561, 2
    %564 = vrot.lane.b32.xlu0 %v563, 64
    %v565 = vpop.permute.xlu0 %564
    %567 = vst.msk [vmem:[#allocation3 + $0x8] sm:$0xc0] %vm552, %v565
    %v568 = vld [vmem:[%s355 + $0x1] sm:$0xf]
    %v569 = vpack.c.bf16 %v568, %v568
    %v571 = vrot.slane %v569, 2
    %573 = vst.msk [vmem:[#allocation3 + $0x10] sm:$0xc0] %vm543, %v571
    %v574 = vld [vmem:[%s355 + $0x2] sm:$0xf]
    %v575 = vpack.c.bf16 %v574, %v574
    %v577 = vrot.slane %v575, 2
    %578 = vrot.lane.b32.xlu0 %v577, 64
    %v579 = vpop.permute.xlu0 %578
    %581 = vst.msk [vmem:[#allocation3 + $0x10] sm:$0xc0] %vm552, %v579
    %s582 = scalar_lea.vmem [#allocation2], 40
    %v583 = vld [vmem:[%s582] sm:$0xf]
    %v584 = vpack.c.bf16 %v583, %v583
    %v586 = vrot.slane %v584, 2
    %588 = vst.msk [vmem:[#allocation3 + $0x18] sm:$0xc0] %vm543, %v586
    %v589 = vld [vmem:[%s582 + $0x1] sm:$0xf]
    %v590 = vpack.c.bf16 %v589, %v589
    %v592 = vrot.slane %v590, 2
    %593 = vrot.lane.b32.xlu0 %v592, 64
    %v594 = vpop.permute.xlu0 %593
    %596 = vst.msk [vmem:[#allocation3 + $0x18] sm:$0xc0] %vm552, %v594
    %v597 = vld [vmem:[%s582 + $0x2] sm:$0xf]
    %v598 = vpack.c.bf16 %v597, %v597
    %v600 = vrot.slane %v598, 2
    %602 = vst.msk [vmem:[#allocation3 + $0x20] sm:$0xc0] %vm543, %v600
    %s603 = scalar_lea.vmem [#allocation2], 48
    %v604 = vld [vmem:[%s603] sm:$0xf]
    %v605 = vpack.c.bf16 %v604, %v604
    %606 = vst.msk [vmem:[#allocation3 + $0x28] sm:$0x3] %vm367, %v605
    %v607 = vld [vmem:[%s603 + $0x1] sm:$0xf]
    %v608 = vpack.c.bf16 %v607, %v607
    %610 = vrot.lane.b32.xlu0 %v608, 64
    %v611 = vpop.permute.xlu0 %610
    %613 = vst.msk [vmem:[#allocation3 + $0x28] sm:$0x3] %vm375, %v611
    %v614 = vld [vmem:[%s603 + $0x2] sm:$0xf]
    %v615 = vpack.c.bf16 %v614, %v614
    %616 = vst.msk [vmem:[#allocation3 + $0x30] sm:$0x3] %vm367, %v615
    %v617 = vld [vmem:[%s357] sm:$0xf]
    %v618 = vpack.c.bf16 %v617, %v617
    %620 = vrot.lane.b32.xlu0 %v618, 64
    %v621 = vpop.permute.xlu0 %620
    %623 = vst.msk [vmem:[#allocation3 + $0x30] sm:$0x3] %vm375, %v621
    %v624 = vld [vmem:[%s357 + $0x1] sm:$0xf]
    %v625 = vpack.c.bf16 %v624, %v624
    %626 = vst.msk [vmem:[#allocation3 + $0x38] sm:$0x3] %vm367, %v625
    %v627 = vld [vmem:[%s357 + $0x2] sm:$0xf]
    %v628 = vpack.c.bf16 %v627, %v627
    %630 = vrot.lane.b32.xlu0 %v628, 64
    %v631 = vpop.permute.xlu0 %630
    %633 = vst.msk [vmem:[#allocation3 + $0x38] sm:$0x3] %vm375, %v631
    %v634 = vld [vmem:[%s359] sm:$0xf]
    %v635 = vpack.c.bf16 %v634, %v634
    %636 = vst.msk [vmem:[#allocation3 + $0x40] sm:$0x3] %vm367, %v635
    %v637 = vld [vmem:[%s359 + $0x1] sm:$0xf]
    %v638 = vpack.c.bf16 %v637, %v637
    %640 = vrot.lane.b32.xlu0 %v638, 64
    %v641 = vpop.permute.xlu0 %640
    %643 = vst.msk [vmem:[#allocation3 + $0x40] sm:$0x3] %vm375, %v641
    %v644 = vld [vmem:[%s359 + $0x2] sm:$0xf]
    %v645 = vpack.c.bf16 %v644, %v644
    %646 = vst.msk [vmem:[#allocation3 + $0x48] sm:$0x3] %vm367, %v645
    %v647 = vld [vmem:[%s357] sm:$0xf]
    %v648 = vpack.c.bf16 %v647, %v647
    %v650 = vrot.slane %v648, 6
    %652 = vst.msk [vmem:[#allocation3 + $0x28] sm:$0xc] %vm415, %v650
    %v653 = vld [vmem:[%s357 + $0x1] sm:$0xf]
    %v654 = vpack.c.bf16 %v653, %v653
    %v656 = vrot.slane %v654, 6
    %657 = vrot.lane.b32.xlu0 %v656, 64
    %v658 = vpop.permute.xlu0 %657
    %660 = vst.msk [vmem:[#allocation3 + $0x28] sm:$0xc] %vm424, %v658
    %v661 = vld [vmem:[%s357 + $0x2] sm:$0xf]
    %v662 = vpack.c.bf16 %v661, %v661
    %v664 = vrot.slane %v662, 6
    %666 = vst.msk [vmem:[#allocation3 + $0x30] sm:$0xc] %vm415, %v664
    %v667 = vld [vmem:[%s359] sm:$0xf]
    %v668 = vpack.c.bf16 %v667, %v667
    %v670 = vrot.slane %v668, 6
    %671 = vrot.lane.b32.xlu0 %v670, 64
    %v672 = vpop.permute.xlu0 %671
    %674 = vst.msk [vmem:[#allocation3 + $0x30] sm:$0xc] %vm424, %v672
    %v675 = vld [vmem:[%s359 + $0x1] sm:$0xf]
    %v676 = vpack.c.bf16 %v675, %v675
    %v678 = vrot.slane %v676, 6
    %680 = vst.msk [vmem:[#allocation3 + $0x38] sm:$0xc] %vm415, %v678
    %v681 = vld [vmem:[%s359 + $0x2] sm:$0xf]
    %v682 = vpack.c.bf16 %v681, %v681
    %v684 = vrot.slane %v682, 6
    %685 = vrot.lane.b32.xlu0 %v684, 64
    %v686 = vpop.permute.xlu0 %685
    %688 = vst.msk [vmem:[#allocation3 + $0x38] sm:$0xc] %vm424, %v686
    %v689 = vld [vmem:[%s361] sm:$0xf]
    %v690 = vpack.c.bf16 %v689, %v689
    %v692 = vrot.slane %v690, 6
    %694 = vst.msk [vmem:[#allocation3 + $0x40] sm:$0xc] %vm415, %v692
    %v695 = vld [vmem:[%s361 + $0x1] sm:$0xf]
    %v696 = vpack.c.bf16 %v695, %v695
    %v698 = vrot.slane %v696, 6
    %699 = vrot.lane.b32.xlu0 %v698, 64
    %v700 = vpop.permute.xlu0 %699
    %702 = vst.msk [vmem:[#allocation3 + $0x40] sm:$0xc] %vm424, %v700
    %v703 = vld [vmem:[%s361 + $0x2] sm:$0xf]
    %v704 = vpack.c.bf16 %v703, %v703
    %v706 = vrot.slane %v704, 6
    %708 = vst.msk [vmem:[#allocation3 + $0x48] sm:$0xc] %vm415, %v706
    %v709 = vld [vmem:[%s359] sm:$0xf]
    %v710 = vpack.c.bf16 %v709, %v709
    %v712 = vrot.slane %v710, 4
    %714 = vst.msk [vmem:[#allocation3 + $0x28] sm:$0x30] %vm479, %v712
    %v715 = vld [vmem:[%s359 + $0x1] sm:$0xf]
    %v716 = vpack.c.bf16 %v715, %v715
    %v718 = vrot.slane %v716, 4
    %719 = vrot.lane.b32.xlu0 %v718, 64
    %v720 = vpop.permute.xlu0 %719
    %722 = vst.msk [vmem:[#allocation3 + $0x28] sm:$0x30] %vm488, %v720
    %v723 = vld [vmem:[%s359 + $0x2] sm:$0xf]
    %v724 = vpack.c.bf16 %v723, %v723
    %v726 = vrot.slane %v724, 4
    %728 = vst.msk [vmem:[#allocation3 + $0x30] sm:$0x30] %vm479, %v726
    %v729 = vld [vmem:[%s361] sm:$0xf]
    %v730 = vpack.c.bf16 %v729, %v729
    %v732 = vrot.slane %v730, 4
    %733 = vrot.lane.b32.xlu0 %v732, 64
    %v734 = vpop.permute.xlu0 %733
    %736 = vst.msk [vmem:[#allocation3 + $0x30] sm:$0x30] %vm488, %v734
    %v737 = vld [vmem:[%s361 + $0x1] sm:$0xf]
    %v738 = vpack.c.bf16 %v737, %v737
    %v740 = vrot.slane %v738, 4
    %742 = vst.msk [vmem:[#allocation3 + $0x38] sm:$0x30] %vm479, %v740
    %v743 = vld [vmem:[%s361 + $0x2] sm:$0xf]
    %v744 = vpack.c.bf16 %v743, %v743
    %v746 = vrot.slane %v744, 4
    %747 = vrot.lane.b32.xlu0 %v746, 64
    %v748 = vpop.permute.xlu0 %747
    %750 = vst.msk [vmem:[#allocation3 + $0x38] sm:$0x30] %vm488, %v748
    %v751 = vld [vmem:[%s363] sm:$0xf]
    %v752 = vpack.c.bf16 %v751, %v751
    %v754 = vrot.slane %v752, 4
    %756 = vst.msk [vmem:[#allocation3 + $0x40] sm:$0x30] %vm479, %v754
    %v757 = vld [vmem:[%s363 + $0x1] sm:$0xf]
    %v758 = vpack.c.bf16 %v757, %v757
    %v760 = vrot.slane %v758, 4
    %761 = vrot.lane.b32.xlu0 %v760, 64
    %v762 = vpop.permute.xlu0 %761
    %764 = vst.msk [vmem:[#allocation3 + $0x40] sm:$0x30] %vm488, %v762
    %v765 = vld [vmem:[%s363 + $0x2] sm:$0xf]
    %v766 = vpack.c.bf16 %v765, %v765
    %v768 = vrot.slane %v766, 4
    %770 = vst.msk [vmem:[#allocation3 + $0x48] sm:$0x30] %vm479, %v768
    %v771 = vld [vmem:[%s361] sm:$0xf]
    %v772 = vpack.c.bf16 %v771, %v771
    %v774 = vrot.slane %v772, 2
    %776 = vst.msk [vmem:[#allocation3 + $0x28] sm:$0xc0] %vm543, %v774
    %v777 = vld [vmem:[%s361 + $0x1] sm:$0xf]
    %v778 = vpack.c.bf16 %v777, %v777
    %v780 = vrot.slane %v778, 2
    %781 = vrot.lane.b32.xlu0 %v780, 64
    %v782 = vpop.permute.xlu0 %781
    %784 = vst.msk [vmem:[#allocation3 + $0x28] sm:$0xc0] %vm552, %v782
    %v785 = vld [vmem:[%s361 + $0x2] sm:$0xf]
    %v786 = vpack.c.bf16 %v785, %v785
    %v788 = vrot.slane %v786, 2
    %790 = vst.msk [vmem:[#allocation3 + $0x30] sm:$0xc0] %vm543, %v788
    %v791 = vld [vmem:[%s363] sm:$0xf]
    %v792 = vpack.c.bf16 %v791, %v791
    %v794 = vrot.slane %v792, 2
    %795 = vrot.lane.b32.xlu0 %v794, 64
    %v796 = vpop.permute.xlu0 %795
    %798 = vst.msk [vmem:[#allocation3 + $0x30] sm:$0xc0] %vm552, %v796
    %v799 = vld [vmem:[%s363 + $0x1] sm:$0xf]
    %v800 = vpack.c.bf16 %v799, %v799
    %v802 = vrot.slane %v800, 2
    %804 = vst.msk [vmem:[#allocation3 + $0x38] sm:$0xc0] %vm543, %v802
    %v805 = vld [vmem:[%s363 + $0x2] sm:$0xf]
    %v806 = vpack.c.bf16 %v805, %v805
    %v808 = vrot.slane %v806, 2
    %809 = vrot.lane.b32.xlu0 %v808, 64
    %v810 = vpop.permute.xlu0 %809
    %812 = vst.msk [vmem:[#allocation3 + $0x38] sm:$0xc0] %vm552, %v810
    %s813 = scalar_lea.vmem [#allocation2], 88
    %v814 = vld [vmem:[%s813] sm:$0xf]
    %v815 = vpack.c.bf16 %v814, %v814
    %v817 = vrot.slane %v815, 2
    %819 = vst.msk [vmem:[#allocation3 + $0x40] sm:$0xc0] %vm543, %v817
    %v820 = vld [vmem:[%s813 + $0x1] sm:$0xf]
    %v821 = vpack.c.bf16 %v820, %v820
    %v823 = vrot.slane %v821, 2
    %824 = vrot.lane.b32.xlu0 %v823, 64
    %v825 = vpop.permute.xlu0 %824
    %827 = vst.msk [vmem:[#allocation3 + $0x40] sm:$0xc0] %vm552, %v825
    %v828 = vld [vmem:[%s813 + $0x2] sm:$0xf]
    %v829 = vpack.c.bf16 %v828, %v828
    %v831 = vrot.slane %v829, 2
    %833 = vst.msk [vmem:[#allocation3 + $0x48] sm:$0xc0] %vm543, %v831
    %v834 = vld [vmem:[#allocation3] sm:$0xff]
    %v835 = vld [vmem:[#allocation3 + $0x8] sm:$0xff]
    %v836 = vld [vmem:[#allocation3 + $0x10] sm:$0xff]
    %v837 = vld [vmem:[#allocation3 + $0x18] sm:$0xff]
    %v838 = vld [vmem:[#allocation3 + $0x20] sm:$0xff]
    %v839 = vld [vmem:[#allocation3 + $0x28] sm:$0xff]
    %v840 = vld [vmem:[#allocation3 + $0x30] sm:$0xff]
    %v841 = vld [vmem:[#allocation3 + $0x38] sm:$0xff]
    %v842 = vld [vmem:[#allocation3 + $0x40] sm:$0xff]
    %v843 = vld [vmem:[#allocation3 + $0x48] sm:$0xff]
    %v844 = vld [vmem:[#allocation6] sm:$0xf]
    %v845 = vld [vmem:[#allocation6 + $0x4] sm:$0xf]
    %v846 = vld [vmem:[#allocation6 + $0x8] sm:$0xf]
    %v847 = vld [vmem:[#allocation6 + $0xc] sm:$0xf]
    %v848 = vld [vmem:[#allocation6 + $0x10] sm:$0xf]
    %v849 = vld [vmem:[#allocation6 + $0x14] sm:$0xf]
    %v850 = vld [vmem:[#allocation6 + $0x18] sm:$0xf]
    %v851 = vld [vmem:[#allocation6 + $0x1c] sm:$0xf]
    %v852 = vld [vmem:[#allocation6 + $0x20] sm:$0xf]
    %v853 = vld [vmem:[#allocation6 + $0x24] sm:$0xf]
    %v854 = vld [vmem:[#allocation6 + $0x28] sm:$0xf]
    %v855 = vld [vmem:[#allocation6 + $0x2c] sm:$0xf]
    %v856 = vld [vmem:[#allocation6 + $0x30] sm:$0xf]
    %v857 = vld [vmem:[#allocation6 + $0x34] sm:$0xf]
    %v858 = vld [vmem:[#allocation6 + $0x38] sm:$0xf]
    %v859 = vld [vmem:[#allocation6 + $0x3c] sm:$0xf]
    %v860 = vld [vmem:[#allocation6 + $0x40] sm:$0xf]
    %v861 = vld [vmem:[#allocation6 + $0x44] sm:$0xf]
    %v862 = vld [vmem:[#allocation6 + $0x48] sm:$0xf]
    %v863 = vld [vmem:[#allocation6 + $0x4c] sm:$0xf]
    %v864 = vld [vmem:[#allocation6 + $0x50] sm:$0xf]
    %v865 = vld [vmem:[#allocation6 + $0x54] sm:$0xf]
    %v866 = vld [vmem:[#allocation6 + $0x58] sm:$0xf]
    %v867 = vld [vmem:[#allocation6 + $0x5c] sm:$0xf]
    %v868 = vld [vmem:[#allocation6 + $0x60] sm:$0xf]
    %v869 = vld [vmem:[#allocation6 + $0x64] sm:$0xf]
    %v870 = vld [vmem:[#allocation6 + $0x68] sm:$0xf]
    %v871 = vld [vmem:[#allocation6 + $0x6c] sm:$0xf]
    %v872 = vld [vmem:[#allocation6 + $0x70] sm:$0xf]
    %v873 = vld [vmem:[#allocation6 + $0x74] sm:$0xf]
    %v874 = vld [vmem:[#allocation6 + $0x78] sm:$0xf]
    %v875 = vld [vmem:[#allocation6 + $0x7c] sm:$0xf]
    %v876 = vld [vmem:[#allocation6 + $0x80] sm:$0xf]
    %v877 = vld [vmem:[#allocation6 + $0x84] sm:$0xf]
    %v878 = vld [vmem:[#allocation6 + $0x88] sm:$0xf]
    %v879 = vld [vmem:[#allocation6 + $0x8c] sm:$0xf]
    %v880 = vld [vmem:[#allocation6 + $0x90] sm:$0xf]
    %v881 = vld [vmem:[#allocation6 + $0x94] sm:$0xf]
    %v882 = vld [vmem:[#allocation6 + $0x98] sm:$0xf]
    %v883 = vld [vmem:[#allocation6 + $0x9c] sm:$0xf]
    %v884 = vld [vmem:[#allocation6 + $0xa0] sm:$0xf]
    %v885 = vld [vmem:[#allocation6 + $0xa4] sm:$0xf]
    %v886 = vld [vmem:[#allocation6 + $0xa8] sm:$0xf]
    %v887 = vld [vmem:[#allocation6 + $0xac] sm:$0xf]
    %v888 = vld [vmem:[#allocation6 + $0xb0] sm:$0xf]
    %v889 = vld [vmem:[#allocation6 + $0xb4] sm:$0xf]
    %v890 = vld [vmem:[#allocation6 + $0xb8] sm:$0xf]
    %v891 = vld [vmem:[#allocation6 + $0xbc] sm:$0xf]
    %v892 = vld [vmem:[#allocation6 + $0xc0] sm:$0xf]
    %v893 = vld [vmem:[#allocation6 + $0xc4] sm:$0xf]
    %v894 = vld [vmem:[#allocation6 + $0xc8] sm:$0xf]
    %v895 = vld [vmem:[#allocation6 + $0xcc] sm:$0xf]
    %v896 = vld [vmem:[#allocation6 + $0xd0] sm:$0xf]
    %v897 = vld [vmem:[#allocation6 + $0xd4] sm:$0xf]
    %v898 = vld [vmem:[#allocation6 + $0xd8] sm:$0xf]
    %v899 = vld [vmem:[#allocation6 + $0xdc] sm:$0xf]
    %v900 = vld [vmem:[#allocation6 + $0xe0] sm:$0xf]
    %v901 = vld [vmem:[#allocation6 + $0xe4] sm:$0xf]
    %v902 = vld [vmem:[#allocation6 + $0xe8] sm:$0xf]
    %v903 = vld [vmem:[#allocation6 + $0xec] sm:$0xf]
    %v904 = vld [vmem:[#allocation6 + $0xf0] sm:$0xf]
    %v905 = vld [vmem:[#allocation6 + $0xf4] sm:$0xf]
    %v906 = vld [vmem:[#allocation6 + $0xf8] sm:$0xf]
    %v907 = vld [vmem:[#allocation6 + $0xfc] sm:$0xf]
    %v908 = vld [vmem:[#allocation6 + $0x100] sm:$0xf]
    %v909 = vld [vmem:[#allocation6 + $0x104] sm:$0xf]
    %v910 = vld [vmem:[#allocation6 + $0x108] sm:$0xf]
    %v911 = vld [vmem:[#allocation6 + $0x10c] sm:$0xf]
    %v912 = vld [vmem:[#allocation6 + $0x110] sm:$0xf]
    %v913 = vld [vmem:[#allocation6 + $0x114] sm:$0xf]
    %v914 = vld [vmem:[#allocation6 + $0x118] sm:$0xf]
    %v915 = vld [vmem:[#allocation6 + $0x11c] sm:$0xf]
    %v916 = vld [vmem:[#allocation6 + $0x120] sm:$0xf]
    %v917 = vld [vmem:[#allocation6 + $0x124] sm:$0xf]
    %v918 = vld [vmem:[#allocation6 + $0x128] sm:$0xf]
    %v919 = vld [vmem:[#allocation6 + $0x12c] sm:$0xf]
    %v920 = vld [vmem:[#allocation6 + $0x130] sm:$0xf]
    %v921 = vld [vmem:[#allocation6 + $0x134] sm:$0xf]
    %v922 = vld [vmem:[#allocation6 + $0x138] sm:$0xf]
    %v923 = vld [vmem:[#allocation6 + $0x13c] sm:$0xf]
    %v924 = vld [vmem:[%s4] sm:$0x1]
    %v926 = vlaneseq
    %v927 = vshrl.u32 %v926, 7
    %v928 = vsub.s32 0, %v927
    %v929 = vrot.slane %v924, %v928
    %v1011 = vunpack.c.l.b16 %v844
    %v1012 = vunpack.c.l.b16 %v845
    %v1013 = vunpack.c.l.b16 %v846
    %v1014 = vunpack.c.l.b16 %v847
    %v1015 = vunpack.c.l.b16 %v848
    %v1016 = vunpack.c.l.b16 %v849
    %v1017 = vunpack.c.l.b16 %v850
    %v1018 = vunpack.c.l.b16 %v851
    %v1019 = vunpack.c.l.b16 %v852
    %v1020 = vunpack.c.l.b16 %v853
    %v1021 = vunpack.c.l.b16 %v854
    %v1022 = vunpack.c.l.b16 %v855
    %v1023 = vunpack.c.l.b16 %v856
    %v1024 = vunpack.c.l.b16 %v857
    %v1025 = vunpack.c.l.b16 %v858
    %v1026 = vunpack.c.l.b16 %v859
    %v1027 = vunpack.c.l.b16 %v860
    %v1028 = vunpack.c.l.b16 %v861
    %v1029 = vunpack.c.l.b16 %v862
    %v1030 = vunpack.c.l.b16 %v863
    %v1031 = vunpack.c.l.b16 %v864
    %v1032 = vunpack.c.l.b16 %v865
    %v1033 = vunpack.c.l.b16 %v866
    %v1034 = vunpack.c.l.b16 %v867
    %v1035 = vunpack.c.l.b16 %v868
    %v1036 = vunpack.c.l.b16 %v869
    %v1037 = vunpack.c.l.b16 %v870
    %v1038 = vunpack.c.l.b16 %v871
    %v1039 = vunpack.c.l.b16 %v872
    %v1040 = vunpack.c.l.b16 %v873
    %v1041 = vunpack.c.l.b16 %v874
    %v1042 = vunpack.c.l.b16 %v875
    %v1043 = vunpack.c.l.b16 %v876
    %v1044 = vunpack.c.l.b16 %v877
    %v1045 = vunpack.c.l.b16 %v878
    %v1046 = vunpack.c.l.b16 %v879
    %v1047 = vunpack.c.l.b16 %v880
    %v1048 = vunpack.c.l.b16 %v881
    %v1049 = vunpack.c.l.b16 %v882
    %v1050 = vunpack.c.l.b16 %v883
    %v1051 = vunpack.c.l.b16 %v884
    %v1052 = vunpack.c.l.b16 %v885
    %v1053 = vunpack.c.l.b16 %v886
    %v1054 = vunpack.c.l.b16 %v887
    %v1055 = vunpack.c.l.b16 %v888
    %v1056 = vunpack.c.l.b16 %v889
    %v1057 = vunpack.c.l.b16 %v890
    %v1058 = vunpack.c.l.b16 %v891
    %v1059 = vunpack.c.l.b16 %v892
    %v1060 = vunpack.c.l.b16 %v893
    %v1061 = vunpack.c.l.b16 %v894
    %v1062 = vunpack.c.l.b16 %v895
    %v1063 = vunpack.c.l.b16 %v896
    %v1064 = vunpack.c.l.b16 %v897
    %v1065 = vunpack.c.l.b16 %v898
    %v1066 = vunpack.c.l.b16 %v899
    %v1067 = vunpack.c.l.b16 %v900
    %v1068 = vunpack.c.l.b16 %v901
    %v1069 = vunpack.c.l.b16 %v902
    %v1070 = vunpack.c.l.b16 %v903
    %v1071 = vunpack.c.l.b16 %v904
    %v1072 = vunpack.c.l.b16 %v905
    %v1073 = vunpack.c.l.b16 %v906
    %v1074 = vunpack.c.l.b16 %v907
    %v1075 = vunpack.c.l.b16 %v908
    %v1076 = vunpack.c.l.b16 %v909
    %v1077 = vunpack.c.l.b16 %v910
    %v1078 = vunpack.c.l.b16 %v911
    %v1079 = vunpack.c.l.b16 %v912
    %v1080 = vunpack.c.l.b16 %v913
    %v1081 = vunpack.c.l.b16 %v914
    %v1082 = vunpack.c.l.b16 %v915
    %v1083 = vunpack.c.l.b16 %v916
    %v1084 = vunpack.c.l.b16 %v917
    %v1085 = vunpack.c.l.b16 %v918
    %v1086 = vunpack.c.l.b16 %v919
    %v1087 = vunpack.c.l.b16 %v920
    %v1088 = vunpack.c.l.b16 %v921
    %v1089 = vunpack.c.l.b16 %v922
    %v1090 = vunpack.c.l.b16 %v923
    %v1091 = vpack.c.b16 %v1012, %v1011
    %v1092 = vpack.c.b16 %v1014, %v1013
    %v1093 = vpack.c.b16 %v1016, %v1015
    %v1094 = vpack.c.b16 %v1018, %v1017
    %v1095 = vpack.c.b16 %v1020, %v1019
    %v1096 = vpack.c.b16 %v1022, %v1021
    %v1097 = vpack.c.b16 %v1024, %v1023
    %v1098 = vpack.c.b16 %v1026, %v1025
    %v1099 = vpack.c.b16 %v1028, %v1027
    %v1100 = vpack.c.b16 %v1030, %v1029
    %v1101 = vpack.c.b16 %v1032, %v1031
    %v1102 = vpack.c.b16 %v1034, %v1033
    %v1103 = vpack.c.b16 %v1036, %v1035
    %v1104 = vpack.c.b16 %v1038, %v1037
    %v1105 = vpack.c.b16 %v1040, %v1039
    %v1106 = vpack.c.b16 %v1042, %v1041
    %v1107 = vpack.c.b16 %v1044, %v1043
    %v1108 = vpack.c.b16 %v1046, %v1045
    %v1109 = vpack.c.b16 %v1048, %v1047
    %v1110 = vpack.c.b16 %v1050, %v1049
    %v1111 = vpack.c.b16 %v1052, %v1051
    %v1112 = vpack.c.b16 %v1054, %v1053
    %v1113 = vpack.c.b16 %v1056, %v1055
    %v1114 = vpack.c.b16 %v1058, %v1057
    %v1115 = vpack.c.b16 %v1060, %v1059
    %v1116 = vpack.c.b16 %v1062, %v1061
    %v1117 = vpack.c.b16 %v1064, %v1063
    %v1118 = vpack.c.b16 %v1066, %v1065
    %v1119 = vpack.c.b16 %v1068, %v1067
    %v1120 = vpack.c.b16 %v1070, %v1069
    %v1121 = vpack.c.b16 %v1072, %v1071
    %v1122 = vpack.c.b16 %v1074, %v1073
    %v1123 = vpack.c.b16 %v1076, %v1075
    %v1124 = vpack.c.b16 %v1078, %v1077
    %v1125 = vpack.c.b16 %v1080, %v1079
    %v1126 = vpack.c.b16 %v1082, %v1081
    %v1127 = vpack.c.b16 %v1084, %v1083
    %v1128 = vpack.c.b16 %v1086, %v1085
    %v1129 = vpack.c.b16 %v1088, %v1087
    %v1130 = vpack.c.b16 %v1090, %v1089
    %1171 = vmatprep.subr.bf16.mxu0 0
    %1172 = vmatpush1.bf16.msra.mxu0 %v1091
    %1173 = vmatprep.subr.bf16.mxu0 0
    %1174 = vmatpush1.bf16.msra.mxu0 %v1092
    %1175 = vmatprep.subr.bf16.mxu0 0
    %1176 = vmatpush1.bf16.msra.mxu0 %v1093
    %1177 = vmatprep.subr.bf16.mxu0 0
    %1178 = vmatpush1.bf16.msra.mxu0 %v1094
    %1179 = vmatprep.subr.bf16.mxu0 0
    %1180 = vmatpush1.bf16.msra.mxu0 %v1095
    %1181 = vmatprep.subr.bf16.mxu0 0
    %1182 = vmatpush1.bf16.msra.mxu0 %v1096
    %1183 = vmatprep.subr.bf16.mxu0 0
    %1184 = vmatpush1.bf16.msra.mxu0 %v1097
    %1185 = vmatprep.subr.bf16.mxu0 0
    %1186 = vmatpush1.bf16.msra.mxu0 %v1098
    %1187 = vmatprep.subr.bf16.mxu0 0
    %1188 = vmatpush1.bf16.msra.mxu0 %v1099
    %1189 = vmatprep.subr.bf16.mxu0 0
    %1190 = vmatpush1.bf16.msra.mxu0 %v1100
    %1191 = vmatprep.subr.bf16.mxu0 0
    %1192 = vmatpush1.bf16.msra.mxu0 %v1101
    %1193 = vmatprep.subr.bf16.mxu0 0
    %1194 = vmatpush1.bf16.msra.mxu0 %v1102
    %1195 = vmatprep.subr.bf16.mxu0 0
    %1196 = vmatpush1.bf16.msra.mxu0 %v1103
    %1197 = vmatprep.subr.bf16.mxu0 0
    %1198 = vmatpush1.bf16.msra.mxu0 %v1104
    %1199 = vmatprep.subr.bf16.mxu0 0
    %1200 = vmatpush1.bf16.msra.mxu0 %v1105
    %1201 = vmatprep.subr.bf16.mxu0 0
    %1202 = vmatpush1.bf16.msra.mxu0 %v1106
    %1203 = vmatprep.mubr.bf16.mxu0 %v835
    %1204 = vmatmul.mubr.bf16.gmra.mrb[0].mxu0 %v834
    %v1205 = vpop.f32.mrb[0].mxu0
    %v1206 = vadd.f32 %v929, %v1205
    %v1207 = vpop.f32.mrb[0].mxu0
    %v1208 = vpop.f32.mrb[0].mxu0
    %v1209 = vadd.f32 %v929, %v1208
    %v1210 = vpop.f32.mrb[0].mxu0
    %1211 = vmatprep.mubr.bf16.mxu0 %v840
    %1212 = vmatmul.mubr.bf16.gmra.mrb[0].mxu0 %v839
    %v1213 = vpop.f32.mrb[0].mxu0
    %v1214 = vadd.f32 %v929, %v1213
    %v1215 = vpop.f32.mrb[0].mxu0
    %v1216 = vpop.f32.mrb[0].mxu0
    %v1217 = vadd.f32 %v929, %v1216
    %v1218 = vpop.f32.mrb[0].mxu0
    %1219 = vdwg.mxu0
    %1220 = vmatprep.subr.bf16.mxu0 0
    %1221 = vmatpush1.bf16.msra.mxu0 %v1107
    %1222 = vmatprep.subr.bf16.mxu0 0
    %1223 = vmatpush1.bf16.msra.mxu0 %v1108
    %1224 = vmatprep.subr.bf16.mxu0 0
    %1225 = vmatpush1.bf16.msra.mxu0 %v1109
    %1226 = vmatprep.subr.bf16.mxu0 0
    %1227 = vmatpush1.bf16.msra.mxu0 %v1110
    %1228 = vmatprep.subr.bf16.mxu0 0
    %1229 = vmatpush1.bf16.msra.mxu0 %v1111
    %1230 = vmatprep.subr.bf16.mxu0 0
    %1231 = vmatpush1.bf16.msra.mxu0 %v1112
    %1232 = vmatprep.subr.bf16.mxu0 0
    %1233 = vmatpush1.bf16.msra.mxu0 %v1113
    %1234 = vmatprep.subr.bf16.mxu0 0
    %1235 = vmatpush1.bf16.msra.mxu0 %v1114
    %1236 = vmatprep.subr.bf16.mxu0 0
    %1237 = vmatpush1.bf16.msra.mxu0 %v1115
    %1238 = vmatprep.subr.bf16.mxu0 0
    %1239 = vmatpush1.bf16.msra.mxu0 %v1116
    %1240 = vmatprep.subr.bf16.mxu0 0
    %1241 = vmatpush1.bf16.msra.mxu0 %v1117
    %1242 = vmatprep.subr.bf16.mxu0 0
    %1243 = vmatpush1.bf16.msra.mxu0 %v1118
    %1244 = vmatprep.subr.bf16.mxu0 0
    %1245 = vmatpush1.bf16.msra.mxu0 %v1119
    %1246 = vmatprep.subr.bf16.mxu0 0
    %1247 = vmatpush1.bf16.msra.mxu0 %v1120
    %1248 = vmatprep.subr.bf16.mxu0 0
    %1249 = vmatpush1.bf16.msra.mxu0 %v1121
    %1250 = vmatprep.subr.bf16.mxu0 0
    %1251 = vmatpush1.bf16.msra.mxu0 %v1122
    %1252 = vmatprep.mubr.bf16.mxu0 %v837
    %1253 = vmatmul.mubr.bf16.gmra.mrb[0].mxu0 %v836
    %v1254 = vpop.f32.mrb[0].mxu0
    %v1255 = vadd.f32 %v1206, %v1254
    %v1256 = vpop.f32.mrb[0].mxu0
    %v1257 = vpop.f32.mrb[0].mxu0
    %v1258 = vadd.f32 %v1209, %v1257
    %v1259 = vpop.f32.mrb[0].mxu0
    %1260 = vmatprep.mubr.bf16.mxu0 %v842
    %1261 = vmatmul.mubr.bf16.gmra.mrb[0].mxu0 %v841
    %v1262 = vpop.f32.mrb[0].mxu0
    %v1263 = vadd.f32 %v1214, %v1262
    %v1264 = vpop.f32.mrb[0].mxu0
    %v1265 = vpop.f32.mrb[0].mxu0
    %v1266 = vadd.f32 %v1217, %v1265
    %v1267 = vpop.f32.mrb[0].mxu0
    %1268 = vdwg.mxu0
    %1269 = vmatprep.subr.bf16.mxu0 0
    %1270 = vmatpush1.bf16.msra.mxu0 %v1123
    %1271 = vmatprep.subr.bf16.mxu0 0
    %1272 = vmatpush1.bf16.msra.mxu0 %v1124
    %1273 = vmatprep.subr.bf16.mxu0 0
    %1274 = vmatpush1.bf16.msra.mxu0 %v1125
    %1275 = vmatprep.subr.bf16.mxu0 0
    %1276 = vmatpush1.bf16.msra.mxu0 %v1126
    %1277 = vmatprep.subr.bf16.mxu0 0
    %1278 = vmatpush1.bf16.msra.mxu0 %v1127
    %1279 = vmatprep.subr.bf16.mxu0 0
    %1280 = vmatpush1.bf16.msra.mxu0 %v1128
    %1281 = vmatprep.subr.bf16.mxu0 0
    %1282 = vmatpush1.bf16.msra.mxu0 %v1129
    %1283 = vmatprep.subr.bf16.mxu0 0
    %1284 = vmatpush1.bf16.msra.mxu0 %v1130
    %1285 = vmatprep.subr.bf16.mxu0 0
    %1286 = vmatpush1.bf16.msra.mxu0 0
    %1287 = vmatprep.subr.bf16.mxu0 0
    %1288 = vmatpush1.bf16.msra.mxu0 0
    %1289 = vmatprep.subr.bf16.mxu0 0
    %1290 = vmatpush1.bf16.msra.mxu0 0
    %1291 = vmatprep.subr.bf16.mxu0 0
    %1292 = vmatpush1.bf16.msra.mxu0 0
    %1293 = vmatprep.subr.bf16.mxu0 0
    %1294 = vmatpush1.bf16.msra.mxu0 0
    %1295 = vmatprep.subr.bf16.mxu0 0
    %1296 = vmatpush1.bf16.msra.mxu0 0
    %1297 = vmatprep.subr.bf16.mxu0 0
    %1298 = vmatpush1.bf16.msra.mxu0 0
    %1299 = vmatprep.subr.bf16.mxu0 0
    %1300 = vmatpush1.bf16.msra.mxu0 0
    %1301 = vmatprep.mubr.bf16.mxu0 0
    %1302 = vmatmul.mubr.bf16.gmra.mrb[0].mxu0 %v838
    %v1303 = vpop.f32.mrb[0].mxu0
    %v1304 = vadd.f32 %v1255, %v1303
    %v1305 = vpop.f32.mrb[0].mxu0
    %v1306 = vpop.f32.mrb[0].mxu0
    %v1307 = vadd.f32 %v1258, %v1306
    %v1308 = vpop.f32.mrb[0].mxu0
    %1309 = vmatprep.mubr.bf16.mxu0 0
    %1310 = vmatmul.mubr.bf16.gmra.mrb[0].mxu0 %v843
    %v1311 = vpop.f32.mrb[0].mxu0
    %v1312 = vadd.f32 %v1263, %v1311
    %v1313 = vpop.f32.mrb[0].mxu0
    %v1314 = vpop.f32.mrb[0].mxu0
    %v1315 = vadd.f32 %v1266, %v1314
    %v1316 = vpop.f32.mrb[0].mxu0
    %1317 = vdwg.mxu0
    %v1318 = vmax.f32 %v1304, 0.0
    %v1319 = vmax.f32 %v1307, 0.0
    %v1320 = vmax.f32 %v1312, 0.0
    %v1321 = vmax.f32 %v1315, 0.0
    %v1323 = vrot.slane %v1318, 4
    %v1325 = vmax.f32 %v1318, %v1323
    %v1327 = vrot.slane %v1325, 1
    %v1329 = vmax.f32 %v1325, %v1327
    %v1331 = vrot.slane %v1329, 1
    %vm1333 = vcmask 1040384
    %v1334 = vsel %vm1333, %v1329, %v1331
    %s1335 = scalar_lea.vmem [#allocation4], 4
    %1336 = vst [vmem:[%s1335 + $0x1] sm:$0x3] %v1334
    %v1338 = vrot.slane %v1319, 4
    %v1340 = vmax.f32 %v1319, %v1338
    %v1342 = vrot.slane %v1340, 1
    %v1344 = vmax.f32 %v1340, %v1342
    %v1346 = vrot.slane %v1344, 1
    %v1348 = vsel %vm1333, %v1344, %v1346
    %s1349 = scalar_lea.vmem [#allocation4], 8
    %1350 = vst [vmem:[%s1349 + $0x1] sm:$0x3] %v1348
    %v1352 = vrot.slane %v1320, 4
    %v1354 = vmax.f32 %v1320, %v1352
    %v1356 = vrot.slane %v1354, 1
    %v1358 = vmax.f32 %v1354, %v1356
    %v1360 = vrot.slane %v1358, 1
    %v1362 = vsel %vm1333, %v1358, %v1360
    %s1363 = scalar_lea.vmem [#allocation4], 20
    %1364 = vst [vmem:[%s1363 + $0x1] sm:$0x3] %v1362
    %v1366 = vrot.slane %v1321, 4
    %v1368 = vmax.f32 %v1321, %v1366
    %v1370 = vrot.slane %v1368, 1
    %v1372 = vmax.f32 %v1368, %v1370
    %v1374 = vrot.slane %v1372, 1
    %v1376 = vsel %vm1333, %v1372, %v1374
    %s1377 = scalar_lea.vmem [#allocation4], 24
    %1378 = vst [vmem:[%s1377 + $0x1] sm:$0x3] %v1376
    %v1379 = vld [vmem:[#allocation4] sm:$0x3]
    %v1380 = vpack.c.bf16 %v1379, %v1379
    %1381 = vst [vmem:[#allocation5] sm:$0x1] %v1380
    %v1382 = vld [vmem:[#allocation4 + $0x1] sm:$0x3]
    %v1383 = vpack.c.bf16 %v1382, %v1382
    %1384 = vst [vmem:[#allocation5 + $0x4] sm:$0x1] %v1383
    %v1385 = vld [vmem:[#allocation4 + $0x2] sm:$0x3]
    %v1386 = vpack.c.bf16 %v1385, %v1385
    %1387 = vst [vmem:[#allocation5 + $0x8] sm:$0x1] %v1386
    %v1388 = vld [vmem:[%s1335] sm:$0x3]
    %v1389 = vpack.c.bf16 %v1388, %v1388
    %1390 = vst [vmem:[#allocation5 + $0xc] sm:$0x1] %v1389
    %v1391 = vld [vmem:[%s1335 + $0x1] sm:$0x3]
    %v1392 = vpack.c.bf16 %v1391, %v1391
    %1393 = vst [vmem:[#allocation5 + $0x10] sm:$0x1] %v1392
    %v1394 = vld [vmem:[%s1335 + $0x2] sm:$0x3]
    %v1395 = vpack.c.bf16 %v1394, %v1394
    %1396 = vst [vmem:[#allocation5 + $0x14] sm:$0x1] %v1395
    %v1397 = vld [vmem:[%s1349] sm:$0x3]
    %v1398 = vpack.c.bf16 %v1397, %v1397
    %1399 = vst [vmem:[#allocation5 + $0x18] sm:$0x1] %v1398
    %v1400 = vld [vmem:[%s1349 + $0x1] sm:$0x3]
    %v1401 = vpack.c.bf16 %v1400, %v1400
    %1402 = vst [vmem:[#allocation5 + $0x1c] sm:$0x1] %v1401
    %v1403 = vld [vmem:[%s1349 + $0x2] sm:$0x3]
    %v1404 = vpack.c.bf16 %v1403, %v1403
    %1405 = vst [vmem:[#allocation5 + $0x20] sm:$0x1] %v1404
    %v1406 = vld [vmem:[%s1335] sm:$0x3]
    %v1407 = vpack.c.bf16 %v1406, %v1406
    %v1409 = vunpack.c.l.b16 %v1407
    %v1410 = vpack.c.b16 %v1409, %v1409
    %v1411 = vrot.slane %v1410, 7
    %1413 = vst [vmem:[#allocation5] sm:$0x2] %v1411
    %v1414 = vld [vmem:[%s1335 + $0x1] sm:$0x3]
    %v1415 = vpack.c.bf16 %v1414, %v1414
    %v1417 = vunpack.c.l.b16 %v1415
    %v1418 = vpack.c.b16 %v1417, %v1417
    %v1419 = vrot.slane %v1418, 7
    %1421 = vst [vmem:[#allocation5 + $0x4] sm:$0x2] %v1419
    %v1422 = vld [vmem:[%s1335 + $0x2] sm:$0x3]
    %v1423 = vpack.c.bf16 %v1422, %v1422
    %v1425 = vunpack.c.l.b16 %v1423
    %v1426 = vpack.c.b16 %v1425, %v1425
    %v1427 = vrot.slane %v1426, 7
    %1429 = vst [vmem:[#allocation5 + $0x8] sm:$0x2] %v1427
    %v1430 = vld [vmem:[%s1349] sm:$0x3]
    %v1431 = vpack.c.bf16 %v1430, %v1430
    %v1433 = vunpack.c.l.b16 %v1431
    %v1434 = vpack.c.b16 %v1433, %v1433
    %v1435 = vrot.slane %v1434, 7
    %1437 = vst [vmem:[#allocation5 + $0xc] sm:$0x2] %v1435
    %v1438 = vld [vmem:[%s1349 + $0x1] sm:$0x3]
    %v1439 = vpack.c.bf16 %v1438, %v1438
    %v1441 = vunpack.c.l.b16 %v1439
    %v1442 = vpack.c.b16 %v1441, %v1441
    %v1443 = vrot.slane %v1442, 7
    %1445 = vst [vmem:[#allocation5 + $0x10] sm:$0x2] %v1443
    %v1446 = vld [vmem:[%s1349 + $0x2] sm:$0x3]
    %v1447 = vpack.c.bf16 %v1446, %v1446
    %v1449 = vunpack.c.l.b16 %v1447
    %v1450 = vpack.c.b16 %v1449, %v1449
    %v1451 = vrot.slane %v1450, 7
    %1453 = vst [vmem:[#allocation5 + $0x14] sm:$0x2] %v1451
    %s1454 = scalar_lea.vmem [#allocation4], 12
    %v1455 = vld [vmem:[%s1454] sm:$0x3]
    %v1456 = vpack.c.bf16 %v1455, %v1455
    %v1458 = vunpack.c.l.b16 %v1456
    %v1459 = vpack.c.b16 %v1458, %v1458
    %v1460 = vrot.slane %v1459, 7
    %1462 = vst [vmem:[#allocation5 + $0x18] sm:$0x2] %v1460
    %v1463 = vld [vmem:[%s1454 + $0x1] sm:$0x3]
    %v1464 = vpack.c.bf16 %v1463, %v1463
    %v1466 = vunpack.c.l.b16 %v1464
    %v1467 = vpack.c.b16 %v1466, %v1466
    %v1468 = vrot.slane %v1467, 7
    %1470 = vst [vmem:[#allocation5 + $0x1c] sm:$0x2] %v1468
    %v1471 = vld [vmem:[%s1454 + $0x2] sm:$0x3]
    %v1472 = vpack.c.bf16 %v1471, %v1471
    %v1474 = vunpack.c.l.b16 %v1472
    %v1475 = vpack.c.b16 %v1474, %v1474
    %v1476 = vrot.slane %v1475, 7
    %1478 = vst [vmem:[#allocation5 + $0x20] sm:$0x2] %v1476
    %s1479 = scalar_lea.vmem [#allocation4], 16
    %v1480 = vld [vmem:[%s1479] sm:$0x3]
    %v1481 = vpack.c.bf16 %v1480, %v1480
    %v1483 = vunpack.c.l.b16 %v1481
    %v1484 = vpack.c.b16 %v1483, %v1483
    %v1485 = vrot.slane %v1484, 6
    %1487 = vst [vmem:[#allocation5] sm:$0x4] %v1485
    %v1488 = vld [vmem:[%s1479 + $0x1] sm:$0x3]
    %v1489 = vpack.c.bf16 %v1488, %v1488
    %v1491 = vunpack.c.l.b16 %v1489
    %v1492 = vpack.c.b16 %v1491, %v1491
    %v1493 = vrot.slane %v1492, 6
    %1495 = vst [vmem:[#allocation5 + $0x4] sm:$0x4] %v1493
    %v1496 = vld [vmem:[%s1479 + $0x2] sm:$0x3]
    %v1497 = vpack.c.bf16 %v1496, %v1496
    %v1499 = vunpack.c.l.b16 %v1497
    %v1500 = vpack.c.b16 %v1499, %v1499
    %v1501 = vrot.slane %v1500, 6
    %1503 = vst [vmem:[#allocation5 + $0x8] sm:$0x4] %v1501
    %v1504 = vld [vmem:[%s1363] sm:$0x3]
    %v1505 = vpack.c.bf16 %v1504, %v1504
    %v1507 = vunpack.c.l.b16 %v1505
    %v1508 = vpack.c.b16 %v1507, %v1507
    %v1509 = vrot.slane %v1508, 6
    %1511 = vst [vmem:[#allocation5 + $0xc] sm:$0x4] %v1509
    %v1512 = vld [vmem:[%s1363 + $0x1] sm:$0x3]
    %v1513 = vpack.c.bf16 %v1512, %v1512
    %v1515 = vunpack.c.l.b16 %v1513
    %v1516 = vpack.c.b16 %v1515, %v1515
    %v1517 = vrot.slane %v1516, 6
    %1519 = vst [vmem:[#allocation5 + $0x10] sm:$0x4] %v1517
    %v1520 = vld [vmem:[%s1363 + $0x2] sm:$0x3]
    %v1521 = vpack.c.bf16 %v1520, %v1520
    %v1523 = vunpack.c.l.b16 %v1521
    %v1524 = vpack.c.b16 %v1523, %v1523
    %v1525 = vrot.slane %v1524, 6
    %1527 = vst [vmem:[#allocation5 + $0x14] sm:$0x4] %v1525
    %v1528 = vld [vmem:[%s1377] sm:$0x3]
    %v1529 = vpack.c.bf16 %v1528, %v1528
    %v1531 = vunpack.c.l.b16 %v1529
    %v1532 = vpack.c.b16 %v1531, %v1531
    %v1533 = vrot.slane %v1532, 6
    %1535 = vst [vmem:[#allocation5 + $0x18] sm:$0x4] %v1533
    %v1536 = vld [vmem:[%s1377 + $0x1] sm:$0x3]
    %v1537 = vpack.c.bf16 %v1536, %v1536
    %v1539 = vunpack.c.l.b16 %v1537
    %v1540 = vpack.c.b16 %v1539, %v1539
    %v1541 = vrot.slane %v1540, 6
    %1543 = vst [vmem:[#allocation5 + $0x1c] sm:$0x4] %v1541
    %v1544 = vld [vmem:[%s1377 + $0x2] sm:$0x3]
    %v1545 = vpack.c.bf16 %v1544, %v1544
    %v1547 = vunpack.c.l.b16 %v1545
    %v1548 = vpack.c.b16 %v1547, %v1547
    %v1549 = vrot.slane %v1548, 6
    %1551 = vst [vmem:[#allocation5 + $0x20] sm:$0x4] %v1549
    %v1552 = vld [vmem:[%s1363] sm:$0x3]
    %v1553 = vpack.c.bf16 %v1552, %v1552
    %v1555 = vunpack.c.l.b16 %v1553
    %v1556 = vpack.c.b16 %v1555, %v1555
    %v1557 = vrot.slane %v1556, 5
    %1559 = vst [vmem:[#allocation5] sm:$0x8] %v1557
    %v1560 = vld [vmem:[%s1363 + $0x1] sm:$0x3]
    %v1561 = vpack.c.bf16 %v1560, %v1560
    %v1563 = vunpack.c.l.b16 %v1561
    %v1564 = vpack.c.b16 %v1563, %v1563
    %v1565 = vrot.slane %v1564, 5
    %1567 = vst [vmem:[#allocation5 + $0x4] sm:$0x8] %v1565
    %v1568 = vld [vmem:[%s1363 + $0x2] sm:$0x3]
    %v1569 = vpack.c.bf16 %v1568, %v1568
    %v1571 = vunpack.c.l.b16 %v1569
    %v1572 = vpack.c.b16 %v1571, %v1571
    %v1573 = vrot.slane %v1572, 5
    %1575 = vst [vmem:[#allocation5 + $0x8] sm:$0x8] %v1573
    %v1576 = vld [vmem:[%s1377] sm:$0x3]
    %v1577 = vpack.c.bf16 %v1576, %v1576
    %v1579 = vunpack.c.l.b16 %v1577
    %v1580 = vpack.c.b16 %v1579, %v1579
    %v1581 = vrot.slane %v1580, 5
    %1583 = vst [vmem:[#allocation5 + $0xc] sm:$0x8] %v1581
    %v1584 = vld [vmem:[%s1377 + $0x1] sm:$0x3]
    %v1585 = vpack.c.bf16 %v1584, %v1584
    %v1587 = vunpack.c.l.b16 %v1585
    %v1588 = vpack.c.b16 %v1587, %v1587
    %v1589 = vrot.slane %v1588, 5
    %1591 = vst [vmem:[#allocation5 + $0x10] sm:$0x8] %v1589
    %v1592 = vld [vmem:[%s1377 + $0x2] sm:$0x3]
    %v1593 = vpack.c.bf16 %v1592, %v1592
    %v1595 = vunpack.c.l.b16 %v1593
    %v1596 = vpack.c.b16 %v1595, %v1595
    %v1597 = vrot.slane %v1596, 5
    %1599 = vst [vmem:[#allocation5 + $0x14] sm:$0x8] %v1597
    %s1600 = scalar_lea.vmem [#allocation4], 28
    %v1601 = vld [vmem:[%s1600] sm:$0x3]
    %v1602 = vpack.c.bf16 %v1601, %v1601
    %v1604 = vunpack.c.l.b16 %v1602
    %v1605 = vpack.c.b16 %v1604, %v1604
    %v1606 = vrot.slane %v1605, 5
    %1608 = vst [vmem:[#allocation5 + $0x18] sm:$0x8] %v1606
    %v1609 = vld [vmem:[%s1600 + $0x1] sm:$0x3]
    %v1610 = vpack.c.bf16 %v1609, %v1609
    %v1612 = vunpack.c.l.b16 %v1610
    %v1613 = vpack.c.b16 %v1612, %v1612
    %v1614 = vrot.slane %v1613, 5
    %1616 = vst [vmem:[#allocation5 + $0x1c] sm:$0x8] %v1614
    %v1617 = vld [vmem:[%s1600 + $0x2] sm:$0x3]
    %v1618 = vpack.c.bf16 %v1617, %v1617
    %v1620 = vunpack.c.l.b16 %v1618
    %v1621 = vpack.c.b16 %v1620, %v1620
    %v1622 = vrot.slane %v1621, 5
    %1624 = vst [vmem:[#allocation5 + $0x20] sm:$0x8] %v1622
    %v1625 = vld [vmem:[#allocation5] sm:$0xff]
    %v1626 = vld [vmem:[#allocation5 + $0x8] sm:$0xff]
    %v1627 = vld [vmem:[#allocation5 + $0x10] sm:$0xff]
    %v1628 = vld [vmem:[#allocation5 + $0x18] sm:$0xff]
    %v1629 = vld [vmem:[#allocation5 + $0x20] sm:$0xf]
    %v1630 = vld [vmem:[%s5] sm:$0xff]
    %v1631 = vld [vmem:[%s5 + $0x8] sm:$0xff]
    %v1632 = vld [vmem:[%s5 + $0x10] sm:$0xff]
    %v1633 = vld [vmem:[%s5 + $0x18] sm:$0xff]
    %v1634 = vld [vmem:[%s5 + $0x20] sm:$0xff]
    %v1635 = vld [vmem:[%s5 + $0x28] sm:$0xff]
    %v1636 = vld [vmem:[%s5 + $0x30] sm:$0xff]
    %v1637 = vld [vmem:[%s5 + $0x38] sm:$0xff]
    %v1638 = vld [vmem:[%s5 + $0x40] sm:$0xff]
    %v1639 = vld [vmem:[%s5 + $0x48] sm:$0xff]
    %v1640 = vld [vmem:[%s5 + $0x50] sm:$0xff]
    %v1641 = vld [vmem:[%s5 + $0x58] sm:$0xff]
    %v1642 = vld [vmem:[%s5 + $0x60] sm:$0xff]
    %v1643 = vld [vmem:[%s5 + $0x68] sm:$0xff]
    %v1644 = vld [vmem:[%s5 + $0x70] sm:$0xff]
    %v1645 = vld [vmem:[%s5 + $0x78] sm:$0xff]
    %v1646 = vld [vmem:[%s5 + $0x80] sm:$0xff]
    %v1647 = vld [vmem:[%s5 + $0x88] sm:$0xff]
    %v1648 = vld [vmem:[%s5 + $0x90] sm:$0xff]
    %v1649 = vld [vmem:[%s5 + $0x98] sm:$0xff]
    %v1650 = vld [vmem:[%s5 + $0xa0] sm:$0xff]
    %v1651 = vld [vmem:[%s5 + $0xa8] sm:$0xff]
    %v1652 = vld [vmem:[%s5 + $0xb0] sm:$0xff]
    %v1653 = vld [vmem:[%s5 + $0xb8] sm:$0xff]
    %v1654 = vld [vmem:[%s5 + $0xc0] sm:$0xff]
    %v1655 = vld [vmem:[%s5 + $0xc8] sm:$0xff]
    %v1656 = vld [vmem:[%s5 + $0xd0] sm:$0xff]
    %v1657 = vld [vmem:[%s5 + $0xd8] sm:$0xff]
    %v1658 = vld [vmem:[%s5 + $0xe0] sm:$0xff]
    %v1659 = vld [vmem:[%s5 + $0xe8] sm:$0xff]
    %v1660 = vld [vmem:[%s5 + $0xf0] sm:$0xff]
    %v1661 = vld [vmem:[%s5 + $0xf8] sm:$0xff]
    %v1662 = vld [vmem:[%s5 + $0x100] sm:$0xff]
    %v1663 = vld [vmem:[%s5 + $0x108] sm:$0xff]
    %v1664 = vld [vmem:[%s5 + $0x110] sm:$0xff]
    %v1665 = vld [vmem:[%s5 + $0x118] sm:$0xff]
    %v1666 = vld [vmem:[%s5 + $0x120] sm:$0xff]
    %v1667 = vld [vmem:[%s5 + $0x128] sm:$0xff]
    %v1668 = vld [vmem:[%s5 + $0x130] sm:$0xff]
    %v1669 = vld [vmem:[%s5 + $0x138] sm:$0xff]
    %v1670 = vld [vmem:[%s5 + $0x140] sm:$0xff]
    %v1671 = vld [vmem:[%s5 + $0x148] sm:$0xff]
    %v1672 = vld [vmem:[%s5 + $0x150] sm:$0xff]
    %v1673 = vld [vmem:[%s5 + $0x158] sm:$0xff]
    %v1674 = vld [vmem:[%s5 + $0x160] sm:$0xff]
    %v1675 = vld [vmem:[%s5 + $0x168] sm:$0xff]
    %v1676 = vld [vmem:[%s5 + $0x170] sm:$0xff]
    %v1677 = vld [vmem:[%s5 + $0x178] sm:$0xff]
    %v1678 = vld [vmem:[%s5 + $0x180] sm:$0xff]
    %v1679 = vld [vmem:[%s5 + $0x188] sm:$0xff]
    %v1680 = vld [vmem:[%s5 + $0x190] sm:$0xff]
    %v1681 = vld [vmem:[%s5 + $0x198] sm:$0xff]
    %v1682 = vld [vmem:[%s5 + $0x1a0] sm:$0xff]
    %v1683 = vld [vmem:[%s5 + $0x1a8] sm:$0xff]
    %v1684 = vld [vmem:[%s5 + $0x1b0] sm:$0xff]
    %v1685 = vld [vmem:[%s5 + $0x1b8] sm:$0xff]
    %v1686 = vld [vmem:[%s5 + $0x1c0] sm:$0xff]
    %v1687 = vld [vmem:[%s5 + $0x1c8] sm:$0xff]
    %v1688 = vld [vmem:[%s5 + $0x1d0] sm:$0xff]
    %v1689 = vld [vmem:[%s5 + $0x1d8] sm:$0xff]
    %v1690 = vld [vmem:[%s5 + $0x1e0] sm:$0xff]
    %v1691 = vld [vmem:[%s5 + $0x1e8] sm:$0xff]
    %v1692 = vld [vmem:[%s5 + $0x1f0] sm:$0xff]
    %v1693 = vld [vmem:[%s5 + $0x1f8] sm:$0xff]
    %v1694 = vld [vmem:[%s5 + $0x200] sm:$0xff]
    %v1695 = vld [vmem:[%s5 + $0x208] sm:$0xff]
    %v1696 = vld [vmem:[%s5 + $0x210] sm:$0xff]
    %v1697 = vld [vmem:[%s5 + $0x218] sm:$0xff]
    %v1698 = vld [vmem:[%s5 + $0x220] sm:$0xff]
    %v1699 = vld [vmem:[%s5 + $0x228] sm:$0xff]
    %v1700 = vld [vmem:[%s5 + $0x230] sm:$0xff]
    %v1701 = vld [vmem:[%s5 + $0x238] sm:$0xff]
    %v1702 = vld [vmem:[%s5 + $0x240] sm:$0xff]
    %v1703 = vld [vmem:[%s5 + $0x248] sm:$0xff]
    %v1704 = vld [vmem:[%s5 + $0x250] sm:$0xff]
    %v1705 = vld [vmem:[%s5 + $0x258] sm:$0xff]
    %v1706 = vld [vmem:[%s5 + $0x260] sm:$0xff]
    %v1707 = vld [vmem:[%s5 + $0x268] sm:$0xff]
    %v1708 = vld [vmem:[%s5 + $0x270] sm:$0xff]
    %v1709 = vld [vmem:[%s5 + $0x278] sm:$0xff]
    %v1710 = vld [vmem:[%s5 + $0x280] sm:$0xff]
    %v1711 = vld [vmem:[%s5 + $0x288] sm:$0xff]
    %v1712 = vld [vmem:[%s5 + $0x290] sm:$0xff]
    %v1713 = vld [vmem:[%s5 + $0x298] sm:$0xff]
    %v1714 = vld [vmem:[%s5 + $0x2a0] sm:$0xff]
    %v1715 = vld [vmem:[%s5 + $0x2a8] sm:$0xff]
    %v1716 = vld [vmem:[%s5 + $0x2b0] sm:$0xff]
    %v1717 = vld [vmem:[%s5 + $0x2b8] sm:$0xff]
    %v1718 = vld [vmem:[%s5 + $0x2c0] sm:$0xff]
    %v1719 = vld [vmem:[%s5 + $0x2c8] sm:$0xff]
    %v1720 = vld [vmem:[%s5 + $0x2d0] sm:$0xff]
    %v1721 = vld [vmem:[%s5 + $0x2d8] sm:$0xff]
    %v1722 = vld [vmem:[%s5 + $0x2e0] sm:$0xff]
    %v1723 = vld [vmem:[%s5 + $0x2e8] sm:$0xff]
    %v1724 = vld [vmem:[%s5 + $0x2f0] sm:$0xff]
    %v1725 = vld [vmem:[%s5 + $0x2f8] sm:$0xff]
    %v1726 = vld [vmem:[%s5 + $0x300] sm:$0xff]
    %v1727 = vld [vmem:[%s5 + $0x308] sm:$0xff]
    %v1728 = vld [vmem:[%s5 + $0x310] sm:$0xff]
    %v1729 = vld [vmem:[%s5 + $0x318] sm:$0xff]
    %v1730 = vld [vmem:[%s5 + $0x320] sm:$0xff]
    %v1731 = vld [vmem:[%s5 + $0x328] sm:$0xff]
    %v1732 = vld [vmem:[%s5 + $0x330] sm:$0xff]
    %v1733 = vld [vmem:[%s5 + $0x338] sm:$0xff]
    %v1734 = vld [vmem:[%s5 + $0x340] sm:$0xff]
    %v1735 = vld [vmem:[%s5 + $0x348] sm:$0xff]
    %v1736 = vld [vmem:[%s5 + $0x350] sm:$0xff]
    %v1737 = vld [vmem:[%s5 + $0x358] sm:$0xff]
    %v1738 = vld [vmem:[%s5 + $0x360] sm:$0xff]
    %v1739 = vld [vmem:[%s5 + $0x368] sm:$0xff]
    %v1740 = vld [vmem:[%s5 + $0x370] sm:$0xff]
    %v1741 = vld [vmem:[%s5 + $0x378] sm:$0xff]
    %v1742 = vld [vmem:[%s5 + $0x380] sm:$0xff]
    %v1743 = vld [vmem:[%s5 + $0x388] sm:$0xff]
    %v1744 = vld [vmem:[%s5 + $0x390] sm:$0xff]
    %v1745 = vld [vmem:[%s5 + $0x398] sm:$0xff]
    %v1746 = vld [vmem:[%s5 + $0x3a0] sm:$0xff]
    %v1747 = vld [vmem:[%s5 + $0x3a8] sm:$0xff]
    %v1748 = vld [vmem:[%s5 + $0x3b0] sm:$0xff]
    %v1749 = vld [vmem:[%s5 + $0x3b8] sm:$0xff]
    %v1750 = vld [vmem:[%s5 + $0x3c0] sm:$0xff]
    %v1751 = vld [vmem:[%s5 + $0x3c8] sm:$0xff]
    %v1752 = vld [vmem:[%s5 + $0x3d0] sm:$0xff]
    %v1753 = vld [vmem:[%s5 + $0x3d8] sm:$0xff]
    %v1754 = vld [vmem:[%s5 + $0x3e0] sm:$0xff]
    %v1755 = vld [vmem:[%s5 + $0x3e8] sm:$0xff]
    %v1756 = vld [vmem:[%s5 + $0x3f0] sm:$0xff]
    %v1757 = vld [vmem:[%s5 + $0x3f8] sm:$0xff]
    %v1758 = vld [vmem:[%s5 + $0x400] sm:$0xff]
    %v1759 = vld [vmem:[%s5 + $0x408] sm:$0xff]
    %v1760 = vld [vmem:[%s5 + $0x410] sm:$0xff]
    %v1761 = vld [vmem:[%s5 + $0x418] sm:$0xff]
    %v1762 = vld [vmem:[%s5 + $0x420] sm:$0xff]
    %v1763 = vld [vmem:[%s5 + $0x428] sm:$0xff]
    %v1764 = vld [vmem:[%s5 + $0x430] sm:$0xff]
    %v1765 = vld [vmem:[%s5 + $0x438] sm:$0xff]
    %v1766 = vld [vmem:[%s5 + $0x440] sm:$0xff]
    %v1767 = vld [vmem:[%s5 + $0x448] sm:$0xff]
    %v1768 = vld [vmem:[%s5 + $0x450] sm:$0xff]
    %v1769 = vld [vmem:[%s5 + $0x458] sm:$0xff]
    %v1770 = vld [vmem:[%s5 + $0x460] sm:$0xff]
    %v1771 = vld [vmem:[%s5 + $0x468] sm:$0xff]
    %v1772 = vld [vmem:[%s5 + $0x470] sm:$0xff]
    %v1773 = vld [vmem:[%s5 + $0x478] sm:$0xff]
    %v1774 = vld [vmem:[%s5 + $0x480] sm:$0xff]
    %v1775 = vld [vmem:[%s5 + $0x488] sm:$0xff]
    %v1776 = vld [vmem:[%s5 + $0x490] sm:$0xff]
    %v1777 = vld [vmem:[%s5 + $0x498] sm:$0xff]
    %v1778 = vld [vmem:[%s5 + $0x4a0] sm:$0xff]
    %v1779 = vld [vmem:[%s5 + $0x4a8] sm:$0xff]
    %v1780 = vld [vmem:[%s5 + $0x4b0] sm:$0xff]
    %v1781 = vld [vmem:[%s5 + $0x4b8] sm:$0xff]
    %v1782 = vld [vmem:[%s5 + $0x4c0] sm:$0xff]
    %v1783 = vld [vmem:[%s5 + $0x4c8] sm:$0xff]
    %v1784 = vld [vmem:[%s5 + $0x4d0] sm:$0xff]
    %v1785 = vld [vmem:[%s5 + $0x4d8] sm:$0xff]
    %v1786 = vld [vmem:[%s5 + $0x4e0] sm:$0xff]
    %v1787 = vld [vmem:[%s5 + $0x4e8] sm:$0xff]
    %v1788 = vld [vmem:[%s5 + $0x4f0] sm:$0xff]
    %v1789 = vld [vmem:[%s5 + $0x4f8] sm:$0xff]
    %v1790 = vld [vmem:[%s5 + $0x500] sm:$0xff]
    %v1791 = vld [vmem:[%s5 + $0x508] sm:$0xff]
    %v1792 = vld [vmem:[%s5 + $0x510] sm:$0xff]
    %v1793 = vld [vmem:[%s5 + $0x518] sm:$0xff]
    %v1794 = vld [vmem:[%s5 + $0x520] sm:$0xff]
    %v1795 = vld [vmem:[%s5 + $0x528] sm:$0xff]
    %v1796 = vld [vmem:[%s5 + $0x530] sm:$0xff]
    %v1797 = vld [vmem:[%s5 + $0x538] sm:$0xff]
    %v1798 = vld [vmem:[%s5 + $0x540] sm:$0xff]
    %v1799 = vld [vmem:[%s5 + $0x548] sm:$0xff]
    %v1800 = vld [vmem:[%s5 + $0x550] sm:$0xff]
    %v1801 = vld [vmem:[%s5 + $0x558] sm:$0xff]
    %v1802 = vld [vmem:[%s5 + $0x560] sm:$0xff]
    %v1803 = vld [vmem:[%s5 + $0x568] sm:$0xff]
    %v1804 = vld [vmem:[%s5 + $0x570] sm:$0xff]
    %v1805 = vld [vmem:[%s5 + $0x578] sm:$0xff]
    %v1806 = vld [vmem:[%s5 + $0x580] sm:$0xff]
    %v1807 = vld [vmem:[%s5 + $0x588] sm:$0xff]
    %v1808 = vld [vmem:[%s5 + $0x590] sm:$0xff]
    %v1809 = vld [vmem:[%s5 + $0x598] sm:$0xff]
    %v1810 = vld [vmem:[%s5 + $0x5a0] sm:$0xff]
    %v1811 = vld [vmem:[%s5 + $0x5a8] sm:$0xff]
    %v1812 = vld [vmem:[%s5 + $0x5b0] sm:$0xff]
    %v1813 = vld [vmem:[%s5 + $0x5b8] sm:$0xff]
    %v1814 = vld [vmem:[%s5 + $0x5c0] sm:$0xff]
    %v1815 = vld [vmem:[%s5 + $0x5c8] sm:$0xff]
    %v1816 = vld [vmem:[%s5 + $0x5d0] sm:$0xff]
    %v1817 = vld [vmem:[%s5 + $0x5d8] sm:$0xff]
    %v1818 = vld [vmem:[%s5 + $0x5e0] sm:$0xff]
    %v1819 = vld [vmem:[%s5 + $0x5e8] sm:$0xff]
    %v1820 = vld [vmem:[%s5 + $0x5f0] sm:$0xff]
    %v1821 = vld [vmem:[%s5 + $0x5f8] sm:$0xff]
    %v1822 = vld [vmem:[%s5 + $0x600] sm:$0xff]
    %v1823 = vld [vmem:[%s5 + $0x608] sm:$0xff]
    %v1824 = vld [vmem:[%s5 + $0x610] sm:$0xff]
    %v1825 = vld [vmem:[%s5 + $0x618] sm:$0xff]
    %v1826 = vld [vmem:[%s5 + $0x620] sm:$0xff]
    %v1827 = vld [vmem:[%s5 + $0x628] sm:$0xff]
    %v1828 = vld [vmem:[%s5 + $0x630] sm:$0xff]
    %v1829 = vld [vmem:[%s5 + $0x638] sm:$0xff]
    %v1830 = vld [vmem:[%s5 + $0x640] sm:$0xff]
    %v1831 = vld [vmem:[%s5 + $0x648] sm:$0xff]
    %v1832 = vld [vmem:[%s5 + $0x650] sm:$0xff]
    %v1833 = vld [vmem:[%s5 + $0x658] sm:$0xff]
    %v1834 = vld [vmem:[%s5 + $0x660] sm:$0xff]
    %v1835 = vld [vmem:[%s5 + $0x668] sm:$0xff]
    %v1836 = vld [vmem:[%s5 + $0x670] sm:$0xff]
    %v1837 = vld [vmem:[%s5 + $0x678] sm:$0xff]
    %v1838 = vld [vmem:[%s5 + $0x680] sm:$0xff]
    %v1839 = vld [vmem:[%s5 + $0x688] sm:$0xff]
    %v1840 = vld [vmem:[%s5 + $0x690] sm:$0xff]
    %v1841 = vld [vmem:[%s5 + $0x698] sm:$0xff]
    %v1842 = vld [vmem:[%s5 + $0x6a0] sm:$0xff]
    %v1843 = vld [vmem:[%s5 + $0x6a8] sm:$0xff]
    %v1844 = vld [vmem:[%s5 + $0x6b0] sm:$0xff]
    %v1845 = vld [vmem:[%s5 + $0x6b8] sm:$0xff]
    %v1846 = vld [vmem:[%s5 + $0x6c0] sm:$0xff]
    %v1847 = vld [vmem:[%s5 + $0x6c8] sm:$0xff]
    %v1848 = vld [vmem:[%s5 + $0x6d0] sm:$0xff]
    %v1849 = vld [vmem:[%s5 + $0x6d8] sm:$0xff]
    %v1850 = vld [vmem:[%s5 + $0x6e0] sm:$0xff]
    %v1851 = vld [vmem:[%s5 + $0x6e8] sm:$0xff]
    %v1852 = vld [vmem:[%s5 + $0x6f0] sm:$0xff]
    %v1853 = vld [vmem:[%s5 + $0x6f8] sm:$0xff]
    %v1854 = vld [vmem:[%s5 + $0x700] sm:$0xff]
    %v1855 = vld [vmem:[%s5 + $0x708] sm:$0xff]
    %v1856 = vld [vmem:[%s5 + $0x710] sm:$0xff]
    %v1857 = vld [vmem:[%s5 + $0x718] sm:$0xff]
    %v1858 = vld [vmem:[%s5 + $0x720] sm:$0xff]
    %v1859 = vld [vmem:[%s5 + $0x728] sm:$0xff]
    %v1860 = vld [vmem:[%s5 + $0x730] sm:$0xff]
    %v1861 = vld [vmem:[%s5 + $0x738] sm:$0xff]
    %v1862 = vld [vmem:[%s5 + $0x740] sm:$0xff]
    %v1863 = vld [vmem:[%s5 + $0x748] sm:$0xff]
    %v1864 = vld [vmem:[%s5 + $0x750] sm:$0xff]
    %v1865 = vld [vmem:[%s5 + $0x758] sm:$0xff]
    %v1866 = vld [vmem:[%s5 + $0x760] sm:$0xff]
    %v1867 = vld [vmem:[%s5 + $0x768] sm:$0xff]
    %v1868 = vld [vmem:[%s5 + $0x770] sm:$0xff]
    %v1869 = vld [vmem:[%s5 + $0x778] sm:$0xff]
    %v1870 = vld [vmem:[%s5 + $0x780] sm:$0xff]
    %v1871 = vld [vmem:[%s5 + $0x788] sm:$0xff]
    %v1872 = vld [vmem:[%s5 + $0x790] sm:$0xff]
    %v1873 = vld [vmem:[%s5 + $0x798] sm:$0xff]
    %v1874 = vld [vmem:[%s5 + $0x7a0] sm:$0xff]
    %v1875 = vld [vmem:[%s5 + $0x7a8] sm:$0xff]
    %v1876 = vld [vmem:[%s5 + $0x7b0] sm:$0xff]
    %v1877 = vld [vmem:[%s5 + $0x7b8] sm:$0xff]
    %v1878 = vld [vmem:[%s5 + $0x7c0] sm:$0xff]
    %v1879 = vld [vmem:[%s5 + $0x7c8] sm:$0xff]
    %v1880 = vld [vmem:[%s5 + $0x7d0] sm:$0xff]
    %v1881 = vld [vmem:[%s5 + $0x7d8] sm:$0xff]
    %v1882 = vld [vmem:[%s5 + $0x7e0] sm:$0xff]
    %v1883 = vld [vmem:[%s5 + $0x7e8] sm:$0xff]
    %v1884 = vld [vmem:[%s5 + $0x7f0] sm:$0xff]
    %v1885 = vld [vmem:[%s5 + $0x7f8] sm:$0xff]
    %v1886 = vld [vmem:[%s5 + $0x800] sm:$0xff]
    %v1887 = vld [vmem:[%s5 + $0x808] sm:$0xff]
    %v1888 = vld [vmem:[%s5 + $0x810] sm:$0xff]
    %v1889 = vld [vmem:[%s5 + $0x818] sm:$0xff]
    %v1890 = vld [vmem:[%s5 + $0x820] sm:$0xff]
    %v1891 = vld [vmem:[%s5 + $0x828] sm:$0xff]
    %v1892 = vld [vmem:[%s5 + $0x830] sm:$0xff]
    %v1893 = vld [vmem:[%s5 + $0x838] sm:$0xff]
    %v1894 = vld [vmem:[%s5 + $0x840] sm:$0xff]
    %v1895 = vld [vmem:[%s5 + $0x848] sm:$0xff]
    %v1896 = vld [vmem:[%s5 + $0x850] sm:$0xff]
    %v1897 = vld [vmem:[%s5 + $0x858] sm:$0xff]
    %v1898 = vld [vmem:[%s5 + $0x860] sm:$0xff]
    %v1899 = vld [vmem:[%s5 + $0x868] sm:$0xff]
    %v1900 = vld [vmem:[%s5 + $0x870] sm:$0xff]
    %v1901 = vld [vmem:[%s5 + $0x878] sm:$0xff]
    %v1902 = vld [vmem:[%s5 + $0x880] sm:$0xff]
    %v1903 = vld [vmem:[%s5 + $0x888] sm:$0xff]
    %v1904 = vld [vmem:[%s5 + $0x890] sm:$0xff]
    %v1905 = vld [vmem:[%s5 + $0x898] sm:$0xff]
    %v1906 = vld [vmem:[%s5 + $0x8a0] sm:$0xff]
    %v1907 = vld [vmem:[%s5 + $0x8a8] sm:$0xff]
    %v1908 = vld [vmem:[%s5 + $0x8b0] sm:$0xff]
    %v1909 = vld [vmem:[%s5 + $0x8b8] sm:$0xff]
    %v1910 = vld [vmem:[%s5 + $0x8c0] sm:$0xff]
    %v1911 = vld [vmem:[%s5 + $0x8c8] sm:$0xff]
    %v1912 = vld [vmem:[%s5 + $0x8d0] sm:$0xff]
    %v1913 = vld [vmem:[%s5 + $0x8d8] sm:$0xff]
    %v1914 = vld [vmem:[%s5 + $0x8e0] sm:$0xff]
    %v1915 = vld [vmem:[%s5 + $0x8e8] sm:$0xff]
    %v1916 = vld [vmem:[%s5 + $0x8f0] sm:$0xff]
    %v1917 = vld [vmem:[%s5 + $0x8f8] sm:$0xff]
    %v1918 = vld [vmem:[%s6] sm:$0xf]
    %v1920 = vlaneseq
    %v1921 = vshrl.u32 %v1920, 7
    %v1922 = vsub.s32 0, %v1921
    %v1923 = vrot.slane %v1918, %v1922
    %v1924 = vlaneseq
    %v1925 = vshrl.u32 %v1924, 7
    %v1926 = vsub.s32 1, %v1925
    %v1927 = vrot.slane %v1918, %v1926
    %v1928 = vlaneseq
    %v1929 = vshrl.u32 %v1928, 7
    %v1930 = vsub.s32 2, %v1929
    %v1931 = vrot.slane %v1918, %v1930
    %v1932 = vlaneseq
    %v1933 = vshrl.u32 %v1932, 7
    %v1934 = vsub.s32 3, %v1933
    %v1935 = vrot.slane %v1918, %v1934
    %v1945 = vunpack.c.l.b16 %v1625
    %v1946 = vunpack.c.h.b16 %v1625
    %v1947 = vunpack.c.l.b16 %v1626
    %v1948 = vunpack.c.h.b16 %v1626
    %v1949 = vunpack.c.l.b16 %v1627
    %v1950 = vunpack.c.h.b16 %v1627
    %v1951 = vunpack.c.l.b16 %v1628
    %v1952 = vunpack.c.h.b16 %v1628
    %v1953 = vunpack.c.l.b16 %v1629
    %v1954 = vpack.c.b16 %v1945, %v1945
    %v1955 = vpack.c.b16 %v1946, %v1946
    %v1956 = vpack.c.b16 %v1947, %v1947
    %v1957 = vpack.c.b16 %v1948, %v1948
    %v1958 = vpack.c.b16 %v1949, %v1949
    %v1959 = vpack.c.b16 %v1950, %v1950
    %v1960 = vpack.c.b16 %v1951, %v1951
    %v1961 = vpack.c.b16 %v1952, %v1952
    %v1962 = vpack.c.b16 %v1953, %v1953
    %v2260 = vunpack.c.l.b16 %v1630
    %v2261 = vunpack.c.h.b16 %v1630
    %v2262 = vunpack.c.l.b16 %v1631
    %v2263 = vunpack.c.h.b16 %v1631
    %v2264 = vunpack.c.l.b16 %v1632
    %v2265 = vunpack.c.h.b16 %v1632
    %v2266 = vunpack.c.l.b16 %v1633
    %v2267 = vunpack.c.h.b16 %v1633
    %v2268 = vunpack.c.l.b16 %v1634
    %v2269 = vunpack.c.h.b16 %v1634
    %v2270 = vunpack.c.l.b16 %v1635
    %v2271 = vunpack.c.h.b16 %v1635
    %v2272 = vunpack.c.l.b16 %v1636
    %v2273 = vunpack.c.h.b16 %v1636
    %v2274 = vunpack.c.l.b16 %v1637
    %v2275 = vunpack.c.h.b16 %v1637
    %v2276 = vunpack.c.l.b16 %v1638
    %v2277 = vunpack.c.h.b16 %v1638
    %v2278 = vunpack.c.l.b16 %v1639
    %v2279 = vunpack.c.h.b16 %v1639
    %v2280 = vunpack.c.l.b16 %v1640
    %v2281 = vunpack.c.h.b16 %v1640
    %v2282 = vunpack.c.l.b16 %v1641
    %v2283 = vunpack.c.h.b16 %v1641
    %v2284 = vunpack.c.l.b16 %v1642
    %v2285 = vunpack.c.h.b16 %v1642
    %v2286 = vunpack.c.l.b16 %v1643
    %v2287 = vunpack.c.h.b16 %v1643
    %v2288 = vunpack.c.l.b16 %v1644
    %v2289 = vunpack.c.h.b16 %v1644
    %v2290 = vunpack.c.l.b16 %v1645
    %v2291 = vunpack.c.h.b16 %v1645
    %v2292 = vunpack.c.l.b16 %v1646
    %v2293 = vunpack.c.h.b16 %v1646
    %v2294 = vunpack.c.l.b16 %v1647
    %v2295 = vunpack.c.h.b16 %v1647
    %v2296 = vunpack.c.l.b16 %v1648
    %v2297 = vunpack.c.h.b16 %v1648
    %v2298 = vunpack.c.l.b16 %v1649
    %v2299 = vunpack.c.h.b16 %v1649
    %v2300 = vunpack.c.l.b16 %v1650
    %v2301 = vunpack.c.h.b16 %v1650
    %v2302 = vunpack.c.l.b16 %v1651
    %v2303 = vunpack.c.h.b16 %v1651
    %v2304 = vunpack.c.l.b16 %v1652
    %v2305 = vunpack.c.h.b16 %v1652
    %v2306 = vunpack.c.l.b16 %v1653
    %v2307 = vunpack.c.h.b16 %v1653
    %v2308 = vunpack.c.l.b16 %v1654
    %v2309 = vunpack.c.h.b16 %v1654
    %v2310 = vunpack.c.l.b16 %v1655
    %v2311 = vunpack.c.h.b16 %v1655
    %v2312 = vunpack.c.l.b16 %v1656
    %v2313 = vunpack.c.h.b16 %v1656
    %v2314 = vunpack.c.l.b16 %v1657
    %v2315 = vunpack.c.h.b16 %v1657
    %v2316 = vunpack.c.l.b16 %v1658
    %v2317 = vunpack.c.h.b16 %v1658
    %v2318 = vunpack.c.l.b16 %v1659
    %v2319 = vunpack.c.h.b16 %v1659
    %v2320 = vunpack.c.l.b16 %v1660
    %v2321 = vunpack.c.h.b16 %v1660
    %v2322 = vunpack.c.l.b16 %v1661
    %v2323 = vunpack.c.h.b16 %v1661
    %v2324 = vunpack.c.l.b16 %v1662
    %v2325 = vunpack.c.h.b16 %v1662
    %v2326 = vunpack.c.l.b16 %v1663
    %v2327 = vunpack.c.h.b16 %v1663
    %v2328 = vunpack.c.l.b16 %v1664
    %v2329 = vunpack.c.h.b16 %v1664
    %v2330 = vunpack.c.l.b16 %v1665
    %v2331 = vunpack.c.h.b16 %v1665
    %v2332 = vunpack.c.l.b16 %v1666
    %v2333 = vunpack.c.h.b16 %v1666
    %v2334 = vunpack.c.l.b16 %v1667
    %v2335 = vunpack.c.h.b16 %v1667
    %v2336 = vunpack.c.l.b16 %v1668
    %v2337 = vunpack.c.h.b16 %v1668
    %v2338 = vunpack.c.l.b16 %v1669
    %v2339 = vunpack.c.h.b16 %v1669
    %v2340 = vunpack.c.l.b16 %v1670
    %v2341 = vunpack.c.h.b16 %v1670
    %v2342 = vunpack.c.l.b16 %v1671
    %v2343 = vunpack.c.h.b16 %v1671
    %v2344 = vunpack.c.l.b16 %v1672
    %v2345 = vunpack.c.h.b16 %v1672
    %v2346 = vunpack.c.l.b16 %v1673
    %v2347 = vunpack.c.h.b16 %v1673
    %v2348 = vunpack.c.l.b16 %v1674
    %v2349 = vunpack.c.h.b16 %v1674
    %v2350 = vunpack.c.l.b16 %v1675
    %v2351 = vunpack.c.h.b16 %v1675
    %v2352 = vunpack.c.l.b16 %v1676
    %v2353 = vunpack.c.h.b16 %v1676
    %v2354 = vunpack.c.l.b16 %v1677
    %v2355 = vunpack.c.h.b16 %v1677
    %v2356 = vunpack.c.l.b16 %v1678
    %v2357 = vunpack.c.h.b16 %v1678
    %v2358 = vunpack.c.l.b16 %v1679
    %v2359 = vunpack.c.h.b16 %v1679
    %v2360 = vunpack.c.l.b16 %v1680
    %v2361 = vunpack.c.h.b16 %v1680
    %v2362 = vunpack.c.l.b16 %v1681
    %v2363 = vunpack.c.h.b16 %v1681
    %v2364 = vunpack.c.l.b16 %v1682
    %v2365 = vunpack.c.h.b16 %v1682
    %v2366 = vunpack.c.l.b16 %v1683
    %v2367 = vunpack.c.h.b16 %v1683
    %v2368 = vunpack.c.l.b16 %v1684
    %v2369 = vunpack.c.h.b16 %v1684
    %v2370 = vunpack.c.l.b16 %v1685
    %v2371 = vunpack.c.h.b16 %v1685
    %v2372 = vunpack.c.l.b16 %v1686
    %v2373 = vunpack.c.h.b16 %v1686
    %v2374 = vunpack.c.l.b16 %v1687
    %v2375 = vunpack.c.h.b16 %v1687
    %v2376 = vunpack.c.l.b16 %v1688
    %v2377 = vunpack.c.h.b16 %v1688
    %v2378 = vunpack.c.l.b16 %v1689
    %v2379 = vunpack.c.h.b16 %v1689
    %v2380 = vunpack.c.l.b16 %v1690
    %v2381 = vunpack.c.h.b16 %v1690
    %v2382 = vunpack.c.l.b16 %v1691
    %v2383 = vunpack.c.h.b16 %v1691
    %v2384 = vunpack.c.l.b16 %v1692
    %v2385 = vunpack.c.h.b16 %v1692
    %v2386 = vunpack.c.l.b16 %v1693
    %v2387 = vunpack.c.h.b16 %v1693
    %v2388 = vunpack.c.l.b16 %v1694
    %v2389 = vunpack.c.h.b16 %v1694
    %v2390 = vunpack.c.l.b16 %v1695
    %v2391 = vunpack.c.h.b16 %v1695
    %v2392 = vunpack.c.l.b16 %v1696
    %v2393 = vunpack.c.h.b16 %v1696
    %v2394 = vunpack.c.l.b16 %v1697
    %v2395 = vunpack.c.h.b16 %v1697
    %v2396 = vunpack.c.l.b16 %v1698
    %v2397 = vunpack.c.h.b16 %v1698
    %v2398 = vunpack.c.l.b16 %v1699
    %v2399 = vunpack.c.h.b16 %v1699
    %v2400 = vunpack.c.l.b16 %v1700
    %v2401 = vunpack.c.h.b16 %v1700
    %v2402 = vunpack.c.l.b16 %v1701
    %v2403 = vunpack.c.h.b16 %v1701
    %v2404 = vunpack.c.l.b16 %v1702
    %v2405 = vunpack.c.h.b16 %v1702
    %v2406 = vunpack.c.l.b16 %v1703
    %v2407 = vunpack.c.h.b16 %v1703
    %v2408 = vunpack.c.l.b16 %v1704
    %v2409 = vunpack.c.h.b16 %v1704
    %v2410 = vunpack.c.l.b16 %v1705
    %v2411 = vunpack.c.h.b16 %v1705
    %v2412 = vunpack.c.l.b16 %v1706
    %v2413 = vunpack.c.h.b16 %v1706
    %v2414 = vunpack.c.l.b16 %v1707
    %v2415 = vunpack.c.h.b16 %v1707
    %v2416 = vunpack.c.l.b16 %v1708
    %v2417 = vunpack.c.h.b16 %v1708
    %v2418 = vunpack.c.l.b16 %v1709
    %v2419 = vunpack.c.h.b16 %v1709
    %v2420 = vunpack.c.l.b16 %v1710
    %v2421 = vunpack.c.h.b16 %v1710
    %v2422 = vunpack.c.l.b16 %v1711
    %v2423 = vunpack.c.h.b16 %v1711
    %v2424 = vunpack.c.l.b16 %v1712
    %v2425 = vunpack.c.h.b16 %v1712
    %v2426 = vunpack.c.l.b16 %v1713
    %v2427 = vunpack.c.h.b16 %v1713
    %v2428 = vunpack.c.l.b16 %v1714
    %v2429 = vunpack.c.h.b16 %v1714
    %v2430 = vunpack.c.l.b16 %v1715
    %v2431 = vunpack.c.h.b16 %v1715
    %v2432 = vunpack.c.l.b16 %v1716
    %v2433 = vunpack.c.h.b16 %v1716
    %v2434 = vunpack.c.l.b16 %v1717
    %v2435 = vunpack.c.h.b16 %v1717
    %v2436 = vunpack.c.l.b16 %v1718
    %v2437 = vunpack.c.h.b16 %v1718
    %v2438 = vunpack.c.l.b16 %v1719
    %v2439 = vunpack.c.h.b16 %v1719
    %v2440 = vunpack.c.l.b16 %v1720
    %v2441 = vunpack.c.h.b16 %v1720
    %v2442 = vunpack.c.l.b16 %v1721
    %v2443 = vunpack.c.h.b16 %v1721
    %v2444 = vunpack.c.l.b16 %v1722
    %v2445 = vunpack.c.h.b16 %v1722
    %v2446 = vunpack.c.l.b16 %v1723
    %v2447 = vunpack.c.h.b16 %v1723
    %v2448 = vunpack.c.l.b16 %v1724
    %v2449 = vunpack.c.h.b16 %v1724
    %v2450 = vunpack.c.l.b16 %v1725
    %v2451 = vunpack.c.h.b16 %v1725
    %v2452 = vunpack.c.l.b16 %v1726
    %v2453 = vunpack.c.h.b16 %v1726
    %v2454 = vunpack.c.l.b16 %v1727
    %v2455 = vunpack.c.h.b16 %v1727
    %v2456 = vunpack.c.l.b16 %v1728
    %v2457 = vunpack.c.h.b16 %v1728
    %v2458 = vunpack.c.l.b16 %v1729
    %v2459 = vunpack.c.h.b16 %v1729
    %v2460 = vunpack.c.l.b16 %v1730
    %v2461 = vunpack.c.h.b16 %v1730
    %v2462 = vunpack.c.l.b16 %v1731
    %v2463 = vunpack.c.h.b16 %v1731
    %v2464 = vunpack.c.l.b16 %v1732
    %v2465 = vunpack.c.h.b16 %v1732
    %v2466 = vunpack.c.l.b16 %v1733
    %v2467 = vunpack.c.h.b16 %v1733
    %v2468 = vunpack.c.l.b16 %v1734
    %v2469 = vunpack.c.h.b16 %v1734
    %v2470 = vunpack.c.l.b16 %v1735
    %v2471 = vunpack.c.h.b16 %v1735
    %v2472 = vunpack.c.l.b16 %v1736
    %v2473 = vunpack.c.h.b16 %v1736
    %v2474 = vunpack.c.l.b16 %v1737
    %v2475 = vunpack.c.h.b16 %v1737
    %v2476 = vunpack.c.l.b16 %v1738
    %v2477 = vunpack.c.h.b16 %v1738
    %v2478 = vunpack.c.l.b16 %v1739
    %v2479 = vunpack.c.h.b16 %v1739
    %v2480 = vunpack.c.l.b16 %v1740
    %v2481 = vunpack.c.h.b16 %v1740
    %v2482 = vunpack.c.l.b16 %v1741
    %v2483 = vunpack.c.h.b16 %v1741
    %v2484 = vunpack.c.l.b16 %v1742
    %v2485 = vunpack.c.h.b16 %v1742
    %v2486 = vunpack.c.l.b16 %v1743
    %v2487 = vunpack.c.h.b16 %v1743
    %v2488 = vunpack.c.l.b16 %v1744
    %v2489 = vunpack.c.h.b16 %v1744
    %v2490 = vunpack.c.l.b16 %v1745
    %v2491 = vunpack.c.h.b16 %v1745
    %v2492 = vunpack.c.l.b16 %v1746
    %v2493 = vunpack.c.h.b16 %v1746
    %v2494 = vunpack.c.l.b16 %v1747
    %v2495 = vunpack.c.h.b16 %v1747
    %v2496 = vunpack.c.l.b16 %v1748
    %v2497 = vunpack.c.h.b16 %v1748
    %v2498 = vunpack.c.l.b16 %v1749
    %v2499 = vunpack.c.h.b16 %v1749
    %v2500 = vunpack.c.l.b16 %v1750
    %v2501 = vunpack.c.h.b16 %v1750
    %v2502 = vunpack.c.l.b16 %v1751
    %v2503 = vunpack.c.h.b16 %v1751
    %v2504 = vunpack.c.l.b16 %v1752
    %v2505 = vunpack.c.h.b16 %v1752
    %v2506 = vunpack.c.l.b16 %v1753
    %v2507 = vunpack.c.h.b16 %v1753
    %v2508 = vunpack.c.l.b16 %v1754
    %v2509 = vunpack.c.h.b16 %v1754
    %v2510 = vunpack.c.l.b16 %v1755
    %v2511 = vunpack.c.h.b16 %v1755
    %v2512 = vunpack.c.l.b16 %v1756
    %v2513 = vunpack.c.h.b16 %v1756
    %v2514 = vunpack.c.l.b16 %v1757
    %v2515 = vunpack.c.h.b16 %v1757
    %v2516 = vunpack.c.l.b16 %v1758
    %v2517 = vunpack.c.h.b16 %v1758
    %v2518 = vunpack.c.l.b16 %v1759
    %v2519 = vunpack.c.h.b16 %v1759
    %v2520 = vunpack.c.l.b16 %v1760
    %v2521 = vunpack.c.h.b16 %v1760
    %v2522 = vunpack.c.l.b16 %v1761
    %v2523 = vunpack.c.h.b16 %v1761
    %v2524 = vunpack.c.l.b16 %v1762
    %v2525 = vunpack.c.h.b16 %v1762
    %v2526 = vunpack.c.l.b16 %v1763
    %v2527 = vunpack.c.h.b16 %v1763
    %v2528 = vunpack.c.l.b16 %v1764
    %v2529 = vunpack.c.h.b16 %v1764
    %v2530 = vunpack.c.l.b16 %v1765
    %v2531 = vunpack.c.h.b16 %v1765
    %v2532 = vunpack.c.l.b16 %v1766
    %v2533 = vunpack.c.h.b16 %v1766
    %v2534 = vunpack.c.l.b16 %v1767
    %v2535 = vunpack.c.h.b16 %v1767
    %v2536 = vunpack.c.l.b16 %v1768
    %v2537 = vunpack.c.h.b16 %v1768
    %v2538 = vunpack.c.l.b16 %v1769
    %v2539 = vunpack.c.h.b16 %v1769
    %v2540 = vunpack.c.l.b16 %v1770
    %v2541 = vunpack.c.h.b16 %v1770
    %v2542 = vunpack.c.l.b16 %v1771
    %v2543 = vunpack.c.h.b16 %v1771
    %v2544 = vunpack.c.l.b16 %v1772
    %v2545 = vunpack.c.h.b16 %v1772
    %v2546 = vunpack.c.l.b16 %v1773
    %v2547 = vunpack.c.h.b16 %v1773
    %v2548 = vunpack.c.l.b16 %v1774
    %v2549 = vunpack.c.h.b16 %v1774
    %v2550 = vunpack.c.l.b16 %v1775
    %v2551 = vunpack.c.h.b16 %v1775
    %v2552 = vunpack.c.l.b16 %v1776
    %v2553 = vunpack.c.h.b16 %v1776
    %v2554 = vunpack.c.l.b16 %v1777
    %v2555 = vunpack.c.h.b16 %v1777
    %v2556 = vunpack.c.l.b16 %v1778
    %v2557 = vunpack.c.h.b16 %v1778
    %v2558 = vunpack.c.l.b16 %v1779
    %v2559 = vunpack.c.h.b16 %v1779
    %v2560 = vunpack.c.l.b16 %v1780
    %v2561 = vunpack.c.h.b16 %v1780
    %v2562 = vunpack.c.l.b16 %v1781
    %v2563 = vunpack.c.h.b16 %v1781
    %v2564 = vunpack.c.l.b16 %v1782
    %v2565 = vunpack.c.h.b16 %v1782
    %v2566 = vunpack.c.l.b16 %v1783
    %v2567 = vunpack.c.h.b16 %v1783
    %v2568 = vunpack.c.l.b16 %v1784
    %v2569 = vunpack.c.h.b16 %v1784
    %v2570 = vunpack.c.l.b16 %v1785
    %v2571 = vunpack.c.h.b16 %v1785
    %v2572 = vunpack.c.l.b16 %v1786
    %v2573 = vunpack.c.h.b16 %v1786
    %v2574 = vunpack.c.l.b16 %v1787
    %v2575 = vunpack.c.h.b16 %v1787
    %v2576 = vunpack.c.l.b16 %v1788
    %v2577 = vunpack.c.h.b16 %v1788
    %v2578 = vunpack.c.l.b16 %v1789
    %v2579 = vunpack.c.h.b16 %v1789
    %v2580 = vunpack.c.l.b16 %v1790
    %v2581 = vunpack.c.h.b16 %v1790
    %v2582 = vunpack.c.l.b16 %v1791
    %v2583 = vunpack.c.h.b16 %v1791
    %v2584 = vunpack.c.l.b16 %v1792
    %v2585 = vunpack.c.h.b16 %v1792
    %v2586 = vunpack.c.l.b16 %v1793
    %v2587 = vunpack.c.h.b16 %v1793
    %v2588 = vunpack.c.l.b16 %v1794
    %v2589 = vunpack.c.h.b16 %v1794
    %v2590 = vunpack.c.l.b16 %v1795
    %v2591 = vunpack.c.h.b16 %v1795
    %v2592 = vunpack.c.l.b16 %v1796
    %v2593 = vunpack.c.h.b16 %v1796
    %v2594 = vunpack.c.l.b16 %v1797
    %v2595 = vunpack.c.h.b16 %v1797
    %v2596 = vunpack.c.l.b16 %v1798
    %v2597 = vunpack.c.h.b16 %v1798
    %v2598 = vunpack.c.l.b16 %v1799
    %v2599 = vunpack.c.h.b16 %v1799
    %v2600 = vunpack.c.l.b16 %v1800
    %v2601 = vunpack.c.h.b16 %v1800
    %v2602 = vunpack.c.l.b16 %v1801
    %v2603 = vunpack.c.h.b16 %v1801
    %v2604 = vunpack.c.l.b16 %v1802
    %v2605 = vunpack.c.h.b16 %v1802
    %v2606 = vunpack.c.l.b16 %v1803
    %v2607 = vunpack.c.h.b16 %v1803
    %v2608 = vunpack.c.l.b16 %v1804
    %v2609 = vunpack.c.h.b16 %v1804
    %v2610 = vunpack.c.l.b16 %v1805
    %v2611 = vunpack.c.h.b16 %v1805
    %v2612 = vunpack.c.l.b16 %v1806
    %v2613 = vunpack.c.h.b16 %v1806
    %v2614 = vunpack.c.l.b16 %v1807
    %v2615 = vunpack.c.h.b16 %v1807
    %v2616 = vunpack.c.l.b16 %v1808
    %v2617 = vunpack.c.h.b16 %v1808
    %v2618 = vunpack.c.l.b16 %v1809
    %v2619 = vunpack.c.h.b16 %v1809
    %v2620 = vunpack.c.l.b16 %v1810
    %v2621 = vunpack.c.h.b16 %v1810
    %v2622 = vunpack.c.l.b16 %v1811
    %v2623 = vunpack.c.h.b16 %v1811
    %v2624 = vunpack.c.l.b16 %v1812
    %v2625 = vunpack.c.h.b16 %v1812
    %v2626 = vunpack.c.l.b16 %v1813
    %v2627 = vunpack.c.h.b16 %v1813
    %v2628 = vunpack.c.l.b16 %v1814
    %v2629 = vunpack.c.h.b16 %v1814
    %v2630 = vunpack.c.l.b16 %v1815
    %v2631 = vunpack.c.h.b16 %v1815
    %v2632 = vunpack.c.l.b16 %v1816
    %v2633 = vunpack.c.h.b16 %v1816
    %v2634 = vunpack.c.l.b16 %v1817
    %v2635 = vunpack.c.h.b16 %v1817
    %v2636 = vunpack.c.l.b16 %v1818
    %v2637 = vunpack.c.h.b16 %v1818
    %v2638 = vunpack.c.l.b16 %v1819
    %v2639 = vunpack.c.h.b16 %v1819
    %v2640 = vunpack.c.l.b16 %v1820
    %v2641 = vunpack.c.h.b16 %v1820
    %v2642 = vunpack.c.l.b16 %v1821
    %v2643 = vunpack.c.h.b16 %v1821
    %v2644 = vunpack.c.l.b16 %v1822
    %v2645 = vunpack.c.h.b16 %v1822
    %v2646 = vunpack.c.l.b16 %v1823
    %v2647 = vunpack.c.h.b16 %v1823
    %v2648 = vunpack.c.l.b16 %v1824
    %v2649 = vunpack.c.h.b16 %v1824
    %v2650 = vunpack.c.l.b16 %v1825
    %v2651 = vunpack.c.h.b16 %v1825
    %v2652 = vunpack.c.l.b16 %v1826
    %v2653 = vunpack.c.h.b16 %v1826
    %v2654 = vunpack.c.l.b16 %v1827
    %v2655 = vunpack.c.h.b16 %v1827
    %v2656 = vunpack.c.l.b16 %v1828
    %v2657 = vunpack.c.h.b16 %v1828
    %v2658 = vunpack.c.l.b16 %v1829
    %v2659 = vunpack.c.h.b16 %v1829
    %v2660 = vunpack.c.l.b16 %v1830
    %v2661 = vunpack.c.h.b16 %v1830
    %v2662 = vunpack.c.l.b16 %v1831
    %v2663 = vunpack.c.h.b16 %v1831
    %v2664 = vunpack.c.l.b16 %v1832
    %v2665 = vunpack.c.h.b16 %v1832
    %v2666 = vunpack.c.l.b16 %v1833
    %v2667 = vunpack.c.h.b16 %v1833
    %v2668 = vunpack.c.l.b16 %v1834
    %v2669 = vunpack.c.h.b16 %v1834
    %v2670 = vunpack.c.l.b16 %v1835
    %v2671 = vunpack.c.h.b16 %v1835
    %v2672 = vunpack.c.l.b16 %v1836
    %v2673 = vunpack.c.h.b16 %v1836
    %v2674 = vunpack.c.l.b16 %v1837
    %v2675 = vunpack.c.h.b16 %v1837
    %v2676 = vunpack.c.l.b16 %v1838
    %v2677 = vunpack.c.h.b16 %v1838
    %v2678 = vunpack.c.l.b16 %v1839
    %v2679 = vunpack.c.h.b16 %v1839
    %v2680 = vunpack.c.l.b16 %v1840
    %v2681 = vunpack.c.h.b16 %v1840
    %v2682 = vunpack.c.l.b16 %v1841
    %v2683 = vunpack.c.h.b16 %v1841
    %v2684 = vunpack.c.l.b16 %v1842
    %v2685 = vunpack.c.h.b16 %v1842
    %v2686 = vunpack.c.l.b16 %v1843
    %v2687 = vunpack.c.h.b16 %v1843
    %v2688 = vunpack.c.l.b16 %v1844
    %v2689 = vunpack.c.h.b16 %v1844
    %v2690 = vunpack.c.l.b16 %v1845
    %v2691 = vunpack.c.h.b16 %v1845
    %v2692 = vunpack.c.l.b16 %v1846
    %v2693 = vunpack.c.h.b16 %v1846
    %v2694 = vunpack.c.l.b16 %v1847
    %v2695 = vunpack.c.h.b16 %v1847
    %v2696 = vunpack.c.l.b16 %v1848
    %v2697 = vunpack.c.h.b16 %v1848
    %v2698 = vunpack.c.l.b16 %v1849
    %v2699 = vunpack.c.h.b16 %v1849
    %v2700 = vunpack.c.l.b16 %v1850
    %v2701 = vunpack.c.h.b16 %v1850
    %v2702 = vunpack.c.l.b16 %v1851
    %v2703 = vunpack.c.h.b16 %v1851
    %v2704 = vunpack.c.l.b16 %v1852
    %v2705 = vunpack.c.h.b16 %v1852
    %v2706 = vunpack.c.l.b16 %v1853
    %v2707 = vunpack.c.h.b16 %v1853
    %v2708 = vunpack.c.l.b16 %v1854
    %v2709 = vunpack.c.h.b16 %v1854
    %v2710 = vunpack.c.l.b16 %v1855
    %v2711 = vunpack.c.h.b16 %v1855
    %v2712 = vunpack.c.l.b16 %v1856
    %v2713 = vunpack.c.h.b16 %v1856
    %v2714 = vunpack.c.l.b16 %v1857
    %v2715 = vunpack.c.h.b16 %v1857
    %v2716 = vunpack.c.l.b16 %v1858
    %v2717 = vunpack.c.h.b16 %v1858
    %v2718 = vunpack.c.l.b16 %v1859
    %v2719 = vunpack.c.h.b16 %v1859
    %v2720 = vunpack.c.l.b16 %v1860
    %v2721 = vunpack.c.h.b16 %v1860
    %v2722 = vunpack.c.l.b16 %v1861
    %v2723 = vunpack.c.h.b16 %v1861
    %v2724 = vunpack.c.l.b16 %v1862
    %v2725 = vunpack.c.h.b16 %v1862
    %v2726 = vunpack.c.l.b16 %v1863
    %v2727 = vunpack.c.h.b16 %v1863
    %v2728 = vunpack.c.l.b16 %v1864
    %v2729 = vunpack.c.h.b16 %v1864
    %v2730 = vunpack.c.l.b16 %v1865
    %v2731 = vunpack.c.h.b16 %v1865
    %v2732 = vunpack.c.l.b16 %v1866
    %v2733 = vunpack.c.h.b16 %v1866
    %v2734 = vunpack.c.l.b16 %v1867
    %v2735 = vunpack.c.h.b16 %v1867
    %v2736 = vunpack.c.l.b16 %v1868
    %v2737 = vunpack.c.h.b16 %v1868
    %v2738 = vunpack.c.l.b16 %v1869
    %v2739 = vunpack.c.h.b16 %v1869
    %v2740 = vunpack.c.l.b16 %v1870
    %v2741 = vunpack.c.h.b16 %v1870
    %v2742 = vunpack.c.l.b16 %v1871
    %v2743 = vunpack.c.h.b16 %v1871
    %v2744 = vunpack.c.l.b16 %v1872
    %v2745 = vunpack.c.h.b16 %v1872
    %v2746 = vunpack.c.l.b16 %v1873
    %v2747 = vunpack.c.h.b16 %v1873
    %v2748 = vunpack.c.l.b16 %v1874
    %v2749 = vunpack.c.h.b16 %v1874
    %v2750 = vunpack.c.l.b16 %v1875
    %v2751 = vunpack.c.h.b16 %v1875
    %v2752 = vunpack.c.l.b16 %v1876
    %v2753 = vunpack.c.h.b16 %v1876
    %v2754 = vunpack.c.l.b16 %v1877
    %v2755 = vunpack.c.h.b16 %v1877
    %v2756 = vunpack.c.l.b16 %v1878
    %v2757 = vunpack.c.h.b16 %v1878
    %v2758 = vunpack.c.l.b16 %v1879
    %v2759 = vunpack.c.h.b16 %v1879
    %v2760 = vunpack.c.l.b16 %v1880
    %v2761 = vunpack.c.h.b16 %v1880
    %v2762 = vunpack.c.l.b16 %v1881
    %v2763 = vunpack.c.h.b16 %v1881
    %v2764 = vunpack.c.l.b16 %v1882
    %v2765 = vunpack.c.h.b16 %v1882
    %v2766 = vunpack.c.l.b16 %v1883
    %v2767 = vunpack.c.h.b16 %v1883
    %v2768 = vunpack.c.l.b16 %v1884
    %v2769 = vunpack.c.h.b16 %v1884
    %v2770 = vunpack.c.l.b16 %v1885
    %v2771 = vunpack.c.h.b16 %v1885
    %v2772 = vunpack.c.l.b16 %v1886
    %v2773 = vunpack.c.h.b16 %v1886
    %v2774 = vunpack.c.l.b16 %v1887
    %v2775 = vunpack.c.h.b16 %v1887
    %v2776 = vunpack.c.l.b16 %v1888
    %v2777 = vunpack.c.h.b16 %v1888
    %v2778 = vunpack.c.l.b16 %v1889
    %v2779 = vunpack.c.h.b16 %v1889
    %v2780 = vunpack.c.l.b16 %v1890
    %v2781 = vunpack.c.h.b16 %v1890
    %v2782 = vunpack.c.l.b16 %v1891
    %v2783 = vunpack.c.h.b16 %v1891
    %v2784 = vunpack.c.l.b16 %v1892
    %v2785 = vunpack.c.h.b16 %v1892
    %v2786 = vunpack.c.l.b16 %v1893
    %v2787 = vunpack.c.h.b16 %v1893
    %v2788 = vunpack.c.l.b16 %v1894
    %v2789 = vunpack.c.h.b16 %v1894
    %v2790 = vunpack.c.l.b16 %v1895
    %v2791 = vunpack.c.h.b16 %v1895
    %v2792 = vunpack.c.l.b16 %v1896
    %v2793 = vunpack.c.h.b16 %v1896
    %v2794 = vunpack.c.l.b16 %v1897
    %v2795 = vunpack.c.h.b16 %v1897
    %v2796 = vunpack.c.l.b16 %v1898
    %v2797 = vunpack.c.h.b16 %v1898
    %v2798 = vunpack.c.l.b16 %v1899
    %v2799 = vunpack.c.h.b16 %v1899
    %v2800 = vunpack.c.l.b16 %v1900
    %v2801 = vunpack.c.h.b16 %v1900
    %v2802 = vunpack.c.l.b16 %v1901
    %v2803 = vunpack.c.h.b16 %v1901
    %v2804 = vunpack.c.l.b16 %v1902
    %v2805 = vunpack.c.h.b16 %v1902
    %v2806 = vunpack.c.l.b16 %v1903
    %v2807 = vunpack.c.h.b16 %v1903
    %v2808 = vunpack.c.l.b16 %v1904
    %v2809 = vunpack.c.h.b16 %v1904
    %v2810 = vunpack.c.l.b16 %v1905
    %v2811 = vunpack.c.h.b16 %v1905
    %v2812 = vunpack.c.l.b16 %v1906
    %v2813 = vunpack.c.h.b16 %v1906
    %v2814 = vunpack.c.l.b16 %v1907
    %v2815 = vunpack.c.h.b16 %v1907
    %v2816 = vunpack.c.l.b16 %v1908
    %v2817 = vunpack.c.h.b16 %v1908
    %v2818 = vunpack.c.l.b16 %v1909
    %v2819 = vunpack.c.h.b16 %v1909
    %v2820 = vunpack.c.l.b16 %v1910
    %v2821 = vunpack.c.h.b16 %v1910
    %v2822 = vunpack.c.l.b16 %v1911
    %v2823 = vunpack.c.h.b16 %v1911
    %v2824 = vunpack.c.l.b16 %v1912
    %v2825 = vunpack.c.h.b16 %v1912
    %v2826 = vunpack.c.l.b16 %v1913
    %v2827 = vunpack.c.h.b16 %v1913
    %v2828 = vunpack.c.l.b16 %v1914
    %v2829 = vunpack.c.h.b16 %v1914
    %v2830 = vunpack.c.l.b16 %v1915
    %v2831 = vunpack.c.h.b16 %v1915
    %v2832 = vunpack.c.l.b16 %v1916
    %v2833 = vunpack.c.h.b16 %v1916
    %v2834 = vunpack.c.l.b16 %v1917
    %v2835 = vunpack.c.h.b16 %v1917
    %v2836 = vpack.c.b16 %v2264, %v2260
    %v2837 = vpack.c.b16 %v2265, %v2261
    %v2838 = vpack.c.b16 %v2266, %v2262
    %v2839 = vpack.c.b16 %v2267, %v2263
    %v2840 = vpack.c.b16 %v2272, %v2268
    %v2841 = vpack.c.b16 %v2273, %v2269
    %v2842 = vpack.c.b16 %v2274, %v2270
    %v2843 = vpack.c.b16 %v2275, %v2271
    %v2844 = vpack.c.b16 %v2280, %v2276
    %v2845 = vpack.c.b16 %v2281, %v2277
    %v2846 = vpack.c.b16 %v2282, %v2278
    %v2847 = vpack.c.b16 %v2283, %v2279
    %v2848 = vpack.c.b16 %v2288, %v2284
    %v2849 = vpack.c.b16 %v2289, %v2285
    %v2850 = vpack.c.b16 %v2290, %v2286
    %v2851 = vpack.c.b16 %v2291, %v2287
    %v2852 = vpack.c.b16 %v2296, %v2292
    %v2853 = vpack.c.b16 %v2297, %v2293
    %v2854 = vpack.c.b16 %v2298, %v2294
    %v2855 = vpack.c.b16 %v2299, %v2295
    %v2856 = vpack.c.b16 %v2304, %v2300
    %v2857 = vpack.c.b16 %v2305, %v2301
    %v2858 = vpack.c.b16 %v2306, %v2302
    %v2859 = vpack.c.b16 %v2307, %v2303
    %v2860 = vpack.c.b16 %v2312, %v2308
    %v2861 = vpack.c.b16 %v2313, %v2309
    %v2862 = vpack.c.b16 %v2314, %v2310
    %v2863 = vpack.c.b16 %v2315, %v2311
    %v2864 = vpack.c.b16 %v2320, %v2316
    %v2865 = vpack.c.b16 %v2321, %v2317
    %v2866 = vpack.c.b16 %v2322, %v2318
    %v2867 = vpack.c.b16 %v2323, %v2319
    %v2868 = vpack.c.b16 %v2328, %v2324
    %v2869 = vpack.c.b16 %v2329, %v2325
    %v2870 = vpack.c.b16 %v2330, %v2326
    %v2871 = vpack.c.b16 %v2331, %v2327
    %v2872 = vpack.c.b16 %v2336, %v2332
    %v2873 = vpack.c.b16 %v2337, %v2333
    %v2874 = vpack.c.b16 %v2338, %v2334
    %v2875 = vpack.c.b16 %v2339, %v2335
    %v2876 = vpack.c.b16 %v2344, %v2340
    %v2877 = vpack.c.b16 %v2345, %v2341
    %v2878 = vpack.c.b16 %v2346, %v2342
    %v2879 = vpack.c.b16 %v2347, %v2343
    %v2880 = vpack.c.b16 %v2352, %v2348
    %v2881 = vpack.c.b16 %v2353, %v2349
    %v2882 = vpack.c.b16 %v2354, %v2350
    %v2883 = vpack.c.b16 %v2355, %v2351
    %v2884 = vpack.c.b16 %v2360, %v2356
    %v2885 = vpack.c.b16 %v2361, %v2357
    %v2886 = vpack.c.b16 %v2362, %v2358
    %v2887 = vpack.c.b16 %v2363, %v2359
    %v2888 = vpack.c.b16 %v2368, %v2364
    %v2889 = vpack.c.b16 %v2369, %v2365
    %v2890 = vpack.c.b16 %v2370, %v2366
    %v2891 = vpack.c.b16 %v2371, %v2367
    %v2892 = vpack.c.b16 %v2376, %v2372
    %v2893 = vpack.c.b16 %v2377, %v2373
    %v2894 = vpack.c.b16 %v2378, %v2374
    %v2895 = vpack.c.b16 %v2379, %v2375
    %v2896 = vpack.c.b16 %v2384, %v2380
    %v2897 = vpack.c.b16 %v2385, %v2381
    %v2898 = vpack.c.b16 %v2386, %v2382
    %v2899 = vpack.c.b16 %v2387, %v2383
    %v2900 = vpack.c.b16 %v2392, %v2388
    %v2901 = vpack.c.b16 %v2393, %v2389
    %v2902 = vpack.c.b16 %v2394, %v2390
    %v2903 = vpack.c.b16 %v2395, %v2391
    %v2904 = vpack.c.b16 %v2400, %v2396
    %v2905 = vpack.c.b16 %v2401, %v2397
    %v2906 = vpack.c.b16 %v2402, %v2398
    %v2907 = vpack.c.b16 %v2403, %v2399
    %v2908 = vpack.c.b16 %v2408, %v2404
    %v2909 = vpack.c.b16 %v2409, %v2405
    %v2910 = vpack.c.b16 %v2410, %v2406
    %v2911 = vpack.c.b16 %v2411, %v2407
    %v2912 = vpack.c.b16 %v2416, %v2412
    %v2913 = vpack.c.b16 %v2417, %v2413
    %v2914 = vpack.c.b16 %v2418, %v2414
    %v2915 = vpack.c.b16 %v2419, %v2415
    %v2916 = vpack.c.b16 %v2424, %v2420
    %v2917 = vpack.c.b16 %v2425, %v2421
    %v2918 = vpack.c.b16 %v2426, %v2422
    %v2919 = vpack.c.b16 %v2427, %v2423
    %v2920 = vpack.c.b16 %v2432, %v2428
    %v2921 = vpack.c.b16 %v2433, %v2429
    %v2922 = vpack.c.b16 %v2434, %v2430
    %v2923 = vpack.c.b16 %v2435, %v2431
    %v2924 = vpack.c.b16 %v2440, %v2436
    %v2925 = vpack.c.b16 %v2441, %v2437
    %v2926 = vpack.c.b16 %v2442, %v2438
    %v2927 = vpack.c.b16 %v2443, %v2439
    %v2928 = vpack.c.b16 %v2448, %v2444
    %v2929 = vpack.c.b16 %v2449, %v2445
    %v2930 = vpack.c.b16 %v2450, %v2446
    %v2931 = vpack.c.b16 %v2451, %v2447
    %v2932 = vpack.c.b16 %v2456, %v2452
    %v2933 = vpack.c.b16 %v2457, %v2453
    %v2934 = vpack.c.b16 %v2458, %v2454
    %v2935 = vpack.c.b16 %v2459, %v2455
    %v2936 = vpack.c.b16 %v2464, %v2460
    %v2937 = vpack.c.b16 %v2465, %v2461
    %v2938 = vpack.c.b16 %v2466, %v2462
    %v2939 = vpack.c.b16 %v2467, %v2463
    %v2940 = vpack.c.b16 %v2472, %v2468
    %v2941 = vpack.c.b16 %v2473, %v2469
    %v2942 = vpack.c.b16 %v2474, %v2470
    %v2943 = vpack.c.b16 %v2475, %v2471
    %v2944 = vpack.c.b16 %v2480, %v2476
    %v2945 = vpack.c.b16 %v2481, %v2477
    %v2946 = vpack.c.b16 %v2482, %v2478
    %v2947 = vpack.c.b16 %v2483, %v2479
    %v2948 = vpack.c.b16 %v2488, %v2484
    %v2949 = vpack.c.b16 %v2489, %v2485
    %v2950 = vpack.c.b16 %v2490, %v2486
    %v2951 = vpack.c.b16 %v2491, %v2487
    %v2952 = vpack.c.b16 %v2496, %v2492
    %v2953 = vpack.c.b16 %v2497, %v2493
    %v2954 = vpack.c.b16 %v2498, %v2494
    %v2955 = vpack.c.b16 %v2499, %v2495
    %v2956 = vpack.c.b16 %v2504, %v2500
    %v2957 = vpack.c.b16 %v2505, %v2501
    %v2958 = vpack.c.b16 %v2506, %v2502
    %v2959 = vpack.c.b16 %v2507, %v2503
    %v2960 = vpack.c.b16 %v2512, %v2508
    %v2961 = vpack.c.b16 %v2513, %v2509
    %v2962 = vpack.c.b16 %v2514, %v2510
    %v2963 = vpack.c.b16 %v2515, %v2511
    %v2964 = vpack.c.b16 %v2520, %v2516
    %v2965 = vpack.c.b16 %v2521, %v2517
    %v2966 = vpack.c.b16 %v2522, %v2518
    %v2967 = vpack.c.b16 %v2523, %v2519
    %v2968 = vpack.c.b16 %v2528, %v2524
    %v2969 = vpack.c.b16 %v2529, %v2525
    %v2970 = vpack.c.b16 %v2530, %v2526
    %v2971 = vpack.c.b16 %v2531, %v2527
    %v2972 = vpack.c.b16 %v2536, %v2532
    %v2973 = vpack.c.b16 %v2537, %v2533
    %v2974 = vpack.c.b16 %v2538, %v2534
    %v2975 = vpack.c.b16 %v2539, %v2535
    %v2976 = vpack.c.b16 %v2544, %v2540
    %v2977 = vpack.c.b16 %v2545, %v2541
    %v2978 = vpack.c.b16 %v2546, %v2542
    %v2979 = vpack.c.b16 %v2547, %v2543
    %v2980 = vpack.c.b16 %v2552, %v2548
    %v2981 = vpack.c.b16 %v2553, %v2549
    %v2982 = vpack.c.b16 %v2554, %v2550
    %v2983 = vpack.c.b16 %v2555, %v2551
    %v2984 = vpack.c.b16 %v2560, %v2556
    %v2985 = vpack.c.b16 %v2561, %v2557
    %v2986 = vpack.c.b16 %v2562, %v2558
    %v2987 = vpack.c.b16 %v2563, %v2559
    %v2988 = vpack.c.b16 %v2568, %v2564
    %v2989 = vpack.c.b16 %v2569, %v2565
    %v2990 = vpack.c.b16 %v2570, %v2566
    %v2991 = vpack.c.b16 %v2571, %v2567
    %v2992 = vpack.c.b16 %v2576, %v2572
    %v2993 = vpack.c.b16 %v2577, %v2573
    %v2994 = vpack.c.b16 %v2578, %v2574
    %v2995 = vpack.c.b16 %v2579, %v2575
    %v2996 = vpack.c.b16 %v2584, %v2580
    %v2997 = vpack.c.b16 %v2585, %v2581
    %v2998 = vpack.c.b16 %v2586, %v2582
    %v2999 = vpack.c.b16 %v2587, %v2583
    %v3000 = vpack.c.b16 %v2592, %v2588
    %v3001 = vpack.c.b16 %v2593, %v2589
    %v3002 = vpack.c.b16 %v2594, %v2590
    %v3003 = vpack.c.b16 %v2595, %v2591
    %v3004 = vpack.c.b16 %v2600, %v2596
    %v3005 = vpack.c.b16 %v2601, %v2597
    %v3006 = vpack.c.b16 %v2602, %v2598
    %v3007 = vpack.c.b16 %v2603, %v2599
    %v3008 = vpack.c.b16 %v2608, %v2604
    %v3009 = vpack.c.b16 %v2609, %v2605
    %v3010 = vpack.c.b16 %v2610, %v2606
    %v3011 = vpack.c.b16 %v2611, %v2607
    %v3012 = vpack.c.b16 %v2616, %v2612
    %v3013 = vpack.c.b16 %v2617, %v2613
    %v3014 = vpack.c.b16 %v2618, %v2614
    %v3015 = vpack.c.b16 %v2619, %v2615
    %v3016 = vpack.c.b16 %v2624, %v2620
    %v3017 = vpack.c.b16 %v2625, %v2621
    %v3018 = vpack.c.b16 %v2626, %v2622
    %v3019 = vpack.c.b16 %v2627, %v2623
    %v3020 = vpack.c.b16 %v2632, %v2628
    %v3021 = vpack.c.b16 %v2633, %v2629
    %v3022 = vpack.c.b16 %v2634, %v2630
    %v3023 = vpack.c.b16 %v2635, %v2631
    %v3024 = vpack.c.b16 %v2640, %v2636
    %v3025 = vpack.c.b16 %v2641, %v2637
    %v3026 = vpack.c.b16 %v2642, %v2638
    %v3027 = vpack.c.b16 %v2643, %v2639
    %v3028 = vpack.c.b16 %v2648, %v2644
    %v3029 = vpack.c.b16 %v2649, %v2645
    %v3030 = vpack.c.b16 %v2650, %v2646
    %v3031 = vpack.c.b16 %v2651, %v2647
    %v3032 = vpack.c.b16 %v2656, %v2652
    %v3033 = vpack.c.b16 %v2657, %v2653
    %v3034 = vpack.c.b16 %v2658, %v2654
    %v3035 = vpack.c.b16 %v2659, %v2655
    %v3036 = vpack.c.b16 %v2664, %v2660
    %v3037 = vpack.c.b16 %v2665, %v2661
    %v3038 = vpack.c.b16 %v2666, %v2662
    %v3039 = vpack.c.b16 %v2667, %v2663
    %v3040 = vpack.c.b16 %v2672, %v2668
    %v3041 = vpack.c.b16 %v2673, %v2669
    %v3042 = vpack.c.b16 %v2674, %v2670
    %v3043 = vpack.c.b16 %v2675, %v2671
    %v3044 = vpack.c.b16 %v2680, %v2676
    %v3045 = vpack.c.b16 %v2681, %v2677
    %v3046 = vpack.c.b16 %v2682, %v2678
    %v3047 = vpack.c.b16 %v2683, %v2679
    %v3048 = vpack.c.b16 %v2688, %v2684
    %v3049 = vpack.c.b16 %v2689, %v2685
    %v3050 = vpack.c.b16 %v2690, %v2686
    %v3051 = vpack.c.b16 %v2691, %v2687
    %v3052 = vpack.c.b16 %v2696, %v2692
    %v3053 = vpack.c.b16 %v2697, %v2693
    %v3054 = vpack.c.b16 %v2698, %v2694
    %v3055 = vpack.c.b16 %v2699, %v2695
    %v3056 = vpack.c.b16 %v2704, %v2700
    %v3057 = vpack.c.b16 %v2705, %v2701
    %v3058 = vpack.c.b16 %v2706, %v2702
    %v3059 = vpack.c.b16 %v2707, %v2703
    %v3060 = vpack.c.b16 %v2712, %v2708
    %v3061 = vpack.c.b16 %v2713, %v2709
    %v3062 = vpack.c.b16 %v2714, %v2710
    %v3063 = vpack.c.b16 %v2715, %v2711
    %v3064 = vpack.c.b16 %v2720, %v2716
    %v3065 = vpack.c.b16 %v2721, %v2717
    %v3066 = vpack.c.b16 %v2722, %v2718
    %v3067 = vpack.c.b16 %v2723, %v2719
    %v3068 = vpack.c.b16 %v2728, %v2724
    %v3069 = vpack.c.b16 %v2729, %v2725
    %v3070 = vpack.c.b16 %v2730, %v2726
    %v3071 = vpack.c.b16 %v2731, %v2727
    %v3072 = vpack.c.b16 %v2736, %v2732
    %v3073 = vpack.c.b16 %v2737, %v2733
    %v3074 = vpack.c.b16 %v2738, %v2734
    %v3075 = vpack.c.b16 %v2739, %v2735
    %v3076 = vpack.c.b16 %v2744, %v2740
    %v3077 = vpack.c.b16 %v2745, %v2741
    %v3078 = vpack.c.b16 %v2746, %v2742
    %v3079 = vpack.c.b16 %v2747, %v2743
    %v3080 = vpack.c.b16 %v2752, %v2748
    %v3081 = vpack.c.b16 %v2753, %v2749
    %v3082 = vpack.c.b16 %v2754, %v2750
    %v3083 = vpack.c.b16 %v2755, %v2751
    %v3084 = vpack.c.b16 %v2760, %v2756
    %v3085 = vpack.c.b16 %v2761, %v2757
    %v3086 = vpack.c.b16 %v2762, %v2758
    %v3087 = vpack.c.b16 %v2763, %v2759
    %v3088 = vpack.c.b16 %v2768, %v2764
    %v3089 = vpack.c.b16 %v2769, %v2765
    %v3090 = vpack.c.b16 %v2770, %v2766
    %v3091 = vpack.c.b16 %v2771, %v2767
    %v3092 = vpack.c.b16 %v2776, %v2772
    %v3093 = vpack.c.b16 %v2777, %v2773
    %v3094 = vpack.c.b16 %v2778, %v2774
    %v3095 = vpack.c.b16 %v2779, %v2775
    %v3096 = vpack.c.b16 %v2784, %v2780
    %v3097 = vpack.c.b16 %v2785, %v2781
    %v3098 = vpack.c.b16 %v2786, %v2782
    %v3099 = vpack.c.b16 %v2787, %v2783
    %v3100 = vpack.c.b16 %v2792, %v2788
    %v3101 = vpack.c.b16 %v2793, %v2789
    %v3102 = vpack.c.b16 %v2794, %v2790
    %v3103 = vpack.c.b16 %v2795, %v2791
    %v3104 = vpack.c.b16 %v2800, %v2796
    %v3105 = vpack.c.b16 %v2801, %v2797
    %v3106 = vpack.c.b16 %v2802, %v2798
    %v3107 = vpack.c.b16 %v2803, %v2799
    %v3108 = vpack.c.b16 %v2808, %v2804
    %v3109 = vpack.c.b16 %v2809, %v2805
    %v3110 = vpack.c.b16 %v2810, %v2806
    %v3111 = vpack.c.b16 %v2811, %v2807
    %v3112 = vpack.c.b16 %v2816, %v2812
    %v3113 = vpack.c.b16 %v2817, %v2813
    %v3114 = vpack.c.b16 %v2818, %v2814
    %v3115 = vpack.c.b16 %v2819, %v2815
    %v3116 = vpack.c.b16 %v2824, %v2820
    %v3117 = vpack.c.b16 %v2825, %v2821
    %v3118 = vpack.c.b16 %v2826, %v2822
    %v3119 = vpack.c.b16 %v2827, %v2823
    %v3120 = vpack.c.b16 %v2832, %v2828
    %v3121 = vpack.c.b16 %v2833, %v2829
    %v3122 = vpack.c.b16 %v2834, %v2830
    %v3123 = vpack.c.b16 %v2835, %v2831
    %3412 = vmatprep.subr.bf16.mxu0 %v2837
    %3413 = vmatpush1.bf16.msra.mxu0 %v2836
    %3414 = vmatprep.subr.bf16.mxu0 %v2841
    %3415 = vmatpush1.bf16.msra.mxu0 %v2840
    %3416 = vmatprep.subr.bf16.mxu0 %v2845
    %3417 = vmatpush1.bf16.msra.mxu0 %v2844
    %3418 = vmatprep.subr.bf16.mxu0 %v2849
    %3419 = vmatpush1.bf16.msra.mxu0 %v2848
    %3420 = vmatprep.subr.bf16.mxu0 %v2853
    %3421 = vmatpush1.bf16.msra.mxu0 %v2852
    %3422 = vmatprep.subr.bf16.mxu0 %v2857
    %3423 = vmatpush1.bf16.msra.mxu0 %v2856
    %3424 = vmatprep.subr.bf16.mxu0 %v2861
    %3425 = vmatpush1.bf16.msra.mxu0 %v2860
    %3426 = vmatprep.subr.bf16.mxu0 %v2865
    %3427 = vmatpush1.bf16.msra.mxu0 %v2864
    %3428 = vmatprep.subr.bf16.mxu0 %v2869
    %3429 = vmatpush1.bf16.msra.mxu0 %v2868
    %3430 = vmatprep.subr.bf16.mxu0 %v2873
    %3431 = vmatpush1.bf16.msra.mxu0 %v2872
    %3432 = vmatprep.subr.bf16.mxu0 %v2877
    %3433 = vmatpush1.bf16.msra.mxu0 %v2876
    %3434 = vmatprep.subr.bf16.mxu0 %v2881
    %3435 = vmatpush1.bf16.msra.mxu0 %v2880
    %3436 = vmatprep.subr.bf16.mxu0 %v2885
    %3437 = vmatpush1.bf16.msra.mxu0 %v2884
    %3438 = vmatprep.subr.bf16.mxu0 %v2889
    %3439 = vmatpush1.bf16.msra.mxu0 %v2888
    %3440 = vmatprep.subr.bf16.mxu0 %v2893
    %3441 = vmatpush1.bf16.msra.mxu0 %v2892
    %3442 = vmatprep.subr.bf16.mxu0 %v2897
    %3443 = vmatpush1.bf16.msra.mxu0 %v2896
    %3444 = vmatprep.mubr.bf16.mxu0 %v1955
    %3445 = vmatmul.mubr.bf16.gmra.mrb[0].mxu0 %v1954
    %v3446 = vpop.f32.mrb[0].mxu0
    %v3447 = vadd.f32 %v1923, %v3446
    %v3448 = vpop.f32.mrb[0].mxu0
    %v3449 = vadd.f32 %v1927, %v3448
    %v3450 = vpop.f32.mrb[0].mxu0
    %v3451 = vpop.f32.mrb[0].mxu0
    %3452 = vdwg.mxu0
    %3453 = vmatprep.subr.bf16.mxu0 %v2901
    %3454 = vmatpush1.bf16.msra.mxu0 %v2900
    %3455 = vmatprep.subr.bf16.mxu0 %v2905
    %3456 = vmatpush1.bf16.msra.mxu0 %v2904
    %3457 = vmatprep.subr.bf16.mxu0 %v2909
    %3458 = vmatpush1.bf16.msra.mxu0 %v2908
    %3459 = vmatprep.subr.bf16.mxu0 %v2913
    %3460 = vmatpush1.bf16.msra.mxu0 %v2912
    %3461 = vmatprep.subr.bf16.mxu0 %v2917
    %3462 = vmatpush1.bf16.msra.mxu0 %v2916
    %3463 = vmatprep.subr.bf16.mxu0 %v2921
    %3464 = vmatpush1.bf16.msra.mxu0 %v2920
    %3465 = vmatprep.subr.bf16.mxu0 %v2925
    %3466 = vmatpush1.bf16.msra.mxu0 %v2924
    %3467 = vmatprep.subr.bf16.mxu0 %v2929
    %3468 = vmatpush1.bf16.msra.mxu0 %v2928
    %3469 = vmatprep.subr.bf16.mxu0 %v2933
    %3470 = vmatpush1.bf16.msra.mxu0 %v2932
    %3471 = vmatprep.subr.bf16.mxu0 %v2937
    %3472 = vmatpush1.bf16.msra.mxu0 %v2936
    %3473 = vmatprep.subr.bf16.mxu0 %v2941
    %3474 = vmatpush1.bf16.msra.mxu0 %v2940
    %3475 = vmatprep.subr.bf16.mxu0 %v2945
    %3476 = vmatpush1.bf16.msra.mxu0 %v2944
    %3477 = vmatprep.subr.bf16.mxu0 %v2949
    %3478 = vmatpush1.bf16.msra.mxu0 %v2948
    %3479 = vmatprep.subr.bf16.mxu0 %v2953
    %3480 = vmatpush1.bf16.msra.mxu0 %v2952
    %3481 = vmatprep.subr.bf16.mxu0 %v2957
    %3482 = vmatpush1.bf16.msra.mxu0 %v2956
    %3483 = vmatprep.subr.bf16.mxu0 %v2961
    %3484 = vmatpush1.bf16.msra.mxu0 %v2960
    %3485 = vmatprep.mubr.bf16.mxu0 %v1957
    %3486 = vmatmul.mubr.bf16.gmra.mrb[0].mxu0 %v1956
    %v3487 = vpop.f32.mrb[0].mxu0
    %v3488 = vadd.f32 %v3447, %v3487
    %v3489 = vpop.f32.mrb[0].mxu0
    %v3490 = vadd.f32 %v3449, %v3489
    %v3491 = vpop.f32.mrb[0].mxu0
    %v3492 = vpop.f32.mrb[0].mxu0
    %3493 = vdwg.mxu0
    %3494 = vmatprep.subr.bf16.mxu0 %v2965
    %3495 = vmatpush1.bf16.msra.mxu0 %v2964
    %3496 = vmatprep.subr.bf16.mxu0 %v2969
    %3497 = vmatpush1.bf16.msra.mxu0 %v2968
    %3498 = vmatprep.subr.bf16.mxu0 %v2973
    %3499 = vmatpush1.bf16.msra.mxu0 %v2972
    %3500 = vmatprep.subr.bf16.mxu0 %v2977
    %3501 = vmatpush1.bf16.msra.mxu0 %v2976
    %3502 = vmatprep.subr.bf16.mxu0 %v2981
    %3503 = vmatpush1.bf16.msra.mxu0 %v2980
    %3504 = vmatprep.subr.bf16.mxu0 %v2985
    %3505 = vmatpush1.bf16.msra.mxu0 %v2984
    %3506 = vmatprep.subr.bf16.mxu0 %v2989
    %3507 = vmatpush1.bf16.msra.mxu0 %v2988
    %3508 = vmatprep.subr.bf16.mxu0 %v2993
    %3509 = vmatpush1.bf16.msra.mxu0 %v2992
    %3510 = vmatprep.subr.bf16.mxu0 %v2997
    %3511 = vmatpush1.bf16.msra.mxu0 %v2996
    %3512 = vmatprep.subr.bf16.mxu0 %v3001
    %3513 = vmatpush1.bf16.msra.mxu0 %v3000
    %3514 = vmatprep.subr.bf16.mxu0 %v3005
    %3515 = vmatpush1.bf16.msra.mxu0 %v3004
    %3516 = vmatprep.subr.bf16.mxu0 %v3009
    %3517 = vmatpush1.bf16.msra.mxu0 %v3008
    %3518 = vmatprep.subr.bf16.mxu0 %v3013
    %3519 = vmatpush1.bf16.msra.mxu0 %v3012
    %3520 = vmatprep.subr.bf16.mxu0 %v3017
    %3521 = vmatpush1.bf16.msra.mxu0 %v3016
    %3522 = vmatprep.subr.bf16.mxu0 %v3021
    %3523 = vmatpush1.bf16.msra.mxu0 %v3020
    %3524 = vmatprep.subr.bf16.mxu0 %v3025
    %3525 = vmatpush1.bf16.msra.mxu0 %v3024
    %3526 = vmatprep.mubr.bf16.mxu0 %v1959
    %3527 = vmatmul.mubr.bf16.gmra.mrb[0].mxu0 %v1958
    %v3528 = vpop.f32.mrb[0].mxu0
    %v3529 = vadd.f32 %v3488, %v3528
    %v3530 = vpop.f32.mrb[0].mxu0
    %v3531 = vadd.f32 %v3490, %v3530
    %v3532 = vpop.f32.mrb[0].mxu0
    %v3533 = vpop.f32.mrb[0].mxu0
    %3534 = vdwg.mxu0
    %3535 = vmatprep.subr.bf16.mxu0 %v3029
    %3536 = vmatpush1.bf16.msra.mxu0 %v3028
    %3537 = vmatprep.subr.bf16.mxu0 %v3033
    %3538 = vmatpush1.bf16.msra.mxu0 %v3032
    %3539 = vmatprep.subr.bf16.mxu0 %v3037
    %3540 = vmatpush1.bf16.msra.mxu0 %v3036
    %3541 = vmatprep.subr.bf16.mxu0 %v3041
    %3542 = vmatpush1.bf16.msra.mxu0 %v3040
    %3543 = vmatprep.subr.bf16.mxu0 %v3045
    %3544 = vmatpush1.bf16.msra.mxu0 %v3044
    %3545 = vmatprep.subr.bf16.mxu0 %v3049
    %3546 = vmatpush1.bf16.msra.mxu0 %v3048
    %3547 = vmatprep.subr.bf16.mxu0 %v3053
    %3548 = vmatpush1.bf16.msra.mxu0 %v3052
    %3549 = vmatprep.subr.bf16.mxu0 %v3057
    %3550 = vmatpush1.bf16.msra.mxu0 %v3056
    %3551 = vmatprep.subr.bf16.mxu0 %v3061
    %3552 = vmatpush1.bf16.msra.mxu0 %v3060
    %3553 = vmatprep.subr.bf16.mxu0 %v3065
    %3554 = vmatpush1.bf16.msra.mxu0 %v3064
    %3555 = vmatprep.subr.bf16.mxu0 %v3069
    %3556 = vmatpush1.bf16.msra.mxu0 %v3068
    %3557 = vmatprep.subr.bf16.mxu0 %v3073
    %3558 = vmatpush1.bf16.msra.mxu0 %v3072
    %3559 = vmatprep.subr.bf16.mxu0 %v3077
    %3560 = vmatpush1.bf16.msra.mxu0 %v3076
    %3561 = vmatprep.subr.bf16.mxu0 %v3081
    %3562 = vmatpush1.bf16.msra.mxu0 %v3080
    %3563 = vmatprep.subr.bf16.mxu0 %v3085
    %3564 = vmatpush1.bf16.msra.mxu0 %v3084
    %3565 = vmatprep.subr.bf16.mxu0 %v3089
    %3566 = vmatpush1.bf16.msra.mxu0 %v3088
    %3567 = vmatprep.mubr.bf16.mxu0 %v1961
    %3568 = vmatmul.mubr.bf16.gmra.mrb[0].mxu0 %v1960
    %v3569 = vpop.f32.mrb[0].mxu0
    %v3570 = vadd.f32 %v3529, %v3569
    %v3571 = vpop.f32.mrb[0].mxu0
    %v3572 = vadd.f32 %v3531, %v3571
    %v3573 = vpop.f32.mrb[0].mxu0
    %v3574 = vpop.f32.mrb[0].mxu0
    %3575 = vdwg.mxu0
    %3576 = vmatprep.subr.bf16.mxu0 %v3093
    %3577 = vmatpush1.bf16.msra.mxu0 %v3092
    %3578 = vmatprep.subr.bf16.mxu0 %v3097
    %3579 = vmatpush1.bf16.msra.mxu0 %v3096
    %3580 = vmatprep.subr.bf16.mxu0 %v3101
    %3581 = vmatpush1.bf16.msra.mxu0 %v3100
    %3582 = vmatprep.subr.bf16.mxu0 %v3105
    %3583 = vmatpush1.bf16.msra.mxu0 %v3104
    %3584 = vmatprep.subr.bf16.mxu0 %v3109
    %3585 = vmatpush1.bf16.msra.mxu0 %v3108
    %3586 = vmatprep.subr.bf16.mxu0 %v3113
    %3587 = vmatpush1.bf16.msra.mxu0 %v3112
    %3588 = vmatprep.subr.bf16.mxu0 %v3117
    %3589 = vmatpush1.bf16.msra.mxu0 %v3116
    %3590 = vmatprep.subr.bf16.mxu0 %v3121
    %3591 = vmatpush1.bf16.msra.mxu0 %v3120
    %3592 = vmatprep.subr.bf16.mxu0 0
    %3593 = vmatpush1.bf16.msra.mxu0 0
    %3594 = vmatprep.subr.bf16.mxu0 0
    %3595 = vmatpush1.bf16.msra.mxu0 0
    %3596 = vmatprep.subr.bf16.mxu0 0
    %3597 = vmatpush1.bf16.msra.mxu0 0
    %3598 = vmatprep.subr.bf16.mxu0 0
    %3599 = vmatpush1.bf16.msra.mxu0 0
    %3600 = vmatprep.subr.bf16.mxu0 0
    %3601 = vmatpush1.bf16.msra.mxu0 0
    %3602 = vmatprep.subr.bf16.mxu0 0
    %3603 = vmatpush1.bf16.msra.mxu0 0
    %3604 = vmatprep.subr.bf16.mxu0 0
    %3605 = vmatpush1.bf16.msra.mxu0 0
    %3606 = vmatprep.subr.bf16.mxu0 0
    %3607 = vmatpush1.bf16.msra.mxu0 0
    %3608 = vmatprep.mubr.bf16.mxu0 0
    %3609 = vmatmul.mubr.bf16.gmra.mrb[0].mxu0 %v1962
    %v3610 = vpop.f32.mrb[0].mxu0
    %v3611 = vadd.f32 %v3570, %v3610
    %v3612 = vpop.f32.mrb[0].mxu0
    %v3613 = vadd.f32 %v3572, %v3612
    %v3614 = vpop.f32.mrb[0].mxu0
    %v3615 = vpop.f32.mrb[0].mxu0
    %3616 = vdwg.mxu0
    %3617 = vmatprep.subr.bf16.mxu0 %v2839
    %3618 = vmatpush1.bf16.msra.mxu0 %v2838
    %3619 = vmatprep.subr.bf16.mxu0 %v2843
    %3620 = vmatpush1.bf16.msra.mxu0 %v2842
    %3621 = vmatprep.subr.bf16.mxu0 %v2847
    %3622 = vmatpush1.bf16.msra.mxu0 %v2846
    %3623 = vmatprep.subr.bf16.mxu0 %v2851
    %3624 = vmatpush1.bf16.msra.mxu0 %v2850
    %3625 = vmatprep.subr.bf16.mxu0 %v2855
    %3626 = vmatpush1.bf16.msra.mxu0 %v2854
    %3627 = vmatprep.subr.bf16.mxu0 %v2859
    %3628 = vmatpush1.bf16.msra.mxu0 %v2858
    %3629 = vmatprep.subr.bf16.mxu0 %v2863
    %3630 = vmatpush1.bf16.msra.mxu0 %v2862
    %3631 = vmatprep.subr.bf16.mxu0 %v2867
    %3632 = vmatpush1.bf16.msra.mxu0 %v2866
    %3633 = vmatprep.subr.bf16.mxu0 %v2871
    %3634 = vmatpush1.bf16.msra.mxu0 %v2870
    %3635 = vmatprep.subr.bf16.mxu0 %v2875
    %3636 = vmatpush1.bf16.msra.mxu0 %v2874
    %3637 = vmatprep.subr.bf16.mxu0 %v2879
    %3638 = vmatpush1.bf16.msra.mxu0 %v2878
    %3639 = vmatprep.subr.bf16.mxu0 %v2883
    %3640 = vmatpush1.bf16.msra.mxu0 %v2882
    %3641 = vmatprep.subr.bf16.mxu0 %v2887
    %3642 = vmatpush1.bf16.msra.mxu0 %v2886
    %3643 = vmatprep.subr.bf16.mxu0 %v2891
    %3644 = vmatpush1.bf16.msra.mxu0 %v2890
    %3645 = vmatprep.subr.bf16.mxu0 %v2895
    %3646 = vmatpush1.bf16.msra.mxu0 %v2894
    %3647 = vmatprep.subr.bf16.mxu0 %v2899
    %3648 = vmatpush1.bf16.msra.mxu0 %v2898
    %3649 = vmatprep.mubr.bf16.mxu0 %v1955
    %3650 = vmatmul.mubr.bf16.gmra.mrb[0].mxu0 %v1954
    %v3651 = vpop.f32.mrb[0].mxu0
    %v3652 = vadd.f32 %v1931, %v3651
    %v3653 = vpop.f32.mrb[0].mxu0
    %v3654 = vadd.f32 %v1935, %v3653
    %v3655 = vpop.f32.mrb[0].mxu0
    %v3656 = vpop.f32.mrb[0].mxu0
    %3657 = vdwg.mxu0
    %3658 = vmatprep.subr.bf16.mxu0 %v2903
    %3659 = vmatpush1.bf16.msra.mxu0 %v2902
    %3660 = vmatprep.subr.bf16.mxu0 %v2907
    %3661 = vmatpush1.bf16.msra.mxu0 %v2906
    %3662 = vmatprep.subr.bf16.mxu0 %v2911
    %3663 = vmatpush1.bf16.msra.mxu0 %v2910
    %3664 = vmatprep.subr.bf16.mxu0 %v2915
    %3665 = vmatpush1.bf16.msra.mxu0 %v2914
    %3666 = vmatprep.subr.bf16.mxu0 %v2919
    %3667 = vmatpush1.bf16.msra.mxu0 %v2918
    %3668 = vmatprep.subr.bf16.mxu0 %v2923
    %3669 = vmatpush1.bf16.msra.mxu0 %v2922
    %3670 = vmatprep.subr.bf16.mxu0 %v2927
    %3671 = vmatpush1.bf16.msra.mxu0 %v2926
    %3672 = vmatprep.subr.bf16.mxu0 %v2931
    %3673 = vmatpush1.bf16.msra.mxu0 %v2930
    %3674 = vmatprep.subr.bf16.mxu0 %v2935
    %3675 = vmatpush1.bf16.msra.mxu0 %v2934
    %3676 = vmatprep.subr.bf16.mxu0 %v2939
    %3677 = vmatpush1.bf16.msra.mxu0 %v2938
    %3678 = vmatprep.subr.bf16.mxu0 %v2943
    %3679 = vmatpush1.bf16.msra.mxu0 %v2942
    %3680 = vmatprep.subr.bf16.mxu0 %v2947
    %3681 = vmatpush1.bf16.msra.mxu0 %v2946
    %3682 = vmatprep.subr.bf16.mxu0 %v2951
    %3683 = vmatpush1.bf16.msra.mxu0 %v2950
    %3684 = vmatprep.subr.bf16.mxu0 %v2955
    %3685 = vmatpush1.bf16.msra.mxu0 %v2954
    %3686 = vmatprep.subr.bf16.mxu0 %v2959
    %3687 = vmatpush1.bf16.msra.mxu0 %v2958
    %3688 = vmatprep.subr.bf16.mxu0 %v2963
    %3689 = vmatpush1.bf16.msra.mxu0 %v2962
    %3690 = vmatprep.mubr.bf16.mxu0 %v1957
    %3691 = vmatmul.mubr.bf16.gmra.mrb[0].mxu0 %v1956
    %v3692 = vpop.f32.mrb[0].mxu0
    %v3693 = vadd.f32 %v3652, %v3692
    %v3694 = vpop.f32.mrb[0].mxu0
    %v3695 = vadd.f32 %v3654, %v3694
    %v3696 = vpop.f32.mrb[0].mxu0
    %v3697 = vpop.f32.mrb[0].mxu0
    %3698 = vdwg.mxu0
    %3699 = vmatprep.subr.bf16.mxu0 %v2967
    %3700 = vmatpush1.bf16.msra.mxu0 %v2966
    %3701 = vmatprep.subr.bf16.mxu0 %v2971
    %3702 = vmatpush1.bf16.msra.mxu0 %v2970
    %3703 = vmatprep.subr.bf16.mxu0 %v2975
    %3704 = vmatpush1.bf16.msra.mxu0 %v2974
    %3705 = vmatprep.subr.bf16.mxu0 %v2979
    %3706 = vmatpush1.bf16.msra.mxu0 %v2978
    %3707 = vmatprep.subr.bf16.mxu0 %v2983
    %3708 = vmatpush1.bf16.msra.mxu0 %v2982
    %3709 = vmatprep.subr.bf16.mxu0 %v2987
    %3710 = vmatpush1.bf16.msra.mxu0 %v2986
    %3711 = vmatprep.subr.bf16.mxu0 %v2991
    %3712 = vmatpush1.bf16.msra.mxu0 %v2990
    %3713 = vmatprep.subr.bf16.mxu0 %v2995
    %3714 = vmatpush1.bf16.msra.mxu0 %v2994
    %3715 = vmatprep.subr.bf16.mxu0 %v2999
    %3716 = vmatpush1.bf16.msra.mxu0 %v2998
    %3717 = vmatprep.subr.bf16.mxu0 %v3003
    %3718 = vmatpush1.bf16.msra.mxu0 %v3002
    %3719 = vmatprep.subr.bf16.mxu0 %v3007
    %3720 = vmatpush1.bf16.msra.mxu0 %v3006
    %3721 = vmatprep.subr.bf16.mxu0 %v3011
    %3722 = vmatpush1.bf16.msra.mxu0 %v3010
    %3723 = vmatprep.subr.bf16.mxu0 %v3015
    %3724 = vmatpush1.bf16.msra.mxu0 %v3014
    %3725 = vmatprep.subr.bf16.mxu0 %v3019
    %3726 = vmatpush1.bf16.msra.mxu0 %v3018
    %3727 = vmatprep.subr.bf16.mxu0 %v3023
    %3728 = vmatpush1.bf16.msra.mxu0 %v3022
    %3729 = vmatprep.subr.bf16.mxu0 %v3027
    %3730 = vmatpush1.bf16.msra.mxu0 %v3026
    %3731 = vmatprep.mubr.bf16.mxu0 %v1959
    %3732 = vmatmul.mubr.bf16.gmra.mrb[0].mxu0 %v1958
    %v3733 = vpop.f32.mrb[0].mxu0
    %v3734 = vadd.f32 %v3693, %v3733
    %v3735 = vpop.f32.mrb[0].mxu0
    %v3736 = vadd.f32 %v3695, %v3735
    %v3737 = vpop.f32.mrb[0].mxu0
    %v3738 = vpop.f32.mrb[0].mxu0
    %3739 = vdwg.mxu0
    %3740 = vmatprep.subr.bf16.mxu0 %v3031
    %3741 = vmatpush1.bf16.msra.mxu0 %v3030
    %3742 = vmatprep.subr.bf16.mxu0 %v3035
    %3743 = vmatpush1.bf16.msra.mxu0 %v3034
    %3744 = vmatprep.subr.bf16.mxu0 %v3039
    %3745 = vmatpush1.bf16.msra.mxu0 %v3038
    %3746 = vmatprep.subr.bf16.mxu0 %v3043
    %3747 = vmatpush1.bf16.msra.mxu0 %v3042
    %3748 = vmatprep.subr.bf16.mxu0 %v3047
    %3749 = vmatpush1.bf16.msra.mxu0 %v3046
    %3750 = vmatprep.subr.bf16.mxu0 %v3051
    %3751 = vmatpush1.bf16.msra.mxu0 %v3050
    %3752 = vmatprep.subr.bf16.mxu0 %v3055
    %3753 = vmatpush1.bf16.msra.mxu0 %v3054
    %3754 = vmatprep.subr.bf16.mxu0 %v3059
    %3755 = vmatpush1.bf16.msra.mxu0 %v3058
    %3756 = vmatprep.subr.bf16.mxu0 %v3063
    %3757 = vmatpush1.bf16.msra.mxu0 %v3062
    %3758 = vmatprep.subr.bf16.mxu0 %v3067
    %3759 = vmatpush1.bf16.msra.mxu0 %v3066
    %3760 = vmatprep.subr.bf16.mxu0 %v3071
    %3761 = vmatpush1.bf16.msra.mxu0 %v3070
    %3762 = vmatprep.subr.bf16.mxu0 %v3075
    %3763 = vmatpush1.bf16.msra.mxu0 %v3074
    %3764 = vmatprep.subr.bf16.mxu0 %v3079
    %3765 = vmatpush1.bf16.msra.mxu0 %v3078
    %3766 = vmatprep.subr.bf16.mxu0 %v3083
    %3767 = vmatpush1.bf16.msra.mxu0 %v3082
    %3768 = vmatprep.subr.bf16.mxu0 %v3087
    %3769 = vmatpush1.bf16.msra.mxu0 %v3086
    %3770 = vmatprep.subr.bf16.mxu0 %v3091
    %3771 = vmatpush1.bf16.msra.mxu0 %v3090
    %3772 = vmatprep.mubr.bf16.mxu0 %v1961
    %3773 = vmatmul.mubr.bf16.gmra.mrb[0].mxu0 %v1960
    %v3774 = vpop.f32.mrb[0].mxu0
    %v3775 = vadd.f32 %v3734, %v3774
    %v3776 = vpop.f32.mrb[0].mxu0
    %v3777 = vadd.f32 %v3736, %v3776
    %v3778 = vpop.f32.mrb[0].mxu0
    %v3779 = vpop.f32.mrb[0].mxu0
    %3780 = vdwg.mxu0
    %3781 = vmatprep.subr.bf16.mxu0 %v3095
    %3782 = vmatpush1.bf16.msra.mxu0 %v3094
    %3783 = vmatprep.subr.bf16.mxu0 %v3099
    %3784 = vmatpush1.bf16.msra.mxu0 %v3098
    %3785 = vmatprep.subr.bf16.mxu0 %v3103
    %3786 = vmatpush1.bf16.msra.mxu0 %v3102
    %3787 = vmatprep.subr.bf16.mxu0 %v3107
    %3788 = vmatpush1.bf16.msra.mxu0 %v3106
    %3789 = vmatprep.subr.bf16.mxu0 %v3111
    %3790 = vmatpush1.bf16.msra.mxu0 %v3110
    %3791 = vmatprep.subr.bf16.mxu0 %v3115
    %3792 = vmatpush1.bf16.msra.mxu0 %v3114
    %3793 = vmatprep.subr.bf16.mxu0 %v3119
    %3794 = vmatpush1.bf16.msra.mxu0 %v3118
    %3795 = vmatprep.subr.bf16.mxu0 %v3123
    %3796 = vmatpush1.bf16.msra.mxu0 %v3122
    %3797 = vmatprep.subr.bf16.mxu0 0
    %3798 = vmatpush1.bf16.msra.mxu0 0
    %3799 = vmatprep.subr.bf16.mxu0 0
    %3800 = vmatpush1.bf16.msra.mxu0 0
    %3801 = vmatprep.subr.bf16.mxu0 0
    %3802 = vmatpush1.bf16.msra.mxu0 0
    %3803 = vmatprep.subr.bf16.mxu0 0
    %3804 = vmatpush1.bf16.msra.mxu0 0
    %3805 = vmatprep.subr.bf16.mxu0 0
    %3806 = vmatpush1.bf16.msra.mxu0 0
    %3807 = vmatprep.subr.bf16.mxu0 0
    %3808 = vmatpush1.bf16.msra.mxu0 0
    %3809 = vmatprep.subr.bf16.mxu0 0
    %3810 = vmatpush1.bf16.msra.mxu0 0
    %3811 = vmatprep.subr.bf16.mxu0 0
    %3812 = vmatpush1.bf16.msra.mxu0 0
    %3813 = vmatprep.mubr.bf16.mxu0 0
    %3814 = vmatmul.mubr.bf16.gmra.mrb[0].mxu0 %v1962
    %v3815 = vpop.f32.mrb[0].mxu0
    %v3816 = vadd.f32 %v3775, %v3815
    %v3817 = vpop.f32.mrb[0].mxu0
    %v3818 = vadd.f32 %v3777, %v3817
    %v3819 = vpop.f32.mrb[0].mxu0
    %v3820 = vpop.f32.mrb[0].mxu0
    %3821 = vdwg.mxu0
    %v3822 = vmax.f32 %v3611, 0.0
    %v3823 = vmax.f32 %v3613, 0.0
    %v3824 = vmax.f32 %v3816, 0.0
    %v3825 = vmax.f32 %v3818, 0.0
    %vm3826 = vcmask 1043456
    %v3827 = vsel %vm3826, %v3822, -inf
    %v3828 = vrot.slane %v3827, 4
    %v3829 = vmax.f32 %v3827, %v3828
    %v3830 = vrot.slane %v3829, 2
    %v3831 = vmax.f32 %v3829, %v3830
    %v3832 = vrot.slane %v3831, 1
    %v3833 = vmax.f32 %v3831, %v3832
    %v3834 = vsel %vm3826, %v3823, -inf
    %v3835 = vrot.slane %v3834, 4
    %v3836 = vmax.f32 %v3834, %v3835
    %v3837 = vrot.slane %v3836, 2
    %v3838 = vmax.f32 %v3836, %v3837
    %v3839 = vrot.slane %v3838, 1
    %v3840 = vmax.f32 %v3838, %v3839
    %v3841 = vsel %vm3826, %v3824, -inf
    %v3842 = vrot.slane %v3841, 4
    %v3843 = vmax.f32 %v3841, %v3842
    %v3844 = vrot.slane %v3843, 2
    %v3845 = vmax.f32 %v3843, %v3844
    %v3846 = vrot.slane %v3845, 1
    %v3847 = vmax.f32 %v3845, %v3846
    %v3848 = vsel %vm3826, %v3825, -inf
    %v3849 = vrot.slane %v3848, 4
    %v3850 = vmax.f32 %v3848, %v3849
    %v3851 = vrot.slane %v3850, 2
    %v3852 = vmax.f32 %v3850, %v3851
    %v3853 = vrot.slane %v3852, 1
    %v3854 = vmax.f32 %v3852, %v3853
    %vm3855 = vcmask 1047556
    %v3856 = vsel %vm3855, %v3822, -inf
    %v3857 = vrot.slane %v3856, 4
    %v3858 = vmax.f32 %v3856, %v3857
    %v3859 = vrot.slane %v3858, 2
    %v3860 = vmax.f32 %v3858, %v3859
    %v3861 = vrot.slane %v3860, 1
    %v3862 = vmax.f32 %v3860, %v3861
    %v3863 = vsel %vm3855, %v3823, -inf
    %v3864 = vrot.slane %v3863, 4
    %v3865 = vmax.f32 %v3863, %v3864
    %v3866 = vrot.slane %v3865, 2
    %v3867 = vmax.f32 %v3865, %v3866
    %v3868 = vrot.slane %v3867, 1
    %v3869 = vmax.f32 %v3867, %v3868
    %v3870 = vsel %vm3855, %v3824, -inf
    %v3871 = vrot.slane %v3870, 4
    %v3872 = vmax.f32 %v3870, %v3871
    %v3873 = vrot.slane %v3872, 2
    %v3874 = vmax.f32 %v3872, %v3873
    %v3875 = vrot.slane %v3874, 1
    %v3876 = vmax.f32 %v3874, %v3875
    %v3877 = vsel %vm3855, %v3825, -inf
    %v3878 = vrot.slane %v3877, 4
    %v3879 = vmax.f32 %v3877, %v3878
    %v3880 = vrot.slane %v3879, 2
    %v3881 = vmax.f32 %v3879, %v3880
    %v3882 = vrot.slane %v3881, 1
    %v3883 = vmax.f32 %v3881, %v3882
    %v3884 = vsel %vm1333, %v3833, %v3862
    %v3885 = vsel %vm1333, %v3840, %v3869
    %v3886 = vsel %vm1333, %v3847, %v3876
    %v3887 = vsel %vm1333, %v3854, %v3883
    %v3888 = vpack.c.bf16 %v3884, %v3884
    %v3889 = vpack.c.bf16 %v3885, %v3885
    %v3890 = vpack.c.bf16 %v3886, %v3886
    %v3891 = vpack.c.bf16 %v3887, %v3887
    %v3892 = vld [vmem:[#allocation9] sm:$0xff]
    %v3893 = vld [vmem:[#allocation9 + $0x8] sm:$0xff]
    %v3894 = vld [vmem:[#allocation9 + $0x10] sm:$0xff]
    %v3895 = vld [vmem:[#allocation9 + $0x18] sm:$0xff]
    %v3896 = vld [vmem:[#allocation9 + $0x20] sm:$0xff]
    %v3897 = vld [vmem:[#allocation9 + $0x28] sm:$0xff]
    %v3898 = vld [vmem:[#allocation9 + $0x30] sm:$0xff]
    %v3899 = vld [vmem:[#allocation9 + $0x38] sm:$0xff]
    %v3900 = vld [vmem:[#allocation9 + $0x40] sm:$0xff]
    %v3901 = vld [vmem:[#allocation9 + $0x48] sm:$0xff]
    %v3902 = vld [vmem:[#allocation9 + $0x50] sm:$0xff]
    %v3903 = vld [vmem:[#allocation9 + $0x58] sm:$0xff]
    %v3904 = vld [vmem:[#allocation9 + $0x60] sm:$0xff]
    %v3905 = vld [vmem:[#allocation9 + $0x68] sm:$0xff]
    %v3906 = vld [vmem:[#allocation9 + $0x70] sm:$0xff]
    %v3907 = vld [vmem:[#allocation9 + $0x78] sm:$0xff]
    %v3908 = vld [vmem:[#allocation9 + $0x80] sm:$0xff]
    %v3909 = vld [vmem:[#allocation9 + $0x88] sm:$0xff]
    %v3910 = vld [vmem:[#allocation9 + $0x90] sm:$0xff]
    %v3911 = vld [vmem:[#allocation9 + $0x98] sm:$0xff]
    %v3912 = vld [vmem:[#allocation9 + $0xa0] sm:$0xff]
    %v3913 = vld [vmem:[#allocation9 + $0xa8] sm:$0xff]
    %v3914 = vld [vmem:[#allocation9 + $0xb0] sm:$0xff]
    %v3915 = vld [vmem:[#allocation9 + $0xb8] sm:$0xff]
    %v3916 = vld [vmem:[#allocation9 + $0xc0] sm:$0xff]
    %v3917 = vld [vmem:[#allocation9 + $0xc8] sm:$0xff]
    %v3918 = vld [vmem:[#allocation9 + $0xd0] sm:$0xff]
    %v3919 = vld [vmem:[#allocation9 + $0xd8] sm:$0xff]
    %v3920 = vld [vmem:[#allocation9 + $0xe0] sm:$0xff]
    %v3921 = vld [vmem:[#allocation9 + $0xe8] sm:$0xff]
    %v3922 = vld [vmem:[#allocation9 + $0xf0] sm:$0xff]
    %v3923 = vld [vmem:[#allocation9 + $0xf8] sm:$0xff]
    %v3924 = vld [vmem:[#allocation9 + $0x100] sm:$0xff]
    %v3925 = vld [vmem:[#allocation9 + $0x108] sm:$0xff]
    %v3926 = vld [vmem:[#allocation9 + $0x110] sm:$0xff]
    %v3927 = vld [vmem:[#allocation9 + $0x118] sm:$0xff]
    %v3928 = vld [vmem:[#allocation9 + $0x120] sm:$0xff]
    %v3929 = vld [vmem:[#allocation9 + $0x128] sm:$0xff]
    %v3930 = vld [vmem:[#allocation9 + $0x130] sm:$0xff]
    %v3931 = vld [vmem:[#allocation9 + $0x138] sm:$0xff]
    %v3932 = vld [vmem:[#allocation9 + $0x140] sm:$0xff]
    %v3933 = vld [vmem:[#allocation9 + $0x148] sm:$0xff]
    %v3934 = vld [vmem:[#allocation9 + $0x150] sm:$0xff]
    %v3935 = vld [vmem:[#allocation9 + $0x158] sm:$0xff]
    %v3936 = vld [vmem:[#allocation9 + $0x160] sm:$0xff]
    %v3937 = vld [vmem:[#allocation9 + $0x168] sm:$0xff]
    %v3938 = vld [vmem:[#allocation9 + $0x170] sm:$0xff]
    %v3939 = vld [vmem:[#allocation9 + $0x178] sm:$0xff]
    %v3940 = vld [vmem:[#allocation9 + $0x180] sm:$0xff]
    %v3941 = vld [vmem:[#allocation9 + $0x188] sm:$0xff]
    %v3942 = vld [vmem:[#allocation9 + $0x190] sm:$0xff]
    %v3943 = vld [vmem:[#allocation9 + $0x198] sm:$0xff]
    %v3944 = vld [vmem:[#allocation9 + $0x1a0] sm:$0xff]
    %v3945 = vld [vmem:[#allocation9 + $0x1a8] sm:$0xff]
    %v3946 = vld [vmem:[#allocation9 + $0x1b0] sm:$0xff]
    %v3947 = vld [vmem:[#allocation9 + $0x1b8] sm:$0xff]
    %v3948 = vld [vmem:[#allocation9 + $0x1c0] sm:$0xff]
    %v3949 = vld [vmem:[#allocation9 + $0x1c8] sm:$0xff]
    %v3950 = vld [vmem:[#allocation9 + $0x1d0] sm:$0xff]
    %v3951 = vld [vmem:[#allocation9 + $0x1d8] sm:$0xff]
    %v3952 = vld [vmem:[#allocation9 + $0x1e0] sm:$0xff]
    %v3953 = vld [vmem:[#allocation9 + $0x1e8] sm:$0xff]
    %v3954 = vld [vmem:[#allocation9 + $0x1f0] sm:$0xff]
    %v3955 = vld [vmem:[#allocation9 + $0x1f8] sm:$0xff]
    %v3956 = vld [vmem:[#allocation9 + $0x200] sm:$0xff]
    %v3957 = vld [vmem:[#allocation9 + $0x208] sm:$0xff]
    %v3958 = vld [vmem:[#allocation9 + $0x210] sm:$0xff]
    %v3959 = vld [vmem:[#allocation9 + $0x218] sm:$0xff]
    %v3960 = vld [vmem:[#allocation9 + $0x220] sm:$0xff]
    %v3961 = vld [vmem:[#allocation9 + $0x228] sm:$0xff]
    %v3962 = vld [vmem:[#allocation9 + $0x230] sm:$0xff]
    %v3963 = vld [vmem:[#allocation9 + $0x238] sm:$0xff]
    %v3964 = vld [vmem:[#allocation9 + $0x240] sm:$0xff]
    %v3965 = vld [vmem:[#allocation9 + $0x248] sm:$0xff]
    %v3966 = vld [vmem:[#allocation9 + $0x250] sm:$0xff]
    %v3967 = vld [vmem:[#allocation9 + $0x258] sm:$0xff]
    %v3968 = vld [vmem:[#allocation9 + $0x260] sm:$0xff]
    %v3969 = vld [vmem:[#allocation9 + $0x268] sm:$0xff]
    %v3970 = vld [vmem:[#allocation9 + $0x270] sm:$0xff]
    %v3971 = vld [vmem:[#allocation9 + $0x278] sm:$0xff]
    %v3972 = vld [vmem:[#allocation9 + $0x280] sm:$0xff]
    %v3973 = vld [vmem:[#allocation9 + $0x288] sm:$0xff]
    %v3974 = vld [vmem:[#allocation9 + $0x290] sm:$0xff]
    %v3975 = vld [vmem:[#allocation9 + $0x298] sm:$0xff]
    %v3976 = vld [vmem:[#allocation9 + $0x2a0] sm:$0xff]
    %v3977 = vld [vmem:[#allocation9 + $0x2a8] sm:$0xff]
    %v3978 = vld [vmem:[#allocation9 + $0x2b0] sm:$0xff]
    %v3979 = vld [vmem:[#allocation9 + $0x2b8] sm:$0xff]
    %v3980 = vld [vmem:[#allocation9 + $0x2c0] sm:$0xff]
    %v3981 = vld [vmem:[#allocation9 + $0x2c8] sm:$0xff]
    %v3982 = vld [vmem:[#allocation9 + $0x2d0] sm:$0xff]
    %v3983 = vld [vmem:[#allocation9 + $0x2d8] sm:$0xff]
    %v3984 = vld [vmem:[#allocation9 + $0x2e0] sm:$0xff]
    %v3985 = vld [vmem:[#allocation9 + $0x2e8] sm:$0xff]
    %v3986 = vld [vmem:[#allocation9 + $0x2f0] sm:$0xff]
    %v3987 = vld [vmem:[#allocation9 + $0x2f8] sm:$0xff]
    %v3988 = vld [vmem:[#allocation9 + $0x300] sm:$0xff]
    %v3989 = vld [vmem:[#allocation9 + $0x308] sm:$0xff]
    %v3990 = vld [vmem:[#allocation9 + $0x310] sm:$0xff]
    %v3991 = vld [vmem:[#allocation9 + $0x318] sm:$0xff]
    %v3992 = vld [vmem:[#allocation9 + $0x320] sm:$0xff]
    %v3993 = vld [vmem:[#allocation9 + $0x328] sm:$0xff]
    %v3994 = vld [vmem:[#allocation9 + $0x330] sm:$0xff]
    %v3995 = vld [vmem:[#allocation9 + $0x338] sm:$0xff]
    %v3996 = vld [vmem:[#allocation9 + $0x340] sm:$0xff]
    %v3997 = vld [vmem:[#allocation9 + $0x348] sm:$0xff]
    %v3998 = vld [vmem:[#allocation9 + $0x350] sm:$0xff]
    %v3999 = vld [vmem:[#allocation9 + $0x358] sm:$0xff]
    %v4000 = vld [vmem:[#allocation9 + $0x360] sm:$0xff]
    %v4001 = vld [vmem:[#allocation9 + $0x368] sm:$0xff]
    %v4002 = vld [vmem:[#allocation9 + $0x370] sm:$0xff]
    %v4003 = vld [vmem:[#allocation9 + $0x378] sm:$0xff]
    %v4004 = vld [vmem:[#allocation9 + $0x380] sm:$0xff]
    %v4005 = vld [vmem:[#allocation9 + $0x388] sm:$0xff]
    %v4006 = vld [vmem:[#allocation9 + $0x390] sm:$0xff]
    %v4007 = vld [vmem:[#allocation9 + $0x398] sm:$0xff]
    %v4008 = vld [vmem:[#allocation9 + $0x3a0] sm:$0xff]
    %v4009 = vld [vmem:[#allocation9 + $0x3a8] sm:$0xff]
    %v4010 = vld [vmem:[#allocation9 + $0x3b0] sm:$0xff]
    %v4011 = vld [vmem:[#allocation9 + $0x3b8] sm:$0xff]
    %v4012 = vld [vmem:[#allocation9 + $0x3c0] sm:$0xff]
    %v4013 = vld [vmem:[#allocation9 + $0x3c8] sm:$0xff]
    %v4014 = vld [vmem:[#allocation9 + $0x3d0] sm:$0xff]
    %v4015 = vld [vmem:[#allocation9 + $0x3d8] sm:$0xff]
    %v4016 = vld [vmem:[#allocation9 + $0x3e0] sm:$0xff]
    %v4017 = vld [vmem:[#allocation9 + $0x3e8] sm:$0xff]
    %v4018 = vld [vmem:[#allocation9 + $0x3f0] sm:$0xff]
    %v4019 = vld [vmem:[#allocation9 + $0x3f8] sm:$0xff]
    %v4020 = vld [vmem:[%s8] sm:$0xf]
    %v4022 = vlaneseq
    %v4023 = vshrl.u32 %v4022, 7
    %v4024 = vsub.s32 0, %v4023
    %v4025 = vrot.slane %v4020, %v4024
    %v4026 = vlaneseq
    %v4027 = vshrl.u32 %v4026, 7
    %v4028 = vsub.s32 1, %v4027
    %v4029 = vrot.slane %v4020, %v4028
    %v4030 = vlaneseq
    %v4031 = vshrl.u32 %v4030, 7
    %v4032 = vsub.s32 2, %v4031
    %v4033 = vrot.slane %v4020, %v4032
    %v4034 = vlaneseq
    %v4035 = vshrl.u32 %v4034, 7
    %v4036 = vsub.s32 3, %v4035
    %v4037 = vrot.slane %v4020, %v4036
    %v4170 = vunpack.c.l.b16 %v3892
    %v4171 = vunpack.c.h.b16 %v3892
    %v4172 = vunpack.c.l.b16 %v3893
    %v4173 = vunpack.c.h.b16 %v3893
    %v4174 = vunpack.c.l.b16 %v3894
    %v4175 = vunpack.c.h.b16 %v3894
    %v4176 = vunpack.c.l.b16 %v3895
    %v4177 = vunpack.c.h.b16 %v3895
    %v4178 = vunpack.c.l.b16 %v3896
    %v4179 = vunpack.c.h.b16 %v3896
    %v4180 = vunpack.c.l.b16 %v3897
    %v4181 = vunpack.c.h.b16 %v3897
    %v4182 = vunpack.c.l.b16 %v3898
    %v4183 = vunpack.c.h.b16 %v3898
    %v4184 = vunpack.c.l.b16 %v3899
    %v4185 = vunpack.c.h.b16 %v3899
    %v4186 = vunpack.c.l.b16 %v3900
    %v4187 = vunpack.c.h.b16 %v3900
    %v4188 = vunpack.c.l.b16 %v3901
    %v4189 = vunpack.c.h.b16 %v3901
    %v4190 = vunpack.c.l.b16 %v3902
    %v4191 = vunpack.c.h.b16 %v3902
    %v4192 = vunpack.c.l.b16 %v3903
    %v4193 = vunpack.c.h.b16 %v3903
    %v4194 = vunpack.c.l.b16 %v3904
    %v4195 = vunpack.c.h.b16 %v3904
    %v4196 = vunpack.c.l.b16 %v3905
    %v4197 = vunpack.c.h.b16 %v3905
    %v4198 = vunpack.c.l.b16 %v3906
    %v4199 = vunpack.c.h.b16 %v3906
    %v4200 = vunpack.c.l.b16 %v3907
    %v4201 = vunpack.c.h.b16 %v3907
    %v4202 = vunpack.c.l.b16 %v3908
    %v4203 = vunpack.c.h.b16 %v3908
    %v4204 = vunpack.c.l.b16 %v3909
    %v4205 = vunpack.c.h.b16 %v3909
    %v4206 = vunpack.c.l.b16 %v3910
    %v4207 = vunpack.c.h.b16 %v3910
    %v4208 = vunpack.c.l.b16 %v3911
    %v4209 = vunpack.c.h.b16 %v3911
    %v4210 = vunpack.c.l.b16 %v3912
    %v4211 = vunpack.c.h.b16 %v3912
    %v4212 = vunpack.c.l.b16 %v3913
    %v4213 = vunpack.c.h.b16 %v3913
    %v4214 = vunpack.c.l.b16 %v3914
    %v4215 = vunpack.c.h.b16 %v3914
    %v4216 = vunpack.c.l.b16 %v3915
    %v4217 = vunpack.c.h.b16 %v3915
    %v4218 = vunpack.c.l.b16 %v3916
    %v4219 = vunpack.c.h.b16 %v3916
    %v4220 = vunpack.c.l.b16 %v3917
    %v4221 = vunpack.c.h.b16 %v3917
    %v4222 = vunpack.c.l.b16 %v3918
    %v4223 = vunpack.c.h.b16 %v3918
    %v4224 = vunpack.c.l.b16 %v3919
    %v4225 = vunpack.c.h.b16 %v3919
    %v4226 = vunpack.c.l.b16 %v3920
    %v4227 = vunpack.c.h.b16 %v3920
    %v4228 = vunpack.c.l.b16 %v3921
    %v4229 = vunpack.c.h.b16 %v3921
    %v4230 = vunpack.c.l.b16 %v3922
    %v4231 = vunpack.c.h.b16 %v3922
    %v4232 = vunpack.c.l.b16 %v3923
    %v4233 = vunpack.c.h.b16 %v3923
    %v4234 = vunpack.c.l.b16 %v3924
    %v4235 = vunpack.c.h.b16 %v3924
    %v4236 = vunpack.c.l.b16 %v3925
    %v4237 = vunpack.c.h.b16 %v3925
    %v4238 = vunpack.c.l.b16 %v3926
    %v4239 = vunpack.c.h.b16 %v3926
    %v4240 = vunpack.c.l.b16 %v3927
    %v4241 = vunpack.c.h.b16 %v3927
    %v4242 = vunpack.c.l.b16 %v3928
    %v4243 = vunpack.c.h.b16 %v3928
    %v4244 = vunpack.c.l.b16 %v3929
    %v4245 = vunpack.c.h.b16 %v3929
    %v4246 = vunpack.c.l.b16 %v3930
    %v4247 = vunpack.c.h.b16 %v3930
    %v4248 = vunpack.c.l.b16 %v3931
    %v4249 = vunpack.c.h.b16 %v3931
    %v4250 = vunpack.c.l.b16 %v3932
    %v4251 = vunpack.c.h.b16 %v3932
    %v4252 = vunpack.c.l.b16 %v3933
    %v4253 = vunpack.c.h.b16 %v3933
    %v4254 = vunpack.c.l.b16 %v3934
    %v4255 = vunpack.c.h.b16 %v3934
    %v4256 = vunpack.c.l.b16 %v3935
    %v4257 = vunpack.c.h.b16 %v3935
    %v4258 = vunpack.c.l.b16 %v3936
    %v4259 = vunpack.c.h.b16 %v3936
    %v4260 = vunpack.c.l.b16 %v3937
    %v4261 = vunpack.c.h.b16 %v3937
    %v4262 = vunpack.c.l.b16 %v3938
    %v4263 = vunpack.c.h.b16 %v3938
    %v4264 = vunpack.c.l.b16 %v3939
    %v4265 = vunpack.c.h.b16 %v3939
    %v4266 = vunpack.c.l.b16 %v3940
    %v4267 = vunpack.c.h.b16 %v3940
    %v4268 = vunpack.c.l.b16 %v3941
    %v4269 = vunpack.c.h.b16 %v3941
    %v4270 = vunpack.c.l.b16 %v3942
    %v4271 = vunpack.c.h.b16 %v3942
    %v4272 = vunpack.c.l.b16 %v3943
    %v4273 = vunpack.c.h.b16 %v3943
    %v4274 = vunpack.c.l.b16 %v3944
    %v4275 = vunpack.c.h.b16 %v3944
    %v4276 = vunpack.c.l.b16 %v3945
    %v4277 = vunpack.c.h.b16 %v3945
    %v4278 = vunpack.c.l.b16 %v3946
    %v4279 = vunpack.c.h.b16 %v3946
    %v4280 = vunpack.c.l.b16 %v3947
    %v4281 = vunpack.c.h.b16 %v3947
    %v4282 = vunpack.c.l.b16 %v3948
    %v4283 = vunpack.c.h.b16 %v3948
    %v4284 = vunpack.c.l.b16 %v3949
    %v4285 = vunpack.c.h.b16 %v3949
    %v4286 = vunpack.c.l.b16 %v3950
    %v4287 = vunpack.c.h.b16 %v3950
    %v4288 = vunpack.c.l.b16 %v3951
    %v4289 = vunpack.c.h.b16 %v3951
    %v4290 = vunpack.c.l.b16 %v3952
    %v4291 = vunpack.c.h.b16 %v3952
    %v4292 = vunpack.c.l.b16 %v3953
    %v4293 = vunpack.c.h.b16 %v3953
    %v4294 = vunpack.c.l.b16 %v3954
    %v4295 = vunpack.c.h.b16 %v3954
    %v4296 = vunpack.c.l.b16 %v3955
    %v4297 = vunpack.c.h.b16 %v3955
    %v4298 = vunpack.c.l.b16 %v3956
    %v4299 = vunpack.c.h.b16 %v3956
    %v4300 = vunpack.c.l.b16 %v3957
    %v4301 = vunpack.c.h.b16 %v3957
    %v4302 = vunpack.c.l.b16 %v3958
    %v4303 = vunpack.c.h.b16 %v3958
    %v4304 = vunpack.c.l.b16 %v3959
    %v4305 = vunpack.c.h.b16 %v3959
    %v4306 = vunpack.c.l.b16 %v3960
    %v4307 = vunpack.c.h.b16 %v3960
    %v4308 = vunpack.c.l.b16 %v3961
    %v4309 = vunpack.c.h.b16 %v3961
    %v4310 = vunpack.c.l.b16 %v3962
    %v4311 = vunpack.c.h.b16 %v3962
    %v4312 = vunpack.c.l.b16 %v3963
    %v4313 = vunpack.c.h.b16 %v3963
    %v4314 = vunpack.c.l.b16 %v3964
    %v4315 = vunpack.c.h.b16 %v3964
    %v4316 = vunpack.c.l.b16 %v3965
    %v4317 = vunpack.c.h.b16 %v3965
    %v4318 = vunpack.c.l.b16 %v3966
    %v4319 = vunpack.c.h.b16 %v3966
    %v4320 = vunpack.c.l.b16 %v3967
    %v4321 = vunpack.c.h.b16 %v3967
    %v4322 = vunpack.c.l.b16 %v3968
    %v4323 = vunpack.c.h.b16 %v3968
    %v4324 = vunpack.c.l.b16 %v3969
    %v4325 = vunpack.c.h.b16 %v3969
    %v4326 = vunpack.c.l.b16 %v3970
    %v4327 = vunpack.c.h.b16 %v3970
    %v4328 = vunpack.c.l.b16 %v3971
    %v4329 = vunpack.c.h.b16 %v3971
    %v4330 = vunpack.c.l.b16 %v3972
    %v4331 = vunpack.c.h.b16 %v3972
    %v4332 = vunpack.c.l.b16 %v3973
    %v4333 = vunpack.c.h.b16 %v3973
    %v4334 = vunpack.c.l.b16 %v3974
    %v4335 = vunpack.c.h.b16 %v3974
    %v4336 = vunpack.c.l.b16 %v3975
    %v4337 = vunpack.c.h.b16 %v3975
    %v4338 = vunpack.c.l.b16 %v3976
    %v4339 = vunpack.c.h.b16 %v3976
    %v4340 = vunpack.c.l.b16 %v3977
    %v4341 = vunpack.c.h.b16 %v3977
    %v4342 = vunpack.c.l.b16 %v3978
    %v4343 = vunpack.c.h.b16 %v3978
    %v4344 = vunpack.c.l.b16 %v3979
    %v4345 = vunpack.c.h.b16 %v3979
    %v4346 = vunpack.c.l.b16 %v3980
    %v4347 = vunpack.c.h.b16 %v3980
    %v4348 = vunpack.c.l.b16 %v3981
    %v4349 = vunpack.c.h.b16 %v3981
    %v4350 = vunpack.c.l.b16 %v3982
    %v4351 = vunpack.c.h.b16 %v3982
    %v4352 = vunpack.c.l.b16 %v3983
    %v4353 = vunpack.c.h.b16 %v3983
    %v4354 = vunpack.c.l.b16 %v3984
    %v4355 = vunpack.c.h.b16 %v3984
    %v4356 = vunpack.c.l.b16 %v3985
    %v4357 = vunpack.c.h.b16 %v3985
    %v4358 = vunpack.c.l.b16 %v3986
    %v4359 = vunpack.c.h.b16 %v3986
    %v4360 = vunpack.c.l.b16 %v3987
    %v4361 = vunpack.c.h.b16 %v3987
    %v4362 = vunpack.c.l.b16 %v3988
    %v4363 = vunpack.c.h.b16 %v3988
    %v4364 = vunpack.c.l.b16 %v3989
    %v4365 = vunpack.c.h.b16 %v3989
    %v4366 = vunpack.c.l.b16 %v3990
    %v4367 = vunpack.c.h.b16 %v3990
    %v4368 = vunpack.c.l.b16 %v3991
    %v4369 = vunpack.c.h.b16 %v3991
    %v4370 = vunpack.c.l.b16 %v3992
    %v4371 = vunpack.c.h.b16 %v3992
    %v4372 = vunpack.c.l.b16 %v3993
    %v4373 = vunpack.c.h.b16 %v3993
    %v4374 = vunpack.c.l.b16 %v3994
    %v4375 = vunpack.c.h.b16 %v3994
    %v4376 = vunpack.c.l.b16 %v3995
    %v4377 = vunpack.c.h.b16 %v3995
    %v4378 = vunpack.c.l.b16 %v3996
    %v4379 = vunpack.c.h.b16 %v3996
    %v4380 = vunpack.c.l.b16 %v3997
    %v4381 = vunpack.c.h.b16 %v3997
    %v4382 = vunpack.c.l.b16 %v3998
    %v4383 = vunpack.c.h.b16 %v3998
    %v4384 = vunpack.c.l.b16 %v3999
    %v4385 = vunpack.c.h.b16 %v3999
    %v4386 = vunpack.c.l.b16 %v4000
    %v4387 = vunpack.c.h.b16 %v4000
    %v4388 = vunpack.c.l.b16 %v4001
    %v4389 = vunpack.c.h.b16 %v4001
    %v4390 = vunpack.c.l.b16 %v4002
    %v4391 = vunpack.c.h.b16 %v4002
    %v4392 = vunpack.c.l.b16 %v4003
    %v4393 = vunpack.c.h.b16 %v4003
    %v4394 = vunpack.c.l.b16 %v4004
    %v4395 = vunpack.c.h.b16 %v4004
    %v4396 = vunpack.c.l.b16 %v4005
    %v4397 = vunpack.c.h.b16 %v4005
    %v4398 = vunpack.c.l.b16 %v4006
    %v4399 = vunpack.c.h.b16 %v4006
    %v4400 = vunpack.c.l.b16 %v4007
    %v4401 = vunpack.c.h.b16 %v4007
    %v4402 = vunpack.c.l.b16 %v4008
    %v4403 = vunpack.c.h.b16 %v4008
    %v4404 = vunpack.c.l.b16 %v4009
    %v4405 = vunpack.c.h.b16 %v4009
    %v4406 = vunpack.c.l.b16 %v4010
    %v4407 = vunpack.c.h.b16 %v4010
    %v4408 = vunpack.c.l.b16 %v4011
    %v4409 = vunpack.c.h.b16 %v4011
    %v4410 = vunpack.c.l.b16 %v4012
    %v4411 = vunpack.c.h.b16 %v4012
    %v4412 = vunpack.c.l.b16 %v4013
    %v4413 = vunpack.c.h.b16 %v4013
    %v4414 = vunpack.c.l.b16 %v4014
    %v4415 = vunpack.c.h.b16 %v4014
    %v4416 = vunpack.c.l.b16 %v4015
    %v4417 = vunpack.c.h.b16 %v4015
    %v4418 = vunpack.c.l.b16 %v4016
    %v4419 = vunpack.c.h.b16 %v4016
    %v4420 = vunpack.c.l.b16 %v4017
    %v4421 = vunpack.c.h.b16 %v4017
    %v4422 = vunpack.c.l.b16 %v4018
    %v4423 = vunpack.c.h.b16 %v4018
    %v4424 = vunpack.c.l.b16 %v4019
    %v4425 = vunpack.c.h.b16 %v4019
    %v4426 = vpack.c.b16 %v4174, %v4170
    %v4427 = vpack.c.b16 %v4175, %v4171
    %v4428 = vpack.c.b16 %v4176, %v4172
    %v4429 = vpack.c.b16 %v4177, %v4173
    %v4430 = vpack.c.b16 %v4182, %v4178
    %v4431 = vpack.c.b16 %v4183, %v4179
    %v4432 = vpack.c.b16 %v4184, %v4180
    %v4433 = vpack.c.b16 %v4185, %v4181
    %v4434 = vpack.c.b16 %v4190, %v4186
    %v4435 = vpack.c.b16 %v4191, %v4187
    %v4436 = vpack.c.b16 %v4192, %v4188
    %v4437 = vpack.c.b16 %v4193, %v4189
    %v4438 = vpack.c.b16 %v4198, %v4194
    %v4439 = vpack.c.b16 %v4199, %v4195
    %v4440 = vpack.c.b16 %v4200, %v4196
    %v4441 = vpack.c.b16 %v4201, %v4197
    %v4442 = vpack.c.b16 %v4206, %v4202
    %v4443 = vpack.c.b16 %v4207, %v4203
    %v4444 = vpack.c.b16 %v4208, %v4204
    %v4445 = vpack.c.b16 %v4209, %v4205
    %v4446 = vpack.c.b16 %v4214, %v4210
    %v4447 = vpack.c.b16 %v4215, %v4211
    %v4448 = vpack.c.b16 %v4216, %v4212
    %v4449 = vpack.c.b16 %v4217, %v4213
    %v4450 = vpack.c.b16 %v4222, %v4218
    %v4451 = vpack.c.b16 %v4223, %v4219
    %v4452 = vpack.c.b16 %v4224, %v4220
    %v4453 = vpack.c.b16 %v4225, %v4221
    %v4454 = vpack.c.b16 %v4230, %v4226
    %v4455 = vpack.c.b16 %v4231, %v4227
    %v4456 = vpack.c.b16 %v4232, %v4228
    %v4457 = vpack.c.b16 %v4233, %v4229
    %v4458 = vpack.c.b16 %v4238, %v4234
    %v4459 = vpack.c.b16 %v4239, %v4235
    %v4460 = vpack.c.b16 %v4240, %v4236
    %v4461 = vpack.c.b16 %v4241, %v4237
    %v4462 = vpack.c.b16 %v4246, %v4242
    %v4463 = vpack.c.b16 %v4247, %v4243
    %v4464 = vpack.c.b16 %v4248, %v4244
    %v4465 = vpack.c.b16 %v4249, %v4245
    %v4466 = vpack.c.b16 %v4254, %v4250
    %v4467 = vpack.c.b16 %v4255, %v4251
    %v4468 = vpack.c.b16 %v4256, %v4252
    %v4469 = vpack.c.b16 %v4257, %v4253
    %v4470 = vpack.c.b16 %v4262, %v4258
    %v4471 = vpack.c.b16 %v4263, %v4259
    %v4472 = vpack.c.b16 %v4264, %v4260
    %v4473 = vpack.c.b16 %v4265, %v4261
    %v4474 = vpack.c.b16 %v4270, %v4266
    %v4475 = vpack.c.b16 %v4271, %v4267
    %v4476 = vpack.c.b16 %v4272, %v4268
    %v4477 = vpack.c.b16 %v4273, %v4269
    %v4478 = vpack.c.b16 %v4278, %v4274
    %v4479 = vpack.c.b16 %v4279, %v4275
    %v4480 = vpack.c.b16 %v4280, %v4276
    %v4481 = vpack.c.b16 %v4281, %v4277
    %v4482 = vpack.c.b16 %v4286, %v4282
    %v4483 = vpack.c.b16 %v4287, %v4283
    %v4484 = vpack.c.b16 %v4288, %v4284
    %v4485 = vpack.c.b16 %v4289, %v4285
    %v4486 = vpack.c.b16 %v4294, %v4290
    %v4487 = vpack.c.b16 %v4295, %v4291
    %v4488 = vpack.c.b16 %v4296, %v4292
    %v4489 = vpack.c.b16 %v4297, %v4293
    %v4490 = vpack.c.b16 %v4302, %v4298
    %v4491 = vpack.c.b16 %v4303, %v4299
    %v4492 = vpack.c.b16 %v4304, %v4300
    %v4493 = vpack.c.b16 %v4305, %v4301
    %v4494 = vpack.c.b16 %v4310, %v4306
    %v4495 = vpack.c.b16 %v4311, %v4307
    %v4496 = vpack.c.b16 %v4312, %v4308
    %v4497 = vpack.c.b16 %v4313, %v4309
    %v4498 = vpack.c.b16 %v4318, %v4314
    %v4499 = vpack.c.b16 %v4319, %v4315
    %v4500 = vpack.c.b16 %v4320, %v4316
    %v4501 = vpack.c.b16 %v4321, %v4317
    %v4502 = vpack.c.b16 %v4326, %v4322
    %v4503 = vpack.c.b16 %v4327, %v4323
    %v4504 = vpack.c.b16 %v4328, %v4324
    %v4505 = vpack.c.b16 %v4329, %v4325
    %v4506 = vpack.c.b16 %v4334, %v4330
    %v4507 = vpack.c.b16 %v4335, %v4331
    %v4508 = vpack.c.b16 %v4336, %v4332
    %v4509 = vpack.c.b16 %v4337, %v4333
    %v4510 = vpack.c.b16 %v4342, %v4338
    %v4511 = vpack.c.b16 %v4343, %v4339
    %v4512 = vpack.c.b16 %v4344, %v4340
    %v4513 = vpack.c.b16 %v4345, %v4341
    %v4514 = vpack.c.b16 %v4350, %v4346
    %v4515 = vpack.c.b16 %v4351, %v4347
    %v4516 = vpack.c.b16 %v4352, %v4348
    %v4517 = vpack.c.b16 %v4353, %v4349
    %v4518 = vpack.c.b16 %v4358, %v4354
    %v4519 = vpack.c.b16 %v4359, %v4355
    %v4520 = vpack.c.b16 %v4360, %v4356
    %v4521 = vpack.c.b16 %v4361, %v4357
    %v4522 = vpack.c.b16 %v4366, %v4362
    %v4523 = vpack.c.b16 %v4367, %v4363
    %v4524 = vpack.c.b16 %v4368, %v4364
    %v4525 = vpack.c.b16 %v4369, %v4365
    %v4526 = vpack.c.b16 %v4374, %v4370
    %v4527 = vpack.c.b16 %v4375, %v4371
    %v4528 = vpack.c.b16 %v4376, %v4372
    %v4529 = vpack.c.b16 %v4377, %v4373
    %v4530 = vpack.c.b16 %v4382, %v4378
    %v4531 = vpack.c.b16 %v4383, %v4379
    %v4532 = vpack.c.b16 %v4384, %v4380
    %v4533 = vpack.c.b16 %v4385, %v4381
    %v4534 = vpack.c.b16 %v4390, %v4386
    %v4535 = vpack.c.b16 %v4391, %v4387
    %v4536 = vpack.c.b16 %v4392, %v4388
    %v4537 = vpack.c.b16 %v4393, %v4389
    %v4538 = vpack.c.b16 %v4398, %v4394
    %v4539 = vpack.c.b16 %v4399, %v4395
    %v4540 = vpack.c.b16 %v4400, %v4396
    %v4541 = vpack.c.b16 %v4401, %v4397
    %v4542 = vpack.c.b16 %v4406, %v4402
    %v4543 = vpack.c.b16 %v4407, %v4403
    %v4544 = vpack.c.b16 %v4408, %v4404
    %v4545 = vpack.c.b16 %v4409, %v4405
    %v4546 = vpack.c.b16 %v4414, %v4410
    %v4547 = vpack.c.b16 %v4415, %v4411
    %v4548 = vpack.c.b16 %v4416, %v4412
    %v4549 = vpack.c.b16 %v4417, %v4413
    %v4550 = vpack.c.b16 %v4422, %v4418
    %v4551 = vpack.c.b16 %v4423, %v4419
    %v4552 = vpack.c.b16 %v4424, %v4420
    %v4553 = vpack.c.b16 %v4425, %v4421
    %4682 = vmatprep.subr.bf16.mxu0 %v4427
    %4683 = vmatpush1.bf16.msra.mxu0 %v4426
    %4684 = vmatprep.subr.bf16.mxu0 %v4431
    %4685 = vmatpush1.bf16.msra.mxu0 %v4430
    %4686 = vmatprep.subr.bf16.mxu0 %v4435
    %4687 = vmatpush1.bf16.msra.mxu0 %v4434
    %4688 = vmatprep.subr.bf16.mxu0 %v4439
    %4689 = vmatpush1.bf16.msra.mxu0 %v4438
    %4690 = vmatprep.subr.bf16.mxu0 %v4443
    %4691 = vmatpush1.bf16.msra.mxu0 %v4442
    %4692 = vmatprep.subr.bf16.mxu0 %v4447
    %4693 = vmatpush1.bf16.msra.mxu0 %v4446
    %4694 = vmatprep.subr.bf16.mxu0 %v4451
    %4695 = vmatpush1.bf16.msra.mxu0 %v4450
    %4696 = vmatprep.subr.bf16.mxu0 %v4455
    %4697 = vmatpush1.bf16.msra.mxu0 %v4454
    %4698 = vmatprep.subr.bf16.mxu0 %v4459
    %4699 = vmatpush1.bf16.msra.mxu0 %v4458
    %4700 = vmatprep.subr.bf16.mxu0 %v4463
    %4701 = vmatpush1.bf16.msra.mxu0 %v4462
    %4702 = vmatprep.subr.bf16.mxu0 %v4467
    %4703 = vmatpush1.bf16.msra.mxu0 %v4466
    %4704 = vmatprep.subr.bf16.mxu0 %v4471
    %4705 = vmatpush1.bf16.msra.mxu0 %v4470
    %4706 = vmatprep.subr.bf16.mxu0 %v4475
    %4707 = vmatpush1.bf16.msra.mxu0 %v4474
    %4708 = vmatprep.subr.bf16.mxu0 %v4479
    %4709 = vmatpush1.bf16.msra.mxu0 %v4478
    %4710 = vmatprep.subr.bf16.mxu0 %v4483
    %4711 = vmatpush1.bf16.msra.mxu0 %v4482
    %4712 = vmatprep.subr.bf16.mxu0 %v4487
    %4713 = vmatpush1.bf16.msra.mxu0 %v4486
    %4714 = vmatprep.mubr.bf16.mxu0 %v3889
    %4715 = vmatmul.mubr.bf16.gmra.mrb[0].mxu0 %v3888
    %v4716 = vpop.f32.mrb[0].mxu0
    %v4717 = vadd.f32 %v4025, %v4716
    %v4718 = vpop.f32.mrb[0].mxu0
    %v4719 = vadd.f32 %v4029, %v4718
    %v4720 = vpop.f32.mrb[0].mxu0
    %v4721 = vpop.f32.mrb[0].mxu0
    %4722 = vdwg.mxu0
    %4723 = vmatprep.subr.bf16.mxu0 %v4491
    %4724 = vmatpush1.bf16.msra.mxu0 %v4490
    %4725 = vmatprep.subr.bf16.mxu0 %v4495
    %4726 = vmatpush1.bf16.msra.mxu0 %v4494
    %4727 = vmatprep.subr.bf16.mxu0 %v4499
    %4728 = vmatpush1.bf16.msra.mxu0 %v4498
    %4729 = vmatprep.subr.bf16.mxu0 %v4503
    %4730 = vmatpush1.bf16.msra.mxu0 %v4502
    %4731 = vmatprep.subr.bf16.mxu0 %v4507
    %4732 = vmatpush1.bf16.msra.mxu0 %v4506
    %4733 = vmatprep.subr.bf16.mxu0 %v4511
    %4734 = vmatpush1.bf16.msra.mxu0 %v4510
    %4735 = vmatprep.subr.bf16.mxu0 %v4515
    %4736 = vmatpush1.bf16.msra.mxu0 %v4514
    %4737 = vmatprep.subr.bf16.mxu0 %v4519
    %4738 = vmatpush1.bf16.msra.mxu0 %v4518
    %4739 = vmatprep.subr.bf16.mxu0 %v4523
    %4740 = vmatpush1.bf16.msra.mxu0 %v4522
    %4741 = vmatprep.subr.bf16.mxu0 %v4527
    %4742 = vmatpush1.bf16.msra.mxu0 %v4526
    %4743 = vmatprep.subr.bf16.mxu0 %v4531
    %4744 = vmatpush1.bf16.msra.mxu0 %v4530
    %4745 = vmatprep.subr.bf16.mxu0 %v4535
    %4746 = vmatpush1.bf16.msra.mxu0 %v4534
    %4747 = vmatprep.subr.bf16.mxu0 %v4539
    %4748 = vmatpush1.bf16.msra.mxu0 %v4538
    %4749 = vmatprep.subr.bf16.mxu0 %v4543
    %4750 = vmatpush1.bf16.msra.mxu0 %v4542
    %4751 = vmatprep.subr.bf16.mxu0 %v4547
    %4752 = vmatpush1.bf16.msra.mxu0 %v4546
    %4753 = vmatprep.subr.bf16.mxu0 %v4551
    %4754 = vmatpush1.bf16.msra.mxu0 %v4550
    %4755 = vmatprep.mubr.bf16.mxu0 %v3891
    %4756 = vmatmul.mubr.bf16.gmra.mrb[0].mxu0 %v3890
    %v4757 = vpop.f32.mrb[0].mxu0
    %v4758 = vadd.f32 %v4717, %v4757
    %v4759 = vpop.f32.mrb[0].mxu0
    %v4760 = vadd.f32 %v4719, %v4759
    %v4761 = vpop.f32.mrb[0].mxu0
    %v4762 = vpop.f32.mrb[0].mxu0
    %4763 = vdwg.mxu0
    %4764 = vmatprep.subr.bf16.mxu0 %v4429
    %4765 = vmatpush1.bf16.msra.mxu0 %v4428
    %4766 = vmatprep.subr.bf16.mxu0 %v4433
    %4767 = vmatpush1.bf16.msra.mxu0 %v4432
    %4768 = vmatprep.subr.bf16.mxu0 %v4437
    %4769 = vmatpush1.bf16.msra.mxu0 %v4436
    %4770 = vmatprep.subr.bf16.mxu0 %v4441
    %4771 = vmatpush1.bf16.msra.mxu0 %v4440
    %4772 = vmatprep.subr.bf16.mxu0 %v4445
    %4773 = vmatpush1.bf16.msra.mxu0 %v4444
    %4774 = vmatprep.subr.bf16.mxu0 %v4449
    %4775 = vmatpush1.bf16.msra.mxu0 %v4448
    %4776 = vmatprep.subr.bf16.mxu0 %v4453
    %4777 = vmatpush1.bf16.msra.mxu0 %v4452
    %4778 = vmatprep.subr.bf16.mxu0 %v4457
    %4779 = vmatpush1.bf16.msra.mxu0 %v4456
    %4780 = vmatprep.subr.bf16.mxu0 %v4461
    %4781 = vmatpush1.bf16.msra.mxu0 %v4460
    %4782 = vmatprep.subr.bf16.mxu0 %v4465
    %4783 = vmatpush1.bf16.msra.mxu0 %v4464
    %4784 = vmatprep.subr.bf16.mxu0 %v4469
    %4785 = vmatpush1.bf16.msra.mxu0 %v4468
    %4786 = vmatprep.subr.bf16.mxu0 %v4473
    %4787 = vmatpush1.bf16.msra.mxu0 %v4472
    %4788 = vmatprep.subr.bf16.mxu0 %v4477
    %4789 = vmatpush1.bf16.msra.mxu0 %v4476
    %4790 = vmatprep.subr.bf16.mxu0 %v4481
    %4791 = vmatpush1.bf16.msra.mxu0 %v4480
    %4792 = vmatprep.subr.bf16.mxu0 %v4485
    %4793 = vmatpush1.bf16.msra.mxu0 %v4484
    %4794 = vmatprep.subr.bf16.mxu0 %v4489
    %4795 = vmatpush1.bf16.msra.mxu0 %v4488
    %4796 = vmatprep.mubr.bf16.mxu0 %v3889
    %4797 = vmatmul.mubr.bf16.gmra.mrb[0].mxu0 %v3888
    %v4798 = vpop.f32.mrb[0].mxu0
    %v4799 = vadd.f32 %v4033, %v4798
    %v4800 = vpop.f32.mrb[0].mxu0
    %v4801 = vadd.f32 %v4037, %v4800
    %v4802 = vpop.f32.mrb[0].mxu0
    %v4803 = vpop.f32.mrb[0].mxu0
    %4804 = vdwg.mxu0
    %4805 = vmatprep.subr.bf16.mxu0 %v4493
    %4806 = vmatpush1.bf16.msra.mxu0 %v4492
    %4807 = vmatprep.subr.bf16.mxu0 %v4497
    %4808 = vmatpush1.bf16.msra.mxu0 %v4496
    %4809 = vmatprep.subr.bf16.mxu0 %v4501
    %4810 = vmatpush1.bf16.msra.mxu0 %v4500
    %4811 = vmatprep.subr.bf16.mxu0 %v4505
    %4812 = vmatpush1.bf16.msra.mxu0 %v4504
    %4813 = vmatprep.subr.bf16.mxu0 %v4509
    %4814 = vmatpush1.bf16.msra.mxu0 %v4508
    %4815 = vmatprep.subr.bf16.mxu0 %v4513
    %4816 = vmatpush1.bf16.msra.mxu0 %v4512
    %4817 = vmatprep.subr.bf16.mxu0 %v4517
    %4818 = vmatpush1.bf16.msra.mxu0 %v4516
    %4819 = vmatprep.subr.bf16.mxu0 %v4521
    %4820 = vmatpush1.bf16.msra.mxu0 %v4520
    %4821 = vmatprep.subr.bf16.mxu0 %v4525
    %4822 = vmatpush1.bf16.msra.mxu0 %v4524
    %4823 = vmatprep.subr.bf16.mxu0 %v4529
    %4824 = vmatpush1.bf16.msra.mxu0 %v4528
    %4825 = vmatprep.subr.bf16.mxu0 %v4533
    %4826 = vmatpush1.bf16.msra.mxu0 %v4532
    %4827 = vmatprep.subr.bf16.mxu0 %v4537
    %4828 = vmatpush1.bf16.msra.mxu0 %v4536
    %4829 = vmatprep.subr.bf16.mxu0 %v4541
    %4830 = vmatpush1.bf16.msra.mxu0 %v4540
    %4831 = vmatprep.subr.bf16.mxu0 %v4545
    %4832 = vmatpush1.bf16.msra.mxu0 %v4544
    %4833 = vmatprep.subr.bf16.mxu0 %v4549
    %4834 = vmatpush1.bf16.msra.mxu0 %v4548
    %4835 = vmatprep.subr.bf16.mxu0 %v4553
    %4836 = vmatpush1.bf16.msra.mxu0 %v4552
    %4837 = vmatprep.mubr.bf16.mxu0 %v3891
    %4838 = vmatmul.mubr.bf16.gmra.mrb[0].mxu0 %v3890
    %v4839 = vpop.f32.mrb[0].mxu0
    %v4840 = vadd.f32 %v4799, %v4839
    %v4841 = vpop.f32.mrb[0].mxu0
    %v4842 = vadd.f32 %v4801, %v4841
    %v4843 = vpop.f32.mrb[0].mxu0
    %v4844 = vpop.f32.mrb[0].mxu0
    %4845 = vdwg.mxu0
    %v4846 = vmax.f32 %v4758, 0.0
    %v4847 = vmax.f32 %v4760, 0.0
    %v4848 = vmax.f32 %v4840, 0.0
    %v4849 = vmax.f32 %v4842, 0.0
    %v4850 = vpack.c.bf16 %v4846, %v4846
    %v4851 = vpack.c.bf16 %v4847, %v4847
    %v4852 = vpack.c.bf16 %v4848, %v4848
    %v4853 = vpack.c.bf16 %v4849, %v4849
    %v4854 = vld [vmem:[#allocation11] sm:$0xff]
    %v4855 = vld [vmem:[#allocation11 + $0x8] sm:$0xff]
    %v4856 = vld [vmem:[#allocation11 + $0x10] sm:$0xff]
    %v4857 = vld [vmem:[#allocation11 + $0x18] sm:$0xff]
    %v4858 = vld [vmem:[#allocation11 + $0x20] sm:$0xff]
    %v4859 = vld [vmem:[#allocation11 + $0x28] sm:$0xff]
    %v4860 = vld [vmem:[#allocation11 + $0x30] sm:$0xff]
    %v4861 = vld [vmem:[#allocation11 + $0x38] sm:$0xff]
    %v4862 = vld [vmem:[#allocation11 + $0x40] sm:$0xff]
    %v4863 = vld [vmem:[#allocation11 + $0x48] sm:$0xff]
    %v4864 = vld [vmem:[#allocation11 + $0x50] sm:$0xff]
    %v4865 = vld [vmem:[#allocation11 + $0x58] sm:$0xff]
    %v4866 = vld [vmem:[#allocation11 + $0x60] sm:$0xff]
    %v4867 = vld [vmem:[#allocation11 + $0x68] sm:$0xff]
    %v4868 = vld [vmem:[#allocation11 + $0x70] sm:$0xff]
    %v4869 = vld [vmem:[#allocation11 + $0x78] sm:$0xff]
    %v4870 = vld [vmem:[#allocation11 + $0x80] sm:$0xff]
    %v4871 = vld [vmem:[#allocation11 + $0x88] sm:$0xff]
    %v4872 = vld [vmem:[#allocation11 + $0x90] sm:$0xff]
    %v4873 = vld [vmem:[#allocation11 + $0x98] sm:$0xff]
    %v4874 = vld [vmem:[#allocation11 + $0xa0] sm:$0xff]
    %v4875 = vld [vmem:[#allocation11 + $0xa8] sm:$0xff]
    %v4876 = vld [vmem:[#allocation11 + $0xb0] sm:$0xff]
    %v4877 = vld [vmem:[#allocation11 + $0xb8] sm:$0xff]
    %v4878 = vld [vmem:[#allocation11 + $0xc0] sm:$0xff]
    %v4879 = vld [vmem:[#allocation11 + $0xc8] sm:$0xff]
    %v4880 = vld [vmem:[#allocation11 + $0xd0] sm:$0xff]
    %v4881 = vld [vmem:[#allocation11 + $0xd8] sm:$0xff]
    %v4882 = vld [vmem:[#allocation11 + $0xe0] sm:$0xff]
    %v4883 = vld [vmem:[#allocation11 + $0xe8] sm:$0xff]
    %v4884 = vld [vmem:[#allocation11 + $0xf0] sm:$0xff]
    %v4885 = vld [vmem:[#allocation11 + $0xf8] sm:$0xff]
    %v4886 = vld [vmem:[#allocation11 + $0x100] sm:$0xff]
    %v4887 = vld [vmem:[#allocation11 + $0x108] sm:$0xff]
    %v4888 = vld [vmem:[#allocation11 + $0x110] sm:$0xff]
    %v4889 = vld [vmem:[#allocation11 + $0x118] sm:$0xff]
    %v4890 = vld [vmem:[#allocation11 + $0x120] sm:$0xff]
    %v4891 = vld [vmem:[#allocation11 + $0x128] sm:$0xff]
    %v4892 = vld [vmem:[#allocation11 + $0x130] sm:$0xff]
    %v4893 = vld [vmem:[#allocation11 + $0x138] sm:$0xff]
    %v4894 = vld [vmem:[#allocation11 + $0x140] sm:$0xff]
    %v4895 = vld [vmem:[#allocation11 + $0x148] sm:$0xff]
    %v4896 = vld [vmem:[#allocation11 + $0x150] sm:$0xff]
    %v4897 = vld [vmem:[#allocation11 + $0x158] sm:$0xff]
    %v4898 = vld [vmem:[#allocation11 + $0x160] sm:$0xff]
    %v4899 = vld [vmem:[#allocation11 + $0x168] sm:$0xff]
    %v4900 = vld [vmem:[#allocation11 + $0x170] sm:$0xff]
    %v4901 = vld [vmem:[#allocation11 + $0x178] sm:$0xff]
    %v4902 = vld [vmem:[#allocation11 + $0x180] sm:$0xff]
    %v4903 = vld [vmem:[#allocation11 + $0x188] sm:$0xff]
    %v4904 = vld [vmem:[#allocation11 + $0x190] sm:$0xff]
    %v4905 = vld [vmem:[#allocation11 + $0x198] sm:$0xff]
    %v4906 = vld [vmem:[#allocation11 + $0x1a0] sm:$0xff]
    %v4907 = vld [vmem:[#allocation11 + $0x1a8] sm:$0xff]
    %v4908 = vld [vmem:[#allocation11 + $0x1b0] sm:$0xff]
    %v4909 = vld [vmem:[#allocation11 + $0x1b8] sm:$0xff]
    %v4910 = vld [vmem:[#allocation11 + $0x1c0] sm:$0xff]
    %v4911 = vld [vmem:[#allocation11 + $0x1c8] sm:$0xff]
    %v4912 = vld [vmem:[#allocation11 + $0x1d0] sm:$0xff]
    %v4913 = vld [vmem:[#allocation11 + $0x1d8] sm:$0xff]
    %v4914 = vld [vmem:[#allocation11 + $0x1e0] sm:$0xff]
    %v4915 = vld [vmem:[#allocation11 + $0x1e8] sm:$0xff]
    %v4916 = vld [vmem:[#allocation11 + $0x1f0] sm:$0xff]
    %v4917 = vld [vmem:[#allocation11 + $0x1f8] sm:$0xff]
    %v4918 = vld [vmem:[#allocation11 + $0x200] sm:$0xff]
    %v4919 = vld [vmem:[#allocation11 + $0x208] sm:$0xff]
    %v4920 = vld [vmem:[#allocation11 + $0x210] sm:$0xff]
    %v4921 = vld [vmem:[#allocation11 + $0x218] sm:$0xff]
    %v4922 = vld [vmem:[#allocation11 + $0x220] sm:$0xff]
    %v4923 = vld [vmem:[#allocation11 + $0x228] sm:$0xff]
    %v4924 = vld [vmem:[#allocation11 + $0x230] sm:$0xff]
    %v4925 = vld [vmem:[#allocation11 + $0x238] sm:$0xff]
    %v4926 = vld [vmem:[#allocation11 + $0x240] sm:$0xff]
    %v4927 = vld [vmem:[#allocation11 + $0x248] sm:$0xff]
    %v4928 = vld [vmem:[#allocation11 + $0x250] sm:$0xff]
    %v4929 = vld [vmem:[#allocation11 + $0x258] sm:$0xff]
    %v4930 = vld [vmem:[#allocation11 + $0x260] sm:$0xff]
    %v4931 = vld [vmem:[#allocation11 + $0x268] sm:$0xff]
    %v4932 = vld [vmem:[#allocation11 + $0x270] sm:$0xff]
    %v4933 = vld [vmem:[#allocation11 + $0x278] sm:$0xff]
    %v4934 = vld [vmem:[#allocation11 + $0x280] sm:$0xff]
    %v4935 = vld [vmem:[#allocation11 + $0x288] sm:$0xff]
    %v4936 = vld [vmem:[#allocation11 + $0x290] sm:$0xff]
    %v4937 = vld [vmem:[#allocation11 + $0x298] sm:$0xff]
    %v4938 = vld [vmem:[#allocation11 + $0x2a0] sm:$0xff]
    %v4939 = vld [vmem:[#allocation11 + $0x2a8] sm:$0xff]
    %v4940 = vld [vmem:[#allocation11 + $0x2b0] sm:$0xff]
    %v4941 = vld [vmem:[#allocation11 + $0x2b8] sm:$0xff]
    %v4942 = vld [vmem:[#allocation11 + $0x2c0] sm:$0xff]
    %v4943 = vld [vmem:[#allocation11 + $0x2c8] sm:$0xff]
    %v4944 = vld [vmem:[#allocation11 + $0x2d0] sm:$0xff]
    %v4945 = vld [vmem:[#allocation11 + $0x2d8] sm:$0xff]
    %v4946 = vld [vmem:[#allocation11 + $0x2e0] sm:$0xff]
    %v4947 = vld [vmem:[#allocation11 + $0x2e8] sm:$0xff]
    %v4948 = vld [vmem:[#allocation11 + $0x2f0] sm:$0xff]
    %v4949 = vld [vmem:[#allocation11 + $0x2f8] sm:$0xff]
    %v4950 = vld [vmem:[#allocation11 + $0x300] sm:$0xff]
    %v4951 = vld [vmem:[#allocation11 + $0x308] sm:$0xff]
    %v4952 = vld [vmem:[#allocation11 + $0x310] sm:$0xff]
    %v4953 = vld [vmem:[#allocation11 + $0x318] sm:$0xff]
    %v4954 = vld [vmem:[#allocation11 + $0x320] sm:$0xff]
    %v4955 = vld [vmem:[#allocation11 + $0x328] sm:$0xff]
    %v4956 = vld [vmem:[#allocation11 + $0x330] sm:$0xff]
    %v4957 = vld [vmem:[#allocation11 + $0x338] sm:$0xff]
    %v4958 = vld [vmem:[#allocation11 + $0x340] sm:$0xff]
    %v4959 = vld [vmem:[#allocation11 + $0x348] sm:$0xff]
    %v4960 = vld [vmem:[#allocation11 + $0x350] sm:$0xff]
    %v4961 = vld [vmem:[#allocation11 + $0x358] sm:$0xff]
    %v4962 = vld [vmem:[#allocation11 + $0x360] sm:$0xff]
    %v4963 = vld [vmem:[#allocation11 + $0x368] sm:$0xff]
    %v4964 = vld [vmem:[#allocation11 + $0x370] sm:$0xff]
    %v4965 = vld [vmem:[#allocation11 + $0x378] sm:$0xff]
    %v4966 = vld [vmem:[#allocation11 + $0x380] sm:$0xff]
    %v4967 = vld [vmem:[#allocation11 + $0x388] sm:$0xff]
    %v4968 = vld [vmem:[#allocation11 + $0x390] sm:$0xff]
    %v4969 = vld [vmem:[#allocation11 + $0x398] sm:$0xff]
    %v4970 = vld [vmem:[#allocation11 + $0x3a0] sm:$0xff]
    %v4971 = vld [vmem:[#allocation11 + $0x3a8] sm:$0xff]
    %v4972 = vld [vmem:[#allocation11 + $0x3b0] sm:$0xff]
    %v4973 = vld [vmem:[#allocation11 + $0x3b8] sm:$0xff]
    %v4974 = vld [vmem:[#allocation11 + $0x3c0] sm:$0xff]
    %v4975 = vld [vmem:[#allocation11 + $0x3c8] sm:$0xff]
    %v4976 = vld [vmem:[#allocation11 + $0x3d0] sm:$0xff]
    %v4977 = vld [vmem:[#allocation11 + $0x3d8] sm:$0xff]
    %v4978 = vld [vmem:[#allocation11 + $0x3e0] sm:$0xff]
    %v4979 = vld [vmem:[#allocation11 + $0x3e8] sm:$0xff]
    %v4980 = vld [vmem:[#allocation11 + $0x3f0] sm:$0xff]
    %v4981 = vld [vmem:[#allocation11 + $0x3f8] sm:$0xff]
    %v4982 = vld [vmem:[%s10] sm:$0xf]
    %v4984 = vlaneseq
    %v4985 = vshrl.u32 %v4984, 7
    %v4986 = vsub.s32 0, %v4985
    %v4987 = vrot.slane %v4982, %v4986
    %v4988 = vlaneseq
    %v4989 = vshrl.u32 %v4988, 7
    %v4990 = vsub.s32 1, %v4989
    %v4991 = vrot.slane %v4982, %v4990
    %v4992 = vlaneseq
    %v4993 = vshrl.u32 %v4992, 7
    %v4994 = vsub.s32 2, %v4993
    %v4995 = vrot.slane %v4982, %v4994
    %v4996 = vlaneseq
    %v4997 = vshrl.u32 %v4996, 7
    %v4998 = vsub.s32 3, %v4997
    %v4999 = vrot.slane %v4982, %v4998
    %v5132 = vunpack.c.l.b16 %v4854
    %v5133 = vunpack.c.h.b16 %v4854
    %v5134 = vunpack.c.l.b16 %v4855
    %v5135 = vunpack.c.h.b16 %v4855
    %v5136 = vunpack.c.l.b16 %v4856
    %v5137 = vunpack.c.h.b16 %v4856
    %v5138 = vunpack.c.l.b16 %v4857
    %v5139 = vunpack.c.h.b16 %v4857
    %v5140 = vunpack.c.l.b16 %v4858
    %v5141 = vunpack.c.h.b16 %v4858
    %v5142 = vunpack.c.l.b16 %v4859
    %v5143 = vunpack.c.h.b16 %v4859
    %v5144 = vunpack.c.l.b16 %v4860
    %v5145 = vunpack.c.h.b16 %v4860
    %v5146 = vunpack.c.l.b16 %v4861
    %v5147 = vunpack.c.h.b16 %v4861
    %v5148 = vunpack.c.l.b16 %v4862
    %v5149 = vunpack.c.h.b16 %v4862
    %v5150 = vunpack.c.l.b16 %v4863
    %v5151 = vunpack.c.h.b16 %v4863
    %v5152 = vunpack.c.l.b16 %v4864
    %v5153 = vunpack.c.h.b16 %v4864
    %v5154 = vunpack.c.l.b16 %v4865
    %v5155 = vunpack.c.h.b16 %v4865
    %v5156 = vunpack.c.l.b16 %v4866
    %v5157 = vunpack.c.h.b16 %v4866
    %v5158 = vunpack.c.l.b16 %v4867
    %v5159 = vunpack.c.h.b16 %v4867
    %v5160 = vunpack.c.l.b16 %v4868
    %v5161 = vunpack.c.h.b16 %v4868
    %v5162 = vunpack.c.l.b16 %v4869
    %v5163 = vunpack.c.h.b16 %v4869
    %v5164 = vunpack.c.l.b16 %v4870
    %v5165 = vunpack.c.h.b16 %v4870
    %v5166 = vunpack.c.l.b16 %v4871
    %v5167 = vunpack.c.h.b16 %v4871
    %v5168 = vunpack.c.l.b16 %v4872
    %v5169 = vunpack.c.h.b16 %v4872
    %v5170 = vunpack.c.l.b16 %v4873
    %v5171 = vunpack.c.h.b16 %v4873
    %v5172 = vunpack.c.l.b16 %v4874
    %v5173 = vunpack.c.h.b16 %v4874
    %v5174 = vunpack.c.l.b16 %v4875
    %v5175 = vunpack.c.h.b16 %v4875
    %v5176 = vunpack.c.l.b16 %v4876
    %v5177 = vunpack.c.h.b16 %v4876
    %v5178 = vunpack.c.l.b16 %v4877
    %v5179 = vunpack.c.h.b16 %v4877
    %v5180 = vunpack.c.l.b16 %v4878
    %v5181 = vunpack.c.h.b16 %v4878
    %v5182 = vunpack.c.l.b16 %v4879
    %v5183 = vunpack.c.h.b16 %v4879
    %v5184 = vunpack.c.l.b16 %v4880
    %v5185 = vunpack.c.h.b16 %v4880
    %v5186 = vunpack.c.l.b16 %v4881
    %v5187 = vunpack.c.h.b16 %v4881
    %v5188 = vunpack.c.l.b16 %v4882
    %v5189 = vunpack.c.h.b16 %v4882
    %v5190 = vunpack.c.l.b16 %v4883
    %v5191 = vunpack.c.h.b16 %v4883
    %v5192 = vunpack.c.l.b16 %v4884
    %v5193 = vunpack.c.h.b16 %v4884
    %v5194 = vunpack.c.l.b16 %v4885
    %v5195 = vunpack.c.h.b16 %v4885
    %v5196 = vunpack.c.l.b16 %v4886
    %v5197 = vunpack.c.h.b16 %v4886
    %v5198 = vunpack.c.l.b16 %v4887
    %v5199 = vunpack.c.h.b16 %v4887
    %v5200 = vunpack.c.l.b16 %v4888
    %v5201 = vunpack.c.h.b16 %v4888
    %v5202 = vunpack.c.l.b16 %v4889
    %v5203 = vunpack.c.h.b16 %v4889
    %v5204 = vunpack.c.l.b16 %v4890
    %v5205 = vunpack.c.h.b16 %v4890
    %v5206 = vunpack.c.l.b16 %v4891
    %v5207 = vunpack.c.h.b16 %v4891
    %v5208 = vunpack.c.l.b16 %v4892
    %v5209 = vunpack.c.h.b16 %v4892
    %v5210 = vunpack.c.l.b16 %v4893
    %v5211 = vunpack.c.h.b16 %v4893
    %v5212 = vunpack.c.l.b16 %v4894
    %v5213 = vunpack.c.h.b16 %v4894
    %v5214 = vunpack.c.l.b16 %v4895
    %v5215 = vunpack.c.h.b16 %v4895
    %v5216 = vunpack.c.l.b16 %v4896
    %v5217 = vunpack.c.h.b16 %v4896
    %v5218 = vunpack.c.l.b16 %v4897
    %v5219 = vunpack.c.h.b16 %v4897
    %v5220 = vunpack.c.l.b16 %v4898
    %v5221 = vunpack.c.h.b16 %v4898
    %v5222 = vunpack.c.l.b16 %v4899
    %v5223 = vunpack.c.h.b16 %v4899
    %v5224 = vunpack.c.l.b16 %v4900
    %v5225 = vunpack.c.h.b16 %v4900
    %v5226 = vunpack.c.l.b16 %v4901
    %v5227 = vunpack.c.h.b16 %v4901
    %v5228 = vunpack.c.l.b16 %v4902
    %v5229 = vunpack.c.h.b16 %v4902
    %v5230 = vunpack.c.l.b16 %v4903
    %v5231 = vunpack.c.h.b16 %v4903
    %v5232 = vunpack.c.l.b16 %v4904
    %v5233 = vunpack.c.h.b16 %v4904
    %v5234 = vunpack.c.l.b16 %v4905
    %v5235 = vunpack.c.h.b16 %v4905
    %v5236 = vunpack.c.l.b16 %v4906
    %v5237 = vunpack.c.h.b16 %v4906
    %v5238 = vunpack.c.l.b16 %v4907
    %v5239 = vunpack.c.h.b16 %v4907
    %v5240 = vunpack.c.l.b16 %v4908
    %v5241 = vunpack.c.h.b16 %v4908
    %v5242 = vunpack.c.l.b16 %v4909
    %v5243 = vunpack.c.h.b16 %v4909
    %v5244 = vunpack.c.l.b16 %v4910
    %v5245 = vunpack.c.h.b16 %v4910
    %v5246 = vunpack.c.l.b16 %v4911
    %v5247 = vunpack.c.h.b16 %v4911
    %v5248 = vunpack.c.l.b16 %v4912
    %v5249 = vunpack.c.h.b16 %v4912
    %v5250 = vunpack.c.l.b16 %v4913
    %v5251 = vunpack.c.h.b16 %v4913
    %v5252 = vunpack.c.l.b16 %v4914
    %v5253 = vunpack.c.h.b16 %v4914
    %v5254 = vunpack.c.l.b16 %v4915
    %v5255 = vunpack.c.h.b16 %v4915
    %v5256 = vunpack.c.l.b16 %v4916
    %v5257 = vunpack.c.h.b16 %v4916
    %v5258 = vunpack.c.l.b16 %v4917
    %v5259 = vunpack.c.h.b16 %v4917
    %v5260 = vunpack.c.l.b16 %v4918
    %v5261 = vunpack.c.h.b16 %v4918
    %v5262 = vunpack.c.l.b16 %v4919
    %v5263 = vunpack.c.h.b16 %v4919
    %v5264 = vunpack.c.l.b16 %v4920
    %v5265 = vunpack.c.h.b16 %v4920
    %v5266 = vunpack.c.l.b16 %v4921
    %v5267 = vunpack.c.h.b16 %v4921
    %v5268 = vunpack.c.l.b16 %v4922
    %v5269 = vunpack.c.h.b16 %v4922
    %v5270 = vunpack.c.l.b16 %v4923
    %v5271 = vunpack.c.h.b16 %v4923
    %v5272 = vunpack.c.l.b16 %v4924
    %v5273 = vunpack.c.h.b16 %v4924
    %v5274 = vunpack.c.l.b16 %v4925
    %v5275 = vunpack.c.h.b16 %v4925
    %v5276 = vunpack.c.l.b16 %v4926
    %v5277 = vunpack.c.h.b16 %v4926
    %v5278 = vunpack.c.l.b16 %v4927
    %v5279 = vunpack.c.h.b16 %v4927
    %v5280 = vunpack.c.l.b16 %v4928
    %v5281 = vunpack.c.h.b16 %v4928
    %v5282 = vunpack.c.l.b16 %v4929
    %v5283 = vunpack.c.h.b16 %v4929
    %v5284 = vunpack.c.l.b16 %v4930
    %v5285 = vunpack.c.h.b16 %v4930
    %v5286 = vunpack.c.l.b16 %v4931
    %v5287 = vunpack.c.h.b16 %v4931
    %v5288 = vunpack.c.l.b16 %v4932
    %v5289 = vunpack.c.h.b16 %v4932
    %v5290 = vunpack.c.l.b16 %v4933
    %v5291 = vunpack.c.h.b16 %v4933
    %v5292 = vunpack.c.l.b16 %v4934
    %v5293 = vunpack.c.h.b16 %v4934
    %v5294 = vunpack.c.l.b16 %v4935
    %v5295 = vunpack.c.h.b16 %v4935
    %v5296 = vunpack.c.l.b16 %v4936
    %v5297 = vunpack.c.h.b16 %v4936
    %v5298 = vunpack.c.l.b16 %v4937
    %v5299 = vunpack.c.h.b16 %v4937
    %v5300 = vunpack.c.l.b16 %v4938
    %v5301 = vunpack.c.h.b16 %v4938
    %v5302 = vunpack.c.l.b16 %v4939
    %v5303 = vunpack.c.h.b16 %v4939
    %v5304 = vunpack.c.l.b16 %v4940
    %v5305 = vunpack.c.h.b16 %v4940
    %v5306 = vunpack.c.l.b16 %v4941
    %v5307 = vunpack.c.h.b16 %v4941
    %v5308 = vunpack.c.l.b16 %v4942
    %v5309 = vunpack.c.h.b16 %v4942
    %v5310 = vunpack.c.l.b16 %v4943
    %v5311 = vunpack.c.h.b16 %v4943
    %v5312 = vunpack.c.l.b16 %v4944
    %v5313 = vunpack.c.h.b16 %v4944
    %v5314 = vunpack.c.l.b16 %v4945
    %v5315 = vunpack.c.h.b16 %v4945
    %v5316 = vunpack.c.l.b16 %v4946
    %v5317 = vunpack.c.h.b16 %v4946
    %v5318 = vunpack.c.l.b16 %v4947
    %v5319 = vunpack.c.h.b16 %v4947
    %v5320 = vunpack.c.l.b16 %v4948
    %v5321 = vunpack.c.h.b16 %v4948
    %v5322 = vunpack.c.l.b16 %v4949
    %v5323 = vunpack.c.h.b16 %v4949
    %v5324 = vunpack.c.l.b16 %v4950
    %v5325 = vunpack.c.h.b16 %v4950
    %v5326 = vunpack.c.l.b16 %v4951
    %v5327 = vunpack.c.h.b16 %v4951
    %v5328 = vunpack.c.l.b16 %v4952
    %v5329 = vunpack.c.h.b16 %v4952
    %v5330 = vunpack.c.l.b16 %v4953
    %v5331 = vunpack.c.h.b16 %v4953
    %v5332 = vunpack.c.l.b16 %v4954
    %v5333 = vunpack.c.h.b16 %v4954
    %v5334 = vunpack.c.l.b16 %v4955
    %v5335 = vunpack.c.h.b16 %v4955
    %v5336 = vunpack.c.l.b16 %v4956
    %v5337 = vunpack.c.h.b16 %v4956
    %v5338 = vunpack.c.l.b16 %v4957
    %v5339 = vunpack.c.h.b16 %v4957
    %v5340 = vunpack.c.l.b16 %v4958
    %v5341 = vunpack.c.h.b16 %v4958
    %v5342 = vunpack.c.l.b16 %v4959
    %v5343 = vunpack.c.h.b16 %v4959
    %v5344 = vunpack.c.l.b16 %v4960
    %v5345 = vunpack.c.h.b16 %v4960
    %v5346 = vunpack.c.l.b16 %v4961
    %v5347 = vunpack.c.h.b16 %v4961
    %v5348 = vunpack.c.l.b16 %v4962
    %v5349 = vunpack.c.h.b16 %v4962
    %v5350 = vunpack.c.l.b16 %v4963
    %v5351 = vunpack.c.h.b16 %v4963
    %v5352 = vunpack.c.l.b16 %v4964
    %v5353 = vunpack.c.h.b16 %v4964
    %v5354 = vunpack.c.l.b16 %v4965
    %v5355 = vunpack.c.h.b16 %v4965
    %v5356 = vunpack.c.l.b16 %v4966
    %v5357 = vunpack.c.h.b16 %v4966
    %v5358 = vunpack.c.l.b16 %v4967
    %v5359 = vunpack.c.h.b16 %v4967
    %v5360 = vunpack.c.l.b16 %v4968
    %v5361 = vunpack.c.h.b16 %v4968
    %v5362 = vunpack.c.l.b16 %v4969
    %v5363 = vunpack.c.h.b16 %v4969
    %v5364 = vunpack.c.l.b16 %v4970
    %v5365 = vunpack.c.h.b16 %v4970
    %v5366 = vunpack.c.l.b16 %v4971
    %v5367 = vunpack.c.h.b16 %v4971
    %v5368 = vunpack.c.l.b16 %v4972
    %v5369 = vunpack.c.h.b16 %v4972
    %v5370 = vunpack.c.l.b16 %v4973
    %v5371 = vunpack.c.h.b16 %v4973
    %v5372 = vunpack.c.l.b16 %v4974
    %v5373 = vunpack.c.h.b16 %v4974
    %v5374 = vunpack.c.l.b16 %v4975
    %v5375 = vunpack.c.h.b16 %v4975
    %v5376 = vunpack.c.l.b16 %v4976
    %v5377 = vunpack.c.h.b16 %v4976
    %v5378 = vunpack.c.l.b16 %v4977
    %v5379 = vunpack.c.h.b16 %v4977
    %v5380 = vunpack.c.l.b16 %v4978
    %v5381 = vunpack.c.h.b16 %v4978
    %v5382 = vunpack.c.l.b16 %v4979
    %v5383 = vunpack.c.h.b16 %v4979
    %v5384 = vunpack.c.l.b16 %v4980
    %v5385 = vunpack.c.h.b16 %v4980
    %v5386 = vunpack.c.l.b16 %v4981
    %v5387 = vunpack.c.h.b16 %v4981
    %v5388 = vpack.c.b16 %v5136, %v5132
    %v5389 = vpack.c.b16 %v5137, %v5133
    %v5390 = vpack.c.b16 %v5138, %v5134
    %v5391 = vpack.c.b16 %v5139, %v5135
    %v5392 = vpack.c.b16 %v5144, %v5140
    %v5393 = vpack.c.b16 %v5145, %v5141
    %v5394 = vpack.c.b16 %v5146, %v5142
    %v5395 = vpack.c.b16 %v5147, %v5143
    %v5396 = vpack.c.b16 %v5152, %v5148
    %v5397 = vpack.c.b16 %v5153, %v5149
    %v5398 = vpack.c.b16 %v5154, %v5150
    %v5399 = vpack.c.b16 %v5155, %v5151
    %v5400 = vpack.c.b16 %v5160, %v5156
    %v5401 = vpack.c.b16 %v5161, %v5157
    %v5402 = vpack.c.b16 %v5162, %v5158
    %v5403 = vpack.c.b16 %v5163, %v5159
    %v5404 = vpack.c.b16 %v5168, %v5164
    %v5405 = vpack.c.b16 %v5169, %v5165
    %v5406 = vpack.c.b16 %v5170, %v5166
    %v5407 = vpack.c.b16 %v5171, %v5167
    %v5408 = vpack.c.b16 %v5176, %v5172
    %v5409 = vpack.c.b16 %v5177, %v5173
    %v5410 = vpack.c.b16 %v5178, %v5174
    %v5411 = vpack.c.b16 %v5179, %v5175
    %v5412 = vpack.c.b16 %v5184, %v5180
    %v5413 = vpack.c.b16 %v5185, %v5181
    %v5414 = vpack.c.b16 %v5186, %v5182
    %v5415 = vpack.c.b16 %v5187, %v5183
    %v5416 = vpack.c.b16 %v5192, %v5188
    %v5417 = vpack.c.b16 %v5193, %v5189
    %v5418 = vpack.c.b16 %v5194, %v5190
    %v5419 = vpack.c.b16 %v5195, %v5191
    %v5420 = vpack.c.b16 %v5200, %v5196
    %v5421 = vpack.c.b16 %v5201, %v5197
    %v5422 = vpack.c.b16 %v5202, %v5198
    %v5423 = vpack.c.b16 %v5203, %v5199
    %v5424 = vpack.c.b16 %v5208, %v5204
    %v5425 = vpack.c.b16 %v5209, %v5205
    %v5426 = vpack.c.b16 %v5210, %v5206
    %v5427 = vpack.c.b16 %v5211, %v5207
    %v5428 = vpack.c.b16 %v5216, %v5212
    %v5429 = vpack.c.b16 %v5217, %v5213
    %v5430 = vpack.c.b16 %v5218, %v5214
    %v5431 = vpack.c.b16 %v5219, %v5215
    %v5432 = vpack.c.b16 %v5224, %v5220
    %v5433 = vpack.c.b16 %v5225, %v5221
    %v5434 = vpack.c.b16 %v5226, %v5222
    %v5435 = vpack.c.b16 %v5227, %v5223
    %v5436 = vpack.c.b16 %v5232, %v5228
    %v5437 = vpack.c.b16 %v5233, %v5229
    %v5438 = vpack.c.b16 %v5234, %v5230
    %v5439 = vpack.c.b16 %v5235, %v5231
    %v5440 = vpack.c.b16 %v5240, %v5236
    %v5441 = vpack.c.b16 %v5241, %v5237
    %v5442 = vpack.c.b16 %v5242, %v5238
    %v5443 = vpack.c.b16 %v5243, %v5239
    %v5444 = vpack.c.b16 %v5248, %v5244
    %v5445 = vpack.c.b16 %v5249, %v5245
    %v5446 = vpack.c.b16 %v5250, %v5246
    %v5447 = vpack.c.b16 %v5251, %v5247
    %v5448 = vpack.c.b16 %v5256, %v5252
    %v5449 = vpack.c.b16 %v5257, %v5253
    %v5450 = vpack.c.b16 %v5258, %v5254
    %v5451 = vpack.c.b16 %v5259, %v5255
    %v5452 = vpack.c.b16 %v5264, %v5260
    %v5453 = vpack.c.b16 %v5265, %v5261
    %v5454 = vpack.c.b16 %v5266, %v5262
    %v5455 = vpack.c.b16 %v5267, %v5263
    %v5456 = vpack.c.b16 %v5272, %v5268
    %v5457 = vpack.c.b16 %v5273, %v5269
    %v5458 = vpack.c.b16 %v5274, %v5270
    %v5459 = vpack.c.b16 %v5275, %v5271
    %v5460 = vpack.c.b16 %v5280, %v5276
    %v5461 = vpack.c.b16 %v5281, %v5277
    %v5462 = vpack.c.b16 %v5282, %v5278
    %v5463 = vpack.c.b16 %v5283, %v5279
    %v5464 = vpack.c.b16 %v5288, %v5284
    %v5465 = vpack.c.b16 %v5289, %v5285
    %v5466 = vpack.c.b16 %v5290, %v5286
    %v5467 = vpack.c.b16 %v5291, %v5287
    %v5468 = vpack.c.b16 %v5296, %v5292
    %v5469 = vpack.c.b16 %v5297, %v5293
    %v5470 = vpack.c.b16 %v5298, %v5294
    %v5471 = vpack.c.b16 %v5299, %v5295
    %v5472 = vpack.c.b16 %v5304, %v5300
    %v5473 = vpack.c.b16 %v5305, %v5301
    %v5474 = vpack.c.b16 %v5306, %v5302
    %v5475 = vpack.c.b16 %v5307, %v5303
    %v5476 = vpack.c.b16 %v5312, %v5308
    %v5477 = vpack.c.b16 %v5313, %v5309
    %v5478 = vpack.c.b16 %v5314, %v5310
    %v5479 = vpack.c.b16 %v5315, %v5311
    %v5480 = vpack.c.b16 %v5320, %v5316
    %v5481 = vpack.c.b16 %v5321, %v5317
    %v5482 = vpack.c.b16 %v5322, %v5318
    %v5483 = vpack.c.b16 %v5323, %v5319
    %v5484 = vpack.c.b16 %v5328, %v5324
    %v5485 = vpack.c.b16 %v5329, %v5325
    %v5486 = vpack.c.b16 %v5330, %v5326
    %v5487 = vpack.c.b16 %v5331, %v5327
    %v5488 = vpack.c.b16 %v5336, %v5332
    %v5489 = vpack.c.b16 %v5337, %v5333
    %v5490 = vpack.c.b16 %v5338, %v5334
    %v5491 = vpack.c.b16 %v5339, %v5335
    %v5492 = vpack.c.b16 %v5344, %v5340
    %v5493 = vpack.c.b16 %v5345, %v5341
    %v5494 = vpack.c.b16 %v5346, %v5342
    %v5495 = vpack.c.b16 %v5347, %v5343
    %v5496 = vpack.c.b16 %v5352, %v5348
    %v5497 = vpack.c.b16 %v5353, %v5349
    %v5498 = vpack.c.b16 %v5354, %v5350
    %v5499 = vpack.c.b16 %v5355, %v5351
    %v5500 = vpack.c.b16 %v5360, %v5356
    %v5501 = vpack.c.b16 %v5361, %v5357
    %v5502 = vpack.c.b16 %v5362, %v5358
    %v5503 = vpack.c.b16 %v5363, %v5359
    %v5504 = vpack.c.b16 %v5368, %v5364
    %v5505 = vpack.c.b16 %v5369, %v5365
    %v5506 = vpack.c.b16 %v5370, %v5366
    %v5507 = vpack.c.b16 %v5371, %v5367
    %v5508 = vpack.c.b16 %v5376, %v5372
    %v5509 = vpack.c.b16 %v5377, %v5373
    %v5510 = vpack.c.b16 %v5378, %v5374
    %v5511 = vpack.c.b16 %v5379, %v5375
    %v5512 = vpack.c.b16 %v5384, %v5380
    %v5513 = vpack.c.b16 %v5385, %v5381
    %v5514 = vpack.c.b16 %v5386, %v5382
    %v5515 = vpack.c.b16 %v5387, %v5383
    %5644 = vmatprep.subr.bf16.mxu0 %v5389
    %5645 = vmatpush1.bf16.msra.mxu0 %v5388
    %5646 = vmatprep.subr.bf16.mxu0 %v5393
    %5647 = vmatpush1.bf16.msra.mxu0 %v5392
    %5648 = vmatprep.subr.bf16.mxu0 %v5397
    %5649 = vmatpush1.bf16.msra.mxu0 %v5396
    %5650 = vmatprep.subr.bf16.mxu0 %v5401
    %5651 = vmatpush1.bf16.msra.mxu0 %v5400
    %5652 = vmatprep.subr.bf16.mxu0 %v5405
    %5653 = vmatpush1.bf16.msra.mxu0 %v5404
    %5654 = vmatprep.subr.bf16.mxu0 %v5409
    %5655 = vmatpush1.bf16.msra.mxu0 %v5408
    %5656 = vmatprep.subr.bf16.mxu0 %v5413
    %5657 = vmatpush1.bf16.msra.mxu0 %v5412
    %5658 = vmatprep.subr.bf16.mxu0 %v5417
    %5659 = vmatpush1.bf16.msra.mxu0 %v5416
    %5660 = vmatprep.subr.bf16.mxu0 %v5421
    %5661 = vmatpush1.bf16.msra.mxu0 %v5420
    %5662 = vmatprep.subr.bf16.mxu0 %v5425
    %5663 = vmatpush1.bf16.msra.mxu0 %v5424
    %5664 = vmatprep.subr.bf16.mxu0 %v5429
    %5665 = vmatpush1.bf16.msra.mxu0 %v5428
    %5666 = vmatprep.subr.bf16.mxu0 %v5433
    %5667 = vmatpush1.bf16.msra.mxu0 %v5432
    %5668 = vmatprep.subr.bf16.mxu0 %v5437
    %5669 = vmatpush1.bf16.msra.mxu0 %v5436
    %5670 = vmatprep.subr.bf16.mxu0 %v5441
    %5671 = vmatpush1.bf16.msra.mxu0 %v5440
    %5672 = vmatprep.subr.bf16.mxu0 %v5445
    %5673 = vmatpush1.bf16.msra.mxu0 %v5444
    %5674 = vmatprep.subr.bf16.mxu0 %v5449
    %5675 = vmatpush1.bf16.msra.mxu0 %v5448
    %5676 = vmatprep.mubr.bf16.mxu0 %v4851
    %5677 = vmatmul.mubr.bf16.gmra.mrb[0].mxu0 %v4850
    %v5678 = vpop.f32.mrb[0].mxu0
    %v5679 = vadd.f32 %v4987, %v5678
    %v5680 = vpop.f32.mrb[0].mxu0
    %v5681 = vadd.f32 %v4991, %v5680
    %v5682 = vpop.f32.mrb[0].mxu0
    %v5683 = vpop.f32.mrb[0].mxu0
    %5684 = vdwg.mxu0
    %5685 = vmatprep.subr.bf16.mxu0 %v5453
    %5686 = vmatpush1.bf16.msra.mxu0 %v5452
    %5687 = vmatprep.subr.bf16.mxu0 %v5457
    %5688 = vmatpush1.bf16.msra.mxu0 %v5456
    %5689 = vmatprep.subr.bf16.mxu0 %v5461
    %5690 = vmatpush1.bf16.msra.mxu0 %v5460
    %5691 = vmatprep.subr.bf16.mxu0 %v5465
    %5692 = vmatpush1.bf16.msra.mxu0 %v5464
    %5693 = vmatprep.subr.bf16.mxu0 %v5469
    %5694 = vmatpush1.bf16.msra.mxu0 %v5468
    %5695 = vmatprep.subr.bf16.mxu0 %v5473
    %5696 = vmatpush1.bf16.msra.mxu0 %v5472
    %5697 = vmatprep.subr.bf16.mxu0 %v5477
    %5698 = vmatpush1.bf16.msra.mxu0 %v5476
    %5699 = vmatprep.subr.bf16.mxu0 %v5481
    %5700 = vmatpush1.bf16.msra.mxu0 %v5480
    %5701 = vmatprep.subr.bf16.mxu0 %v5485
    %5702 = vmatpush1.bf16.msra.mxu0 %v5484
    %5703 = vmatprep.subr.bf16.mxu0 %v5489
    %5704 = vmatpush1.bf16.msra.mxu0 %v5488
    %5705 = vmatprep.subr.bf16.mxu0 %v5493
    %5706 = vmatpush1.bf16.msra.mxu0 %v5492
    %5707 = vmatprep.subr.bf16.mxu0 %v5497
    %5708 = vmatpush1.bf16.msra.mxu0 %v5496
    %5709 = vmatprep.subr.bf16.mxu0 %v5501
    %5710 = vmatpush1.bf16.msra.mxu0 %v5500
    %5711 = vmatprep.subr.bf16.mxu0 %v5505
    %5712 = vmatpush1.bf16.msra.mxu0 %v5504
    %5713 = vmatprep.subr.bf16.mxu0 %v5509
    %5714 = vmatpush1.bf16.msra.mxu0 %v5508
    %5715 = vmatprep.subr.bf16.mxu0 %v5513
    %5716 = vmatpush1.bf16.msra.mxu0 %v5512
    %5717 = vmatprep.mubr.bf16.mxu0 %v4853
    %5718 = vmatmul.mubr.bf16.gmra.mrb[0].mxu0 %v4852
    %v5719 = vpop.f32.mrb[0].mxu0
    %v5720 = vadd.f32 %v5679, %v5719
    %v5721 = vpop.f32.mrb[0].mxu0
    %v5722 = vadd.f32 %v5681, %v5721
    %v5723 = vpop.f32.mrb[0].mxu0
    %v5724 = vpop.f32.mrb[0].mxu0
    %5725 = vdwg.mxu0
    %5726 = vmatprep.subr.bf16.mxu0 %v5391
    %5727 = vmatpush1.bf16.msra.mxu0 %v5390
    %5728 = vmatprep.subr.bf16.mxu0 %v5395
    %5729 = vmatpush1.bf16.msra.mxu0 %v5394
    %5730 = vmatprep.subr.bf16.mxu0 %v5399
    %5731 = vmatpush1.bf16.msra.mxu0 %v5398
    %5732 = vmatprep.subr.bf16.mxu0 %v5403
    %5733 = vmatpush1.bf16.msra.mxu0 %v5402
    %5734 = vmatprep.subr.bf16.mxu0 %v5407
    %5735 = vmatpush1.bf16.msra.mxu0 %v5406
    %5736 = vmatprep.subr.bf16.mxu0 %v5411
    %5737 = vmatpush1.bf16.msra.mxu0 %v5410
    %5738 = vmatprep.subr.bf16.mxu0 %v5415
    %5739 = vmatpush1.bf16.msra.mxu0 %v5414
    %5740 = vmatprep.subr.bf16.mxu0 %v5419
    %5741 = vmatpush1.bf16.msra.mxu0 %v5418
    %5742 = vmatprep.subr.bf16.mxu0 %v5423
    %5743 = vmatpush1.bf16.msra.mxu0 %v5422
    %5744 = vmatprep.subr.bf16.mxu0 %v5427
    %5745 = vmatpush1.bf16.msra.mxu0 %v5426
    %5746 = vmatprep.subr.bf16.mxu0 %v5431
    %5747 = vmatpush1.bf16.msra.mxu0 %v5430
    %5748 = vmatprep.subr.bf16.mxu0 %v5435
    %5749 = vmatpush1.bf16.msra.mxu0 %v5434
    %5750 = vmatprep.subr.bf16.mxu0 %v5439
    %5751 = vmatpush1.bf16.msra.mxu0 %v5438
    %5752 = vmatprep.subr.bf16.mxu0 %v5443
    %5753 = vmatpush1.bf16.msra.mxu0 %v5442
    %5754 = vmatprep.subr.bf16.mxu0 %v5447
    %5755 = vmatpush1.bf16.msra.mxu0 %v5446
    %5756 = vmatprep.subr.bf16.mxu0 %v5451
    %5757 = vmatpush1.bf16.msra.mxu0 %v5450
    %5758 = vmatprep.mubr.bf16.mxu0 %v4851
    %5759 = vmatmul.mubr.bf16.gmra.mrb[0].mxu0 %v4850
    %v5760 = vpop.f32.mrb[0].mxu0
    %v5761 = vadd.f32 %v4995, %v5760
    %v5762 = vpop.f32.mrb[0].mxu0
    %v5763 = vadd.f32 %v4999, %v5762
    %v5764 = vpop.f32.mrb[0].mxu0
    %v5765 = vpop.f32.mrb[0].mxu0
    %5766 = vdwg.mxu0
    %5767 = vmatprep.subr.bf16.mxu0 %v5455
    %5768 = vmatpush1.bf16.msra.mxu0 %v5454
    %5769 = vmatprep.subr.bf16.mxu0 %v5459
    %5770 = vmatpush1.bf16.msra.mxu0 %v5458
    %5771 = vmatprep.subr.bf16.mxu0 %v5463
    %5772 = vmatpush1.bf16.msra.mxu0 %v5462
    %5773 = vmatprep.subr.bf16.mxu0 %v5467
    %5774 = vmatpush1.bf16.msra.mxu0 %v5466
    %5775 = vmatprep.subr.bf16.mxu0 %v5471
    %5776 = vmatpush1.bf16.msra.mxu0 %v5470
    %5777 = vmatprep.subr.bf16.mxu0 %v5475
    %5778 = vmatpush1.bf16.msra.mxu0 %v5474
    %5779 = vmatprep.subr.bf16.mxu0 %v5479
    %5780 = vmatpush1.bf16.msra.mxu0 %v5478
    %5781 = vmatprep.subr.bf16.mxu0 %v5483
    %5782 = vmatpush1.bf16.msra.mxu0 %v5482
    %5783 = vmatprep.subr.bf16.mxu0 %v5487
    %5784 = vmatpush1.bf16.msra.mxu0 %v5486
    %5785 = vmatprep.subr.bf16.mxu0 %v5491
    %5786 = vmatpush1.bf16.msra.mxu0 %v5490
    %5787 = vmatprep.subr.bf16.mxu0 %v5495
    %5788 = vmatpush1.bf16.msra.mxu0 %v5494
    %5789 = vmatprep.subr.bf16.mxu0 %v5499
    %5790 = vmatpush1.bf16.msra.mxu0 %v5498
    %5791 = vmatprep.subr.bf16.mxu0 %v5503
    %5792 = vmatpush1.bf16.msra.mxu0 %v5502
    %5793 = vmatprep.subr.bf16.mxu0 %v5507
    %5794 = vmatpush1.bf16.msra.mxu0 %v5506
    %5795 = vmatprep.subr.bf16.mxu0 %v5511
    %5796 = vmatpush1.bf16.msra.mxu0 %v5510
    %5797 = vmatprep.subr.bf16.mxu0 %v5515
    %5798 = vmatpush1.bf16.msra.mxu0 %v5514
    %5799 = vmatprep.mubr.bf16.mxu0 %v4853
    %5800 = vmatmul.mubr.bf16.gmra.mrb[0].mxu0 %v4852
    %v5801 = vpop.f32.mrb[0].mxu0
    %v5802 = vadd.f32 %v5761, %v5801
    %v5803 = vpop.f32.mrb[0].mxu0
    %v5804 = vadd.f32 %v5763, %v5803
    %v5805 = vpop.f32.mrb[0].mxu0
    %v5806 = vpop.f32.mrb[0].mxu0
    %5807 = vdwg.mxu0
    %v5808 = vmax.f32 %v5720, 0.0
    %v5809 = vmax.f32 %v5722, 0.0
    %v5810 = vmax.f32 %v5802, 0.0
    %v5811 = vmax.f32 %v5804, 0.0
    %v5812 = vpack.c.bf16 %v5808, %v5808
    %v5813 = vpack.c.bf16 %v5809, %v5809
    %v5814 = vpack.c.bf16 %v5810, %v5810
    %v5815 = vpack.c.bf16 %v5811, %v5811
    %v5816 = vld [vmem:[%s11] sm:$0xf]
    %v5817 = vld [vmem:[%s11 + $0x4] sm:$0xf]
    %v5818 = vld [vmem:[%s11 + $0x8] sm:$0xf]
    %v5819 = vld [vmem:[%s11 + $0xc] sm:$0xf]
    %v5820 = vld [vmem:[%s11 + $0x10] sm:$0xf]
    %v5821 = vld [vmem:[%s11 + $0x14] sm:$0xf]
    %v5822 = vld [vmem:[%s11 + $0x18] sm:$0xf]
    %v5823 = vld [vmem:[%s11 + $0x1c] sm:$0xf]
    %v5824 = vld [vmem:[%s11 + $0x20] sm:$0xf]
    %v5825 = vld [vmem:[%s11 + $0x24] sm:$0xf]
    %v5826 = vld [vmem:[%s11 + $0x28] sm:$0xf]
    %v5827 = vld [vmem:[%s11 + $0x2c] sm:$0xf]
    %v5828 = vld [vmem:[%s11 + $0x30] sm:$0xf]
    %v5829 = vld [vmem:[%s11 + $0x34] sm:$0xf]
    %v5830 = vld [vmem:[%s11 + $0x38] sm:$0xf]
    %v5831 = vld [vmem:[%s11 + $0x3c] sm:$0xf]
    %v5832 = vld [vmem:[%s11 + $0x40] sm:$0xf]
    %v5833 = vld [vmem:[%s11 + $0x44] sm:$0xf]
    %v5834 = vld [vmem:[%s11 + $0x48] sm:$0xf]
    %v5835 = vld [vmem:[%s11 + $0x4c] sm:$0xf]
    %v5836 = vld [vmem:[%s11 + $0x50] sm:$0xf]
    %v5837 = vld [vmem:[%s11 + $0x54] sm:$0xf]
    %v5838 = vld [vmem:[%s11 + $0x58] sm:$0xf]
    %v5839 = vld [vmem:[%s11 + $0x5c] sm:$0xf]
    %v5840 = vld [vmem:[%s11 + $0x60] sm:$0xf]
    %v5841 = vld [vmem:[%s11 + $0x64] sm:$0xf]
    %v5842 = vld [vmem:[%s11 + $0x68] sm:$0xf]
    %v5843 = vld [vmem:[%s11 + $0x6c] sm:$0xf]
    %v5844 = vld [vmem:[%s11 + $0x70] sm:$0xf]
    %v5845 = vld [vmem:[%s11 + $0x74] sm:$0xf]
    %v5846 = vld [vmem:[%s11 + $0x78] sm:$0xf]
    %v5847 = vld [vmem:[%s11 + $0x7c] sm:$0xf]
    %v5848 = vld [vmem:[%s11 + $0x80] sm:$0xf]
    %v5849 = vld [vmem:[%s11 + $0x84] sm:$0xf]
    %v5850 = vld [vmem:[%s11 + $0x88] sm:$0xf]
    %v5851 = vld [vmem:[%s11 + $0x8c] sm:$0xf]
    %v5852 = vld [vmem:[%s11 + $0x90] sm:$0xf]
    %v5853 = vld [vmem:[%s11 + $0x94] sm:$0xf]
    %v5854 = vld [vmem:[%s11 + $0x98] sm:$0xf]
    %v5855 = vld [vmem:[%s11 + $0x9c] sm:$0xf]
    %v5856 = vld [vmem:[%s11 + $0xa0] sm:$0xf]
    %v5857 = vld [vmem:[%s11 + $0xa4] sm:$0xf]
    %v5858 = vld [vmem:[%s11 + $0xa8] sm:$0xf]
    %v5859 = vld [vmem:[%s11 + $0xac] sm:$0xf]
    %v5860 = vld [vmem:[%s11 + $0xb0] sm:$0xf]
    %v5861 = vld [vmem:[%s11 + $0xb4] sm:$0xf]
    %v5862 = vld [vmem:[%s11 + $0xb8] sm:$0xf]
    %v5863 = vld [vmem:[%s11 + $0xbc] sm:$0xf]
    %v5864 = vld [vmem:[%s11 + $0xc0] sm:$0xf]
    %v5865 = vld [vmem:[%s11 + $0xc4] sm:$0xf]
    %v5866 = vld [vmem:[%s11 + $0xc8] sm:$0xf]
    %v5867 = vld [vmem:[%s11 + $0xcc] sm:$0xf]
    %v5868 = vld [vmem:[%s11 + $0xd0] sm:$0xf]
    %v5869 = vld [vmem:[%s11 + $0xd4] sm:$0xf]
    %v5870 = vld [vmem:[%s11 + $0xd8] sm:$0xf]
    %v5871 = vld [vmem:[%s11 + $0xdc] sm:$0xf]
    %v5872 = vld [vmem:[%s11 + $0xe0] sm:$0xf]
    %v5873 = vld [vmem:[%s11 + $0xe4] sm:$0xf]
    %v5874 = vld [vmem:[%s11 + $0xe8] sm:$0xf]
    %v5875 = vld [vmem:[%s11 + $0xec] sm:$0xf]
    %v5876 = vld [vmem:[%s11 + $0xf0] sm:$0xf]
    %v5877 = vld [vmem:[%s11 + $0xf4] sm:$0xf]
    %v5878 = vld [vmem:[%s11 + $0xf8] sm:$0xf]
    %v5879 = vld [vmem:[%s11 + $0xfc] sm:$0xf]
    %v5880 = vld [vmem:[%s12] sm:$0x1]
    %v5882 = vlaneseq
    %v5883 = vshrl.u32 %v5882, 7
    %v5884 = vsub.s32 0, %v5883
    %v5885 = vrot.slane %v5880, %v5884
    %v5951 = vunpack.c.l.b16 %v5816
    %v5952 = vunpack.c.l.b16 %v5817
    %v5953 = vunpack.c.l.b16 %v5818
    %v5954 = vunpack.c.l.b16 %v5819
    %v5955 = vunpack.c.l.b16 %v5820
    %v5956 = vunpack.c.l.b16 %v5821
    %v5957 = vunpack.c.l.b16 %v5822
    %v5958 = vunpack.c.l.b16 %v5823
    %v5959 = vunpack.c.l.b16 %v5824
    %v5960 = vunpack.c.l.b16 %v5825
    %v5961 = vunpack.c.l.b16 %v5826
    %v5962 = vunpack.c.l.b16 %v5827
    %v5963 = vunpack.c.l.b16 %v5828
    %v5964 = vunpack.c.l.b16 %v5829
    %v5965 = vunpack.c.l.b16 %v5830
    %v5966 = vunpack.c.l.b16 %v5831
    %v5967 = vunpack.c.l.b16 %v5832
    %v5968 = vunpack.c.l.b16 %v5833
    %v5969 = vunpack.c.l.b16 %v5834
    %v5970 = vunpack.c.l.b16 %v5835
    %v5971 = vunpack.c.l.b16 %v5836
    %v5972 = vunpack.c.l.b16 %v5837
    %v5973 = vunpack.c.l.b16 %v5838
    %v5974 = vunpack.c.l.b16 %v5839
    %v5975 = vunpack.c.l.b16 %v5840
    %v5976 = vunpack.c.l.b16 %v5841
    %v5977 = vunpack.c.l.b16 %v5842
    %v5978 = vunpack.c.l.b16 %v5843
    %v5979 = vunpack.c.l.b16 %v5844
    %v5980 = vunpack.c.l.b16 %v5845
    %v5981 = vunpack.c.l.b16 %v5846
    %v5982 = vunpack.c.l.b16 %v5847
    %v5983 = vunpack.c.l.b16 %v5848
    %v5984 = vunpack.c.l.b16 %v5849
    %v5985 = vunpack.c.l.b16 %v5850
    %v5986 = vunpack.c.l.b16 %v5851
    %v5987 = vunpack.c.l.b16 %v5852
    %v5988 = vunpack.c.l.b16 %v5853
    %v5989 = vunpack.c.l.b16 %v5854
    %v5990 = vunpack.c.l.b16 %v5855
    %v5991 = vunpack.c.l.b16 %v5856
    %v5992 = vunpack.c.l.b16 %v5857
    %v5993 = vunpack.c.l.b16 %v5858
    %v5994 = vunpack.c.l.b16 %v5859
    %v5995 = vunpack.c.l.b16 %v5860
    %v5996 = vunpack.c.l.b16 %v5861
    %v5997 = vunpack.c.l.b16 %v5862
    %v5998 = vunpack.c.l.b16 %v5863
    %v5999 = vunpack.c.l.b16 %v5864
    %v6000 = vunpack.c.l.b16 %v5865
    %v6001 = vunpack.c.l.b16 %v5866
    %v6002 = vunpack.c.l.b16 %v5867
    %v6003 = vunpack.c.l.b16 %v5868
    %v6004 = vunpack.c.l.b16 %v5869
    %v6005 = vunpack.c.l.b16 %v5870
    %v6006 = vunpack.c.l.b16 %v5871
    %v6007 = vunpack.c.l.b16 %v5872
    %v6008 = vunpack.c.l.b16 %v5873
    %v6009 = vunpack.c.l.b16 %v5874
    %v6010 = vunpack.c.l.b16 %v5875
    %v6011 = vunpack.c.l.b16 %v5876
    %v6012 = vunpack.c.l.b16 %v5877
    %v6013 = vunpack.c.l.b16 %v5878
    %v6014 = vunpack.c.l.b16 %v5879
    %v6015 = vpack.c.b16 %v5952, %v5951
    %v6016 = vpack.c.b16 %v5954, %v5953
    %v6017 = vpack.c.b16 %v5956, %v5955
    %v6018 = vpack.c.b16 %v5958, %v5957
    %v6019 = vpack.c.b16 %v5960, %v5959
    %v6020 = vpack.c.b16 %v5962, %v5961
    %v6021 = vpack.c.b16 %v5964, %v5963
    %v6022 = vpack.c.b16 %v5966, %v5965
    %v6023 = vpack.c.b16 %v5968, %v5967
    %v6024 = vpack.c.b16 %v5970, %v5969
    %v6025 = vpack.c.b16 %v5972, %v5971
    %v6026 = vpack.c.b16 %v5974, %v5973
    %v6027 = vpack.c.b16 %v5976, %v5975
    %v6028 = vpack.c.b16 %v5978, %v5977
    %v6029 = vpack.c.b16 %v5980, %v5979
    %v6030 = vpack.c.b16 %v5982, %v5981
    %v6031 = vpack.c.b16 %v5984, %v5983
    %v6032 = vpack.c.b16 %v5986, %v5985
    %v6033 = vpack.c.b16 %v5988, %v5987
    %v6034 = vpack.c.b16 %v5990, %v5989
    %v6035 = vpack.c.b16 %v5992, %v5991
    %v6036 = vpack.c.b16 %v5994, %v5993
    %v6037 = vpack.c.b16 %v5996, %v5995
    %v6038 = vpack.c.b16 %v5998, %v5997
    %v6039 = vpack.c.b16 %v6000, %v5999
    %v6040 = vpack.c.b16 %v6002, %v6001
    %v6041 = vpack.c.b16 %v6004, %v6003
    %v6042 = vpack.c.b16 %v6006, %v6005
    %v6043 = vpack.c.b16 %v6008, %v6007
    %v6044 = vpack.c.b16 %v6010, %v6009
    %v6045 = vpack.c.b16 %v6012, %v6011
    %v6046 = vpack.c.b16 %v6014, %v6013
    %6079 = vmatprep.subr.bf16.mxu0 0
    %6080 = vmatpush1.bf16.msra.mxu0 %v6015
    %6081 = vmatprep.subr.bf16.mxu0 0
    %6082 = vmatpush1.bf16.msra.mxu0 %v6016
    %6083 = vmatprep.subr.bf16.mxu0 0
    %6084 = vmatpush1.bf16.msra.mxu0 %v6017
    %6085 = vmatprep.subr.bf16.mxu0 0
    %6086 = vmatpush1.bf16.msra.mxu0 %v6018
    %6087 = vmatprep.subr.bf16.mxu0 0
    %6088 = vmatpush1.bf16.msra.mxu0 %v6019
    %6089 = vmatprep.subr.bf16.mxu0 0
    %6090 = vmatpush1.bf16.msra.mxu0 %v6020
    %6091 = vmatprep.subr.bf16.mxu0 0
    %6092 = vmatpush1.bf16.msra.mxu0 %v6021
    %6093 = vmatprep.subr.bf16.mxu0 0
    %6094 = vmatpush1.bf16.msra.mxu0 %v6022
    %6095 = vmatprep.subr.bf16.mxu0 0
    %6096 = vmatpush1.bf16.msra.mxu0 %v6023
    %6097 = vmatprep.subr.bf16.mxu0 0
    %6098 = vmatpush1.bf16.msra.mxu0 %v6024
    %6099 = vmatprep.subr.bf16.mxu0 0
    %6100 = vmatpush1.bf16.msra.mxu0 %v6025
    %6101 = vmatprep.subr.bf16.mxu0 0
    %6102 = vmatpush1.bf16.msra.mxu0 %v6026
    %6103 = vmatprep.subr.bf16.mxu0 0
    %6104 = vmatpush1.bf16.msra.mxu0 %v6027
    %6105 = vmatprep.subr.bf16.mxu0 0
    %6106 = vmatpush1.bf16.msra.mxu0 %v6028
    %6107 = vmatprep.subr.bf16.mxu0 0
    %6108 = vmatpush1.bf16.msra.mxu0 %v6029
    %6109 = vmatprep.subr.bf16.mxu0 0
    %6110 = vmatpush1.bf16.msra.mxu0 %v6030
    %6111 = vmatprep.mubr.bf16.mxu0 %v5813
    %6112 = vmatmul.mubr.bf16.gmra.mrb[0].mxu0 %v5812
    %v6113 = vpop.f32.mrb[0].mxu0
    %v6114 = vadd.f32 %v5885, %v6113
    %v6115 = vpop.f32.mrb[0].mxu0
    %v6116 = vpop.f32.mrb[0].mxu0
    %v6117 = vpop.f32.mrb[0].mxu0
    %6118 = vdwg.mxu0
    %6119 = vmatprep.subr.bf16.mxu0 0
    %6120 = vmatpush1.bf16.msra.mxu0 %v6031
    %6121 = vmatprep.subr.bf16.mxu0 0
    %6122 = vmatpush1.bf16.msra.mxu0 %v6032
    %6123 = vmatprep.subr.bf16.mxu0 0
    %6124 = vmatpush1.bf16.msra.mxu0 %v6033
    %6125 = vmatprep.subr.bf16.mxu0 0
    %6126 = vmatpush1.bf16.msra.mxu0 %v6034
    %6127 = vmatprep.subr.bf16.mxu0 0
    %6128 = vmatpush1.bf16.msra.mxu0 %v6035
    %6129 = vmatprep.subr.bf16.mxu0 0
    %6130 = vmatpush1.bf16.msra.mxu0 %v6036
    %6131 = vmatprep.subr.bf16.mxu0 0
    %6132 = vmatpush1.bf16.msra.mxu0 %v6037
    %6133 = vmatprep.subr.bf16.mxu0 0
    %6134 = vmatpush1.bf16.msra.mxu0 %v6038
    %6135 = vmatprep.subr.bf16.mxu0 0
    %6136 = vmatpush1.bf16.msra.mxu0 %v6039
    %6137 = vmatprep.subr.bf16.mxu0 0
    %6138 = vmatpush1.bf16.msra.mxu0 %v6040
    %6139 = vmatprep.subr.bf16.mxu0 0
    %6140 = vmatpush1.bf16.msra.mxu0 %v6041
    %6141 = vmatprep.subr.bf16.mxu0 0
    %6142 = vmatpush1.bf16.msra.mxu0 %v6042
    %6143 = vmatprep.subr.bf16.mxu0 0
    %6144 = vmatpush1.bf16.msra.mxu0 %v6043
    %6145 = vmatprep.subr.bf16.mxu0 0
    %6146 = vmatpush1.bf16.msra.mxu0 %v6044
    %6147 = vmatprep.subr.bf16.mxu0 0
    %6148 = vmatpush1.bf16.msra.mxu0 %v6045
    %6149 = vmatprep.subr.bf16.mxu0 0
    %6150 = vmatpush1.bf16.msra.mxu0 %v6046
    %6151 = vmatprep.mubr.bf16.mxu0 %v5815
    %6152 = vmatmul.mubr.bf16.gmra.mrb[0].mxu0 %v5814
    %v6153 = vpop.f32.mrb[0].mxu0
    %v6154 = vadd.f32 %v6114, %v6153
    %v6155 = vpop.f32.mrb[0].mxu0
    %v6156 = vpop.f32.mrb[0].mxu0
    %v6157 = vpop.f32.mrb[0].mxu0
    %6158 = vdwg.mxu0
    %vm6159 = vcmask 74752
    %v6160 = vsel %vm6159, %v6154, -inf
    %6161 = vmax.xlane.f32.xlu0 %v6160
    %v6162 = vpop.xlane.xlu0 %6161
    %v6163 = vsub.f32 %v6154, %v6162
    %v6164 = vmul.f32 %v6163, 1.442695
    %v6165 = vpow.pop %v6164
    %v6166 = vsel %vm6159, %v6165, 0.0
    %6167 = vadd.xlane.f32.xlu0 %v6166
    %v6168 = vpop.xlane.xlu0 %6167
    %v6169 = vrcp.pop %v6168
    %v6170 = vmul.f32 %v6165, %v6169
    %6171 = vst.msk [vmem:[#allocation12] sm:$0x3] %vm6159, %v6170
    // Predicated region
    $region66: #{vgg_forward.1} parent=1 // pred_check
      _
    $region67: #{vgg_forward.1} parent=1 // pred_check_branch
      %6173 = sbr.rel (0) target = $region69
    $region68: #{vgg_forward.1} parent=1 // pred_region
      %s6175 = ssub.s32 32, 32
      %6176 = vsyncadd [#allocation8], %s6175
      %s6178 = sshll.u32 [#allocation12], 4
      %s6179 = int_to_ptr.vmem [resolvable:$true] %s6178
      %6181 = dma.vmem_to_hbm [thread:$0]  %s6179, 32, %s13, [#allocation8]
    $region69: #{vgg_forward.1} parent=1 // pred_fallthru
      _
    // Predicated region
    $region70: #{vgg_forward.1} parent=1 // pred_check
      _
    $region71: #{vgg_forward.1} parent=1 // pred_check_branch
      %6183 = sbr.rel (0) target = $region73
    $region72: #{vgg_forward.1} parent=1 // pred_region
      %6184 = dma.done [#allocation8], 32
    $region73: #{vgg_forward.1} parent=1 // pred_fallthru
      _
    %6185 = vsyncpa [#allocation7], 1
    %6186 = vsyncpa [#allocation10], 1
    %6187 = vsyncpa [#allocation8], 1

</llo_original>
